<compile_context>
chip_gen: v7x
topology: tpu7x:2x2x1
jax: 0.10.0
libtpu: 0.0.40
codegen_flags: <defaults>
</compile_context>

<pallas_src>
import functools

import jax
import jax.numpy as jnp
from jax.experimental import pallas as pl
from jax.experimental.pallas import tpu as pltpu


NCP = 128      # num_classes padded to one full lane group
C = 256        # conv channel width
MAXPAD = 2     # largest conv half-width (K=5)

WEIGHT_ORDER = [
    "w12", "b12", "w3", "b3", "w4", "b4", "w5", "b5",
    "ow12", "ob12", "ow3", "ob3", "ow4", "ob4", "ow5", "ob5", "ow6", "ob6",
    "atten_wT", "h1_wa", "h1_wb", "h1_b", "h2_w", "h2_b",
]


# ---------------------------------------------------------------------------
# Generation-aware VMEM budgeting (v5e/v6e: 128 MiB physical, v7x: 64 MiB).
# ---------------------------------------------------------------------------
def _tpu_vmem_capacity():
    try:
        return int(pltpu.get_tpu_info().vmem_capacity_bytes)
    except Exception:
        return 64 << 20


def _vmem_budget():
    cap = _tpu_vmem_capacity()
    return max(12 << 20, min(24 << 20, cap // 3))


def _vmem_limit():
    cap = _tpu_vmem_capacity()
    return int(min(cap * 3 // 4, 100 << 20))


def _pick_bb(B, L, kd, weight_bytes, budget):
    """Largest batch block within the VMEM budget, keeping >=2 parallel blocks
    (megacore on v7x) and bounding the flat (M, M) attention score tile."""
    best = 1
    for bb in range(1, B + 1):
        if B % bb:
            continue
        if B >= 2 and B // bb < 2:          # keep both TensorCores busy on v7x
            continue
        m = bb * L
        if L <= 512 and m > 512:            # bound quadratic attention buffers
            continue
        per_block = (bb * (L + 2 * MAXPAD) * C * 2      # zero-halo scratch (bf16)
                     + 2 * bb * L * kd * 2              # cols0 block, double-buffered
                     + m * 5 * C * 2                    # largest in-kernel im2col
                     + 10 * m * C * 4                   # live f32/bf16 temporaries
                     + 3 * m * m * 4)                   # attention scores/softmax
        if 2 * weight_bytes + per_block <= budget:
            best = bb
    return best


# ---------------------------------------------------------------------------
# The single fused kernel: conv branches + attention + both NLL heads.
# ---------------------------------------------------------------------------
def _model_kernel(cols0_ref,
                  w12, b12, w3, b3, w4, b4, w5, b5,
                  ow12, ob12, ow3, ob3, ow4, ob4, ow5, ob5, ow6, ob6,
                  attnT, h1wa, h1wb, h1b, h2w, h2b,
                  tag1_ref, mask1_ref, tag2_ref, mask2_ref,
                  num1_ref, den1_ref, num2_ref, den2_ref,
                  act_ref, *, L):
    BB = cols0_ref.shape[0]
    M = BB * L

    # zero the halo rows once; the center is overwritten by each conv layer.
    zero_halo = jnp.zeros((BB, MAXPAD, C), act_ref.dtype)
    act_ref[:, 0:MAXPAD, :] = zero_halo
    act_ref[:, MAXPAD + L:MAXPAD + L + MAXPAD, :] = zero_halo

    def dense(v, w_ref, b_ref=None, relu=True):
        y = jnp.dot(v, w_ref[...], preferred_element_type=jnp.float32)
        if b_ref is not None:
            y = y + b_ref[...]
        if relu:
            y = jnp.maximum(y, 0.0)
        return y

    def conv_layer(y_prev, K, w_ref, b_ref):
        # write previous activation into the zero-halo scratch ('same' padding
        # folded in), gather K lane-aligned shifted slices into one im2col
        # tile, and run a single MXU dot with contraction K*C.
        pad = (K - 1) // 2
        off = MAXPAD - pad
        act_ref[:, MAXPAD:MAXPAD + L, :] = (
            y_prev.reshape(BB, L, C).astype(act_ref.dtype))
        a = act_ref[...]
        cols = jnp.concatenate(
            [jax.lax.slice_in_dim(a, off + k, off + k + L, axis=1)
             for k in range(K)],
            axis=-1).reshape(M, K * C)
        return dense(cols, w_ref, b_ref)

    cols0 = cols0_ref[...].reshape(M, cols0_ref.shape[-1])   # (M, 5*D) bf16

    # aspect branch: relu(cat(conv1, conv2)) -> conv3 -> conv4 -> conv5 (K=5)
    y = dense(cols0, w12, b12)
    y = conv_layer(y, 5, w3, b3)
    y = conv_layer(y, 5, w4, b4)
    as_f = conv_layer(y, 5, w5, b5)

    # opinion branch: relu(cat(_conv1, _conv2)) -> _conv3.._conv6 (K=3)
    y = dense(cols0, ow12, ob12)
    y = conv_layer(y, 3, ow3, ob3)
    y = conv_layer(y, 3, ow4, ob4)
    y = conv_layer(y, 3, ow5, ob5)
    op_f = conv_layer(y, 3, ow6, ob6)

    as_b = as_f.astype(jnp.bfloat16)
    op_b = op_f.astype(jnp.bfloat16)

    # ---- cross attention: h = relu(op @ W^T) fused; lane-dense flat scores ----
    h = dense(op_b, attnT).astype(jnp.bfloat16)                       # (M, 256)
    s = jax.lax.dot_general(as_b, h, (((1,), (1,)), ((), ())),
                            preferred_element_type=jnp.float32)       # (M, M)
    s = jnp.maximum(s, 0.0)                                           # relu(atten)
    if BB > 1:
        # block-diagonal mask so cross-batch scores vanish exactly (exp -> 0)
        rb = jax.lax.broadcasted_iota(jnp.int32, (M, M), 0) // L
        cb = jax.lax.broadcasted_iota(jnp.int32, (M, M), 1) // L
        s = jnp.where(rb == cb, s, -1e9)
    smax = jnp.max(s, axis=0, keepdims=True)                          # torch dim=1
    e = jnp.exp(s - smax)
    aw = (e / jnp.sum(e, axis=0, keepdims=True)).astype(jnp.bfloat16)
    atten_b = jnp.dot(aw, op_b,
                      preferred_element_type=jnp.float32).astype(jnp.bfloat16)

    # ---- fused Linear + log_softmax + masked-mean NLL (per-block partials) ----
    def nll_partial(logits, tag_ref, mask_ref, num_ref, den_ref):
        mx = jnp.max(logits, axis=-1, keepdims=True)
        lse = jnp.log(jnp.sum(jnp.exp(logits - mx), axis=-1, keepdims=True)) + mx
        onehot = jax.lax.broadcasted_iota(jnp.int32, logits.shape, 1) == tag_ref[...]
        picked = jnp.sum(jnp.where(onehot, logits, 0.0), axis=-1, keepdims=True)
        nll = lse - picked                                            # (M, 1)
        msk = mask_ref[...]                                           # (M, 1)
        num = jnp.sum(nll * msk, keepdims=True)                       # (1, 1)
        den = jnp.sum(msk, keepdims=True)
        num_ref[...] = jnp.broadcast_to(num.reshape(1, 1, 1), num_ref.shape)
        den_ref[...] = jnp.broadcast_to(den.reshape(1, 1, 1), den_ref.shape)

    # head 1: cat(as_conv, atten_conv) folded via split weights
    logit1 = (jnp.dot(as_b, h1wa[...], preferred_element_type=jnp.float32)
              + jnp.dot(atten_b, h1wb[...], preferred_element_type=jnp.float32)
              + h1b[...])
    nll_partial(logit1, tag1_ref, mask1_ref, num1_ref, den1_ref)

    # head 2: _linear_ae(op_conv)
    logit2 = jnp.dot(op_b, h2w[...], preferred_element_type=jnp.float32) + h2b[...]
    nll_partial(logit2, tag2_ref, mask2_ref, num2_ref, den2_ref)


# ---------------------------------------------------------------------------
# Parameters (deterministic synthetic init in torch layouts) + one-time prep.
# ---------------------------------------------------------------------------
def init_params(key, vocab, dg, dd, num_classes):
    d = dg + dd
    keys = iter(jax.random.split(key, 40))

    def nrm(shape, scale=0.05):
        return scale * jax.random.normal(next(keys), shape, dtype=jnp.float32)

    p = {}
    p["gen_emb"] = nrm((vocab, dg), 0.1)
    p["domain_emb"] = nrm((vocab, dd), 0.1)

    def conv(name, cout, cin, k):
        p[name + "_w"] = nrm((cout, cin, k))
        p[name + "_b"] = nrm((cout,), 0.01)

    conv("conv1", 128, d, 5); conv("conv2", 128, d, 3)
    conv("conv3", 256, 256, 5); conv("conv4", 256, 256, 5); conv("conv5", 256, 256, 5)
    conv("_conv1", 128, d, 5); conv("_conv2", 128, d, 3)
    conv("_conv3", 256, 256, 3); conv("_conv4", 256, 256, 3)
    conv("_conv5", 256, 256, 3); conv("_conv6", 256, 256, 3)
    p["atten_w"] = nrm((256, 256))                 # Linear(256, 256, bias=False)
    p["linear_ae_w"] = nrm((num_classes, 512))
    p["linear_ae_b"] = nrm((num_classes,), 0.01)
    p["_linear_ae_w"] = nrm((num_classes, 256))
    p["_linear_ae_b"] = nrm((num_classes,), 0.01)
    return p


def prepare_params(p, num_classes):
    """One-time weight re-layout: (K*Cin, Cout) bf16 conv weights (K=3 kernels
    zero-padded to 5 taps where they fuse with a K=5 sibling), conv1|conv2
    concat folded along Cout, class dim padded to 128 lanes with -1e9 bias."""
    q = {"gen_emb": p["gen_emb"], "domain_emb": p["domain_emb"]}

    def convw(name, k_target):
        w = jnp.transpose(p[name + "_w"], (2, 1, 0))            # (K, Cin, Cout)
        if w.shape[0] < k_target:
            e = (k_target - w.shape[0]) // 2
            w = jnp.pad(w, ((e, e), (0, 0), (0, 0)))
        return w.reshape(k_target * w.shape[1], w.shape[2]).astype(jnp.bfloat16)

    def bias(name):
        return p[name + "_b"].reshape(1, -1).astype(jnp.float32)

    q["w12"] = jnp.concatenate([convw("conv1", 5), convw("conv2", 5)], axis=1)
    q["b12"] = jnp.concatenate([bias("conv1"), bias("conv2")], axis=1)
    q["ow12"] = jnp.concatenate([convw("_conv1", 5), convw("_conv2", 5)], axis=1)
    q["ob12"] = jnp.concatenate([bias("_conv1"), bias("_conv2")], axis=1)

    q["w3"], q["b3"] = convw("conv3", 5), bias("conv3")
    q["w4"], q["b4"] = convw("conv4", 5), bias("conv4")
    q["w5"], q["b5"] = convw("conv5", 5), bias("conv5")
    q["ow3"], q["ob3"] = convw("_conv3", 3), bias("_conv3")
    q["ow4"], q["ob4"] = convw("_conv4", 3), bias("_conv4")
    q["ow5"], q["ob5"] = convw("_conv5", 3), bias("_conv5")
    q["ow6"], q["ob6"] = convw("_conv6", 3), bias("_conv6")

    q["atten_wT"] = p["atten_w"].T.astype(jnp.bfloat16)

    def head(w, b):   # torch (nc, Cin) -> (Cin, NCP) bf16; bias (1, NCP) f32
        wt = w.T.astype(jnp.float32)
        wp = jnp.zeros((wt.shape[0], NCP), jnp.float32).at[:, :num_classes].set(wt)
        bp = jnp.full((1, NCP), -1e9, jnp.float32).at[0, :num_classes].set(b)
        return wp.astype(jnp.bfloat16), bp

    lw, lb = head(p["linear_ae_w"], p["linear_ae_b"])
    q["h1_wa"], q["h1_wb"], q["h1_b"] = lw[:256], lw[256:], lb
    q["h2_w"], q["h2_b"] = head(p["_linear_ae_w"], p["_linear_ae_b"])
    return q


# ---------------------------------------------------------------------------
# Forward (training path: crf=False, testing=False -> returns (score1, score2))
# ---------------------------------------------------------------------------
def forward(params, x_ids, x_len, x_len_opi, x_tag, x_tag_opi):
    q = params
    B, L = x_ids.shape
    # NOTE: the `atten_a` block in the PyTorch forward is dead code (its result
    # is never consumed), so it is intentionally not computed.
    # TODO(synk): dropout layers (p=0.6) are identity (deterministic forward);
    # the CRF branch (crf=False) is not implemented.
    # TODO(synk): the embedding gather and the tiny first-layer im2col (160
    # channels) stay in XLA; everything downstream runs in one fused kernel.

    gen = q["gen_emb"][x_ids]
    dom = q["domain_emb"][x_ids]
    x_emb = jnp.concatenate([gen, dom], axis=-1)                       # (B, L, D)
    xp = jnp.pad(x_emb, ((0, 0), (MAXPAD, MAXPAD), (0, 0)))
    cols0 = jnp.concatenate([xp[:, k:k + L, :] for k in range(2 * MAXPAD + 1)],
                            axis=-1).astype(jnp.bfloat16)              # (B, L, 5*D)
    KD = cols0.shape[-1]

    pos = jnp.arange(L)[None, :]
    mask1 = (pos < x_len[:, None]).astype(jnp.float32).reshape(B * L, 1)
    mask2 = (pos < x_len_opi[:, None]).astype(jnp.float32).reshape(B * L, 1)
    tag1 = x_tag.reshape(B * L, 1).astype(jnp.int32)
    tag2 = x_tag_opi.reshape(B * L, 1).astype(jnp.int32)

    weights = [q[k] for k in WEIGHT_ORDER]
    wbytes = sum(int(w.size) * w.dtype.itemsize for w in weights)
    BB = _pick_bb(B, L, KD, wbytes, _vmem_budget())
    nblk = B // BB

    in_specs = ([pl.BlockSpec((BB, L, KD), lambda i: (i, 0, 0))]
                + [pl.BlockSpec(w.shape, lambda i: (0, 0)) for w in weights]
                + [pl.BlockSpec((BB * L, 1), lambda i: (i, 0))] * 4)
    out_specs = [pl.BlockSpec((1, 1, NCP), lambda i: (i, 0, 0))] * 4
    out_shape = [jax.ShapeDtypeStruct((nblk, 1, NCP), jnp.float32)] * 4

    num1, den1, num2, den2 = pl.pallas_call(
        functools.partial(_model_kernel, L=L),
        grid=(nblk,),
        in_specs=in_specs,
        out_specs=out_specs,
        out_shape=out_shape,
        scratch_shapes=[pltpu.VMEM((BB, L + 2 * MAXPAD, C), jnp.bfloat16)],
        compiler_params=pltpu.CompilerParams(
            dimension_semantics=("parallel",),
            vmem_limit_bytes=_vmem_limit()),
    )(cols0, *weights, tag1, mask1, tag2, mask2)

    den1s = jnp.sum(den1[:, 0, 0])
    den2s = jnp.sum(den2[:, 0, 0])
    score1 = jnp.sum(num1[:, 0, 0]) / jnp.maximum(den1s, 1.0)
    score2 = jnp.sum(num2[:, 0, 0]) / jnp.maximum(den2s, 1.0)
    return score1, score2


if __name__ == "__main__":
    key = jax.random.PRNGKey(0)
    pkey, dkey = jax.random.split(key)

    vocab, dg, dd, num_classes = 50, 24, 8, 3
    B, L = 2, 16

    raw = init_params(pkey, vocab, dg, dd, num_classes)
    params = prepare_params(raw, num_classes)

    k1, k2, k3 = jax.random.split(dkey, 3)
    x_ids = jax.random.randint(k1, (B, L), 1, vocab)
    x_len = jnp.array([16, 12], dtype=jnp.int32)      # sorted desc (pack_padded_sequence)
    x_len_opi = jnp.array([16, 10], dtype=jnp.int32)
    x_tag = jax.random.randint(k2, (B, L), 0, num_classes)
    x_tag_opi = jax.random.randint(k3, (B, L), 0, num_classes)

    fwd = jax.jit(functools.partial(forward, params))
    s1, s2 = fwd(x_ids, x_len, x_len_opi, x_tag, x_tag_opi)
    jax.block_until_ready((s1, s2))
    assert bool(jnp.isfinite(s1)) and bool(jnp.isfinite(s2))
    print("KERNEL_OK")
</pallas_src>

<mosaic_0001>
module attributes {stable_mosaic.version = 11 : i64} {
  func.func @_model_kernel(%arg0: i32, %arg1: memref<1x16x160xbf16, #tpu.memory_space<vmem>>, %arg2: memref<160x256xbf16, #tpu.memory_space<vmem>>, %arg3: memref<1x256xf32, #tpu.memory_space<vmem>>, %arg4: memref<1280x256xbf16, #tpu.memory_space<vmem>>, %arg5: memref<1x256xf32, #tpu.memory_space<vmem>>, %arg6: memref<1280x256xbf16, #tpu.memory_space<vmem>>, %arg7: memref<1x256xf32, #tpu.memory_space<vmem>>, %arg8: memref<1280x256xbf16, #tpu.memory_space<vmem>>, %arg9: memref<1x256xf32, #tpu.memory_space<vmem>>, %arg10: memref<160x256xbf16, #tpu.memory_space<vmem>>, %arg11: memref<1x256xf32, #tpu.memory_space<vmem>>, %arg12: memref<768x256xbf16, #tpu.memory_space<vmem>>, %arg13: memref<1x256xf32, #tpu.memory_space<vmem>>, %arg14: memref<768x256xbf16, #tpu.memory_space<vmem>>, %arg15: memref<1x256xf32, #tpu.memory_space<vmem>>, %arg16: memref<768x256xbf16, #tpu.memory_space<vmem>>, %arg17: memref<1x256xf32, #tpu.memory_space<vmem>>, %arg18: memref<768x256xbf16, #tpu.memory_space<vmem>>, %arg19: memref<1x256xf32, #tpu.memory_space<vmem>>, %arg20: memref<256x256xbf16, #tpu.memory_space<vmem>>, %arg21: memref<256x128xbf16, #tpu.memory_space<vmem>>, %arg22: memref<256x128xbf16, #tpu.memory_space<vmem>>, %arg23: memref<1x128xf32, #tpu.memory_space<vmem>>, %arg24: memref<256x128xbf16, #tpu.memory_space<vmem>>, %arg25: memref<1x128xf32, #tpu.memory_space<vmem>>, %arg26: memref<16x1xi32, #tpu.memory_space<vmem>>, %arg27: memref<16x1xf32, #tpu.memory_space<vmem>>, %arg28: memref<16x1xi32, #tpu.memory_space<vmem>>, %arg29: memref<16x1xf32, #tpu.memory_space<vmem>>, %arg30: memref<1x1x128xf32, #tpu.memory_space<vmem>>, %arg31: memref<1x1x128xf32, #tpu.memory_space<vmem>>, %arg32: memref<1x1x128xf32, #tpu.memory_space<vmem>>, %arg33: memref<1x1x128xf32, #tpu.memory_space<vmem>>, %arg34: memref<1x20x256xbf16, #tpu.memory_space<vmem>>) attributes {dimension_semantics = [#tpu.dimension_semantics<parallel>], iteration_bounds = array<i64: 2>, scalar_prefetch = 0 : i64, scratch_operands = 1 : i64, tpu.core_type = #tpu.core_type<tc>, window_params = [{transform_indices = @transform_0, window_bounds = array<i64: 1, 16, 160>}, {pipeline_mode = #tpu.pipeline_mode<synchronous>, transform_indices = @transform_1, window_bounds = array<i64: 160, 256>}, {pipeline_mode = #tpu.pipeline_mode<synchronous>, transform_indices = @transform_2, window_bounds = array<i64: 1, 256>}, {pipeline_mode = #tpu.pipeline_mode<synchronous>, transform_indices = @transform_3, window_bounds = array<i64: 1280, 256>}, {pipeline_mode = #tpu.pipeline_mode<synchronous>, transform_indices = @transform_4, window_bounds = array<i64: 1, 256>}, {pipeline_mode = #tpu.pipeline_mode<synchronous>, transform_indices = @transform_5, window_bounds = array<i64: 1280, 256>}, {pipeline_mode = #tpu.pipeline_mode<synchronous>, transform_indices = @transform_6, window_bounds = array<i64: 1, 256>}, {pipeline_mode = #tpu.pipeline_mode<synchronous>, transform_indices = @transform_7, window_bounds = array<i64: 1280, 256>}, {pipeline_mode = #tpu.pipeline_mode<synchronous>, transform_indices = @transform_8, window_bounds = array<i64: 1, 256>}, {pipeline_mode = #tpu.pipeline_mode<synchronous>, transform_indices = @transform_9, window_bounds = array<i64: 160, 256>}, {pipeline_mode = #tpu.pipeline_mode<synchronous>, transform_indices = @transform_10, window_bounds = array<i64: 1, 256>}, {pipeline_mode = #tpu.pipeline_mode<synchronous>, transform_indices = @transform_11, window_bounds = array<i64: 768, 256>}, {pipeline_mode = #tpu.pipeline_mode<synchronous>, transform_indices = @transform_12, window_bounds = array<i64: 1, 256>}, {pipeline_mode = #tpu.pipeline_mode<synchronous>, transform_indices = @transform_13, window_bounds = array<i64: 768, 256>}, {pipeline_mode = #tpu.pipeline_mode<synchronous>, transform_indices = @transform_14, window_bounds = array<i64: 1, 256>}, {pipeline_mode = #tpu.pipeline_mode<synchronous>, transform_indices = @transform_15, window_bounds = array<i64: 768, 256>}, {pipeline_mode = #tpu.pipeline_mode<synchronous>, transform_indices = @transform_16, window_bounds = array<i64: 1, 256>}, {pipeline_mode = #tpu.pipeline_mode<synchronous>, transform_indices = @transform_17, window_bounds = array<i64: 768, 256>}, {pipeline_mode = #tpu.pipeline_mode<synchronous>, transform_indices = @transform_18, window_bounds = array<i64: 1, 256>}, {pipeline_mode = #tpu.pipeline_mode<synchronous>, transform_indices = @transform_19, window_bounds = array<i64: 256, 256>}, {pipeline_mode = #tpu.pipeline_mode<synchronous>, transform_indices = @transform_20, window_bounds = array<i64: 256, 128>}, {pipeline_mode = #tpu.pipeline_mode<synchronous>, transform_indices = @transform_21, window_bounds = array<i64: 256, 128>}, {pipeline_mode = #tpu.pipeline_mode<synchronous>, transform_indices = @transform_22, window_bounds = array<i64: 1, 128>}, {pipeline_mode = #tpu.pipeline_mode<synchronous>, transform_indices = @transform_23, window_bounds = array<i64: 256, 128>}, {pipeline_mode = #tpu.pipeline_mode<synchronous>, transform_indices = @transform_24, window_bounds = array<i64: 1, 128>}, {transform_indices = @transform_25, window_bounds = array<i64: 16, 1>}, {transform_indices = @transform_26, window_bounds = array<i64: 16, 1>}, {transform_indices = @transform_27, window_bounds = array<i64: 16, 1>}, {transform_indices = @transform_28, window_bounds = array<i64: 16, 1>}, {transform_indices = @transform_29, window_bounds = array<i64: 1, 1, 128>}, {transform_indices = @transform_30, window_bounds = array<i64: 1, 1, 128>}, {transform_indices = @transform_31, window_bounds = array<i64: 1, 1, 128>}, {transform_indices = @transform_32, window_bounds = array<i64: 1, 1, 128>}]} {
    %cst = arith.constant 0.000000e+00 : bf16
    %0 = vector.broadcast %cst : bf16 to vector<1x2x256xbf16>
    %c0 = arith.constant 0 : index
    %c0_0 = arith.constant 0 : index
    %c0_1 = arith.constant 0 : index
    %1 = vector.load %arg34[%c0, %c0_0, %c0_1] : memref<1x20x256xbf16, #tpu.memory_space<vmem>>, vector<1x2x256xbf16>
    tpu.vector_store %arg34[%c0, %c0_0, %c0_1], %0 {strides = array<i32>} : memref<1x20x256xbf16, #tpu.memory_space<vmem>>, vector<1x2x256xbf16>,
    %c0_2 = arith.constant 0 : index
    %c18 = arith.constant 18 : index
    %c0_3 = arith.constant 0 : index
    %2 = vector.load %arg34[%c0_2, %c18, %c0_3] : memref<1x20x256xbf16, #tpu.memory_space<vmem>>, vector<1x2x256xbf16>
    tpu.vector_store %arg34[%c0_2, %c18, %c0_3], %0 {strides = array<i32>} : memref<1x20x256xbf16, #tpu.memory_space<vmem>>, vector<1x2x256xbf16>,
    %c0_4 = arith.constant 0 : index
    %c0_5 = arith.constant 0 : index
    %c0_6 = arith.constant 0 : index
    %3 = vector.load %arg1[%c0_4, %c0_5, %c0_6] : memref<1x16x160xbf16, #tpu.memory_space<vmem>>, vector<1x16x160xbf16>
    %4 = vector.shape_cast %3 : vector<1x16x160xbf16> to vector<16x160xbf16>
    %c0_7 = arith.constant 0 : index
    %c0_8 = arith.constant 0 : index
    %5 = vector.load %arg2[%c0_7, %c0_8] : memref<160x256xbf16, #tpu.memory_space<vmem>>, vector<160x256xbf16>
    %cst_9 = arith.constant dense<0.000000e+00> : vector<16x256xf32>
    %6 = tpu.matmul %4, %5, %cst_9 {dimension_numbers = #tpu.dot_dimension_numbers<[1], [0], [0], [1], [0, 0, 1, 1], [], []>} : vector<16x160xbf16>, vector<160x256xbf16>, vector<16x256xf32> -> vector<16x256xf32>
    %c0_10 = arith.constant 0 : index
    %c0_11 = arith.constant 0 : index
    %7 = vector.load %arg3[%c0_10, %c0_11] : memref<1x256xf32, #tpu.memory_space<vmem>>, vector<1x256xf32>
    %8 = vector.broadcast %7 : vector<1x256xf32> to vector<16x256xf32>
    %9 = arith.addf %6, %8 : vector<16x256xf32>
    %cst_12 = arith.constant 0.000000e+00 : f32
    %10 = vector.broadcast %cst_12 : f32 to vector<16x256xf32>
    %11 = arith.maximumf %9, %10 : vector<16x256xf32>
    %12 = vector.shape_cast %11 : vector<16x256xf32> to vector<1x16x256xf32>
    %13 = arith.truncf %12 : vector<1x16x256xf32> to vector<1x16x256xbf16>
    %c0_13 = arith.constant 0 : index
    %c2 = arith.constant 2 : index
    %c0_14 = arith.constant 0 : index
    %14 = vector.load %arg34[%c0_13, %c2, %c0_14] : memref<1x20x256xbf16, #tpu.memory_space<vmem>>, vector<1x16x256xbf16>
    tpu.vector_store %arg34[%c0_13, %c2, %c0_14], %13 {strides = array<i32>} : memref<1x20x256xbf16, #tpu.memory_space<vmem>>, vector<1x16x256xbf16>,
    %c0_15 = arith.constant 0 : index
    %c0_16 = arith.constant 0 : index
    %c0_17 = arith.constant 0 : index
    %15 = vector.load %arg34[%c0_15, %c0_16, %c0_17] : memref<1x20x256xbf16, #tpu.memory_space<vmem>>, vector<1x20x256xbf16>
    %16 = vector.extract_strided_slice %15 {offsets = [0, 0, 0], sizes = [1, 16, 256], strides = [1, 1, 1]} : vector<1x20x256xbf16> to vector<1x16x256xbf16>
    %17 = vector.extract_strided_slice %15 {offsets = [0, 1, 0], sizes = [1, 16, 256], strides = [1, 1, 1]} : vector<1x20x256xbf16> to vector<1x16x256xbf16>
    %18 = vector.extract_strided_slice %15 {offsets = [0, 2, 0], sizes = [1, 16, 256], strides = [1, 1, 1]} : vector<1x20x256xbf16> to vector<1x16x256xbf16>
    %19 = vector.extract_strided_slice %15 {offsets = [0, 3, 0], sizes = [1, 16, 256], strides = [1, 1, 1]} : vector<1x20x256xbf16> to vector<1x16x256xbf16>
    %20 = vector.extract_strided_slice %15 {offsets = [0, 4, 0], sizes = [1, 16, 256], strides = [1, 1, 1]} : vector<1x20x256xbf16> to vector<1x16x256xbf16>
    %21 = tpu.concatenate %16, %17, %18, %19, %20 in 2 : vector<1x16x256xbf16>, vector<1x16x256xbf16>, vector<1x16x256xbf16>, vector<1x16x256xbf16>, vector<1x16x256xbf16> -> vector<1x16x1280xbf16>
    %22 = vector.shape_cast %21 : vector<1x16x1280xbf16> to vector<16x1280xbf16>
    %c0_18 = arith.constant 0 : index
    %c0_19 = arith.constant 0 : index
    %23 = vector.load %arg4[%c0_18, %c0_19] : memref<1280x256xbf16, #tpu.memory_space<vmem>>, vector<1280x256xbf16>
    %cst_20 = arith.constant dense<0.000000e+00> : vector<16x256xf32>
    %24 = tpu.matmul %22, %23, %cst_20 {dimension_numbers = #tpu.dot_dimension_numbers<[1], [0], [0], [1], [0, 0, 1, 1], [], []>} : vector<16x1280xbf16>, vector<1280x256xbf16>, vector<16x256xf32> -> vector<16x256xf32>
    %c0_21 = arith.constant 0 : index
    %c0_22 = arith.constant 0 : index
    %25 = vector.load %arg5[%c0_21, %c0_22] : memref<1x256xf32, #tpu.memory_space<vmem>>, vector<1x256xf32>
    %26 = vector.broadcast %25 : vector<1x256xf32> to vector<16x256xf32>
    %27 = arith.addf %24, %26 : vector<16x256xf32>
    %cst_23 = arith.constant 0.000000e+00 : f32
    %28 = vector.broadcast %cst_23 : f32 to vector<16x256xf32>
    %29 = arith.maximumf %27, %28 : vector<16x256xf32>
    %30 = vector.shape_cast %29 : vector<16x256xf32> to vector<1x16x256xf32>
    %31 = arith.truncf %30 : vector<1x16x256xf32> to vector<1x16x256xbf16>
    %c0_24 = arith.constant 0 : index
    %c2_25 = arith.constant 2 : index
    %c0_26 = arith.constant 0 : index
    %32 = vector.load %arg34[%c0_24, %c2_25, %c0_26] : memref<1x20x256xbf16, #tpu.memory_space<vmem>>, vector<1x16x256xbf16>
    tpu.vector_store %arg34[%c0_24, %c2_25, %c0_26], %31 {strides = array<i32>} : memref<1x20x256xbf16, #tpu.memory_space<vmem>>, vector<1x16x256xbf16>,
    %c0_27 = arith.constant 0 : index
    %c0_28 = arith.constant 0 : index
    %c0_29 = arith.constant 0 : index
    %33 = vector.load %arg34[%c0_27, %c0_28, %c0_29] : memref<1x20x256xbf16, #tpu.memory_space<vmem>>, vector<1x20x256xbf16>
    %34 = vector.extract_strided_slice %33 {offsets = [0, 0, 0], sizes = [1, 16, 256], strides = [1, 1, 1]} : vector<1x20x256xbf16> to vector<1x16x256xbf16>
    %35 = vector.extract_strided_slice %33 {offsets = [0, 1, 0], sizes = [1, 16, 256], strides = [1, 1, 1]} : vector<1x20x256xbf16> to vector<1x16x256xbf16>
    %36 = vector.extract_strided_slice %33 {offsets = [0, 2, 0], sizes = [1, 16, 256], strides = [1, 1, 1]} : vector<1x20x256xbf16> to vector<1x16x256xbf16>
    %37 = vector.extract_strided_slice %33 {offsets = [0, 3, 0], sizes = [1, 16, 256], strides = [1, 1, 1]} : vector<1x20x256xbf16> to vector<1x16x256xbf16>
    %38 = vector.extract_strided_slice %33 {offsets = [0, 4, 0], sizes = [1, 16, 256], strides = [1, 1, 1]} : vector<1x20x256xbf16> to vector<1x16x256xbf16>
    %39 = tpu.concatenate %34, %35, %36, %37, %38 in 2 : vector<1x16x256xbf16>, vector<1x16x256xbf16>, vector<1x16x256xbf16>, vector<1x16x256xbf16>, vector<1x16x256xbf16> -> vector<1x16x1280xbf16>
    %40 = vector.shape_cast %39 : vector<1x16x1280xbf16> to vector<16x1280xbf16>
    %c0_30 = arith.constant 0 : index
    %c0_31 = arith.constant 0 : index
    %41 = vector.load %arg6[%c0_30, %c0_31] : memref<1280x256xbf16, #tpu.memory_space<vmem>>, vector<1280x256xbf16>
    %cst_32 = arith.constant dense<0.000000e+00> : vector<16x256xf32>
    %42 = tpu.matmul %40, %41, %cst_32 {dimension_numbers = #tpu.dot_dimension_numbers<[1], [0], [0], [1], [0, 0, 1, 1], [], []>} : vector<16x1280xbf16>, vector<1280x256xbf16>, vector<16x256xf32> -> vector<16x256xf32>
    %c0_33 = arith.constant 0 : index
    %c0_34 = arith.constant 0 : index
    %43 = vector.load %arg7[%c0_33, %c0_34] : memref<1x256xf32, #tpu.memory_space<vmem>>, vector<1x256xf32>
    %44 = vector.broadcast %43 : vector<1x256xf32> to vector<16x256xf32>
    %45 = arith.addf %42, %44 : vector<16x256xf32>
    %cst_35 = arith.constant 0.000000e+00 : f32
    %46 = vector.broadcast %cst_35 : f32 to vector<16x256xf32>
    %47 = arith.maximumf %45, %46 : vector<16x256xf32>
    %48 = vector.shape_cast %47 : vector<16x256xf32> to vector<1x16x256xf32>
    %49 = arith.truncf %48 : vector<1x16x256xf32> to vector<1x16x256xbf16>
    %c0_36 = arith.constant 0 : index
    %c2_37 = arith.constant 2 : index
    %c0_38 = arith.constant 0 : index
    %50 = vector.load %arg34[%c0_36, %c2_37, %c0_38] : memref<1x20x256xbf16, #tpu.memory_space<vmem>>, vector<1x16x256xbf16>
    tpu.vector_store %arg34[%c0_36, %c2_37, %c0_38], %49 {strides = array<i32>} : memref<1x20x256xbf16, #tpu.memory_space<vmem>>, vector<1x16x256xbf16>,
    %c0_39 = arith.constant 0 : index
    %c0_40 = arith.constant 0 : index
    %c0_41 = arith.constant 0 : index
    %51 = vector.load %arg34[%c0_39, %c0_40, %c0_41] : memref<1x20x256xbf16, #tpu.memory_space<vmem>>, vector<1x20x256xbf16>
    %52 = vector.extract_strided_slice %51 {offsets = [0, 0, 0], sizes = [1, 16, 256], strides = [1, 1, 1]} : vector<1x20x256xbf16> to vector<1x16x256xbf16>
    %53 = vector.extract_strided_slice %51 {offsets = [0, 1, 0], sizes = [1, 16, 256], strides = [1, 1, 1]} : vector<1x20x256xbf16> to vector<1x16x256xbf16>
    %54 = vector.extract_strided_slice %51 {offsets = [0, 2, 0], sizes = [1, 16, 256], strides = [1, 1, 1]} : vector<1x20x256xbf16> to vector<1x16x256xbf16>
    %55 = vector.extract_strided_slice %51 {offsets = [0, 3, 0], sizes = [1, 16, 256], strides = [1, 1, 1]} : vector<1x20x256xbf16> to vector<1x16x256xbf16>
    %56 = vector.extract_strided_slice %51 {offsets = [0, 4, 0], sizes = [1, 16, 256], strides = [1, 1, 1]} : vector<1x20x256xbf16> to vector<1x16x256xbf16>
    %57 = tpu.concatenate %52, %53, %54, %55, %56 in 2 : vector<1x16x256xbf16>, vector<1x16x256xbf16>, vector<1x16x256xbf16>, vector<1x16x256xbf16>, vector<1x16x256xbf16> -> vector<1x16x1280xbf16>
    %58 = vector.shape_cast %57 : vector<1x16x1280xbf16> to vector<16x1280xbf16>
    %c0_42 = arith.constant 0 : index
    %c0_43 = arith.constant 0 : index
    %59 = vector.load %arg8[%c0_42, %c0_43] : memref<1280x256xbf16, #tpu.memory_space<vmem>>, vector<1280x256xbf16>
    %cst_44 = arith.constant dense<0.000000e+00> : vector<16x256xf32>
    %60 = tpu.matmul %58, %59, %cst_44 {dimension_numbers = #tpu.dot_dimension_numbers<[1], [0], [0], [1], [0, 0, 1, 1], [], []>} : vector<16x1280xbf16>, vector<1280x256xbf16>, vector<16x256xf32> -> vector<16x256xf32>
    %c0_45 = arith.constant 0 : index
    %c0_46 = arith.constant 0 : index
    %61 = vector.load %arg9[%c0_45, %c0_46] : memref<1x256xf32, #tpu.memory_space<vmem>>, vector<1x256xf32>
    %62 = vector.broadcast %61 : vector<1x256xf32> to vector<16x256xf32>
    %63 = arith.addf %60, %62 : vector<16x256xf32>
    %cst_47 = arith.constant 0.000000e+00 : f32
    %64 = vector.broadcast %cst_47 : f32 to vector<16x256xf32>
    %65 = arith.maximumf %63, %64 : vector<16x256xf32>
    %c0_48 = arith.constant 0 : index
    %c0_49 = arith.constant 0 : index
    %66 = vector.load %arg10[%c0_48, %c0_49] : memref<160x256xbf16, #tpu.memory_space<vmem>>, vector<160x256xbf16>
    %cst_50 = arith.constant dense<0.000000e+00> : vector<16x256xf32>
    %67 = tpu.matmul %4, %66, %cst_50 {dimension_numbers = #tpu.dot_dimension_numbers<[1], [0], [0], [1], [0, 0, 1, 1], [], []>} : vector<16x160xbf16>, vector<160x256xbf16>, vector<16x256xf32> -> vector<16x256xf32>
    %c0_51 = arith.constant 0 : index
    %c0_52 = arith.constant 0 : index
    %68 = vector.load %arg11[%c0_51, %c0_52] : memref<1x256xf32, #tpu.memory_space<vmem>>, vector<1x256xf32>
    %69 = vector.broadcast %68 : vector<1x256xf32> to vector<16x256xf32>
    %70 = arith.addf %67, %69 : vector<16x256xf32>
    %cst_53 = arith.constant 0.000000e+00 : f32
    %71 = vector.broadcast %cst_53 : f32 to vector<16x256xf32>
    %72 = arith.maximumf %70, %71 : vector<16x256xf32>
    %73 = vector.shape_cast %72 : vector<16x256xf32> to vector<1x16x256xf32>
    %74 = arith.truncf %73 : vector<1x16x256xf32> to vector<1x16x256xbf16>
    %c0_54 = arith.constant 0 : index
    %c2_55 = arith.constant 2 : index
    %c0_56 = arith.constant 0 : index
    %75 = vector.load %arg34[%c0_54, %c2_55, %c0_56] : memref<1x20x256xbf16, #tpu.memory_space<vmem>>, vector<1x16x256xbf16>
    tpu.vector_store %arg34[%c0_54, %c2_55, %c0_56], %74 {strides = array<i32>} : memref<1x20x256xbf16, #tpu.memory_space<vmem>>, vector<1x16x256xbf16>,
    %c0_57 = arith.constant 0 : index
    %c0_58 = arith.constant 0 : index
    %c0_59 = arith.constant 0 : index
    %76 = vector.load %arg34[%c0_57, %c0_58, %c0_59] : memref<1x20x256xbf16, #tpu.memory_space<vmem>>, vector<1x20x256xbf16>
    %77 = vector.extract_strided_slice %76 {offsets = [0, 1, 0], sizes = [1, 16, 256], strides = [1, 1, 1]} : vector<1x20x256xbf16> to vector<1x16x256xbf16>
    %78 = vector.extract_strided_slice %76 {offsets = [0, 2, 0], sizes = [1, 16, 256], strides = [1, 1, 1]} : vector<1x20x256xbf16> to vector<1x16x256xbf16>
    %79 = vector.extract_strided_slice %76 {offsets = [0, 3, 0], sizes = [1, 16, 256], strides = [1, 1, 1]} : vector<1x20x256xbf16> to vector<1x16x256xbf16>
    %80 = tpu.concatenate %77, %78, %79 in 2 : vector<1x16x256xbf16>, vector<1x16x256xbf16>, vector<1x16x256xbf16> -> vector<1x16x768xbf16>
    %81 = vector.shape_cast %80 : vector<1x16x768xbf16> to vector<16x768xbf16>
    %c0_60 = arith.constant 0 : index
    %c0_61 = arith.constant 0 : index
    %82 = vector.load %arg12[%c0_60, %c0_61] : memref<768x256xbf16, #tpu.memory_space<vmem>>, vector<768x256xbf16>
    %cst_62 = arith.constant dense<0.000000e+00> : vector<16x256xf32>
    %83 = tpu.matmul %81, %82, %cst_62 {dimension_numbers = #tpu.dot_dimension_numbers<[1], [0], [0], [1], [0, 0, 1, 1], [], []>} : vector<16x768xbf16>, vector<768x256xbf16>, vector<16x256xf32> -> vector<16x256xf32>
    %c0_63 = arith.constant 0 : index
    %c0_64 = arith.constant 0 : index
    %84 = vector.load %arg13[%c0_63, %c0_64] : memref<1x256xf32, #tpu.memory_space<vmem>>, vector<1x256xf32>
    %85 = vector.broadcast %84 : vector<1x256xf32> to vector<16x256xf32>
    %86 = arith.addf %83, %85 : vector<16x256xf32>
    %cst_65 = arith.constant 0.000000e+00 : f32
    %87 = vector.broadcast %cst_65 : f32 to vector<16x256xf32>
    %88 = arith.maximumf %86, %87 : vector<16x256xf32>
    %89 = vector.shape_cast %88 : vector<16x256xf32> to vector<1x16x256xf32>
    %90 = arith.truncf %89 : vector<1x16x256xf32> to vector<1x16x256xbf16>
    %c0_66 = arith.constant 0 : index
    %c2_67 = arith.constant 2 : index
    %c0_68 = arith.constant 0 : index
    %91 = vector.load %arg34[%c0_66, %c2_67, %c0_68] : memref<1x20x256xbf16, #tpu.memory_space<vmem>>, vector<1x16x256xbf16>
    tpu.vector_store %arg34[%c0_66, %c2_67, %c0_68], %90 {strides = array<i32>} : memref<1x20x256xbf16, #tpu.memory_space<vmem>>, vector<1x16x256xbf16>,
    %c0_69 = arith.constant 0 : index
    %c0_70 = arith.constant 0 : index
    %c0_71 = arith.constant 0 : index
    %92 = vector.load %arg34[%c0_69, %c0_70, %c0_71] : memref<1x20x256xbf16, #tpu.memory_space<vmem>>, vector<1x20x256xbf16>
    %93 = vector.extract_strided_slice %92 {offsets = [0, 1, 0], sizes = [1, 16, 256], strides = [1, 1, 1]} : vector<1x20x256xbf16> to vector<1x16x256xbf16>
    %94 = vector.extract_strided_slice %92 {offsets = [0, 2, 0], sizes = [1, 16, 256], strides = [1, 1, 1]} : vector<1x20x256xbf16> to vector<1x16x256xbf16>
    %95 = vector.extract_strided_slice %92 {offsets = [0, 3, 0], sizes = [1, 16, 256], strides = [1, 1, 1]} : vector<1x20x256xbf16> to vector<1x16x256xbf16>
    %96 = tpu.concatenate %93, %94, %95 in 2 : vector<1x16x256xbf16>, vector<1x16x256xbf16>, vector<1x16x256xbf16> -> vector<1x16x768xbf16>
    %97 = vector.shape_cast %96 : vector<1x16x768xbf16> to vector<16x768xbf16>
    %c0_72 = arith.constant 0 : index
    %c0_73 = arith.constant 0 : index
    %98 = vector.load %arg14[%c0_72, %c0_73] : memref<768x256xbf16, #tpu.memory_space<vmem>>, vector<768x256xbf16>
    %cst_74 = arith.constant dense<0.000000e+00> : vector<16x256xf32>
    %99 = tpu.matmul %97, %98, %cst_74 {dimension_numbers = #tpu.dot_dimension_numbers<[1], [0], [0], [1], [0, 0, 1, 1], [], []>} : vector<16x768xbf16>, vector<768x256xbf16>, vector<16x256xf32> -> vector<16x256xf32>
    %c0_75 = arith.constant 0 : index
    %c0_76 = arith.constant 0 : index
    %100 = vector.load %arg15[%c0_75, %c0_76] : memref<1x256xf32, #tpu.memory_space<vmem>>, vector<1x256xf32>
    %101 = vector.broadcast %100 : vector<1x256xf32> to vector<16x256xf32>
    %102 = arith.addf %99, %101 : vector<16x256xf32>
    %cst_77 = arith.constant 0.000000e+00 : f32
    %103 = vector.broadcast %cst_77 : f32 to vector<16x256xf32>
    %104 = arith.maximumf %102, %103 : vector<16x256xf32>
    %105 = vector.shape_cast %104 : vector<16x256xf32> to vector<1x16x256xf32>
    %106 = arith.truncf %105 : vector<1x16x256xf32> to vector<1x16x256xbf16>
    %c0_78 = arith.constant 0 : index
    %c2_79 = arith.constant 2 : index
    %c0_80 = arith.constant 0 : index
    %107 = vector.load %arg34[%c0_78, %c2_79, %c0_80] : memref<1x20x256xbf16, #tpu.memory_space<vmem>>, vector<1x16x256xbf16>
    tpu.vector_store %arg34[%c0_78, %c2_79, %c0_80], %106 {strides = array<i32>} : memref<1x20x256xbf16, #tpu.memory_space<vmem>>, vector<1x16x256xbf16>,
    %c0_81 = arith.constant 0 : index
    %c0_82 = arith.constant 0 : index
    %c0_83 = arith.constant 0 : index
    %108 = vector.load %arg34[%c0_81, %c0_82, %c0_83] : memref<1x20x256xbf16, #tpu.memory_space<vmem>>, vector<1x20x256xbf16>
    %109 = vector.extract_strided_slice %108 {offsets = [0, 1, 0], sizes = [1, 16, 256], strides = [1, 1, 1]} : vector<1x20x256xbf16> to vector<1x16x256xbf16>
    %110 = vector.extract_strided_slice %108 {offsets = [0, 2, 0], sizes = [1, 16, 256], strides = [1, 1, 1]} : vector<1x20x256xbf16> to vector<1x16x256xbf16>
    %111 = vector.extract_strided_slice %108 {offsets = [0, 3, 0], sizes = [1, 16, 256], strides = [1, 1, 1]} : vector<1x20x256xbf16> to vector<1x16x256xbf16>
    %112 = tpu.concatenate %109, %110, %111 in 2 : vector<1x16x256xbf16>, vector<1x16x256xbf16>, vector<1x16x256xbf16> -> vector<1x16x768xbf16>
    %113 = vector.shape_cast %112 : vector<1x16x768xbf16> to vector<16x768xbf16>
    %c0_84 = arith.constant 0 : index
    %c0_85 = arith.constant 0 : index
    %114 = vector.load %arg16[%c0_84, %c0_85] : memref<768x256xbf16, #tpu.memory_space<vmem>>, vector<768x256xbf16>
    %cst_86 = arith.constant dense<0.000000e+00> : vector<16x256xf32>
    %115 = tpu.matmul %113, %114, %cst_86 {dimension_numbers = #tpu.dot_dimension_numbers<[1], [0], [0], [1], [0, 0, 1, 1], [], []>} : vector<16x768xbf16>, vector<768x256xbf16>, vector<16x256xf32> -> vector<16x256xf32>
    %c0_87 = arith.constant 0 : index
    %c0_88 = arith.constant 0 : index
    %116 = vector.load %arg17[%c0_87, %c0_88] : memref<1x256xf32, #tpu.memory_space<vmem>>, vector<1x256xf32>
    %117 = vector.broadcast %116 : vector<1x256xf32> to vector<16x256xf32>
    %118 = arith.addf %115, %117 : vector<16x256xf32>
    %cst_89 = arith.constant 0.000000e+00 : f32
    %119 = vector.broadcast %cst_89 : f32 to vector<16x256xf32>
    %120 = arith.maximumf %118, %119 : vector<16x256xf32>
    %121 = vector.shape_cast %120 : vector<16x256xf32> to vector<1x16x256xf32>
    %122 = arith.truncf %121 : vector<1x16x256xf32> to vector<1x16x256xbf16>
    %c0_90 = arith.constant 0 : index
    %c2_91 = arith.constant 2 : index
    %c0_92 = arith.constant 0 : index
    %123 = vector.load %arg34[%c0_90, %c2_91, %c0_92] : memref<1x20x256xbf16, #tpu.memory_space<vmem>>, vector<1x16x256xbf16>
    tpu.vector_store %arg34[%c0_90, %c2_91, %c0_92], %122 {strides = array<i32>} : memref<1x20x256xbf16, #tpu.memory_space<vmem>>, vector<1x16x256xbf16>,
    %c0_93 = arith.constant 0 : index
    %c0_94 = arith.constant 0 : index
    %c0_95 = arith.constant 0 : index
    %124 = vector.load %arg34[%c0_93, %c0_94, %c0_95] : memref<1x20x256xbf16, #tpu.memory_space<vmem>>, vector<1x20x256xbf16>
    %125 = vector.extract_strided_slice %124 {offsets = [0, 1, 0], sizes = [1, 16, 256], strides = [1, 1, 1]} : vector<1x20x256xbf16> to vector<1x16x256xbf16>
    %126 = vector.extract_strided_slice %124 {offsets = [0, 2, 0], sizes = [1, 16, 256], strides = [1, 1, 1]} : vector<1x20x256xbf16> to vector<1x16x256xbf16>
    %127 = vector.extract_strided_slice %124 {offsets = [0, 3, 0], sizes = [1, 16, 256], strides = [1, 1, 1]} : vector<1x20x256xbf16> to vector<1x16x256xbf16>
    %128 = tpu.concatenate %125, %126, %127 in 2 : vector<1x16x256xbf16>, vector<1x16x256xbf16>, vector<1x16x256xbf16> -> vector<1x16x768xbf16>
    %129 = vector.shape_cast %128 : vector<1x16x768xbf16> to vector<16x768xbf16>
    %c0_96 = arith.constant 0 : index
    %c0_97 = arith.constant 0 : index
    %130 = vector.load %arg18[%c0_96, %c0_97] : memref<768x256xbf16, #tpu.memory_space<vmem>>, vector<768x256xbf16>
    %cst_98 = arith.constant dense<0.000000e+00> : vector<16x256xf32>
    %131 = tpu.matmul %129, %130, %cst_98 {dimension_numbers = #tpu.dot_dimension_numbers<[1], [0], [0], [1], [0, 0, 1, 1], [], []>} : vector<16x768xbf16>, vector<768x256xbf16>, vector<16x256xf32> -> vector<16x256xf32>
    %c0_99 = arith.constant 0 : index
    %c0_100 = arith.constant 0 : index
    %132 = vector.load %arg19[%c0_99, %c0_100] : memref<1x256xf32, #tpu.memory_space<vmem>>, vector<1x256xf32>
    %133 = vector.broadcast %132 : vector<1x256xf32> to vector<16x256xf32>
    %134 = arith.addf %131, %133 : vector<16x256xf32>
    %cst_101 = arith.constant 0.000000e+00 : f32
    %135 = vector.broadcast %cst_101 : f32 to vector<16x256xf32>
    %136 = arith.maximumf %134, %135 : vector<16x256xf32>
    %137 = arith.truncf %65 : vector<16x256xf32> to vector<16x256xbf16>
    %138 = arith.truncf %136 : vector<16x256xf32> to vector<16x256xbf16>
    %c0_102 = arith.constant 0 : index
    %c0_103 = arith.constant 0 : index
    %139 = vector.load %arg20[%c0_102, %c0_103] : memref<256x256xbf16, #tpu.memory_space<vmem>>, vector<256x256xbf16>
    %cst_104 = arith.constant dense<0.000000e+00> : vector<16x256xf32>
    %140 = tpu.matmul %138, %139, %cst_104 {dimension_numbers = #tpu.dot_dimension_numbers<[1], [0], [0], [1], [0, 0, 1, 1], [], []>} : vector<16x256xbf16>, vector<256x256xbf16>, vector<16x256xf32> -> vector<16x256xf32>
    %cst_105 = arith.constant 0.000000e+00 : f32
    %141 = vector.broadcast %cst_105 : f32 to vector<16x256xf32>
    %142 = arith.maximumf %140, %141 : vector<16x256xf32>
    %143 = arith.truncf %142 : vector<16x256xf32> to vector<16x256xbf16>
    %cst_106 = arith.constant dense<0.000000e+00> : vector<16x16xf32>
    %144 = tpu.matmul %137, %143, %cst_106 {dimension_numbers = #tpu.dot_dimension_numbers<[1], [1], [0], [0], [0, 0, 1, 0], [], []>} : vector<16x256xbf16>, vector<16x256xbf16>, vector<16x16xf32> -> vector<16x16xf32>
    %cst_107 = arith.constant 0.000000e+00 : f32
    %145 = vector.broadcast %cst_107 : f32 to vector<16x16xf32>
    %146 = arith.maximumf %144, %145 : vector<16x16xf32>
    %cst_108 = arith.constant dense<0xFF800000> : vector<16xf32>
    %147 = vector.multi_reduction <maximumf>, %146, %cst_108 [0] : vector<16x16xf32> to vector<16xf32>
    %148 = vector.shape_cast %147 : vector<16xf32> to vector<1x16xf32>
    %149 = vector.broadcast %148 : vector<1x16xf32> to vector<16x16xf32>
    %150 = arith.subf %146, %149 : vector<16x16xf32>
    %151 = math.exp %150 : vector<16x16xf32>
    %cst_109 = arith.constant dense<0.000000e+00> : vector<16xf32>
    %152 = vector.multi_reduction <add>, %151, %cst_109 [0] : vector<16x16xf32> to vector<16xf32>
    %153 = vector.shape_cast %152 : vector<16xf32> to vector<1x16xf32>
    %154 = vector.broadcast %153 : vector<1x16xf32> to vector<16x16xf32>
    %155 = arith.divf %151, %154 : vector<16x16xf32>
    %156 = arith.truncf %155 : vector<16x16xf32> to vector<16x16xbf16>
    %cst_110 = arith.constant dense<0.000000e+00> : vector<16x256xf32>
    %157 = tpu.matmul %156, %138, %cst_110 {dimension_numbers = #tpu.dot_dimension_numbers<[1], [0], [0], [1], [0, 0, 1, 1], [], []>} : vector<16x16xbf16>, vector<16x256xbf16>, vector<16x256xf32> -> vector<16x256xf32>
    %158 = arith.truncf %157 : vector<16x256xf32> to vector<16x256xbf16>
    %c0_111 = arith.constant 0 : index
    %c0_112 = arith.constant 0 : index
    %159 = vector.load %arg21[%c0_111, %c0_112] : memref<256x128xbf16, #tpu.memory_space<vmem>>, vector<256x128xbf16>
    %cst_113 = arith.constant dense<0.000000e+00> : vector<16x128xf32>
    %160 = tpu.matmul %137, %159, %cst_113 {dimension_numbers = #tpu.dot_dimension_numbers<[1], [0], [0], [1], [0, 0, 1, 1], [], []>} : vector<16x256xbf16>, vector<256x128xbf16>, vector<16x128xf32> -> vector<16x128xf32>
    %c0_114 = arith.constant 0 : index
    %c0_115 = arith.constant 0 : index
    %161 = vector.load %arg22[%c0_114, %c0_115] : memref<256x128xbf16, #tpu.memory_space<vmem>>, vector<256x128xbf16>
    %cst_116 = arith.constant dense<0.000000e+00> : vector<16x128xf32>
    %162 = tpu.matmul %158, %161, %cst_116 {dimension_numbers = #tpu.dot_dimension_numbers<[1], [0], [0], [1], [0, 0, 1, 1], [], []>} : vector<16x256xbf16>, vector<256x128xbf16>, vector<16x128xf32> -> vector<16x128xf32>
    %163 = arith.addf %160, %162 : vector<16x128xf32>
    %c0_117 = arith.constant 0 : index
    %c0_118 = arith.constant 0 : index
    %164 = vector.load %arg23[%c0_117, %c0_118] : memref<1x128xf32, #tpu.memory_space<vmem>>, vector<1x128xf32>
    %165 = vector.broadcast %164 : vector<1x128xf32> to vector<16x128xf32>
    %166 = arith.addf %163, %165 : vector<16x128xf32>
    %cst_119 = arith.constant dense<0xFF800000> : vector<16xf32>
    %167 = vector.multi_reduction <maximumf>, %166, %cst_119 [1] : vector<16x128xf32> to vector<16xf32>
    %168 = vector.shape_cast %167 : vector<16xf32> to vector<16x1xf32>
    %169 = vector.broadcast %168 : vector<16x1xf32> to vector<16x128xf32>
    %170 = arith.subf %166, %169 : vector<16x128xf32>
    %171 = math.exp %170 : vector<16x128xf32>
    %cst_120 = arith.constant dense<0.000000e+00> : vector<16xf32>
    %172 = vector.multi_reduction <add>, %171, %cst_120 [1] : vector<16x128xf32> to vector<16xf32>
    %173 = vector.shape_cast %172 : vector<16xf32> to vector<16x1xf32>
    %174 = math.log %173 : vector<16x1xf32>
    %175 = arith.addf %174, %168 : vector<16x1xf32>
    %176 = tpu.iota {dimensions = array<i32: 1>} : vector<16x128xi32>
    %c0_121 = arith.constant 0 : index
    %c0_122 = arith.constant 0 : index
    %177 = vector.load %arg26[%c0_121, %c0_122] : memref<16x1xi32, #tpu.memory_space<vmem>>, vector<16x1xi32>
    %178 = vector.broadcast %177 : vector<16x1xi32> to vector<16x128xi32>
    %179 = arith.cmpi eq, %176, %178 : vector<16x128xi32>
    %cst_123 = arith.constant 0.000000e+00 : f32
    %180 = vector.broadcast %cst_123 : f32 to vector<16x128xf32>
    %181 = arith.select %179, %166, %180 : vector<16x128xi1>, vector<16x128xf32>
    %cst_124 = arith.constant dense<0.000000e+00> : vector<16xf32>
    %182 = vector.multi_reduction <add>, %181, %cst_124 [1] : vector<16x128xf32> to vector<16xf32>
    %183 = vector.shape_cast %182 : vector<16xf32> to vector<16x1xf32>
    %184 = arith.subf %175, %183 : vector<16x1xf32>
    %c0_125 = arith.constant 0 : index
    %c0_126 = arith.constant 0 : index
    %185 = vector.load %arg27[%c0_125, %c0_126] : memref<16x1xf32, #tpu.memory_space<vmem>>, vector<16x1xf32>
    %186 = arith.mulf %184, %185 : vector<16x1xf32>
    %187 = vector.shape_cast %186 : vector<16x1xf32> to vector<1x16x1xf32>
    %cst_127 = arith.constant dense<0.000000e+00> : vector<1xf32>
    %188 = vector.multi_reduction <add>, %187, %cst_127 [1, 2] : vector<1x16x1xf32> to vector<1xf32>
    %189 = vector.shape_cast %188 : vector<1xf32> to vector<1x1x1xf32>
    %190 = vector.extract %189[0, 0, 0] : f32 from vector<1x1x1xf32>
    %191 = vector.broadcast %190 : f32 to vector<1x1xf32>
    %192 = vector.shape_cast %185 : vector<16x1xf32> to vector<1x16x1xf32>
    %cst_128 = arith.constant dense<0.000000e+00> : vector<1xf32>
    %193 = vector.multi_reduction <add>, %192, %cst_128 [1, 2] : vector<1x16x1xf32> to vector<1xf32>
    %194 = vector.shape_cast %193 : vector<1xf32> to vector<1x1x1xf32>
    %195 = vector.extract %194[0, 0, 0] : f32 from vector<1x1x1xf32>
    %196 = vector.broadcast %195 : f32 to vector<1x1xf32>
    %197 = vector.shape_cast %191 : vector<1x1xf32> to vector<1x1x1xf32>
    %198 = vector.shape_cast %197 : vector<1x1x1xf32> to vector<1x1x1xf32>
    %199 = vector.broadcast %198 : vector<1x1x1xf32> to vector<1x1x128xf32>
    %c0_129 = arith.constant 0 : index
    %c0_130 = arith.constant 0 : index
    %c0_131 = arith.constant 0 : index
    %200 = vector.load %arg30[%c0_129, %c0_130, %c0_131] : memref<1x1x128xf32, #tpu.memory_space<vmem>>, vector<1x1x128xf32>
    tpu.vector_store %arg30[%c0_129, %c0_130, %c0_131], %199 {strides = array<i32>} : memref<1x1x128xf32, #tpu.memory_space<vmem>>, vector<1x1x128xf32>,
    %201 = vector.shape_cast %196 : vector<1x1xf32> to vector<1x1x1xf32>
    %202 = vector.shape_cast %201 : vector<1x1x1xf32> to vector<1x1x1xf32>
    %203 = vector.broadcast %202 : vector<1x1x1xf32> to vector<1x1x128xf32>
    %c0_132 = arith.constant 0 : index
    %c0_133 = arith.constant 0 : index
    %c0_134 = arith.constant 0 : index
    %204 = vector.load %arg31[%c0_132, %c0_133, %c0_134] : memref<1x1x128xf32, #tpu.memory_space<vmem>>, vector<1x1x128xf32>
    tpu.vector_store %arg31[%c0_132, %c0_133, %c0_134], %203 {strides = array<i32>} : memref<1x1x128xf32, #tpu.memory_space<vmem>>, vector<1x1x128xf32>,
    %c0_135 = arith.constant 0 : index
    %c0_136 = arith.constant 0 : index
    %205 = vector.load %arg24[%c0_135, %c0_136] : memref<256x128xbf16, #tpu.memory_space<vmem>>, vector<256x128xbf16>
    %cst_137 = arith.constant dense<0.000000e+00> : vector<16x128xf32>
    %206 = tpu.matmul %138, %205, %cst_137 {dimension_numbers = #tpu.dot_dimension_numbers<[1], [0], [0], [1], [0, 0, 1, 1], [], []>} : vector<16x256xbf16>, vector<256x128xbf16>, vector<16x128xf32> -> vector<16x128xf32>
    %c0_138 = arith.constant 0 : index
    %c0_139 = arith.constant 0 : index
    %207 = vector.load %arg25[%c0_138, %c0_139] : memref<1x128xf32, #tpu.memory_space<vmem>>, vector<1x128xf32>
    %208 = vector.broadcast %207 : vector<1x128xf32> to vector<16x128xf32>
    %209 = arith.addf %206, %208 : vector<16x128xf32>
    %cst_140 = arith.constant dense<0xFF800000> : vector<16xf32>
    %210 = vector.multi_reduction <maximumf>, %209, %cst_140 [1] : vector<16x128xf32> to vector<16xf32>
    %211 = vector.shape_cast %210 : vector<16xf32> to vector<16x1xf32>
    %212 = vector.broadcast %211 : vector<16x1xf32> to vector<16x128xf32>
    %213 = arith.subf %209, %212 : vector<16x128xf32>
    %214 = math.exp %213 : vector<16x128xf32>
    %cst_141 = arith.constant dense<0.000000e+00> : vector<16xf32>
    %215 = vector.multi_reduction <add>, %214, %cst_141 [1] : vector<16x128xf32> to vector<16xf32>
    %216 = vector.shape_cast %215 : vector<16xf32> to vector<16x1xf32>
    %217 = math.log %216 : vector<16x1xf32>
    %218 = arith.addf %217, %211 : vector<16x1xf32>
    %219 = tpu.iota {dimensions = array<i32: 1>} : vector<16x128xi32>
    %c0_142 = arith.constant 0 : index
    %c0_143 = arith.constant 0 : index
    %220 = vector.load %arg28[%c0_142, %c0_143] : memref<16x1xi32, #tpu.memory_space<vmem>>, vector<16x1xi32>
    %221 = vector.broadcast %220 : vector<16x1xi32> to vector<16x128xi32>
    %222 = arith.cmpi eq, %219, %221 : vector<16x128xi32>
    %cst_144 = arith.constant 0.000000e+00 : f32
    %223 = vector.broadcast %cst_144 : f32 to vector<16x128xf32>
    %224 = arith.select %222, %209, %223 : vector<16x128xi1>, vector<16x128xf32>
    %cst_145 = arith.constant dense<0.000000e+00> : vector<16xf32>
    %225 = vector.multi_reduction <add>, %224, %cst_145 [1] : vector<16x128xf32> to vector<16xf32>
    %226 = vector.shape_cast %225 : vector<16xf32> to vector<16x1xf32>
    %227 = arith.subf %218, %226 : vector<16x1xf32>
    %c0_146 = arith.constant 0 : index
    %c0_147 = arith.constant 0 : index
    %228 = vector.load %arg29[%c0_146, %c0_147] : memref<16x1xf32, #tpu.memory_space<vmem>>, vector<16x1xf32>
    %229 = arith.mulf %227, %228 : vector<16x1xf32>
    %230 = vector.shape_cast %229 : vector<16x1xf32> to vector<1x16x1xf32>
    %cst_148 = arith.constant dense<0.000000e+00> : vector<1xf32>
    %231 = vector.multi_reduction <add>, %230, %cst_148 [1, 2] : vector<1x16x1xf32> to vector<1xf32>
    %232 = vector.shape_cast %231 : vector<1xf32> to vector<1x1x1xf32>
    %233 = vector.extract %232[0, 0, 0] : f32 from vector<1x1x1xf32>
    %234 = vector.broadcast %233 : f32 to vector<1x1xf32>
    %235 = vector.shape_cast %228 : vector<16x1xf32> to vector<1x16x1xf32>
    %cst_149 = arith.constant dense<0.000000e+00> : vector<1xf32>
    %236 = vector.multi_reduction <add>, %235, %cst_149 [1, 2] : vector<1x16x1xf32> to vector<1xf32>
    %237 = vector.shape_cast %236 : vector<1xf32> to vector<1x1x1xf32>
    %238 = vector.extract %237[0, 0, 0] : f32 from vector<1x1x1xf32>
    %239 = vector.broadcast %238 : f32 to vector<1x1xf32>
    %240 = vector.shape_cast %234 : vector<1x1xf32> to vector<1x1x1xf32>
    %241 = vector.shape_cast %240 : vector<1x1x1xf32> to vector<1x1x1xf32>
    %242 = vector.broadcast %241 : vector<1x1x1xf32> to vector<1x1x128xf32>
    %c0_150 = arith.constant 0 : index
    %c0_151 = arith.constant 0 : index
    %c0_152 = arith.constant 0 : index
    %243 = vector.load %arg32[%c0_150, %c0_151, %c0_152] : memref<1x1x128xf32, #tpu.memory_space<vmem>>, vector<1x1x128xf32>
    tpu.vector_store %arg32[%c0_150, %c0_151, %c0_152], %242 {strides = array<i32>} : memref<1x1x128xf32, #tpu.memory_space<vmem>>, vector<1x1x128xf32>,
    %244 = vector.shape_cast %239 : vector<1x1xf32> to vector<1x1x1xf32>
    %245 = vector.shape_cast %244 : vector<1x1x1xf32> to vector<1x1x1xf32>
    %246 = vector.broadcast %245 : vector<1x1x1xf32> to vector<1x1x128xf32>
    %c0_153 = arith.constant 0 : index
    %c0_154 = arith.constant 0 : index
    %c0_155 = arith.constant 0 : index
    %247 = vector.load %arg33[%c0_153, %c0_154, %c0_155] : memref<1x1x128xf32, #tpu.memory_space<vmem>>, vector<1x1x128xf32>
    tpu.vector_store %arg33[%c0_153, %c0_154, %c0_155], %246 {strides = array<i32>} : memref<1x1x128xf32, #tpu.memory_space<vmem>>, vector<1x1x128xf32>,
    return
  }
  func.func @transform_0(%arg0: i32) -> (i32, i32, i32) {
    %c0_i32 = arith.constant 0 : i32
    %c0_i32_0 = arith.constant 0 : i32
    %c0_i32_1 = arith.constant 0 : i32
    return %arg0, %c0_i32, %c0_i32_0 : i32, i32, i32
  }
  func.func @transform_1(%arg0: i32) -> (i32, i32) {
    %c0_i32 = arith.constant 0 : i32
    %c0_i32_0 = arith.constant 0 : i32
    %c0_i32_1 = arith.constant 0 : i32
    return %c0_i32, %c0_i32_0 : i32, i32
  }
  func.func @transform_2(%arg0: i32) -> (i32, i32) {
    %c0_i32 = arith.constant 0 : i32
    %c0_i32_0 = arith.constant 0 : i32
    %c0_i32_1 = arith.constant 0 : i32
    return %c0_i32, %c0_i32_0 : i32, i32
  }
  func.func @transform_3(%arg0: i32) -> (i32, i32) {
    %c0_i32 = arith.constant 0 : i32
    %c0_i32_0 = arith.constant 0 : i32
    %c0_i32_1 = arith.constant 0 : i32
    return %c0_i32, %c0_i32_0 : i32, i32
  }
  func.func @transform_4(%arg0: i32) -> (i32, i32) {
    %c0_i32 = arith.constant 0 : i32
    %c0_i32_0 = arith.constant 0 : i32
    %c0_i32_1 = arith.constant 0 : i32
    return %c0_i32, %c0_i32_0 : i32, i32
  }
  func.func @transform_5(%arg0: i32) -> (i32, i32) {
    %c0_i32 = arith.constant 0 : i32
    %c0_i32_0 = arith.constant 0 : i32
    %c0_i32_1 = arith.constant 0 : i32
    return %c0_i32, %c0_i32_0 : i32, i32
  }
  func.func @transform_6(%arg0: i32) -> (i32, i32) {
    %c0_i32 = arith.constant 0 : i32
    %c0_i32_0 = arith.constant 0 : i32
    %c0_i32_1 = arith.constant 0 : i32
    return %c0_i32, %c0_i32_0 : i32, i32
  }
  func.func @transform_7(%arg0: i32) -> (i32, i32) {
    %c0_i32 = arith.constant 0 : i32
    %c0_i32_0 = arith.constant 0 : i32
    %c0_i32_1 = arith.constant 0 : i32
    return %c0_i32, %c0_i32_0 : i32, i32
  }
  func.func @transform_8(%arg0: i32) -> (i32, i32) {
    %c0_i32 = arith.constant 0 : i32
    %c0_i32_0 = arith.constant 0 : i32
    %c0_i32_1 = arith.constant 0 : i32
    return %c0_i32, %c0_i32_0 : i32, i32
  }
  func.func @transform_9(%arg0: i32) -> (i32, i32) {
    %c0_i32 = arith.constant 0 : i32
    %c0_i32_0 = arith.constant 0 : i32
    %c0_i32_1 = arith.constant 0 : i32
    return %c0_i32, %c0_i32_0 : i32, i32
  }
  func.func @transform_10(%arg0: i32) -> (i32, i32) {
    %c0_i32 = arith.constant 0 : i32
    %c0_i32_0 = arith.constant 0 : i32
    %c0_i32_1 = arith.constant 0 : i32
    return %c0_i32, %c0_i32_0 : i32, i32
  }
  func.func @transform_11(%arg0: i32) -> (i32, i32) {
    %c0_i32 = arith.constant 0 : i32
    %c0_i32_0 = arith.constant 0 : i32
    %c0_i32_1 = arith.constant 0 : i32
    return %c0_i32, %c0_i32_0 : i32, i32
  }
  func.func @transform_12(%arg0: i32) -> (i32, i32) {
    %c0_i32 = arith.constant 0 : i32
    %c0_i32_0 = arith.constant 0 : i32
    %c0_i32_1 = arith.constant 0 : i32
    return %c0_i32, %c0_i32_0 : i32, i32
  }
  func.func @transform_13(%arg0: i32) -> (i32, i32) {
    %c0_i32 = arith.constant 0 : i32
    %c0_i32_0 = arith.constant 0 : i32
    %c0_i32_1 = arith.constant 0 : i32
    return %c0_i32, %c0_i32_0 : i32, i32
  }
  func.func @transform_14(%arg0: i32) -> (i32, i32) {
    %c0_i32 = arith.constant 0 : i32
    %c0_i32_0 = arith.constant 0 : i32
    %c0_i32_1 = arith.constant 0 : i32
    return %c0_i32, %c0_i32_0 : i32, i32
  }
  func.func @transform_15(%arg0: i32) -> (i32, i32) {
    %c0_i32 = arith.constant 0 : i32
    %c0_i32_0 = arith.constant 0 : i32
    %c0_i32_1 = arith.constant 0 : i32
    return %c0_i32, %c0_i32_0 : i32, i32
  }
  func.func @transform_16(%arg0: i32) -> (i32, i32) {
    %c0_i32 = arith.constant 0 : i32
    %c0_i32_0 = arith.constant 0 : i32
    %c0_i32_1 = arith.constant 0 : i32
    return %c0_i32, %c0_i32_0 : i32, i32
  }
  func.func @transform_17(%arg0: i32) -> (i32, i32) {
    %c0_i32 = arith.constant 0 : i32
    %c0_i32_0 = arith.constant 0 : i32
    %c0_i32_1 = arith.constant 0 : i32
    return %c0_i32, %c0_i32_0 : i32, i32
  }
  func.func @transform_18(%arg0: i32) -> (i32, i32) {
    %c0_i32 = arith.constant 0 : i32
    %c0_i32_0 = arith.constant 0 : i32
    %c0_i32_1 = arith.constant 0 : i32
    return %c0_i32, %c0_i32_0 : i32, i32
  }
  func.func @transform_19(%arg0: i32) -> (i32, i32) {
    %c0_i32 = arith.constant 0 : i32
    %c0_i32_0 = arith.constant 0 : i32
    %c0_i32_1 = arith.constant 0 : i32
    return %c0_i32, %c0_i32_0 : i32, i32
  }
  func.func @transform_20(%arg0: i32) -> (i32, i32) {
    %c0_i32 = arith.constant 0 : i32
    %c0_i32_0 = arith.constant 0 : i32
    %c0_i32_1 = arith.constant 0 : i32
    return %c0_i32, %c0_i32_0 : i32, i32
  }
  func.func @transform_21(%arg0: i32) -> (i32, i32) {
    %c0_i32 = arith.constant 0 : i32
    %c0_i32_0 = arith.constant 0 : i32
    %c0_i32_1 = arith.constant 0 : i32
    return %c0_i32, %c0_i32_0 : i32, i32
  }
  func.func @transform_22(%arg0: i32) -> (i32, i32) {
    %c0_i32 = arith.constant 0 : i32
    %c0_i32_0 = arith.constant 0 : i32
    %c0_i32_1 = arith.constant 0 : i32
    return %c0_i32, %c0_i32_0 : i32, i32
  }
  func.func @transform_23(%arg0: i32) -> (i32, i32) {
    %c0_i32 = arith.constant 0 : i32
    %c0_i32_0 = arith.constant 0 : i32
    %c0_i32_1 = arith.constant 0 : i32
    return %c0_i32, %c0_i32_0 : i32, i32
  }
  func.func @transform_24(%arg0: i32) -> (i32, i32) {
    %c0_i32 = arith.constant 0 : i32
    %c0_i32_0 = arith.constant 0 : i32
    %c0_i32_1 = arith.constant 0 : i32
    return %c0_i32, %c0_i32_0 : i32, i32
  }
  func.func @transform_25(%arg0: i32) -> (i32, i32) {
    %c0_i32 = arith.constant 0 : i32
    %c0_i32_0 = arith.constant 0 : i32
    return %arg0, %c0_i32 : i32, i32
  }
  func.func @transform_26(%arg0: i32) -> (i32, i32) {
    %c0_i32 = arith.constant 0 : i32
    %c0_i32_0 = arith.constant 0 : i32
    return %arg0, %c0_i32 : i32, i32
  }
  func.func @transform_27(%arg0: i32) -> (i32, i32) {
    %c0_i32 = arith.constant 0 : i32
    %c0_i32_0 = arith.constant 0 : i32
    return %arg0, %c0_i32 : i32, i32
  }
  func.func @transform_28(%arg0: i32) -> (i32, i32) {
    %c0_i32 = arith.constant 0 : i32
    %c0_i32_0 = arith.constant 0 : i32
    return %arg0, %c0_i32 : i32, i32
  }
  func.func @transform_29(%arg0: i32) -> (i32, i32, i32) {
    %c0_i32 = arith.constant 0 : i32
    %c0_i32_0 = arith.constant 0 : i32
    %c0_i32_1 = arith.constant 0 : i32
    return %arg0, %c0_i32, %c0_i32_0 : i32, i32, i32
  }
  func.func @transform_30(%arg0: i32) -> (i32, i32, i32) {
    %c0_i32 = arith.constant 0 : i32
    %c0_i32_0 = arith.constant 0 : i32
    %c0_i32_1 = arith.constant 0 : i32
    return %arg0, %c0_i32, %c0_i32_0 : i32, i32, i32
  }
  func.func @transform_31(%arg0: i32) -> (i32, i32, i32) {
    %c0_i32 = arith.constant 0 : i32
    %c0_i32_0 = arith.constant 0 : i32
    %c0_i32_1 = arith.constant 0 : i32
    return %arg0, %c0_i32, %c0_i32_0 : i32, i32, i32
  }
  func.func @transform_32(%arg0: i32) -> (i32, i32, i32) {
    %c0_i32 = arith.constant 0 : i32
    %c0_i32_0 = arith.constant 0 : i32
    %c0_i32_1 = arith.constant 0 : i32
    return %arg0, %c0_i32, %c0_i32_0 : i32, i32, i32
  }
}

</mosaic_0001>

<llo_original>
// kernel: forward.1
$region0: #{forward.1}
  #allocation0 [shape = 'u32[]', space=smem, size = 0x4, offset = 0x4, fixed_abs, tag = 'smem constant byte address 0x4 - core index']
  #allocation1 [shape = 'u32[144,128]{1,0:T(1,128)}', space=vmem, size = 0x12000, scoped, tag = 'internal scratch']
  #allocation2 [shape = 'bf16[1,20,256]{2,1,0:T(8,128)(2,1)}', space=vmem, size = 0x3000, scoped, tag = 'scratch operand']
  %s0 = inlined_call_operand.smem [shape: u32[33], index: -1, kind: input, shape index: {}]
  %s1 = sld [smem:[%s0]]
  %s2 = scalar_lea.smem %s0, 1
  %s3 = sld [smem:[%s2]]
  %s4 = scalar_lea.smem %s0, 2
  %s5 = sld [smem:[%s4]]
  %s6 = scalar_lea.smem %s0, 3
  %s7 = sld [smem:[%s6]]
  %s8 = scalar_lea.smem %s0, 4
  %s9 = sld [smem:[%s8]]
  %s10 = scalar_lea.smem %s0, 5
  %s11 = sld [smem:[%s10]]
  %s12 = scalar_lea.smem %s0, 6
  %s13 = sld [smem:[%s12]]
  %s14 = scalar_lea.smem %s0, 7
  %s15 = sld [smem:[%s14]]
  %s16 = scalar_lea.smem %s0, 8
  %s17 = sld [smem:[%s16]]
  %s18 = scalar_lea.smem %s0, 9
  %s19 = sld [smem:[%s18]]
  %s20 = scalar_lea.smem %s0, 10
  %s21 = sld [smem:[%s20]]
  %s22 = scalar_lea.smem %s0, 11
  %s23 = sld [smem:[%s22]]
  %s24 = scalar_lea.smem %s0, 12
  %s25 = sld [smem:[%s24]]
  %s26 = scalar_lea.smem %s0, 13
  %s27 = sld [smem:[%s26]]
  %s28 = scalar_lea.smem %s0, 14
  %s29 = sld [smem:[%s28]]
  %s30 = scalar_lea.smem %s0, 15
  %s31 = sld [smem:[%s30]]
  %s32 = scalar_lea.smem %s0, 16
  %s33 = sld [smem:[%s32]]
  %s34 = scalar_lea.smem %s0, 17
  %s35 = sld [smem:[%s34]]
  %s36 = scalar_lea.smem %s0, 18
  %s37 = sld [smem:[%s36]]
  %s38 = scalar_lea.smem %s0, 19
  %s39 = sld [smem:[%s38]]
  %s40 = scalar_lea.smem %s0, 20
  %s41 = sld [smem:[%s40]]
  %s42 = scalar_lea.smem %s0, 21
  %s43 = sld [smem:[%s42]]
  %s44 = scalar_lea.smem %s0, 22
  %s45 = sld [smem:[%s44]]
  %s46 = scalar_lea.smem %s0, 23
  %s47 = sld [smem:[%s46]]
  %s48 = scalar_lea.smem %s0, 24
  %s49 = sld [smem:[%s48]]
  %s50 = scalar_lea.smem %s0, 25
  %s51 = sld [smem:[%s50]]
  %s52 = scalar_lea.smem %s0, 26
  %s53 = sld [smem:[%s52]]
  %s54 = scalar_lea.smem %s0, 27
  %s55 = sld [smem:[%s54]]
  %s56 = scalar_lea.smem %s0, 28
  %s57 = sld [smem:[%s56]]
  %s58 = scalar_lea.smem %s0, 29
  %s59 = sld [smem:[%s58]]
  %s60 = scalar_lea.smem %s0, 30
  %s61 = sld [smem:[%s60]]
  %s62 = scalar_lea.smem %s0, 31
  %s63 = sld [smem:[%s62]]
  %s64 = scalar_lea.smem %s0, 32
  %s65 = sld [smem:[%s64]]
  %66 = xla_tuple %s59, %s61, %s63, %s65
  %s67 = sld [smem:[#allocation0]]
  $region173: #{forward.1} parent=0
    _
  %s69 = ssub.s32 1, %s67
  %s70 = scalar_select 0, %s69, %s67
  loop: start=0, step=1, limit=4
  $region2: #{forward.1} parent=0 // loop_pre_header
    _
  $region3: #{forward.1} parent=0 // loop_header
    %s72 = sphi 0, %s76
    %p73 = scmp.ge.s32.totalorder %s72, 4
    %s82 = sphi 0, %s84
    %s85 = sphi 0, %s82
    %s86 = sphi 0, %s85
    %s102 = sphi 0, %s86
    %s106 = sphi 0, %s106
    %s108 = sphi 0, %s106
    %s109 = sphi 0, %s108
    %s123 = sphi 0, %s109
    %s127 = sphi 0, %s127
    %s129 = sphi 0, %s127
    %s130 = sphi 0, %s129
    %s144 = sphi 0, %s130
    %s148 = sphi 0, %s148
    %s150 = sphi 0, %s148
    %s151 = sphi 0, %s150
    %s165 = sphi 0, %s151
    %s169 = sphi 0, %s169
    %s171 = sphi 0, %s169
    %s172 = sphi 0, %s171
    %s186 = sphi 0, %s172
    %s190 = sphi 0, %s190
    %s192 = sphi 0, %s190
    %s193 = sphi 0, %s192
    %s207 = sphi 0, %s193
    %s211 = sphi 0, %s211
    %s213 = sphi 0, %s211
    %s214 = sphi 0, %s213
    %s228 = sphi 0, %s214
    %s232 = sphi 0, %s232
    %s234 = sphi 0, %s232
    %s235 = sphi 0, %s234
    %s249 = sphi 0, %s235
    %s253 = sphi 0, %s253
    %s255 = sphi 0, %s253
    %s256 = sphi 0, %s255
    %s270 = sphi 0, %s256
    %s274 = sphi 0, %s274
    %s276 = sphi 0, %s274
    %s277 = sphi 0, %s276
    %s291 = sphi 0, %s277
    %s295 = sphi 0, %s295
    %s297 = sphi 0, %s295
    %s298 = sphi 0, %s297
    %s312 = sphi 0, %s298
    %s316 = sphi 0, %s316
    %s318 = sphi 0, %s316
    %s319 = sphi 0, %s318
    %s333 = sphi 0, %s319
    %s337 = sphi 0, %s337
    %s339 = sphi 0, %s337
    %s340 = sphi 0, %s339
    %s354 = sphi 0, %s340
    %s358 = sphi 0, %s358
    %s360 = sphi 0, %s358
    %s361 = sphi 0, %s360
    %s375 = sphi 0, %s361
    %s379 = sphi 0, %s379
    %s381 = sphi 0, %s379
    %s382 = sphi 0, %s381
    %s396 = sphi 0, %s382
    %s400 = sphi 0, %s400
    %s402 = sphi 0, %s400
    %s403 = sphi 0, %s402
    %s417 = sphi 0, %s403
    %s421 = sphi 0, %s421
    %s423 = sphi 0, %s421
    %s424 = sphi 0, %s423
    %s438 = sphi 0, %s424
    %s442 = sphi 0, %s442
    %s444 = sphi 0, %s442
    %s445 = sphi 0, %s444
    %s459 = sphi 0, %s445
    %s463 = sphi 0, %s463
    %s465 = sphi 0, %s463
    %s466 = sphi 0, %s465
    %s480 = sphi 0, %s466
    %s484 = sphi 0, %s484
    %s486 = sphi 0, %s484
    %s487 = sphi 0, %s486
    %s501 = sphi 0, %s487
    %s505 = sphi 0, %s505
    %s507 = sphi 0, %s505
    %s508 = sphi 0, %s507
    %s522 = sphi 0, %s508
    %s526 = sphi 0, %s526
    %s528 = sphi 0, %s526
    %s529 = sphi 0, %s528
    %s543 = sphi 0, %s529
    %s547 = sphi 0, %s547
    %s549 = sphi 0, %s547
    %s550 = sphi 0, %s549
    %s564 = sphi 0, %s550
    %s568 = sphi 0, %s568
    %s570 = sphi 0, %s568
    %s571 = sphi 0, %s570
    %s585 = sphi 0, %s571
    %s589 = sphi 0, %s589
    %s591 = sphi 0, %s589
    %s592 = sphi 0, %s591
    %s606 = sphi 0, %s592
    %s612 = sphi 0, %s614
    %s615 = sphi 0, %s612
    %s616 = sphi 0, %s615
    %s632 = sphi 0, %s616
    %s638 = sphi 0, %s640
    %s641 = sphi 0, %s638
    %s642 = sphi 0, %s641
    %s658 = sphi 0, %s642
    %s664 = sphi 0, %s666
    %s667 = sphi 0, %s664
    %s668 = sphi 0, %s667
    %s684 = sphi 0, %s668
    %s690 = sphi 0, %s692
    %s693 = sphi 0, %s690
    %s694 = sphi 0, %s693
    %s710 = sphi 0, %s694
    %s716 = sphi 0, %s718
    %s719 = sphi 0, %s716
    %s720 = sphi 0, %s719
    %s736 = sphi 0, %s720
    %s742 = sphi 0, %s744
    %s745 = sphi 0, %s742
    %s746 = sphi 0, %s745
    %s762 = sphi 0, %s746
    %s768 = sphi 0, %s770
    %s771 = sphi 0, %s768
    %s772 = sphi 0, %s771
    %s788 = sphi 0, %s772
    %s794 = sphi 0, %s796
    %s797 = sphi 0, %s794
    %s798 = sphi 0, %s797
    %s814 = sphi 0, %s798
  $region4: #{forward.1} parent=0 // loop_header_branch
    %75 = sbr.rel (%p73) target = $region8
  $region5: #{forward.1} parent=0 // loop_body
    %s77 = ssub.s32 %s72, 1
    %s78 = ssub.s32 %s72, 2
    %s79 = sadd.s32 %s72, 1
    %s80 = ssub.s32 %s72, %s79
    %p81 = scmp.eq.s32.totalorder %s80, 0
    %s83 = sadd.s32 %s82, 1
    %s84 = scalar_select %p81, %s82, %s83
    %p87 = pneg %p81
    %p88 = scmp.eq.s32.totalorder %s72, 1
    %p89 = por %p87, %p88
    %p90 = scmp.ne.s32.totalorder %s82, %s85
    %p91 = scmp.eq.s32.totalorder %s72, 0
    %p92 = por %p90, %p91
    %p93 = scmp.ne.s32.totalorder %s82, %s85
    %p94 = scmp.eq.s32.totalorder %s77, 1
    %p95 = por %p93, %p94
    %p96 = scmp.ne.s32.totalorder %s85, %s86
    %p97 = scmp.eq.s32.totalorder %s77, 0
    %p98 = por %p96, %p97
    %p99 = scmp.ne.s32.totalorder %s85, %s86
    %p100 = scmp.eq.s32.totalorder %s78, 1
    %p101 = por %p99, %p100
    %p103 = scmp.ne.s32.totalorder %s86, %s102
    %p104 = scmp.eq.s32.totalorder %s78, 0
    %p105 = por %p103, %p104
    %s107 = sadd.s32 %s106, 1
    %p110 = scmp.eq.s32.totalorder %s72, 1
    %p111 = scmp.ne.s32.totalorder %s106, %s108
    %p112 = scmp.eq.s32.totalorder %s72, 0
    %p113 = por %p111, %p112
    %p114 = scmp.ne.s32.totalorder %s106, %s108
    %p115 = scmp.eq.s32.totalorder %s77, 1
    %p116 = por %p114, %p115
    %p117 = scmp.ne.s32.totalorder %s108, %s109
    %p118 = scmp.eq.s32.totalorder %s77, 0
    %p119 = por %p117, %p118
    %p120 = scmp.ne.s32.totalorder %s108, %s109
    %p121 = scmp.eq.s32.totalorder %s78, 1
    %p122 = por %p120, %p121
    %p124 = scmp.ne.s32.totalorder %s109, %s123
    %p125 = scmp.eq.s32.totalorder %s78, 0
    %p126 = por %p124, %p125
    %s128 = sadd.s32 %s127, 1
    %p131 = scmp.eq.s32.totalorder %s72, 1
    %p132 = scmp.ne.s32.totalorder %s127, %s129
    %p133 = scmp.eq.s32.totalorder %s72, 0
    %p134 = por %p132, %p133
    %p135 = scmp.ne.s32.totalorder %s127, %s129
    %p136 = scmp.eq.s32.totalorder %s77, 1
    %p137 = por %p135, %p136
    %p138 = scmp.ne.s32.totalorder %s129, %s130
    %p139 = scmp.eq.s32.totalorder %s77, 0
    %p140 = por %p138, %p139
    %p141 = scmp.ne.s32.totalorder %s129, %s130
    %p142 = scmp.eq.s32.totalorder %s78, 1
    %p143 = por %p141, %p142
    %p145 = scmp.ne.s32.totalorder %s130, %s144
    %p146 = scmp.eq.s32.totalorder %s78, 0
    %p147 = por %p145, %p146
    %s149 = sadd.s32 %s148, 1
    %p152 = scmp.eq.s32.totalorder %s72, 1
    %p153 = scmp.ne.s32.totalorder %s148, %s150
    %p154 = scmp.eq.s32.totalorder %s72, 0
    %p155 = por %p153, %p154
    %p156 = scmp.ne.s32.totalorder %s148, %s150
    %p157 = scmp.eq.s32.totalorder %s77, 1
    %p158 = por %p156, %p157
    %p159 = scmp.ne.s32.totalorder %s150, %s151
    %p160 = scmp.eq.s32.totalorder %s77, 0
    %p161 = por %p159, %p160
    %p162 = scmp.ne.s32.totalorder %s150, %s151
    %p163 = scmp.eq.s32.totalorder %s78, 1
    %p164 = por %p162, %p163
    %p166 = scmp.ne.s32.totalorder %s151, %s165
    %p167 = scmp.eq.s32.totalorder %s78, 0
    %p168 = por %p166, %p167
    %s170 = sadd.s32 %s169, 1
    %p173 = scmp.eq.s32.totalorder %s72, 1
    %p174 = scmp.ne.s32.totalorder %s169, %s171
    %p175 = scmp.eq.s32.totalorder %s72, 0
    %p176 = por %p174, %p175
    %p177 = scmp.ne.s32.totalorder %s169, %s171
    %p178 = scmp.eq.s32.totalorder %s77, 1
    %p179 = por %p177, %p178
    %p180 = scmp.ne.s32.totalorder %s171, %s172
    %p181 = scmp.eq.s32.totalorder %s77, 0
    %p182 = por %p180, %p181
    %p183 = scmp.ne.s32.totalorder %s171, %s172
    %p184 = scmp.eq.s32.totalorder %s78, 1
    %p185 = por %p183, %p184
    %p187 = scmp.ne.s32.totalorder %s172, %s186
    %p188 = scmp.eq.s32.totalorder %s78, 0
    %p189 = por %p187, %p188
    %s191 = sadd.s32 %s190, 1
    %p194 = scmp.eq.s32.totalorder %s72, 1
    %p195 = scmp.ne.s32.totalorder %s190, %s192
    %p196 = scmp.eq.s32.totalorder %s72, 0
    %p197 = por %p195, %p196
    %p198 = scmp.ne.s32.totalorder %s190, %s192
    %p199 = scmp.eq.s32.totalorder %s77, 1
    %p200 = por %p198, %p199
    %p201 = scmp.ne.s32.totalorder %s192, %s193
    %p202 = scmp.eq.s32.totalorder %s77, 0
    %p203 = por %p201, %p202
    %p204 = scmp.ne.s32.totalorder %s192, %s193
    %p205 = scmp.eq.s32.totalorder %s78, 1
    %p206 = por %p204, %p205
    %p208 = scmp.ne.s32.totalorder %s193, %s207
    %p209 = scmp.eq.s32.totalorder %s78, 0
    %p210 = por %p208, %p209
    %s212 = sadd.s32 %s211, 1
    %p215 = scmp.eq.s32.totalorder %s72, 1
    %p216 = scmp.ne.s32.totalorder %s211, %s213
    %p217 = scmp.eq.s32.totalorder %s72, 0
    %p218 = por %p216, %p217
    %p219 = scmp.ne.s32.totalorder %s211, %s213
    %p220 = scmp.eq.s32.totalorder %s77, 1
    %p221 = por %p219, %p220
    %p222 = scmp.ne.s32.totalorder %s213, %s214
    %p223 = scmp.eq.s32.totalorder %s77, 0
    %p224 = por %p222, %p223
    %p225 = scmp.ne.s32.totalorder %s213, %s214
    %p226 = scmp.eq.s32.totalorder %s78, 1
    %p227 = por %p225, %p226
    %p229 = scmp.ne.s32.totalorder %s214, %s228
    %p230 = scmp.eq.s32.totalorder %s78, 0
    %p231 = por %p229, %p230
    %s233 = sadd.s32 %s232, 1
    %p236 = scmp.eq.s32.totalorder %s72, 1
    %p237 = scmp.ne.s32.totalorder %s232, %s234
    %p238 = scmp.eq.s32.totalorder %s72, 0
    %p239 = por %p237, %p238
    %p240 = scmp.ne.s32.totalorder %s232, %s234
    %p241 = scmp.eq.s32.totalorder %s77, 1
    %p242 = por %p240, %p241
    %p243 = scmp.ne.s32.totalorder %s234, %s235
    %p244 = scmp.eq.s32.totalorder %s77, 0
    %p245 = por %p243, %p244
    %p246 = scmp.ne.s32.totalorder %s234, %s235
    %p247 = scmp.eq.s32.totalorder %s78, 1
    %p248 = por %p246, %p247
    %p250 = scmp.ne.s32.totalorder %s235, %s249
    %p251 = scmp.eq.s32.totalorder %s78, 0
    %p252 = por %p250, %p251
    %s254 = sadd.s32 %s253, 1
    %p257 = scmp.eq.s32.totalorder %s72, 1
    %p258 = scmp.ne.s32.totalorder %s253, %s255
    %p259 = scmp.eq.s32.totalorder %s72, 0
    %p260 = por %p258, %p259
    %p261 = scmp.ne.s32.totalorder %s253, %s255
    %p262 = scmp.eq.s32.totalorder %s77, 1
    %p263 = por %p261, %p262
    %p264 = scmp.ne.s32.totalorder %s255, %s256
    %p265 = scmp.eq.s32.totalorder %s77, 0
    %p266 = por %p264, %p265
    %p267 = scmp.ne.s32.totalorder %s255, %s256
    %p268 = scmp.eq.s32.totalorder %s78, 1
    %p269 = por %p267, %p268
    %p271 = scmp.ne.s32.totalorder %s256, %s270
    %p272 = scmp.eq.s32.totalorder %s78, 0
    %p273 = por %p271, %p272
    %s275 = sadd.s32 %s274, 1
    %p278 = scmp.eq.s32.totalorder %s72, 1
    %p279 = scmp.ne.s32.totalorder %s274, %s276
    %p280 = scmp.eq.s32.totalorder %s72, 0
    %p281 = por %p279, %p280
    %p282 = scmp.ne.s32.totalorder %s274, %s276
    %p283 = scmp.eq.s32.totalorder %s77, 1
    %p284 = por %p282, %p283
    %p285 = scmp.ne.s32.totalorder %s276, %s277
    %p286 = scmp.eq.s32.totalorder %s77, 0
    %p287 = por %p285, %p286
    %p288 = scmp.ne.s32.totalorder %s276, %s277
    %p289 = scmp.eq.s32.totalorder %s78, 1
    %p290 = por %p288, %p289
    %p292 = scmp.ne.s32.totalorder %s277, %s291
    %p293 = scmp.eq.s32.totalorder %s78, 0
    %p294 = por %p292, %p293
    %s296 = sadd.s32 %s295, 1
    %p299 = scmp.eq.s32.totalorder %s72, 1
    %p300 = scmp.ne.s32.totalorder %s295, %s297
    %p301 = scmp.eq.s32.totalorder %s72, 0
    %p302 = por %p300, %p301
    %p303 = scmp.ne.s32.totalorder %s295, %s297
    %p304 = scmp.eq.s32.totalorder %s77, 1
    %p305 = por %p303, %p304
    %p306 = scmp.ne.s32.totalorder %s297, %s298
    %p307 = scmp.eq.s32.totalorder %s77, 0
    %p308 = por %p306, %p307
    %p309 = scmp.ne.s32.totalorder %s297, %s298
    %p310 = scmp.eq.s32.totalorder %s78, 1
    %p311 = por %p309, %p310
    %p313 = scmp.ne.s32.totalorder %s298, %s312
    %p314 = scmp.eq.s32.totalorder %s78, 0
    %p315 = por %p313, %p314
    %s317 = sadd.s32 %s316, 1
    %p320 = scmp.eq.s32.totalorder %s72, 1
    %p321 = scmp.ne.s32.totalorder %s316, %s318
    %p322 = scmp.eq.s32.totalorder %s72, 0
    %p323 = por %p321, %p322
    %p324 = scmp.ne.s32.totalorder %s316, %s318
    %p325 = scmp.eq.s32.totalorder %s77, 1
    %p326 = por %p324, %p325
    %p327 = scmp.ne.s32.totalorder %s318, %s319
    %p328 = scmp.eq.s32.totalorder %s77, 0
    %p329 = por %p327, %p328
    %p330 = scmp.ne.s32.totalorder %s318, %s319
    %p331 = scmp.eq.s32.totalorder %s78, 1
    %p332 = por %p330, %p331
    %p334 = scmp.ne.s32.totalorder %s319, %s333
    %p335 = scmp.eq.s32.totalorder %s78, 0
    %p336 = por %p334, %p335
    %s338 = sadd.s32 %s337, 1
    %p341 = scmp.eq.s32.totalorder %s72, 1
    %p342 = scmp.ne.s32.totalorder %s337, %s339
    %p343 = scmp.eq.s32.totalorder %s72, 0
    %p344 = por %p342, %p343
    %p345 = scmp.ne.s32.totalorder %s337, %s339
    %p346 = scmp.eq.s32.totalorder %s77, 1
    %p347 = por %p345, %p346
    %p348 = scmp.ne.s32.totalorder %s339, %s340
    %p349 = scmp.eq.s32.totalorder %s77, 0
    %p350 = por %p348, %p349
    %p351 = scmp.ne.s32.totalorder %s339, %s340
    %p352 = scmp.eq.s32.totalorder %s78, 1
    %p353 = por %p351, %p352
    %p355 = scmp.ne.s32.totalorder %s340, %s354
    %p356 = scmp.eq.s32.totalorder %s78, 0
    %p357 = por %p355, %p356
    %s359 = sadd.s32 %s358, 1
    %p362 = scmp.eq.s32.totalorder %s72, 1
    %p363 = scmp.ne.s32.totalorder %s358, %s360
    %p364 = scmp.eq.s32.totalorder %s72, 0
    %p365 = por %p363, %p364
    %p366 = scmp.ne.s32.totalorder %s358, %s360
    %p367 = scmp.eq.s32.totalorder %s77, 1
    %p368 = por %p366, %p367
    %p369 = scmp.ne.s32.totalorder %s360, %s361
    %p370 = scmp.eq.s32.totalorder %s77, 0
    %p371 = por %p369, %p370
    %p372 = scmp.ne.s32.totalorder %s360, %s361
    %p373 = scmp.eq.s32.totalorder %s78, 1
    %p374 = por %p372, %p373
    %p376 = scmp.ne.s32.totalorder %s361, %s375
    %p377 = scmp.eq.s32.totalorder %s78, 0
    %p378 = por %p376, %p377
    %s380 = sadd.s32 %s379, 1
    %p383 = scmp.eq.s32.totalorder %s72, 1
    %p384 = scmp.ne.s32.totalorder %s379, %s381
    %p385 = scmp.eq.s32.totalorder %s72, 0
    %p386 = por %p384, %p385
    %p387 = scmp.ne.s32.totalorder %s379, %s381
    %p388 = scmp.eq.s32.totalorder %s77, 1
    %p389 = por %p387, %p388
    %p390 = scmp.ne.s32.totalorder %s381, %s382
    %p391 = scmp.eq.s32.totalorder %s77, 0
    %p392 = por %p390, %p391
    %p393 = scmp.ne.s32.totalorder %s381, %s382
    %p394 = scmp.eq.s32.totalorder %s78, 1
    %p395 = por %p393, %p394
    %p397 = scmp.ne.s32.totalorder %s382, %s396
    %p398 = scmp.eq.s32.totalorder %s78, 0
    %p399 = por %p397, %p398
    %s401 = sadd.s32 %s400, 1
    %p404 = scmp.eq.s32.totalorder %s72, 1
    %p405 = scmp.ne.s32.totalorder %s400, %s402
    %p406 = scmp.eq.s32.totalorder %s72, 0
    %p407 = por %p405, %p406
    %p408 = scmp.ne.s32.totalorder %s400, %s402
    %p409 = scmp.eq.s32.totalorder %s77, 1
    %p410 = por %p408, %p409
    %p411 = scmp.ne.s32.totalorder %s402, %s403
    %p412 = scmp.eq.s32.totalorder %s77, 0
    %p413 = por %p411, %p412
    %p414 = scmp.ne.s32.totalorder %s402, %s403
    %p415 = scmp.eq.s32.totalorder %s78, 1
    %p416 = por %p414, %p415
    %p418 = scmp.ne.s32.totalorder %s403, %s417
    %p419 = scmp.eq.s32.totalorder %s78, 0
    %p420 = por %p418, %p419
    %s422 = sadd.s32 %s421, 1
    %p425 = scmp.eq.s32.totalorder %s72, 1
    %p426 = scmp.ne.s32.totalorder %s421, %s423
    %p427 = scmp.eq.s32.totalorder %s72, 0
    %p428 = por %p426, %p427
    %p429 = scmp.ne.s32.totalorder %s421, %s423
    %p430 = scmp.eq.s32.totalorder %s77, 1
    %p431 = por %p429, %p430
    %p432 = scmp.ne.s32.totalorder %s423, %s424
    %p433 = scmp.eq.s32.totalorder %s77, 0
    %p434 = por %p432, %p433
    %p435 = scmp.ne.s32.totalorder %s423, %s424
    %p436 = scmp.eq.s32.totalorder %s78, 1
    %p437 = por %p435, %p436
    %p439 = scmp.ne.s32.totalorder %s424, %s438
    %p440 = scmp.eq.s32.totalorder %s78, 0
    %p441 = por %p439, %p440
    %s443 = sadd.s32 %s442, 1
    %p446 = scmp.eq.s32.totalorder %s72, 1
    %p447 = scmp.ne.s32.totalorder %s442, %s444
    %p448 = scmp.eq.s32.totalorder %s72, 0
    %p449 = por %p447, %p448
    %p450 = scmp.ne.s32.totalorder %s442, %s444
    %p451 = scmp.eq.s32.totalorder %s77, 1
    %p452 = por %p450, %p451
    %p453 = scmp.ne.s32.totalorder %s444, %s445
    %p454 = scmp.eq.s32.totalorder %s77, 0
    %p455 = por %p453, %p454
    %p456 = scmp.ne.s32.totalorder %s444, %s445
    %p457 = scmp.eq.s32.totalorder %s78, 1
    %p458 = por %p456, %p457
    %p460 = scmp.ne.s32.totalorder %s445, %s459
    %p461 = scmp.eq.s32.totalorder %s78, 0
    %p462 = por %p460, %p461
    %s464 = sadd.s32 %s463, 1
    %p467 = scmp.eq.s32.totalorder %s72, 1
    %p468 = scmp.ne.s32.totalorder %s463, %s465
    %p469 = scmp.eq.s32.totalorder %s72, 0
    %p470 = por %p468, %p469
    %p471 = scmp.ne.s32.totalorder %s463, %s465
    %p472 = scmp.eq.s32.totalorder %s77, 1
    %p473 = por %p471, %p472
    %p474 = scmp.ne.s32.totalorder %s465, %s466
    %p475 = scmp.eq.s32.totalorder %s77, 0
    %p476 = por %p474, %p475
    %p477 = scmp.ne.s32.totalorder %s465, %s466
    %p478 = scmp.eq.s32.totalorder %s78, 1
    %p479 = por %p477, %p478
    %p481 = scmp.ne.s32.totalorder %s466, %s480
    %p482 = scmp.eq.s32.totalorder %s78, 0
    %p483 = por %p481, %p482
    %s485 = sadd.s32 %s484, 1
    %p488 = scmp.eq.s32.totalorder %s72, 1
    %p489 = scmp.ne.s32.totalorder %s484, %s486
    %p490 = scmp.eq.s32.totalorder %s72, 0
    %p491 = por %p489, %p490
    %p492 = scmp.ne.s32.totalorder %s484, %s486
    %p493 = scmp.eq.s32.totalorder %s77, 1
    %p494 = por %p492, %p493
    %p495 = scmp.ne.s32.totalorder %s486, %s487
    %p496 = scmp.eq.s32.totalorder %s77, 0
    %p497 = por %p495, %p496
    %p498 = scmp.ne.s32.totalorder %s486, %s487
    %p499 = scmp.eq.s32.totalorder %s78, 1
    %p500 = por %p498, %p499
    %p502 = scmp.ne.s32.totalorder %s487, %s501
    %p503 = scmp.eq.s32.totalorder %s78, 0
    %p504 = por %p502, %p503
    %s506 = sadd.s32 %s505, 1
    %p509 = scmp.eq.s32.totalorder %s72, 1
    %p510 = scmp.ne.s32.totalorder %s505, %s507
    %p511 = scmp.eq.s32.totalorder %s72, 0
    %p512 = por %p510, %p511
    %p513 = scmp.ne.s32.totalorder %s505, %s507
    %p514 = scmp.eq.s32.totalorder %s77, 1
    %p515 = por %p513, %p514
    %p516 = scmp.ne.s32.totalorder %s507, %s508
    %p517 = scmp.eq.s32.totalorder %s77, 0
    %p518 = por %p516, %p517
    %p519 = scmp.ne.s32.totalorder %s507, %s508
    %p520 = scmp.eq.s32.totalorder %s78, 1
    %p521 = por %p519, %p520
    %p523 = scmp.ne.s32.totalorder %s508, %s522
    %p524 = scmp.eq.s32.totalorder %s78, 0
    %p525 = por %p523, %p524
    %s527 = sadd.s32 %s526, 1
    %p530 = scmp.eq.s32.totalorder %s72, 1
    %p531 = scmp.ne.s32.totalorder %s526, %s528
    %p532 = scmp.eq.s32.totalorder %s72, 0
    %p533 = por %p531, %p532
    %p534 = scmp.ne.s32.totalorder %s526, %s528
    %p535 = scmp.eq.s32.totalorder %s77, 1
    %p536 = por %p534, %p535
    %p537 = scmp.ne.s32.totalorder %s528, %s529
    %p538 = scmp.eq.s32.totalorder %s77, 0
    %p539 = por %p537, %p538
    %p540 = scmp.ne.s32.totalorder %s528, %s529
    %p541 = scmp.eq.s32.totalorder %s78, 1
    %p542 = por %p540, %p541
    %p544 = scmp.ne.s32.totalorder %s529, %s543
    %p545 = scmp.eq.s32.totalorder %s78, 0
    %p546 = por %p544, %p545
    %s548 = sadd.s32 %s547, 1
    %p551 = scmp.eq.s32.totalorder %s72, 1
    %p552 = scmp.ne.s32.totalorder %s547, %s549
    %p553 = scmp.eq.s32.totalorder %s72, 0
    %p554 = por %p552, %p553
    %p555 = scmp.ne.s32.totalorder %s547, %s549
    %p556 = scmp.eq.s32.totalorder %s77, 1
    %p557 = por %p555, %p556
    %p558 = scmp.ne.s32.totalorder %s549, %s550
    %p559 = scmp.eq.s32.totalorder %s77, 0
    %p560 = por %p558, %p559
    %p561 = scmp.ne.s32.totalorder %s549, %s550
    %p562 = scmp.eq.s32.totalorder %s78, 1
    %p563 = por %p561, %p562
    %p565 = scmp.ne.s32.totalorder %s550, %s564
    %p566 = scmp.eq.s32.totalorder %s78, 0
    %p567 = por %p565, %p566
    %s569 = sadd.s32 %s568, 1
    %p572 = scmp.eq.s32.totalorder %s72, 1
    %p573 = scmp.ne.s32.totalorder %s568, %s570
    %p574 = scmp.eq.s32.totalorder %s72, 0
    %p575 = por %p573, %p574
    %p576 = scmp.ne.s32.totalorder %s568, %s570
    %p577 = scmp.eq.s32.totalorder %s77, 1
    %p578 = por %p576, %p577
    %p579 = scmp.ne.s32.totalorder %s570, %s571
    %p580 = scmp.eq.s32.totalorder %s77, 0
    %p581 = por %p579, %p580
    %p582 = scmp.ne.s32.totalorder %s570, %s571
    %p583 = scmp.eq.s32.totalorder %s78, 1
    %p584 = por %p582, %p583
    %p586 = scmp.ne.s32.totalorder %s571, %s585
    %p587 = scmp.eq.s32.totalorder %s78, 0
    %p588 = por %p586, %p587
    %s590 = sadd.s32 %s589, 1
    %p593 = scmp.eq.s32.totalorder %s72, 1
    %p594 = scmp.ne.s32.totalorder %s589, %s591
    %p595 = scmp.eq.s32.totalorder %s72, 0
    %p596 = por %p594, %p595
    %p597 = scmp.ne.s32.totalorder %s589, %s591
    %p598 = scmp.eq.s32.totalorder %s77, 1
    %p599 = por %p597, %p598
    %p600 = scmp.ne.s32.totalorder %s591, %s592
    %p601 = scmp.eq.s32.totalorder %s77, 0
    %p602 = por %p600, %p601
    %p603 = scmp.ne.s32.totalorder %s591, %s592
    %p604 = scmp.eq.s32.totalorder %s78, 1
    %p605 = por %p603, %p604
    %p607 = scmp.ne.s32.totalorder %s592, %s606
    %p608 = scmp.eq.s32.totalorder %s78, 0
    %p609 = por %p607, %p608
    %s610 = ssub.s32 %s72, %s79
    %p611 = scmp.eq.s32.totalorder %s610, 0
    %s613 = sadd.s32 %s612, 1
    %s614 = scalar_select %p611, %s612, %s613
    %p617 = pneg %p611
    %p618 = scmp.eq.s32.totalorder %s72, 1
    %p619 = por %p617, %p618
    %p620 = scmp.ne.s32.totalorder %s612, %s615
    %p621 = scmp.eq.s32.totalorder %s72, 0
    %p622 = por %p620, %p621
    %p623 = scmp.ne.s32.totalorder %s612, %s615
    %p624 = scmp.eq.s32.totalorder %s77, 1
    %p625 = por %p623, %p624
    %p626 = scmp.ne.s32.totalorder %s615, %s616
    %p627 = scmp.eq.s32.totalorder %s77, 0
    %p628 = por %p626, %p627
    %p629 = scmp.ne.s32.totalorder %s615, %s616
    %p630 = scmp.eq.s32.totalorder %s78, 1
    %p631 = por %p629, %p630
    %p633 = scmp.ne.s32.totalorder %s616, %s632
    %p634 = scmp.eq.s32.totalorder %s78, 0
    %p635 = por %p633, %p634
    %s636 = ssub.s32 %s72, %s79
    %p637 = scmp.eq.s32.totalorder %s636, 0
    %s639 = sadd.s32 %s638, 1
    %s640 = scalar_select %p637, %s638, %s639
    %p643 = pneg %p637
    %p644 = scmp.eq.s32.totalorder %s72, 1
    %p645 = por %p643, %p644
    %p646 = scmp.ne.s32.totalorder %s638, %s641
    %p647 = scmp.eq.s32.totalorder %s72, 0
    %p648 = por %p646, %p647
    %p649 = scmp.ne.s32.totalorder %s638, %s641
    %p650 = scmp.eq.s32.totalorder %s77, 1
    %p651 = por %p649, %p650
    %p652 = scmp.ne.s32.totalorder %s641, %s642
    %p653 = scmp.eq.s32.totalorder %s77, 0
    %p654 = por %p652, %p653
    %p655 = scmp.ne.s32.totalorder %s641, %s642
    %p656 = scmp.eq.s32.totalorder %s78, 1
    %p657 = por %p655, %p656
    %p659 = scmp.ne.s32.totalorder %s642, %s658
    %p660 = scmp.eq.s32.totalorder %s78, 0
    %p661 = por %p659, %p660
    %s662 = ssub.s32 %s72, %s79
    %p663 = scmp.eq.s32.totalorder %s662, 0
    %s665 = sadd.s32 %s664, 1
    %s666 = scalar_select %p663, %s664, %s665
    %p669 = pneg %p663
    %p670 = scmp.eq.s32.totalorder %s72, 1
    %p671 = por %p669, %p670
    %p672 = scmp.ne.s32.totalorder %s664, %s667
    %p673 = scmp.eq.s32.totalorder %s72, 0
    %p674 = por %p672, %p673
    %p675 = scmp.ne.s32.totalorder %s664, %s667
    %p676 = scmp.eq.s32.totalorder %s77, 1
    %p677 = por %p675, %p676
    %p678 = scmp.ne.s32.totalorder %s667, %s668
    %p679 = scmp.eq.s32.totalorder %s77, 0
    %p680 = por %p678, %p679
    %p681 = scmp.ne.s32.totalorder %s667, %s668
    %p682 = scmp.eq.s32.totalorder %s78, 1
    %p683 = por %p681, %p682
    %p685 = scmp.ne.s32.totalorder %s668, %s684
    %p686 = scmp.eq.s32.totalorder %s78, 0
    %p687 = por %p685, %p686
    %s688 = ssub.s32 %s72, %s79
    %p689 = scmp.eq.s32.totalorder %s688, 0
    %s691 = sadd.s32 %s690, 1
    %s692 = scalar_select %p689, %s690, %s691
    %p695 = pneg %p689
    %p696 = scmp.eq.s32.totalorder %s72, 1
    %p697 = por %p695, %p696
    %p698 = scmp.ne.s32.totalorder %s690, %s693
    %p699 = scmp.eq.s32.totalorder %s72, 0
    %p700 = por %p698, %p699
    %p701 = scmp.ne.s32.totalorder %s690, %s693
    %p702 = scmp.eq.s32.totalorder %s77, 1
    %p703 = por %p701, %p702
    %p704 = scmp.ne.s32.totalorder %s693, %s694
    %p705 = scmp.eq.s32.totalorder %s77, 0
    %p706 = por %p704, %p705
    %p707 = scmp.ne.s32.totalorder %s693, %s694
    %p708 = scmp.eq.s32.totalorder %s78, 1
    %p709 = por %p707, %p708
    %p711 = scmp.ne.s32.totalorder %s694, %s710
    %p712 = scmp.eq.s32.totalorder %s78, 0
    %p713 = por %p711, %p712
    %s714 = ssub.s32 %s72, %s79
    %p715 = scmp.eq.s32.totalorder %s714, 0
    %s717 = sadd.s32 %s716, 1
    %s718 = scalar_select %p715, %s716, %s717
    %p721 = pneg %p715
    %p722 = scmp.eq.s32.totalorder %s72, 1
    %p723 = por %p721, %p722
    %p724 = scmp.ne.s32.totalorder %s716, %s719
    %p725 = scmp.eq.s32.totalorder %s72, 0
    %p726 = por %p724, %p725
    %p727 = scmp.ne.s32.totalorder %s716, %s719
    %p728 = scmp.eq.s32.totalorder %s77, 1
    %p729 = por %p727, %p728
    %p730 = scmp.ne.s32.totalorder %s719, %s720
    %p731 = scmp.eq.s32.totalorder %s77, 0
    %p732 = por %p730, %p731
    %p733 = scmp.ne.s32.totalorder %s719, %s720
    %p734 = scmp.eq.s32.totalorder %s78, 1
    %p735 = por %p733, %p734
    %p737 = scmp.ne.s32.totalorder %s720, %s736
    %p738 = scmp.eq.s32.totalorder %s78, 0
    %p739 = por %p737, %p738
    %s740 = ssub.s32 %s72, %s79
    %p741 = scmp.eq.s32.totalorder %s740, 0
    %s743 = sadd.s32 %s742, 1
    %s744 = scalar_select %p741, %s742, %s743
    %p747 = pneg %p741
    %p748 = scmp.eq.s32.totalorder %s72, 1
    %p749 = por %p747, %p748
    %p750 = scmp.ne.s32.totalorder %s742, %s745
    %p751 = scmp.eq.s32.totalorder %s72, 0
    %p752 = por %p750, %p751
    %p753 = scmp.ne.s32.totalorder %s742, %s745
    %p754 = scmp.eq.s32.totalorder %s77, 1
    %p755 = por %p753, %p754
    %p756 = scmp.ne.s32.totalorder %s745, %s746
    %p757 = scmp.eq.s32.totalorder %s77, 0
    %p758 = por %p756, %p757
    %p759 = scmp.ne.s32.totalorder %s745, %s746
    %p760 = scmp.eq.s32.totalorder %s78, 1
    %p761 = por %p759, %p760
    %p763 = scmp.ne.s32.totalorder %s746, %s762
    %p764 = scmp.eq.s32.totalorder %s78, 0
    %p765 = por %p763, %p764
    %s766 = ssub.s32 %s72, %s79
    %p767 = scmp.eq.s32.totalorder %s766, 0
    %s769 = sadd.s32 %s768, 1
    %s770 = scalar_select %p767, %s768, %s769
    %p773 = pneg %p767
    %p774 = scmp.eq.s32.totalorder %s72, 1
    %p775 = por %p773, %p774
    %p776 = scmp.ne.s32.totalorder %s768, %s771
    %p777 = scmp.eq.s32.totalorder %s72, 0
    %p778 = por %p776, %p777
    %p779 = scmp.ne.s32.totalorder %s768, %s771
    %p780 = scmp.eq.s32.totalorder %s77, 1
    %p781 = por %p779, %p780
    %p782 = scmp.ne.s32.totalorder %s771, %s772
    %p783 = scmp.eq.s32.totalorder %s77, 0
    %p784 = por %p782, %p783
    %p785 = scmp.ne.s32.totalorder %s771, %s772
    %p786 = scmp.eq.s32.totalorder %s78, 1
    %p787 = por %p785, %p786
    %p789 = scmp.ne.s32.totalorder %s772, %s788
    %p790 = scmp.eq.s32.totalorder %s78, 0
    %p791 = por %p789, %p790
    %s792 = ssub.s32 %s72, %s79
    %p793 = scmp.eq.s32.totalorder %s792, 0
    %s795 = sadd.s32 %s794, 1
    %s796 = scalar_select %p793, %s794, %s795
    %p799 = pneg %p793
    %p800 = scmp.eq.s32.totalorder %s72, 1
    %p801 = por %p799, %p800
    %p802 = scmp.ne.s32.totalorder %s794, %s797
    %p803 = scmp.eq.s32.totalorder %s72, 0
    %p804 = por %p802, %p803
    %p805 = scmp.ne.s32.totalorder %s794, %s797
    %p806 = scmp.eq.s32.totalorder %s77, 1
    %p807 = por %p805, %p806
    %p808 = scmp.ne.s32.totalorder %s797, %s798
    %p809 = scmp.eq.s32.totalorder %s77, 0
    %p810 = por %p808, %p809
    %p811 = scmp.ne.s32.totalorder %s797, %s798
    %p812 = scmp.eq.s32.totalorder %s78, 1
    %p813 = por %p811, %p812
    %p815 = scmp.ne.s32.totalorder %s798, %s814
    %p816 = scmp.eq.s32.totalorder %s78, 0
    %p817 = por %p815, %p816
    %p818 = scmp.le.s32.totalorder 1, %s72
    %p819 = scmp.lt.s32.totalorder %s72, 3
    %p820 = pnand %p818, %p819
    %p821 = pneg %p820
    // Predicated region
    $region9: #{forward.1} parent=5 // pred_check
      _
    $region10: #{forward.1} parent=5 // pred_check_branch
      %823 = sbr.rel (%p820) target = $region12
    $region11: #{forward.1} parent=5 // pred_region
      %s824 = ssub.s32 %s72, 1
      // Predicated region
      $region13: #{forward.1} parent=11 // pred_check
        %p825 = pneg %p119
      $region14: #{forward.1} parent=11 // pred_check_branch
        %827 = sbr.rel (%p825) target = $region16
      $region15: #{forward.1} parent=11 // pred_region
        _
      $region16: #{forward.1} parent=11 // pred_fallthru
        _
      // Predicated region
      $region17: #{forward.1} parent=11 // pred_check
        %p828 = pneg %p140
      $region18: #{forward.1} parent=11 // pred_check_branch
        %830 = sbr.rel (%p828) target = $region20
      $region19: #{forward.1} parent=11 // pred_region
        _
      $region20: #{forward.1} parent=11 // pred_fallthru
        _
      // Predicated region
      $region21: #{forward.1} parent=11 // pred_check
        %p831 = pneg %p161
      $region22: #{forward.1} parent=11 // pred_check_branch
        %833 = sbr.rel (%p831) target = $region24
      $region23: #{forward.1} parent=11 // pred_region
        _
      $region24: #{forward.1} parent=11 // pred_fallthru
        _
      // Predicated region
      $region25: #{forward.1} parent=11 // pred_check
        %p834 = pneg %p182
      $region26: #{forward.1} parent=11 // pred_check_branch
        %836 = sbr.rel (%p834) target = $region28
      $region27: #{forward.1} parent=11 // pred_region
        _
      $region28: #{forward.1} parent=11 // pred_fallthru
        _
      // Predicated region
      $region29: #{forward.1} parent=11 // pred_check
        %p837 = pneg %p203
      $region30: #{forward.1} parent=11 // pred_check_branch
        %839 = sbr.rel (%p837) target = $region32
      $region31: #{forward.1} parent=11 // pred_region
        _
      $region32: #{forward.1} parent=11 // pred_fallthru
        _
      // Predicated region
      $region33: #{forward.1} parent=11 // pred_check
        %p840 = pneg %p224
      $region34: #{forward.1} parent=11 // pred_check_branch
        %842 = sbr.rel (%p840) target = $region36
      $region35: #{forward.1} parent=11 // pred_region
        _
      $region36: #{forward.1} parent=11 // pred_fallthru
        _
      // Predicated region
      $region37: #{forward.1} parent=11 // pred_check
        %p843 = pneg %p245
      $region38: #{forward.1} parent=11 // pred_check_branch
        %845 = sbr.rel (%p843) target = $region40
      $region39: #{forward.1} parent=11 // pred_region
        _
      $region40: #{forward.1} parent=11 // pred_fallthru
        _
      // Predicated region
      $region41: #{forward.1} parent=11 // pred_check
        %p846 = pneg %p266
      $region42: #{forward.1} parent=11 // pred_check_branch
        %848 = sbr.rel (%p846) target = $region44
      $region43: #{forward.1} parent=11 // pred_region
        _
      $region44: #{forward.1} parent=11 // pred_fallthru
        _
      // Predicated region
      $region45: #{forward.1} parent=11 // pred_check
        %p849 = pneg %p287
      $region46: #{forward.1} parent=11 // pred_check_branch
        %851 = sbr.rel (%p849) target = $region48
      $region47: #{forward.1} parent=11 // pred_region
        _
      $region48: #{forward.1} parent=11 // pred_fallthru
        _
      // Predicated region
      $region49: #{forward.1} parent=11 // pred_check
        %p852 = pneg %p308
      $region50: #{forward.1} parent=11 // pred_check_branch
        %854 = sbr.rel (%p852) target = $region52
      $region51: #{forward.1} parent=11 // pred_region
        _
      $region52: #{forward.1} parent=11 // pred_fallthru
        _
      // Predicated region
      $region53: #{forward.1} parent=11 // pred_check
        %p855 = pneg %p329
      $region54: #{forward.1} parent=11 // pred_check_branch
        %857 = sbr.rel (%p855) target = $region56
      $region55: #{forward.1} parent=11 // pred_region
        _
      $region56: #{forward.1} parent=11 // pred_fallthru
        _
      // Predicated region
      $region57: #{forward.1} parent=11 // pred_check
        %p858 = pneg %p350
      $region58: #{forward.1} parent=11 // pred_check_branch
        %860 = sbr.rel (%p858) target = $region60
      $region59: #{forward.1} parent=11 // pred_region
        _
      $region60: #{forward.1} parent=11 // pred_fallthru
        _
      // Predicated region
      $region61: #{forward.1} parent=11 // pred_check
        %p861 = pneg %p371
      $region62: #{forward.1} parent=11 // pred_check_branch
        %863 = sbr.rel (%p861) target = $region64
      $region63: #{forward.1} parent=11 // pred_region
        _
      $region64: #{forward.1} parent=11 // pred_fallthru
        _
      // Predicated region
      $region65: #{forward.1} parent=11 // pred_check
        %p864 = pneg %p392
      $region66: #{forward.1} parent=11 // pred_check_branch
        %866 = sbr.rel (%p864) target = $region68
      $region67: #{forward.1} parent=11 // pred_region
        _
      $region68: #{forward.1} parent=11 // pred_fallthru
        _
      // Predicated region
      $region69: #{forward.1} parent=11 // pred_check
        %p867 = pneg %p413
      $region70: #{forward.1} parent=11 // pred_check_branch
        %869 = sbr.rel (%p867) target = $region72
      $region71: #{forward.1} parent=11 // pred_region
        _
      $region72: #{forward.1} parent=11 // pred_fallthru
        _
      // Predicated region
      $region73: #{forward.1} parent=11 // pred_check
        %p870 = pneg %p434
      $region74: #{forward.1} parent=11 // pred_check_branch
        %872 = sbr.rel (%p870) target = $region76
      $region75: #{forward.1} parent=11 // pred_region
        _
      $region76: #{forward.1} parent=11 // pred_fallthru
        _
      // Predicated region
      $region77: #{forward.1} parent=11 // pred_check
        %p873 = pneg %p455
      $region78: #{forward.1} parent=11 // pred_check_branch
        %875 = sbr.rel (%p873) target = $region80
      $region79: #{forward.1} parent=11 // pred_region
        _
      $region80: #{forward.1} parent=11 // pred_fallthru
        _
      // Predicated region
      $region81: #{forward.1} parent=11 // pred_check
        %p876 = pneg %p476
      $region82: #{forward.1} parent=11 // pred_check_branch
        %878 = sbr.rel (%p876) target = $region84
      $region83: #{forward.1} parent=11 // pred_region
        _
      $region84: #{forward.1} parent=11 // pred_fallthru
        _
      // Predicated region
      $region85: #{forward.1} parent=11 // pred_check
        %p879 = pneg %p497
      $region86: #{forward.1} parent=11 // pred_check_branch
        %881 = sbr.rel (%p879) target = $region88
      $region87: #{forward.1} parent=11 // pred_region
        _
      $region88: #{forward.1} parent=11 // pred_fallthru
        _
      // Predicated region
      $region89: #{forward.1} parent=11 // pred_check
        %p882 = pneg %p518
      $region90: #{forward.1} parent=11 // pred_check_branch
        %884 = sbr.rel (%p882) target = $region92
      $region91: #{forward.1} parent=11 // pred_region
        _
      $region92: #{forward.1} parent=11 // pred_fallthru
        _
      // Predicated region
      $region93: #{forward.1} parent=11 // pred_check
        %p885 = pneg %p539
      $region94: #{forward.1} parent=11 // pred_check_branch
        %887 = sbr.rel (%p885) target = $region96
      $region95: #{forward.1} parent=11 // pred_region
        _
      $region96: #{forward.1} parent=11 // pred_fallthru
        _
      // Predicated region
      $region97: #{forward.1} parent=11 // pred_check
        %p888 = pneg %p560
      $region98: #{forward.1} parent=11 // pred_check_branch
        %890 = sbr.rel (%p888) target = $region100
      $region99: #{forward.1} parent=11 // pred_region
        _
      $region100: #{forward.1} parent=11 // pred_fallthru
        _
      // Predicated region
      $region101: #{forward.1} parent=11 // pred_check
        %p891 = pneg %p581
      $region102: #{forward.1} parent=11 // pred_check_branch
        %893 = sbr.rel (%p891) target = $region104
      $region103: #{forward.1} parent=11 // pred_region
        _
      $region104: #{forward.1} parent=11 // pred_fallthru
        _
      // Predicated region
      $region105: #{forward.1} parent=11 // pred_check
        %p894 = pneg %p602
      $region106: #{forward.1} parent=11 // pred_check_branch
        %896 = sbr.rel (%p894) target = $region108
      $region107: #{forward.1} parent=11 // pred_region
        _
      $region108: #{forward.1} parent=11 // pred_fallthru
        _
    $region12: #{forward.1} parent=5 // pred_fallthru
      _
    %p897 = scmp.lt.s32.totalorder %s72, 2
    // Predicated region
    $region109: #{forward.1} parent=5 // pred_check
      %p898 = pneg %p897
    $region110: #{forward.1} parent=5 // pred_check_branch
      %900 = sbr.rel (%p898) target = $region112
    $region111: #{forward.1} parent=5 // pred_region
      // Predicated region
      $region113: #{forward.1} parent=111 // pred_check
        %p901 = pneg %p92
      $region114: #{forward.1} parent=111 // pred_check_branch
        %903 = sbr.rel (%p901) target = $region116
      $region115: #{forward.1} parent=111 // pred_region
        %p904 = scmp.lt.s32.totalorder %s72, 1
        %s905 = scalar_select %p904, %s72, 1
        %s906 = smul.addr %s905, 4
        %s907 = smul.addr %s906, 4
        %s908 = scalar_lea.vmem %s1, %s907
      $region116: #{forward.1} parent=111 // pred_fallthru
        _
      // Predicated region
      $region117: #{forward.1} parent=111 // pred_check
        %p909 = pneg %p622
      $region118: #{forward.1} parent=111 // pred_check_branch
        %911 = sbr.rel (%p909) target = $region120
      $region119: #{forward.1} parent=111 // pred_region
        %s912 = smul.u32 2, %s72
        %p913 = scmp.lt.s32.totalorder %s912, 3
        %s914 = scalar_select %p913, %s912, 3
        %s915 = smul.addr %s914, 8
        %s916 = scalar_lea.vmem %s51, %s915
        %s917 = smul.u32 2, %s72
      $region120: #{forward.1} parent=111 // pred_fallthru
        _
      // Predicated region
      $region121: #{forward.1} parent=111 // pred_check
        %p918 = pneg %p648
      $region122: #{forward.1} parent=111 // pred_check_branch
        %920 = sbr.rel (%p918) target = $region124
      $region123: #{forward.1} parent=111 // pred_region
        %s921 = smul.u32 2, %s72
        %p922 = scmp.lt.s32.totalorder %s921, 3
        %s923 = scalar_select %p922, %s921, 3
        %s924 = smul.addr %s923, 8
        %s925 = scalar_lea.vmem %s53, %s924
        %s926 = smul.u32 2, %s72
      $region124: #{forward.1} parent=111 // pred_fallthru
        _
      // Predicated region
      $region125: #{forward.1} parent=111 // pred_check
        %p927 = pneg %p674
      $region126: #{forward.1} parent=111 // pred_check_branch
        %929 = sbr.rel (%p927) target = $region128
      $region127: #{forward.1} parent=111 // pred_region
        %s930 = smul.u32 2, %s72
        %p931 = scmp.lt.s32.totalorder %s930, 3
        %s932 = scalar_select %p931, %s930, 3
        %s933 = smul.addr %s932, 8
        %s934 = scalar_lea.vmem %s55, %s933
        %s935 = smul.u32 2, %s72
      $region128: #{forward.1} parent=111 // pred_fallthru
        _
      // Predicated region
      $region129: #{forward.1} parent=111 // pred_check
        %p936 = pneg %p700
      $region130: #{forward.1} parent=111 // pred_check_branch
        %938 = sbr.rel (%p936) target = $region132
      $region131: #{forward.1} parent=111 // pred_region
        %s939 = smul.u32 2, %s72
        %p940 = scmp.lt.s32.totalorder %s939, 3
        %s941 = scalar_select %p940, %s939, 3
        %s942 = smul.addr %s941, 8
        %s943 = scalar_lea.vmem %s57, %s942
        %s944 = smul.u32 2, %s72
      $region132: #{forward.1} parent=111 // pred_fallthru
        _
    $region112: #{forward.1} parent=5 // pred_fallthru
      _
    %p945 = scmp.le.s32.totalorder 1, %s72
    %p946 = scmp.lt.s32.totalorder %s72, 3
    %p947 = pnand %p945, %p946
    %p948 = pneg %p947
    // Predicated region
    $region133: #{forward.1} parent=5 // pred_check
      _
    $region134: #{forward.1} parent=5 // pred_check_branch
      %950 = sbr.rel (%p947) target = $region136
    $region135: #{forward.1} parent=5 // pred_region
      %s951 = ssub.s32 %s72, 1
      %p952 = scmp.lt.s32.totalorder %s77, 1
      %s953 = scalar_select %p952, %s77, 1
      %s954 = smul.addr %s953, 4
      %s955 = smul.addr %s954, 4
      %s956 = scalar_lea.vmem %s1, %s955
      %p957 = pneg %p98
      %p958 = pneg %p95
      %p959 = pneg %p119
      %p960 = pneg %p116
      %p961 = pneg %p140
      %p962 = pneg %p137
      %p963 = pneg %p161
      %p964 = pneg %p158
      %p965 = pneg %p182
      %p966 = pneg %p179
      %p967 = pneg %p203
      %p968 = pneg %p200
      %p969 = pneg %p224
      %p970 = pneg %p221
      %p971 = pneg %p245
      %p972 = pneg %p242
      %p973 = pneg %p266
      %p974 = pneg %p263
      %p975 = pneg %p287
      %p976 = pneg %p284
      %p977 = pneg %p308
      %p978 = pneg %p305
      %p979 = pneg %p329
      %p980 = pneg %p326
      %p981 = pneg %p350
      %p982 = pneg %p347
      %p983 = pneg %p371
      %p984 = pneg %p368
      %p985 = pneg %p392
      %p986 = pneg %p389
      %p987 = pneg %p413
      %p988 = pneg %p410
      %p989 = pneg %p434
      %p990 = pneg %p431
      %p991 = pneg %p455
      %p992 = pneg %p452
      %p993 = pneg %p476
      %p994 = pneg %p473
      %p995 = pneg %p497
      %p996 = pneg %p494
      %p997 = pneg %p518
      %p998 = pneg %p515
      %p999 = pneg %p539
      %p1000 = pneg %p536
      %p1001 = pneg %p560
      %p1002 = pneg %p557
      %p1003 = pneg %p581
      %p1004 = pneg %p578
      %p1005 = pneg %p602
      %p1006 = pneg %p599
      %s1007 = smul.u32 2, %s77
      %p1008 = scmp.lt.s32.totalorder %s1007, 3
      %s1009 = scalar_select %p1008, %s1007, 3
      %s1010 = smul.addr %s1009, 8
      %s1011 = scalar_lea.vmem %s51, %s1010
      %p1012 = pneg %p628
      %p1013 = pneg %p625
      %s1014 = smul.u32 2, %s77
      %p1015 = scmp.lt.s32.totalorder %s1014, 3
      %s1016 = scalar_select %p1015, %s1014, 3
      %s1017 = smul.addr %s1016, 8
      %s1018 = scalar_lea.vmem %s53, %s1017
      %p1019 = pneg %p654
      %p1020 = pneg %p651
      %s1021 = smul.u32 2, %s77
      %p1022 = scmp.lt.s32.totalorder %s1021, 3
      %s1023 = scalar_select %p1022, %s1021, 3
      %s1024 = smul.addr %s1023, 8
      %s1025 = scalar_lea.vmem %s55, %s1024
      %p1026 = pneg %p680
      %p1027 = pneg %p677
      %s1028 = smul.u32 2, %s77
      %p1029 = scmp.lt.s32.totalorder %s1028, 3
      %s1030 = scalar_select %p1029, %s1028, 3
      %s1031 = smul.addr %s1030, 8
      %s1032 = scalar_lea.vmem %s57, %s1031
      %p1033 = pneg %p706
      %p1034 = pneg %p703
      %p1035 = pneg %p732
      %p1036 = pneg %p729
      %p1037 = scmp.lt.s32.totalorder %s77, 1
      %s1038 = scalar_select %p1037, %s77, 1
      %s1039 = scalar_lea.vmem %s59, %s1038
      %p1040 = pneg %p758
      %p1041 = pneg %p755
      %p1042 = scmp.lt.s32.totalorder %s77, 1
      %s1043 = scalar_select %p1042, %s77, 1
      %s1044 = scalar_lea.vmem %s61, %s1043
      %p1045 = pneg %p784
      %p1046 = pneg %p781
      %p1047 = scmp.lt.s32.totalorder %s77, 1
      %s1048 = scalar_select %p1047, %s77, 1
      %s1049 = scalar_lea.vmem %s63, %s1048
      %p1050 = pneg %p810
      %p1051 = pneg %p807
      %p1052 = scmp.lt.s32.totalorder %s77, 1
      %s1053 = scalar_select %p1052, %s77, 1
      %s1054 = scalar_lea.vmem %s65, %s1053
      %p1055 = scmp.lt.s32.totalorder %s77, 1
      %s1056 = scalar_select %p1055, %s77, 1
      %s1057 = smul.addr %s1056, 4
      %s1058 = smul.addr %s1057, 4
      %s1059 = scalar_lea.vmem %s1, %s1058
      %s1060 = smul.u32 2, %s77
      %p1061 = scmp.lt.s32.totalorder %s1060, 3
      %s1062 = scalar_select %p1061, %s1060, 3
      %s1063 = smul.addr %s1062, 8
      %s1064 = scalar_lea.vmem %s51, %s1063
      %s1065 = smul.u32 2, %s77
      %s1066 = smul.u32 2, %s77
      %p1067 = scmp.lt.s32.totalorder %s1066, 3
      %s1068 = scalar_select %p1067, %s1066, 3
      %s1069 = smul.addr %s1068, 8
      %s1070 = scalar_lea.vmem %s53, %s1069
      %s1071 = smul.u32 2, %s77
      %s1072 = smul.u32 2, %s77
      %p1073 = scmp.lt.s32.totalorder %s1072, 3
      %s1074 = scalar_select %p1073, %s1072, 3
      %s1075 = smul.addr %s1074, 8
      %s1076 = scalar_lea.vmem %s55, %s1075
      %s1077 = smul.u32 2, %s77
      %s1078 = smul.u32 2, %s77
      %p1079 = scmp.lt.s32.totalorder %s1078, 3
      %s1080 = scalar_select %p1079, %s1078, 3
      %s1081 = smul.addr %s1080, 8
      %s1082 = scalar_lea.vmem %s57, %s1081
      %s1083 = smul.u32 2, %s77
      %p1084 = scmp.lt.s32.totalorder %s77, 1
      %s1085 = scalar_select %p1084, %s77, 1
      %s1086 = scalar_lea.vmem %s59, %s1085
      %p1087 = scmp.lt.s32.totalorder %s77, 1
      %s1088 = scalar_select %p1087, %s77, 1
      %s1089 = scalar_lea.vmem %s61, %s1088
      %p1090 = scmp.lt.s32.totalorder %s77, 1
      %s1091 = scalar_select %p1090, %s77, 1
      %s1092 = scalar_lea.vmem %s63, %s1091
      %p1093 = scmp.lt.s32.totalorder %s77, 1
      %s1094 = scalar_select %p1093, %s77, 1
      %s1095 = scalar_lea.vmem %s65, %s1094
      %1097 = vst [vmem:[#allocation2] sm:$0x11] 0
      %1098 = vst [vmem:[#allocation2 + $0x10] sm:$0x22] 0
      %v1099 = vld [vmem:[%s1059] sm:$0xff]
      %v1100 = vld [vmem:[%s1059 + $0x8] sm:$0xff]
      %v1101 = vld [vmem:[%s3] sm:$0xff]
      %v1102 = vld [vmem:[%s3 + $0x8] sm:$0xff]
      %v1103 = vld [vmem:[%s3 + $0x10] sm:$0xff]
      %v1104 = vld [vmem:[%s3 + $0x18] sm:$0xff]
      %v1105 = vld [vmem:[%s3 + $0x20] sm:$0xff]
      %v1106 = vld [vmem:[%s3 + $0x28] sm:$0xff]
      %v1107 = vld [vmem:[%s3 + $0x30] sm:$0xff]
      %v1108 = vld [vmem:[%s3 + $0x38] sm:$0xff]
      %v1109 = vld [vmem:[%s3 + $0x40] sm:$0xff]
      %v1110 = vld [vmem:[%s3 + $0x48] sm:$0xff]
      %v1111 = vld [vmem:[%s3 + $0x50] sm:$0xff]
      %v1112 = vld [vmem:[%s3 + $0x58] sm:$0xff]
      %v1113 = vld [vmem:[%s3 + $0x60] sm:$0xff]
      %v1114 = vld [vmem:[%s3 + $0x68] sm:$0xff]
      %v1115 = vld [vmem:[%s3 + $0x70] sm:$0xff]
      %v1116 = vld [vmem:[%s3 + $0x78] sm:$0xff]
      %v1117 = vld [vmem:[%s3 + $0x80] sm:$0xff]
      %v1118 = vld [vmem:[%s3 + $0x88] sm:$0xff]
      %v1119 = vld [vmem:[%s3 + $0x90] sm:$0xff]
      %v1120 = vld [vmem:[%s3 + $0x98] sm:$0xff]
      %v1121 = vld [vmem:[%s5] sm:$0x3]
      %v1123 = vlaneseq
      %v1124 = vshrl.u32 %v1123, 7
      %v1125 = vsub.s32 0, %v1124
      %v1126 = vrot.slane %v1121, %v1125
      %v1127 = vlaneseq
      %v1128 = vshrl.u32 %v1127, 7
      %v1129 = vsub.s32 1, %v1128
      %v1130 = vrot.slane %v1121, %v1129
      %v1135 = vunpack.c.l.b16 %v1099
      %v1136 = vunpack.c.h.b16 %v1099
      %v1137 = vunpack.c.l.b16 %v1100
      %v1138 = vunpack.c.h.b16 %v1100
      %v1139 = vpack.c.b16 %v1137, %v1135
      %v1140 = vpack.c.b16 %v1138, %v1136
      %v1162 = vunpack.c.l.b16 %v1101
      %v1163 = vunpack.c.h.b16 %v1101
      %v1164 = vunpack.c.l.b16 %v1102
      %v1165 = vunpack.c.h.b16 %v1102
      %v1166 = vunpack.c.l.b16 %v1103
      %v1167 = vunpack.c.h.b16 %v1103
      %v1168 = vunpack.c.l.b16 %v1104
      %v1169 = vunpack.c.h.b16 %v1104
      %v1170 = vunpack.c.l.b16 %v1105
      %v1171 = vunpack.c.h.b16 %v1105
      %v1172 = vunpack.c.l.b16 %v1106
      %v1173 = vunpack.c.h.b16 %v1106
      %v1174 = vunpack.c.l.b16 %v1107
      %v1175 = vunpack.c.h.b16 %v1107
      %v1176 = vunpack.c.l.b16 %v1108
      %v1177 = vunpack.c.h.b16 %v1108
      %v1178 = vunpack.c.l.b16 %v1109
      %v1179 = vunpack.c.h.b16 %v1109
      %v1180 = vunpack.c.l.b16 %v1110
      %v1181 = vunpack.c.h.b16 %v1110
      %v1182 = vunpack.c.l.b16 %v1111
      %v1183 = vunpack.c.h.b16 %v1111
      %v1184 = vunpack.c.l.b16 %v1112
      %v1185 = vunpack.c.h.b16 %v1112
      %v1186 = vunpack.c.l.b16 %v1113
      %v1187 = vunpack.c.h.b16 %v1113
      %v1188 = vunpack.c.l.b16 %v1114
      %v1189 = vunpack.c.h.b16 %v1114
      %v1190 = vunpack.c.l.b16 %v1115
      %v1191 = vunpack.c.h.b16 %v1115
      %v1192 = vunpack.c.l.b16 %v1116
      %v1193 = vunpack.c.h.b16 %v1116
      %v1194 = vunpack.c.l.b16 %v1117
      %v1195 = vunpack.c.h.b16 %v1117
      %v1196 = vunpack.c.l.b16 %v1118
      %v1197 = vunpack.c.h.b16 %v1118
      %v1198 = vunpack.c.l.b16 %v1119
      %v1199 = vunpack.c.h.b16 %v1119
      %v1200 = vunpack.c.l.b16 %v1120
      %v1201 = vunpack.c.h.b16 %v1120
      %v1202 = vpack.c.b16 %v1164, %v1162
      %v1203 = vpack.c.b16 %v1165, %v1163
      %v1204 = vpack.c.b16 %v1168, %v1166
      %v1205 = vpack.c.b16 %v1169, %v1167
      %v1206 = vpack.c.b16 %v1172, %v1170
      %v1207 = vpack.c.b16 %v1173, %v1171
      %v1208 = vpack.c.b16 %v1176, %v1174
      %v1209 = vpack.c.b16 %v1177, %v1175
      %v1210 = vpack.c.b16 %v1180, %v1178
      %v1211 = vpack.c.b16 %v1181, %v1179
      %v1212 = vpack.c.b16 %v1184, %v1182
      %v1213 = vpack.c.b16 %v1185, %v1183
      %v1214 = vpack.c.b16 %v1188, %v1186
      %v1215 = vpack.c.b16 %v1189, %v1187
      %v1216 = vpack.c.b16 %v1192, %v1190
      %v1217 = vpack.c.b16 %v1193, %v1191
      %v1218 = vpack.c.b16 %v1196, %v1194
      %v1219 = vpack.c.b16 %v1197, %v1195
      %v1220 = vpack.c.b16 %v1200, %v1198
      %v1221 = vpack.c.b16 %v1201, %v1199
      %vm1242 = vcmask 261120
      %v1244 = vsel %vm1242, %v1140, 0
      %1246 = vmatprep.subr.bf16.mxu0 %v1203
      %1247 = vmatpush1.bf16.msra.mxu0 %v1202
      %1248 = vmatprep.subr.bf16.mxu0 %v1205
      %1249 = vmatpush1.bf16.msra.mxu0 %v1204
      %1250 = vmatprep.subr.bf16.mxu0 %v1207
      %1251 = vmatpush1.bf16.msra.mxu0 %v1206
      %1252 = vmatprep.subr.bf16.mxu0 %v1209
      %1253 = vmatpush1.bf16.msra.mxu0 %v1208
      %1254 = vmatprep.subr.bf16.mxu0 %v1211
      %1255 = vmatpush1.bf16.msra.mxu0 %v1210
      %1256 = vmatprep.subr.bf16.mxu0 %v1213
      %1257 = vmatpush1.bf16.msra.mxu0 %v1212
      %1258 = vmatprep.subr.bf16.mxu0 %v1215
      %1259 = vmatpush1.bf16.msra.mxu0 %v1214
      %1260 = vmatprep.subr.bf16.mxu0 %v1217
      %1261 = vmatpush1.bf16.msra.mxu0 %v1216
      %1262 = vmatprep.subr.bf16.mxu0 %v1219
      %1263 = vmatpush1.bf16.msra.mxu0 %v1218
      %1264 = vmatprep.subr.bf16.mxu0 %v1221
      %1265 = vmatpush1.bf16.msra.mxu0 %v1220
      %1266 = vmatprep.subr.bf16.mxu0 0
      %1267 = vmatpush1.bf16.msra.mxu0 0
      %1268 = vmatprep.subr.bf16.mxu0 0
      %1269 = vmatpush1.bf16.msra.mxu0 0
      %1270 = vmatprep.subr.bf16.mxu0 0
      %1271 = vmatpush1.bf16.msra.mxu0 0
      %1272 = vmatprep.subr.bf16.mxu0 0
      %1273 = vmatpush1.bf16.msra.mxu0 0
      %1274 = vmatprep.subr.bf16.mxu0 0
      %1275 = vmatpush1.bf16.msra.mxu0 0
      %1276 = vmatprep.subr.bf16.mxu0 0
      %1277 = vmatpush1.bf16.msra.mxu0 0
      %1278 = vmatprep.mubr.bf16.mxu0 %v1244
      %1279 = vmatmul.mubr.bf16.gmra.mrb[0].mxu0 %v1139
      %v1280 = vpop.f32.mrb[0].mxu0
      %v1281 = vadd.f32 %v1126, %v1280
      %v1282 = vpop.f32.mrb[0].mxu0
      %v1283 = vadd.f32 %v1130, %v1282
      %v1284 = vpop.f32.mrb[0].mxu0
      %v1285 = vadd.f32 %v1126, %v1284
      %v1286 = vpop.f32.mrb[0].mxu0
      %v1287 = vadd.f32 %v1130, %v1286
      %1288 = vdwg.mxu0
      %v1289 = vmax.f32 %v1281, 0.0
      %v1290 = vmax.f32 %v1283, 0.0
      %v1291 = vmax.f32 %v1285, 0.0
      %v1292 = vmax.f32 %v1287, 0.0
      %v1293 = vpack.c.bf16 %v1291, %v1289
      %v1294 = vpack.c.bf16 %v1292, %v1290
      %v1297 = vunpack.c.l.b16 %v1293
      %v1298 = vunpack.c.l.b16 %v1294
      %v1299 = vunpack.c.h.b16 %v1293
      %v1300 = vunpack.c.h.b16 %v1294
      %v1301 = vpack.c.b16 %v1298, %v1297
      %v1302 = vpack.c.b16 %v1300, %v1299
      %vm1303 = vcmask 1040384
      %vm1304 = vcmask 1044484
      %vm1305 = vmor %vm1303, %vm1304
      %v1306 = vrot.slane %v1301, 7
      %v1307 = vrot.slane %v1306, 4
      %v1308 = vrot.slane %v1302, 7
      %v1309 = vsel %vm1305, %v1307, %v1308
      %v1310 = vrot.slane %v1308, 4
      %1314 = vst [vmem:[#allocation2] sm:$0xee] %v1306
      %1315 = vst [vmem:[#allocation2 + $0x8] sm:$0xff] %v1309
      %1316 = vst [vmem:[#allocation2 + $0x10] sm:$0x11] %v1310
      %v1317 = vld [vmem:[#allocation2] sm:$0xff]
      %v1318 = vld [vmem:[#allocation2 + $0x8] sm:$0xff]
      %v1319 = vld [vmem:[#allocation2 + $0x10] sm:$0x33]
      %v1322 = vunpack.c.l.b16 %v1317
      %v1323 = vunpack.c.h.b16 %v1317
      %v1324 = vunpack.c.l.b16 %v1318
      %v1325 = vunpack.c.h.b16 %v1318
      %v1326 = vpack.c.b16 %v1324, %v1322
      %v1327 = vpack.c.b16 %v1325, %v1323
      %v1331 = vunpack.c.l.b16 %v1319
      %v1332 = vunpack.c.h.b16 %v1319
      %v1333 = vpack.c.b16 %v1331, %v1331
      %v1334 = vpack.c.b16 %v1332, %v1332
      %vm1335 = vsmask.f32 7424
      %v1337 = vshrl.u32 %v1326, 16
      %v1339 = vshll.u32 %v1326, 16
      %v1341 = vrot.slane %v1339, 1
      %v1342 = vor.u32 %v1337, %v1341
      %v1344 = vshll.u32 %v1333, 16
      %v1346 = vrot.slane %v1344, 1
      %v1347 = vsel %vm1335, %v1342, %v1346
      %v1349 = vshrl.u32 %v1327, 16
      %v1351 = vshll.u32 %v1327, 16
      %v1353 = vrot.slane %v1351, 1
      %v1354 = vor.u32 %v1349, %v1353
      %v1356 = vshll.u32 %v1334, 16
      %v1358 = vrot.slane %v1356, 1
      %v1359 = vsel %vm1335, %v1354, %v1358
      %vm1362 = vcmask 1046528
      %v1363 = vrot.slane %v1326, 1
      %v1364 = vrot.slane %v1333, 1
      %v1365 = vsel %vm1362, %v1363, %v1364
      %v1366 = vrot.slane %v1327, 1
      %v1367 = vrot.slane %v1334, 1
      %v1368 = vsel %vm1362, %v1366, %v1367
      %vm1371 = vsmask.f32 6400
      %v1372 = vrot.slane %v1337, 1
      %v1373 = vrot.slane %v1339, 2
      %v1374 = vor.u32 %v1372, %v1373
      %v1375 = vshrl.u32 %v1333, 16
      %v1377 = vrot.slane %v1375, 1
      %v1378 = vrot.slane %v1344, 2
      %v1379 = vor.u32 %v1377, %v1378
      %v1380 = vsel %vm1371, %v1374, %v1379
      %v1381 = vrot.slane %v1349, 1
      %v1382 = vrot.slane %v1351, 2
      %v1383 = vor.u32 %v1381, %v1382
      %v1384 = vshrl.u32 %v1334, 16
      %v1386 = vrot.slane %v1384, 1
      %v1387 = vrot.slane %v1356, 2
      %v1388 = vor.u32 %v1386, %v1387
      %v1389 = vsel %vm1371, %v1383, %v1388
      %vm1392 = vcmask 1045504
      %v1393 = vrot.slane %v1326, 2
      %v1394 = vrot.slane %v1333, 2
      %v1395 = vsel %vm1392, %v1393, %v1394
      %v1396 = vrot.slane %v1327, 2
      %v1397 = vrot.slane %v1334, 2
      %v1398 = vsel %vm1392, %v1396, %v1397
      %v1401 = vld [vmem:[%s7] sm:$0xff]
      %v1402 = vld [vmem:[%s7 + $0x8] sm:$0xff]
      %v1403 = vld [vmem:[%s7 + $0x10] sm:$0xff]
      %v1404 = vld [vmem:[%s7 + $0x18] sm:$0xff]
      %v1405 = vld [vmem:[%s7 + $0x20] sm:$0xff]
      %v1406 = vld [vmem:[%s7 + $0x28] sm:$0xff]
      %v1407 = vld [vmem:[%s7 + $0x30] sm:$0xff]
      %v1408 = vld [vmem:[%s7 + $0x38] sm:$0xff]
      %v1409 = vld [vmem:[%s7 + $0x40] sm:$0xff]
      %v1410 = vld [vmem:[%s7 + $0x48] sm:$0xff]
      %v1411 = vld [vmem:[%s7 + $0x50] sm:$0xff]
      %v1412 = vld [vmem:[%s7 + $0x58] sm:$0xff]
      %v1413 = vld [vmem:[%s7 + $0x60] sm:$0xff]
      %v1414 = vld [vmem:[%s7 + $0x68] sm:$0xff]
      %v1415 = vld [vmem:[%s7 + $0x70] sm:$0xff]
      %v1416 = vld [vmem:[%s7 + $0x78] sm:$0xff]
      %v1417 = vld [vmem:[%s7 + $0x80] sm:$0xff]
      %v1418 = vld [vmem:[%s7 + $0x88] sm:$0xff]
      %v1419 = vld [vmem:[%s7 + $0x90] sm:$0xff]
      %v1420 = vld [vmem:[%s7 + $0x98] sm:$0xff]
      %v1421 = vld [vmem:[%s7 + $0xa0] sm:$0xff]
      %v1422 = vld [vmem:[%s7 + $0xa8] sm:$0xff]
      %v1423 = vld [vmem:[%s7 + $0xb0] sm:$0xff]
      %v1424 = vld [vmem:[%s7 + $0xb8] sm:$0xff]
      %v1425 = vld [vmem:[%s7 + $0xc0] sm:$0xff]
      %v1426 = vld [vmem:[%s7 + $0xc8] sm:$0xff]
      %v1427 = vld [vmem:[%s7 + $0xd0] sm:$0xff]
      %v1428 = vld [vmem:[%s7 + $0xd8] sm:$0xff]
      %v1429 = vld [vmem:[%s7 + $0xe0] sm:$0xff]
      %v1430 = vld [vmem:[%s7 + $0xe8] sm:$0xff]
      %v1431 = vld [vmem:[%s7 + $0xf0] sm:$0xff]
      %v1432 = vld [vmem:[%s7 + $0xf8] sm:$0xff]
      %v1433 = vld [vmem:[%s7 + $0x100] sm:$0xff]
      %v1434 = vld [vmem:[%s7 + $0x108] sm:$0xff]
      %v1435 = vld [vmem:[%s7 + $0x110] sm:$0xff]
      %v1436 = vld [vmem:[%s7 + $0x118] sm:$0xff]
      %v1437 = vld [vmem:[%s7 + $0x120] sm:$0xff]
      %v1438 = vld [vmem:[%s7 + $0x128] sm:$0xff]
      %v1439 = vld [vmem:[%s7 + $0x130] sm:$0xff]
      %v1440 = vld [vmem:[%s7 + $0x138] sm:$0xff]
      %v1441 = vld [vmem:[%s7 + $0x140] sm:$0xff]
      %v1442 = vld [vmem:[%s7 + $0x148] sm:$0xff]
      %v1443 = vld [vmem:[%s7 + $0x150] sm:$0xff]
      %v1444 = vld [vmem:[%s7 + $0x158] sm:$0xff]
      %v1445 = vld [vmem:[%s7 + $0x160] sm:$0xff]
      %v1446 = vld [vmem:[%s7 + $0x168] sm:$0xff]
      %v1447 = vld [vmem:[%s7 + $0x170] sm:$0xff]
      %v1448 = vld [vmem:[%s7 + $0x178] sm:$0xff]
      %v1449 = vld [vmem:[%s7 + $0x180] sm:$0xff]
      %v1450 = vld [vmem:[%s7 + $0x188] sm:$0xff]
      %v1451 = vld [vmem:[%s7 + $0x190] sm:$0xff]
      %v1452 = vld [vmem:[%s7 + $0x198] sm:$0xff]
      %v1453 = vld [vmem:[%s7 + $0x1a0] sm:$0xff]
      %v1454 = vld [vmem:[%s7 + $0x1a8] sm:$0xff]
      %v1455 = vld [vmem:[%s7 + $0x1b0] sm:$0xff]
      %v1456 = vld [vmem:[%s7 + $0x1b8] sm:$0xff]
      %v1457 = vld [vmem:[%s7 + $0x1c0] sm:$0xff]
      %v1458 = vld [vmem:[%s7 + $0x1c8] sm:$0xff]
      %v1459 = vld [vmem:[%s7 + $0x1d0] sm:$0xff]
      %v1460 = vld [vmem:[%s7 + $0x1d8] sm:$0xff]
      %v1461 = vld [vmem:[%s7 + $0x1e0] sm:$0xff]
      %v1462 = vld [vmem:[%s7 + $0x1e8] sm:$0xff]
      %v1463 = vld [vmem:[%s7 + $0x1f0] sm:$0xff]
      %v1464 = vld [vmem:[%s7 + $0x1f8] sm:$0xff]
      %v1465 = vld [vmem:[%s7 + $0x200] sm:$0xff]
      %v1466 = vld [vmem:[%s7 + $0x208] sm:$0xff]
      %v1467 = vld [vmem:[%s7 + $0x210] sm:$0xff]
      %v1468 = vld [vmem:[%s7 + $0x218] sm:$0xff]
      %v1469 = vld [vmem:[%s7 + $0x220] sm:$0xff]
      %v1470 = vld [vmem:[%s7 + $0x228] sm:$0xff]
      %v1471 = vld [vmem:[%s7 + $0x230] sm:$0xff]
      %v1472 = vld [vmem:[%s7 + $0x238] sm:$0xff]
      %v1473 = vld [vmem:[%s7 + $0x240] sm:$0xff]
      %v1474 = vld [vmem:[%s7 + $0x248] sm:$0xff]
      %v1475 = vld [vmem:[%s7 + $0x250] sm:$0xff]
      %v1476 = vld [vmem:[%s7 + $0x258] sm:$0xff]
      %v1477 = vld [vmem:[%s7 + $0x260] sm:$0xff]
      %v1478 = vld [vmem:[%s7 + $0x268] sm:$0xff]
      %v1479 = vld [vmem:[%s7 + $0x270] sm:$0xff]
      %v1480 = vld [vmem:[%s7 + $0x278] sm:$0xff]
      %v1481 = vld [vmem:[%s7 + $0x280] sm:$0xff]
      %v1482 = vld [vmem:[%s7 + $0x288] sm:$0xff]
      %v1483 = vld [vmem:[%s7 + $0x290] sm:$0xff]
      %v1484 = vld [vmem:[%s7 + $0x298] sm:$0xff]
      %v1485 = vld [vmem:[%s7 + $0x2a0] sm:$0xff]
      %v1486 = vld [vmem:[%s7 + $0x2a8] sm:$0xff]
      %v1487 = vld [vmem:[%s7 + $0x2b0] sm:$0xff]
      %v1488 = vld [vmem:[%s7 + $0x2b8] sm:$0xff]
      %v1489 = vld [vmem:[%s7 + $0x2c0] sm:$0xff]
      %v1490 = vld [vmem:[%s7 + $0x2c8] sm:$0xff]
      %v1491 = vld [vmem:[%s7 + $0x2d0] sm:$0xff]
      %v1492 = vld [vmem:[%s7 + $0x2d8] sm:$0xff]
      %v1493 = vld [vmem:[%s7 + $0x2e0] sm:$0xff]
      %v1494 = vld [vmem:[%s7 + $0x2e8] sm:$0xff]
      %v1495 = vld [vmem:[%s7 + $0x2f0] sm:$0xff]
      %v1496 = vld [vmem:[%s7 + $0x2f8] sm:$0xff]
      %v1497 = vld [vmem:[%s7 + $0x300] sm:$0xff]
      %v1498 = vld [vmem:[%s7 + $0x308] sm:$0xff]
      %v1499 = vld [vmem:[%s7 + $0x310] sm:$0xff]
      %v1500 = vld [vmem:[%s7 + $0x318] sm:$0xff]
      %v1501 = vld [vmem:[%s7 + $0x320] sm:$0xff]
      %v1502 = vld [vmem:[%s7 + $0x328] sm:$0xff]
      %v1503 = vld [vmem:[%s7 + $0x330] sm:$0xff]
      %v1504 = vld [vmem:[%s7 + $0x338] sm:$0xff]
      %v1505 = vld [vmem:[%s7 + $0x340] sm:$0xff]
      %v1506 = vld [vmem:[%s7 + $0x348] sm:$0xff]
      %v1507 = vld [vmem:[%s7 + $0x350] sm:$0xff]
      %v1508 = vld [vmem:[%s7 + $0x358] sm:$0xff]
      %v1509 = vld [vmem:[%s7 + $0x360] sm:$0xff]
      %v1510 = vld [vmem:[%s7 + $0x368] sm:$0xff]
      %v1511 = vld [vmem:[%s7 + $0x370] sm:$0xff]
      %v1512 = vld [vmem:[%s7 + $0x378] sm:$0xff]
      %v1513 = vld [vmem:[%s7 + $0x380] sm:$0xff]
      %v1514 = vld [vmem:[%s7 + $0x388] sm:$0xff]
      %v1515 = vld [vmem:[%s7 + $0x390] sm:$0xff]
      %v1516 = vld [vmem:[%s7 + $0x398] sm:$0xff]
      %v1517 = vld [vmem:[%s7 + $0x3a0] sm:$0xff]
      %v1518 = vld [vmem:[%s7 + $0x3a8] sm:$0xff]
      %v1519 = vld [vmem:[%s7 + $0x3b0] sm:$0xff]
      %v1520 = vld [vmem:[%s7 + $0x3b8] sm:$0xff]
      %v1521 = vld [vmem:[%s7 + $0x3c0] sm:$0xff]
      %v1522 = vld [vmem:[%s7 + $0x3c8] sm:$0xff]
      %v1523 = vld [vmem:[%s7 + $0x3d0] sm:$0xff]
      %v1524 = vld [vmem:[%s7 + $0x3d8] sm:$0xff]
      %v1525 = vld [vmem:[%s7 + $0x3e0] sm:$0xff]
      %v1526 = vld [vmem:[%s7 + $0x3e8] sm:$0xff]
      %v1527 = vld [vmem:[%s7 + $0x3f0] sm:$0xff]
      %v1528 = vld [vmem:[%s7 + $0x3f8] sm:$0xff]
      %v1529 = vld [vmem:[%s7 + $0x400] sm:$0xff]
      %v1530 = vld [vmem:[%s7 + $0x408] sm:$0xff]
      %v1531 = vld [vmem:[%s7 + $0x410] sm:$0xff]
      %v1532 = vld [vmem:[%s7 + $0x418] sm:$0xff]
      %v1533 = vld [vmem:[%s7 + $0x420] sm:$0xff]
      %v1534 = vld [vmem:[%s7 + $0x428] sm:$0xff]
      %v1535 = vld [vmem:[%s7 + $0x430] sm:$0xff]
      %v1536 = vld [vmem:[%s7 + $0x438] sm:$0xff]
      %v1537 = vld [vmem:[%s7 + $0x440] sm:$0xff]
      %v1538 = vld [vmem:[%s7 + $0x448] sm:$0xff]
      %v1539 = vld [vmem:[%s7 + $0x450] sm:$0xff]
      %v1540 = vld [vmem:[%s7 + $0x458] sm:$0xff]
      %v1541 = vld [vmem:[%s7 + $0x460] sm:$0xff]
      %v1542 = vld [vmem:[%s7 + $0x468] sm:$0xff]
      %v1543 = vld [vmem:[%s7 + $0x470] sm:$0xff]
      %v1544 = vld [vmem:[%s7 + $0x478] sm:$0xff]
      %v1545 = vld [vmem:[%s7 + $0x480] sm:$0xff]
      %v1546 = vld [vmem:[%s7 + $0x488] sm:$0xff]
      %v1547 = vld [vmem:[%s7 + $0x490] sm:$0xff]
      %v1548 = vld [vmem:[%s7 + $0x498] sm:$0xff]
      %v1549 = vld [vmem:[%s7 + $0x4a0] sm:$0xff]
      %v1550 = vld [vmem:[%s7 + $0x4a8] sm:$0xff]
      %v1551 = vld [vmem:[%s7 + $0x4b0] sm:$0xff]
      %v1552 = vld [vmem:[%s7 + $0x4b8] sm:$0xff]
      %v1553 = vld [vmem:[%s7 + $0x4c0] sm:$0xff]
      %v1554 = vld [vmem:[%s7 + $0x4c8] sm:$0xff]
      %v1555 = vld [vmem:[%s7 + $0x4d0] sm:$0xff]
      %v1556 = vld [vmem:[%s7 + $0x4d8] sm:$0xff]
      %v1557 = vld [vmem:[%s7 + $0x4e0] sm:$0xff]
      %v1558 = vld [vmem:[%s7 + $0x4e8] sm:$0xff]
      %v1559 = vld [vmem:[%s7 + $0x4f0] sm:$0xff]
      %v1560 = vld [vmem:[%s7 + $0x4f8] sm:$0xff]
      %v1561 = vld [vmem:[%s9] sm:$0x3]
      %v1563 = vlaneseq
      %v1564 = vshrl.u32 %v1563, 7
      %v1565 = vsub.s32 0, %v1564
      %v1566 = vrot.slane %v1561, %v1565
      %v1567 = vlaneseq
      %v1568 = vshrl.u32 %v1567, 7
      %v1569 = vsub.s32 1, %v1568
      %v1570 = vrot.slane %v1561, %v1569
      %v1733 = vunpack.c.l.b16 %v1401
      %v1734 = vunpack.c.h.b16 %v1401
      %v1735 = vunpack.c.l.b16 %v1402
      %v1736 = vunpack.c.h.b16 %v1402
      %v1737 = vunpack.c.l.b16 %v1403
      %v1738 = vunpack.c.h.b16 %v1403
      %v1739 = vunpack.c.l.b16 %v1404
      %v1740 = vunpack.c.h.b16 %v1404
      %v1741 = vunpack.c.l.b16 %v1405
      %v1742 = vunpack.c.h.b16 %v1405
      %v1743 = vunpack.c.l.b16 %v1406
      %v1744 = vunpack.c.h.b16 %v1406
      %v1745 = vunpack.c.l.b16 %v1407
      %v1746 = vunpack.c.h.b16 %v1407
      %v1747 = vunpack.c.l.b16 %v1408
      %v1748 = vunpack.c.h.b16 %v1408
      %v1749 = vunpack.c.l.b16 %v1409
      %v1750 = vunpack.c.h.b16 %v1409
      %v1751 = vunpack.c.l.b16 %v1410
      %v1752 = vunpack.c.h.b16 %v1410
      %v1753 = vunpack.c.l.b16 %v1411
      %v1754 = vunpack.c.h.b16 %v1411
      %v1755 = vunpack.c.l.b16 %v1412
      %v1756 = vunpack.c.h.b16 %v1412
      %v1757 = vunpack.c.l.b16 %v1413
      %v1758 = vunpack.c.h.b16 %v1413
      %v1759 = vunpack.c.l.b16 %v1414
      %v1760 = vunpack.c.h.b16 %v1414
      %v1761 = vunpack.c.l.b16 %v1415
      %v1762 = vunpack.c.h.b16 %v1415
      %v1763 = vunpack.c.l.b16 %v1416
      %v1764 = vunpack.c.h.b16 %v1416
      %v1765 = vunpack.c.l.b16 %v1417
      %v1766 = vunpack.c.h.b16 %v1417
      %v1767 = vunpack.c.l.b16 %v1418
      %v1768 = vunpack.c.h.b16 %v1418
      %v1769 = vunpack.c.l.b16 %v1419
      %v1770 = vunpack.c.h.b16 %v1419
      %v1771 = vunpack.c.l.b16 %v1420
      %v1772 = vunpack.c.h.b16 %v1420
      %v1773 = vunpack.c.l.b16 %v1421
      %v1774 = vunpack.c.h.b16 %v1421
      %v1775 = vunpack.c.l.b16 %v1422
      %v1776 = vunpack.c.h.b16 %v1422
      %v1777 = vunpack.c.l.b16 %v1423
      %v1778 = vunpack.c.h.b16 %v1423
      %v1779 = vunpack.c.l.b16 %v1424
      %v1780 = vunpack.c.h.b16 %v1424
      %v1781 = vunpack.c.l.b16 %v1425
      %v1782 = vunpack.c.h.b16 %v1425
      %v1783 = vunpack.c.l.b16 %v1426
      %v1784 = vunpack.c.h.b16 %v1426
      %v1785 = vunpack.c.l.b16 %v1427
      %v1786 = vunpack.c.h.b16 %v1427
      %v1787 = vunpack.c.l.b16 %v1428
      %v1788 = vunpack.c.h.b16 %v1428
      %v1789 = vunpack.c.l.b16 %v1429
      %v1790 = vunpack.c.h.b16 %v1429
      %v1791 = vunpack.c.l.b16 %v1430
      %v1792 = vunpack.c.h.b16 %v1430
      %v1793 = vunpack.c.l.b16 %v1431
      %v1794 = vunpack.c.h.b16 %v1431
      %v1795 = vunpack.c.l.b16 %v1432
      %v1796 = vunpack.c.h.b16 %v1432
      %v1797 = vunpack.c.l.b16 %v1433
      %v1798 = vunpack.c.h.b16 %v1433
      %v1799 = vunpack.c.l.b16 %v1434
      %v1800 = vunpack.c.h.b16 %v1434
      %v1801 = vunpack.c.l.b16 %v1435
      %v1802 = vunpack.c.h.b16 %v1435
      %v1803 = vunpack.c.l.b16 %v1436
      %v1804 = vunpack.c.h.b16 %v1436
      %v1805 = vunpack.c.l.b16 %v1437
      %v1806 = vunpack.c.h.b16 %v1437
      %v1807 = vunpack.c.l.b16 %v1438
      %v1808 = vunpack.c.h.b16 %v1438
      %v1809 = vunpack.c.l.b16 %v1439
      %v1810 = vunpack.c.h.b16 %v1439
      %v1811 = vunpack.c.l.b16 %v1440
      %v1812 = vunpack.c.h.b16 %v1440
      %v1813 = vunpack.c.l.b16 %v1441
      %v1814 = vunpack.c.h.b16 %v1441
      %v1815 = vunpack.c.l.b16 %v1442
      %v1816 = vunpack.c.h.b16 %v1442
      %v1817 = vunpack.c.l.b16 %v1443
      %v1818 = vunpack.c.h.b16 %v1443
      %v1819 = vunpack.c.l.b16 %v1444
      %v1820 = vunpack.c.h.b16 %v1444
      %v1821 = vunpack.c.l.b16 %v1445
      %v1822 = vunpack.c.h.b16 %v1445
      %v1823 = vunpack.c.l.b16 %v1446
      %v1824 = vunpack.c.h.b16 %v1446
      %v1825 = vunpack.c.l.b16 %v1447
      %v1826 = vunpack.c.h.b16 %v1447
      %v1827 = vunpack.c.l.b16 %v1448
      %v1828 = vunpack.c.h.b16 %v1448
      %v1829 = vunpack.c.l.b16 %v1449
      %v1830 = vunpack.c.h.b16 %v1449
      %v1831 = vunpack.c.l.b16 %v1450
      %v1832 = vunpack.c.h.b16 %v1450
      %v1833 = vunpack.c.l.b16 %v1451
      %v1834 = vunpack.c.h.b16 %v1451
      %v1835 = vunpack.c.l.b16 %v1452
      %v1836 = vunpack.c.h.b16 %v1452
      %v1837 = vunpack.c.l.b16 %v1453
      %v1838 = vunpack.c.h.b16 %v1453
      %v1839 = vunpack.c.l.b16 %v1454
      %v1840 = vunpack.c.h.b16 %v1454
      %v1841 = vunpack.c.l.b16 %v1455
      %v1842 = vunpack.c.h.b16 %v1455
      %v1843 = vunpack.c.l.b16 %v1456
      %v1844 = vunpack.c.h.b16 %v1456
      %v1845 = vunpack.c.l.b16 %v1457
      %v1846 = vunpack.c.h.b16 %v1457
      %v1847 = vunpack.c.l.b16 %v1458
      %v1848 = vunpack.c.h.b16 %v1458
      %v1849 = vunpack.c.l.b16 %v1459
      %v1850 = vunpack.c.h.b16 %v1459
      %v1851 = vunpack.c.l.b16 %v1460
      %v1852 = vunpack.c.h.b16 %v1460
      %v1853 = vunpack.c.l.b16 %v1461
      %v1854 = vunpack.c.h.b16 %v1461
      %v1855 = vunpack.c.l.b16 %v1462
      %v1856 = vunpack.c.h.b16 %v1462
      %v1857 = vunpack.c.l.b16 %v1463
      %v1858 = vunpack.c.h.b16 %v1463
      %v1859 = vunpack.c.l.b16 %v1464
      %v1860 = vunpack.c.h.b16 %v1464
      %v1861 = vunpack.c.l.b16 %v1465
      %v1862 = vunpack.c.h.b16 %v1465
      %v1863 = vunpack.c.l.b16 %v1466
      %v1864 = vunpack.c.h.b16 %v1466
      %v1865 = vunpack.c.l.b16 %v1467
      %v1866 = vunpack.c.h.b16 %v1467
      %v1867 = vunpack.c.l.b16 %v1468
      %v1868 = vunpack.c.h.b16 %v1468
      %v1869 = vunpack.c.l.b16 %v1469
      %v1870 = vunpack.c.h.b16 %v1469
      %v1871 = vunpack.c.l.b16 %v1470
      %v1872 = vunpack.c.h.b16 %v1470
      %v1873 = vunpack.c.l.b16 %v1471
      %v1874 = vunpack.c.h.b16 %v1471
      %v1875 = vunpack.c.l.b16 %v1472
      %v1876 = vunpack.c.h.b16 %v1472
      %v1877 = vunpack.c.l.b16 %v1473
      %v1878 = vunpack.c.h.b16 %v1473
      %v1879 = vunpack.c.l.b16 %v1474
      %v1880 = vunpack.c.h.b16 %v1474
      %v1881 = vunpack.c.l.b16 %v1475
      %v1882 = vunpack.c.h.b16 %v1475
      %v1883 = vunpack.c.l.b16 %v1476
      %v1884 = vunpack.c.h.b16 %v1476
      %v1885 = vunpack.c.l.b16 %v1477
      %v1886 = vunpack.c.h.b16 %v1477
      %v1887 = vunpack.c.l.b16 %v1478
      %v1888 = vunpack.c.h.b16 %v1478
      %v1889 = vunpack.c.l.b16 %v1479
      %v1890 = vunpack.c.h.b16 %v1479
      %v1891 = vunpack.c.l.b16 %v1480
      %v1892 = vunpack.c.h.b16 %v1480
      %v1893 = vunpack.c.l.b16 %v1481
      %v1894 = vunpack.c.h.b16 %v1481
      %v1895 = vunpack.c.l.b16 %v1482
      %v1896 = vunpack.c.h.b16 %v1482
      %v1897 = vunpack.c.l.b16 %v1483
      %v1898 = vunpack.c.h.b16 %v1483
      %v1899 = vunpack.c.l.b16 %v1484
      %v1900 = vunpack.c.h.b16 %v1484
      %v1901 = vunpack.c.l.b16 %v1485
      %v1902 = vunpack.c.h.b16 %v1485
      %v1903 = vunpack.c.l.b16 %v1486
      %v1904 = vunpack.c.h.b16 %v1486
      %v1905 = vunpack.c.l.b16 %v1487
      %v1906 = vunpack.c.h.b16 %v1487
      %v1907 = vunpack.c.l.b16 %v1488
      %v1908 = vunpack.c.h.b16 %v1488
      %v1909 = vunpack.c.l.b16 %v1489
      %v1910 = vunpack.c.h.b16 %v1489
      %v1911 = vunpack.c.l.b16 %v1490
      %v1912 = vunpack.c.h.b16 %v1490
      %v1913 = vunpack.c.l.b16 %v1491
      %v1914 = vunpack.c.h.b16 %v1491
      %v1915 = vunpack.c.l.b16 %v1492
      %v1916 = vunpack.c.h.b16 %v1492
      %v1917 = vunpack.c.l.b16 %v1493
      %v1918 = vunpack.c.h.b16 %v1493
      %v1919 = vunpack.c.l.b16 %v1494
      %v1920 = vunpack.c.h.b16 %v1494
      %v1921 = vunpack.c.l.b16 %v1495
      %v1922 = vunpack.c.h.b16 %v1495
      %v1923 = vunpack.c.l.b16 %v1496
      %v1924 = vunpack.c.h.b16 %v1496
      %v1925 = vunpack.c.l.b16 %v1497
      %v1926 = vunpack.c.h.b16 %v1497
      %v1927 = vunpack.c.l.b16 %v1498
      %v1928 = vunpack.c.h.b16 %v1498
      %v1929 = vunpack.c.l.b16 %v1499
      %v1930 = vunpack.c.h.b16 %v1499
      %v1931 = vunpack.c.l.b16 %v1500
      %v1932 = vunpack.c.h.b16 %v1500
      %v1933 = vunpack.c.l.b16 %v1501
      %v1934 = vunpack.c.h.b16 %v1501
      %v1935 = vunpack.c.l.b16 %v1502
      %v1936 = vunpack.c.h.b16 %v1502
      %v1937 = vunpack.c.l.b16 %v1503
      %v1938 = vunpack.c.h.b16 %v1503
      %v1939 = vunpack.c.l.b16 %v1504
      %v1940 = vunpack.c.h.b16 %v1504
      %v1941 = vunpack.c.l.b16 %v1505
      %v1942 = vunpack.c.h.b16 %v1505
      %v1943 = vunpack.c.l.b16 %v1506
      %v1944 = vunpack.c.h.b16 %v1506
      %v1945 = vunpack.c.l.b16 %v1507
      %v1946 = vunpack.c.h.b16 %v1507
      %v1947 = vunpack.c.l.b16 %v1508
      %v1948 = vunpack.c.h.b16 %v1508
      %v1949 = vunpack.c.l.b16 %v1509
      %v1950 = vunpack.c.h.b16 %v1509
      %v1951 = vunpack.c.l.b16 %v1510
      %v1952 = vunpack.c.h.b16 %v1510
      %v1953 = vunpack.c.l.b16 %v1511
      %v1954 = vunpack.c.h.b16 %v1511
      %v1955 = vunpack.c.l.b16 %v1512
      %v1956 = vunpack.c.h.b16 %v1512
      %v1957 = vunpack.c.l.b16 %v1513
      %v1958 = vunpack.c.h.b16 %v1513
      %v1959 = vunpack.c.l.b16 %v1514
      %v1960 = vunpack.c.h.b16 %v1514
      %v1961 = vunpack.c.l.b16 %v1515
      %v1962 = vunpack.c.h.b16 %v1515
      %v1963 = vunpack.c.l.b16 %v1516
      %v1964 = vunpack.c.h.b16 %v1516
      %v1965 = vunpack.c.l.b16 %v1517
      %v1966 = vunpack.c.h.b16 %v1517
      %v1967 = vunpack.c.l.b16 %v1518
      %v1968 = vunpack.c.h.b16 %v1518
      %v1969 = vunpack.c.l.b16 %v1519
      %v1970 = vunpack.c.h.b16 %v1519
      %v1971 = vunpack.c.l.b16 %v1520
      %v1972 = vunpack.c.h.b16 %v1520
      %v1973 = vunpack.c.l.b16 %v1521
      %v1974 = vunpack.c.h.b16 %v1521
      %v1975 = vunpack.c.l.b16 %v1522
      %v1976 = vunpack.c.h.b16 %v1522
      %v1977 = vunpack.c.l.b16 %v1523
      %v1978 = vunpack.c.h.b16 %v1523
      %v1979 = vunpack.c.l.b16 %v1524
      %v1980 = vunpack.c.h.b16 %v1524
      %v1981 = vunpack.c.l.b16 %v1525
      %v1982 = vunpack.c.h.b16 %v1525
      %v1983 = vunpack.c.l.b16 %v1526
      %v1984 = vunpack.c.h.b16 %v1526
      %v1985 = vunpack.c.l.b16 %v1527
      %v1986 = vunpack.c.h.b16 %v1527
      %v1987 = vunpack.c.l.b16 %v1528
      %v1988 = vunpack.c.h.b16 %v1528
      %v1989 = vunpack.c.l.b16 %v1529
      %v1990 = vunpack.c.h.b16 %v1529
      %v1991 = vunpack.c.l.b16 %v1530
      %v1992 = vunpack.c.h.b16 %v1530
      %v1993 = vunpack.c.l.b16 %v1531
      %v1994 = vunpack.c.h.b16 %v1531
      %v1995 = vunpack.c.l.b16 %v1532
      %v1996 = vunpack.c.h.b16 %v1532
      %v1997 = vunpack.c.l.b16 %v1533
      %v1998 = vunpack.c.h.b16 %v1533
      %v1999 = vunpack.c.l.b16 %v1534
      %v2000 = vunpack.c.h.b16 %v1534
      %v2001 = vunpack.c.l.b16 %v1535
      %v2002 = vunpack.c.h.b16 %v1535
      %v2003 = vunpack.c.l.b16 %v1536
      %v2004 = vunpack.c.h.b16 %v1536
      %v2005 = vunpack.c.l.b16 %v1537
      %v2006 = vunpack.c.h.b16 %v1537
      %v2007 = vunpack.c.l.b16 %v1538
      %v2008 = vunpack.c.h.b16 %v1538
      %v2009 = vunpack.c.l.b16 %v1539
      %v2010 = vunpack.c.h.b16 %v1539
      %v2011 = vunpack.c.l.b16 %v1540
      %v2012 = vunpack.c.h.b16 %v1540
      %v2013 = vunpack.c.l.b16 %v1541
      %v2014 = vunpack.c.h.b16 %v1541
      %v2015 = vunpack.c.l.b16 %v1542
      %v2016 = vunpack.c.h.b16 %v1542
      %v2017 = vunpack.c.l.b16 %v1543
      %v2018 = vunpack.c.h.b16 %v1543
      %v2019 = vunpack.c.l.b16 %v1544
      %v2020 = vunpack.c.h.b16 %v1544
      %v2021 = vunpack.c.l.b16 %v1545
      %v2022 = vunpack.c.h.b16 %v1545
      %v2023 = vunpack.c.l.b16 %v1546
      %v2024 = vunpack.c.h.b16 %v1546
      %v2025 = vunpack.c.l.b16 %v1547
      %v2026 = vunpack.c.h.b16 %v1547
      %v2027 = vunpack.c.l.b16 %v1548
      %v2028 = vunpack.c.h.b16 %v1548
      %v2029 = vunpack.c.l.b16 %v1549
      %v2030 = vunpack.c.h.b16 %v1549
      %v2031 = vunpack.c.l.b16 %v1550
      %v2032 = vunpack.c.h.b16 %v1550
      %v2033 = vunpack.c.l.b16 %v1551
      %v2034 = vunpack.c.h.b16 %v1551
      %v2035 = vunpack.c.l.b16 %v1552
      %v2036 = vunpack.c.h.b16 %v1552
      %v2037 = vunpack.c.l.b16 %v1553
      %v2038 = vunpack.c.h.b16 %v1553
      %v2039 = vunpack.c.l.b16 %v1554
      %v2040 = vunpack.c.h.b16 %v1554
      %v2041 = vunpack.c.l.b16 %v1555
      %v2042 = vunpack.c.h.b16 %v1555
      %v2043 = vunpack.c.l.b16 %v1556
      %v2044 = vunpack.c.h.b16 %v1556
      %v2045 = vunpack.c.l.b16 %v1557
      %v2046 = vunpack.c.h.b16 %v1557
      %v2047 = vunpack.c.l.b16 %v1558
      %v2048 = vunpack.c.h.b16 %v1558
      %v2049 = vunpack.c.l.b16 %v1559
      %v2050 = vunpack.c.h.b16 %v1559
      %v2051 = vunpack.c.l.b16 %v1560
      %v2052 = vunpack.c.h.b16 %v1560
      %v2053 = vpack.c.b16 %v1735, %v1733
      %v2054 = vpack.c.b16 %v1736, %v1734
      %v2055 = vpack.c.b16 %v1739, %v1737
      %v2056 = vpack.c.b16 %v1740, %v1738
      %v2057 = vpack.c.b16 %v1743, %v1741
      %v2058 = vpack.c.b16 %v1744, %v1742
      %v2059 = vpack.c.b16 %v1747, %v1745
      %v2060 = vpack.c.b16 %v1748, %v1746
      %v2061 = vpack.c.b16 %v1751, %v1749
      %v2062 = vpack.c.b16 %v1752, %v1750
      %v2063 = vpack.c.b16 %v1755, %v1753
      %v2064 = vpack.c.b16 %v1756, %v1754
      %v2065 = vpack.c.b16 %v1759, %v1757
      %v2066 = vpack.c.b16 %v1760, %v1758
      %v2067 = vpack.c.b16 %v1763, %v1761
      %v2068 = vpack.c.b16 %v1764, %v1762
      %v2069 = vpack.c.b16 %v1767, %v1765
      %v2070 = vpack.c.b16 %v1768, %v1766
      %v2071 = vpack.c.b16 %v1771, %v1769
      %v2072 = vpack.c.b16 %v1772, %v1770
      %v2073 = vpack.c.b16 %v1775, %v1773
      %v2074 = vpack.c.b16 %v1776, %v1774
      %v2075 = vpack.c.b16 %v1779, %v1777
      %v2076 = vpack.c.b16 %v1780, %v1778
      %v2077 = vpack.c.b16 %v1783, %v1781
      %v2078 = vpack.c.b16 %v1784, %v1782
      %v2079 = vpack.c.b16 %v1787, %v1785
      %v2080 = vpack.c.b16 %v1788, %v1786
      %v2081 = vpack.c.b16 %v1791, %v1789
      %v2082 = vpack.c.b16 %v1792, %v1790
      %v2083 = vpack.c.b16 %v1795, %v1793
      %v2084 = vpack.c.b16 %v1796, %v1794
      %v2085 = vpack.c.b16 %v1799, %v1797
      %v2086 = vpack.c.b16 %v1800, %v1798
      %v2087 = vpack.c.b16 %v1803, %v1801
      %v2088 = vpack.c.b16 %v1804, %v1802
      %v2089 = vpack.c.b16 %v1807, %v1805
      %v2090 = vpack.c.b16 %v1808, %v1806
      %v2091 = vpack.c.b16 %v1811, %v1809
      %v2092 = vpack.c.b16 %v1812, %v1810
      %v2093 = vpack.c.b16 %v1815, %v1813
      %v2094 = vpack.c.b16 %v1816, %v1814
      %v2095 = vpack.c.b16 %v1819, %v1817
      %v2096 = vpack.c.b16 %v1820, %v1818
      %v2097 = vpack.c.b16 %v1823, %v1821
      %v2098 = vpack.c.b16 %v1824, %v1822
      %v2099 = vpack.c.b16 %v1827, %v1825
      %v2100 = vpack.c.b16 %v1828, %v1826
      %v2101 = vpack.c.b16 %v1831, %v1829
      %v2102 = vpack.c.b16 %v1832, %v1830
      %v2103 = vpack.c.b16 %v1835, %v1833
      %v2104 = vpack.c.b16 %v1836, %v1834
      %v2105 = vpack.c.b16 %v1839, %v1837
      %v2106 = vpack.c.b16 %v1840, %v1838
      %v2107 = vpack.c.b16 %v1843, %v1841
      %v2108 = vpack.c.b16 %v1844, %v1842
      %v2109 = vpack.c.b16 %v1847, %v1845
      %v2110 = vpack.c.b16 %v1848, %v1846
      %v2111 = vpack.c.b16 %v1851, %v1849
      %v2112 = vpack.c.b16 %v1852, %v1850
      %v2113 = vpack.c.b16 %v1855, %v1853
      %v2114 = vpack.c.b16 %v1856, %v1854
      %v2115 = vpack.c.b16 %v1859, %v1857
      %v2116 = vpack.c.b16 %v1860, %v1858
      %v2117 = vpack.c.b16 %v1863, %v1861
      %v2118 = vpack.c.b16 %v1864, %v1862
      %v2119 = vpack.c.b16 %v1867, %v1865
      %v2120 = vpack.c.b16 %v1868, %v1866
      %v2121 = vpack.c.b16 %v1871, %v1869
      %v2122 = vpack.c.b16 %v1872, %v1870
      %v2123 = vpack.c.b16 %v1875, %v1873
      %v2124 = vpack.c.b16 %v1876, %v1874
      %v2125 = vpack.c.b16 %v1879, %v1877
      %v2126 = vpack.c.b16 %v1880, %v1878
      %v2127 = vpack.c.b16 %v1883, %v1881
      %v2128 = vpack.c.b16 %v1884, %v1882
      %v2129 = vpack.c.b16 %v1887, %v1885
      %v2130 = vpack.c.b16 %v1888, %v1886
      %v2131 = vpack.c.b16 %v1891, %v1889
      %v2132 = vpack.c.b16 %v1892, %v1890
      %v2133 = vpack.c.b16 %v1895, %v1893
      %v2134 = vpack.c.b16 %v1896, %v1894
      %v2135 = vpack.c.b16 %v1899, %v1897
      %v2136 = vpack.c.b16 %v1900, %v1898
      %v2137 = vpack.c.b16 %v1903, %v1901
      %v2138 = vpack.c.b16 %v1904, %v1902
      %v2139 = vpack.c.b16 %v1907, %v1905
      %v2140 = vpack.c.b16 %v1908, %v1906
      %v2141 = vpack.c.b16 %v1911, %v1909
      %v2142 = vpack.c.b16 %v1912, %v1910
      %v2143 = vpack.c.b16 %v1915, %v1913
      %v2144 = vpack.c.b16 %v1916, %v1914
      %v2145 = vpack.c.b16 %v1919, %v1917
      %v2146 = vpack.c.b16 %v1920, %v1918
      %v2147 = vpack.c.b16 %v1923, %v1921
      %v2148 = vpack.c.b16 %v1924, %v1922
      %v2149 = vpack.c.b16 %v1927, %v1925
      %v2150 = vpack.c.b16 %v1928, %v1926
      %v2151 = vpack.c.b16 %v1931, %v1929
      %v2152 = vpack.c.b16 %v1932, %v1930
      %v2153 = vpack.c.b16 %v1935, %v1933
      %v2154 = vpack.c.b16 %v1936, %v1934
      %v2155 = vpack.c.b16 %v1939, %v1937
      %v2156 = vpack.c.b16 %v1940, %v1938
      %v2157 = vpack.c.b16 %v1943, %v1941
      %v2158 = vpack.c.b16 %v1944, %v1942
      %v2159 = vpack.c.b16 %v1947, %v1945
      %v2160 = vpack.c.b16 %v1948, %v1946
      %v2161 = vpack.c.b16 %v1951, %v1949
      %v2162 = vpack.c.b16 %v1952, %v1950
      %v2163 = vpack.c.b16 %v1955, %v1953
      %v2164 = vpack.c.b16 %v1956, %v1954
      %v2165 = vpack.c.b16 %v1959, %v1957
      %v2166 = vpack.c.b16 %v1960, %v1958
      %v2167 = vpack.c.b16 %v1963, %v1961
      %v2168 = vpack.c.b16 %v1964, %v1962
      %v2169 = vpack.c.b16 %v1967, %v1965
      %v2170 = vpack.c.b16 %v1968, %v1966
      %v2171 = vpack.c.b16 %v1971, %v1969
      %v2172 = vpack.c.b16 %v1972, %v1970
      %v2173 = vpack.c.b16 %v1975, %v1973
      %v2174 = vpack.c.b16 %v1976, %v1974
      %v2175 = vpack.c.b16 %v1979, %v1977
      %v2176 = vpack.c.b16 %v1980, %v1978
      %v2177 = vpack.c.b16 %v1983, %v1981
      %v2178 = vpack.c.b16 %v1984, %v1982
      %v2179 = vpack.c.b16 %v1987, %v1985
      %v2180 = vpack.c.b16 %v1988, %v1986
      %v2181 = vpack.c.b16 %v1991, %v1989
      %v2182 = vpack.c.b16 %v1992, %v1990
      %v2183 = vpack.c.b16 %v1995, %v1993
      %v2184 = vpack.c.b16 %v1996, %v1994
      %v2185 = vpack.c.b16 %v1999, %v1997
      %v2186 = vpack.c.b16 %v2000, %v1998
      %v2187 = vpack.c.b16 %v2003, %v2001
      %v2188 = vpack.c.b16 %v2004, %v2002
      %v2189 = vpack.c.b16 %v2007, %v2005
      %v2190 = vpack.c.b16 %v2008, %v2006
      %v2191 = vpack.c.b16 %v2011, %v2009
      %v2192 = vpack.c.b16 %v2012, %v2010
      %v2193 = vpack.c.b16 %v2015, %v2013
      %v2194 = vpack.c.b16 %v2016, %v2014
      %v2195 = vpack.c.b16 %v2019, %v2017
      %v2196 = vpack.c.b16 %v2020, %v2018
      %v2197 = vpack.c.b16 %v2023, %v2021
      %v2198 = vpack.c.b16 %v2024, %v2022
      %v2199 = vpack.c.b16 %v2027, %v2025
      %v2200 = vpack.c.b16 %v2028, %v2026
      %v2201 = vpack.c.b16 %v2031, %v2029
      %v2202 = vpack.c.b16 %v2032, %v2030
      %v2203 = vpack.c.b16 %v2035, %v2033
      %v2204 = vpack.c.b16 %v2036, %v2034
      %v2205 = vpack.c.b16 %v2039, %v2037
      %v2206 = vpack.c.b16 %v2040, %v2038
      %v2207 = vpack.c.b16 %v2043, %v2041
      %v2208 = vpack.c.b16 %v2044, %v2042
      %v2209 = vpack.c.b16 %v2047, %v2045
      %v2210 = vpack.c.b16 %v2048, %v2046
      %v2211 = vpack.c.b16 %v2051, %v2049
      %v2212 = vpack.c.b16 %v2052, %v2050
      %2373 = vmatprep.subr.bf16.mxu0 %v2054
      %2374 = vmatpush1.bf16.msra.mxu0 %v2053
      %2375 = vmatprep.subr.bf16.mxu0 %v2056
      %2376 = vmatpush1.bf16.msra.mxu0 %v2055
      %2377 = vmatprep.subr.bf16.mxu0 %v2058
      %2378 = vmatpush1.bf16.msra.mxu0 %v2057
      %2379 = vmatprep.subr.bf16.mxu0 %v2060
      %2380 = vmatpush1.bf16.msra.mxu0 %v2059
      %2381 = vmatprep.subr.bf16.mxu0 %v2062
      %2382 = vmatpush1.bf16.msra.mxu0 %v2061
      %2383 = vmatprep.subr.bf16.mxu0 %v2064
      %2384 = vmatpush1.bf16.msra.mxu0 %v2063
      %2385 = vmatprep.subr.bf16.mxu0 %v2066
      %2386 = vmatpush1.bf16.msra.mxu0 %v2065
      %2387 = vmatprep.subr.bf16.mxu0 %v2068
      %2388 = vmatpush1.bf16.msra.mxu0 %v2067
      %2389 = vmatprep.subr.bf16.mxu0 %v2070
      %2390 = vmatpush1.bf16.msra.mxu0 %v2069
      %2391 = vmatprep.subr.bf16.mxu0 %v2072
      %2392 = vmatpush1.bf16.msra.mxu0 %v2071
      %2393 = vmatprep.subr.bf16.mxu0 %v2074
      %2394 = vmatpush1.bf16.msra.mxu0 %v2073
      %2395 = vmatprep.subr.bf16.mxu0 %v2076
      %2396 = vmatpush1.bf16.msra.mxu0 %v2075
      %2397 = vmatprep.subr.bf16.mxu0 %v2078
      %2398 = vmatpush1.bf16.msra.mxu0 %v2077
      %2399 = vmatprep.subr.bf16.mxu0 %v2080
      %2400 = vmatpush1.bf16.msra.mxu0 %v2079
      %2401 = vmatprep.subr.bf16.mxu0 %v2082
      %2402 = vmatpush1.bf16.msra.mxu0 %v2081
      %2403 = vmatprep.subr.bf16.mxu0 %v2084
      %2404 = vmatpush1.bf16.msra.mxu0 %v2083
      %2405 = vmatprep.mubr.bf16.mxu0 %v1327
      %2406 = vmatmul.mubr.bf16.gmra.mrb[0].mxu0 %v1326
      %v2407 = vpop.f32.mrb[0].mxu0
      %v2408 = vadd.f32 %v1566, %v2407
      %v2409 = vpop.f32.mrb[0].mxu0
      %v2410 = vadd.f32 %v1570, %v2409
      %v2411 = vpop.f32.mrb[0].mxu0
      %v2412 = vadd.f32 %v1566, %v2411
      %v2413 = vpop.f32.mrb[0].mxu0
      %v2414 = vadd.f32 %v1570, %v2413
      %2415 = vdwg.mxu0
      %2416 = vmatprep.subr.bf16.mxu0 %v2086
      %2417 = vmatpush1.bf16.msra.mxu0 %v2085
      %2418 = vmatprep.subr.bf16.mxu0 %v2088
      %2419 = vmatpush1.bf16.msra.mxu0 %v2087
      %2420 = vmatprep.subr.bf16.mxu0 %v2090
      %2421 = vmatpush1.bf16.msra.mxu0 %v2089
      %2422 = vmatprep.subr.bf16.mxu0 %v2092
      %2423 = vmatpush1.bf16.msra.mxu0 %v2091
      %2424 = vmatprep.subr.bf16.mxu0 %v2094
      %2425 = vmatpush1.bf16.msra.mxu0 %v2093
      %2426 = vmatprep.subr.bf16.mxu0 %v2096
      %2427 = vmatpush1.bf16.msra.mxu0 %v2095
      %2428 = vmatprep.subr.bf16.mxu0 %v2098
      %2429 = vmatpush1.bf16.msra.mxu0 %v2097
      %2430 = vmatprep.subr.bf16.mxu0 %v2100
      %2431 = vmatpush1.bf16.msra.mxu0 %v2099
      %2432 = vmatprep.subr.bf16.mxu0 %v2102
      %2433 = vmatpush1.bf16.msra.mxu0 %v2101
      %2434 = vmatprep.subr.bf16.mxu0 %v2104
      %2435 = vmatpush1.bf16.msra.mxu0 %v2103
      %2436 = vmatprep.subr.bf16.mxu0 %v2106
      %2437 = vmatpush1.bf16.msra.mxu0 %v2105
      %2438 = vmatprep.subr.bf16.mxu0 %v2108
      %2439 = vmatpush1.bf16.msra.mxu0 %v2107
      %2440 = vmatprep.subr.bf16.mxu0 %v2110
      %2441 = vmatpush1.bf16.msra.mxu0 %v2109
      %2442 = vmatprep.subr.bf16.mxu0 %v2112
      %2443 = vmatpush1.bf16.msra.mxu0 %v2111
      %2444 = vmatprep.subr.bf16.mxu0 %v2114
      %2445 = vmatpush1.bf16.msra.mxu0 %v2113
      %2446 = vmatprep.subr.bf16.mxu0 %v2116
      %2447 = vmatpush1.bf16.msra.mxu0 %v2115
      %2448 = vmatprep.mubr.bf16.mxu0 %v1359
      %2449 = vmatmul.mubr.bf16.gmra.mrb[0].mxu0 %v1347
      %v2450 = vpop.f32.mrb[0].mxu0
      %v2451 = vadd.f32 %v2408, %v2450
      %v2452 = vpop.f32.mrb[0].mxu0
      %v2453 = vadd.f32 %v2410, %v2452
      %v2454 = vpop.f32.mrb[0].mxu0
      %v2455 = vadd.f32 %v2412, %v2454
      %v2456 = vpop.f32.mrb[0].mxu0
      %v2457 = vadd.f32 %v2414, %v2456
      %2458 = vdwg.mxu0
      %2459 = vmatprep.subr.bf16.mxu0 %v2118
      %2460 = vmatpush1.bf16.msra.mxu0 %v2117
      %2461 = vmatprep.subr.bf16.mxu0 %v2120
      %2462 = vmatpush1.bf16.msra.mxu0 %v2119
      %2463 = vmatprep.subr.bf16.mxu0 %v2122
      %2464 = vmatpush1.bf16.msra.mxu0 %v2121
      %2465 = vmatprep.subr.bf16.mxu0 %v2124
      %2466 = vmatpush1.bf16.msra.mxu0 %v2123
      %2467 = vmatprep.subr.bf16.mxu0 %v2126
      %2468 = vmatpush1.bf16.msra.mxu0 %v2125
      %2469 = vmatprep.subr.bf16.mxu0 %v2128
      %2470 = vmatpush1.bf16.msra.mxu0 %v2127
      %2471 = vmatprep.subr.bf16.mxu0 %v2130
      %2472 = vmatpush1.bf16.msra.mxu0 %v2129
      %2473 = vmatprep.subr.bf16.mxu0 %v2132
      %2474 = vmatpush1.bf16.msra.mxu0 %v2131
      %2475 = vmatprep.subr.bf16.mxu0 %v2134
      %2476 = vmatpush1.bf16.msra.mxu0 %v2133
      %2477 = vmatprep.subr.bf16.mxu0 %v2136
      %2478 = vmatpush1.bf16.msra.mxu0 %v2135
      %2479 = vmatprep.subr.bf16.mxu0 %v2138
      %2480 = vmatpush1.bf16.msra.mxu0 %v2137
      %2481 = vmatprep.subr.bf16.mxu0 %v2140
      %2482 = vmatpush1.bf16.msra.mxu0 %v2139
      %2483 = vmatprep.subr.bf16.mxu0 %v2142
      %2484 = vmatpush1.bf16.msra.mxu0 %v2141
      %2485 = vmatprep.subr.bf16.mxu0 %v2144
      %2486 = vmatpush1.bf16.msra.mxu0 %v2143
      %2487 = vmatprep.subr.bf16.mxu0 %v2146
      %2488 = vmatpush1.bf16.msra.mxu0 %v2145
      %2489 = vmatprep.subr.bf16.mxu0 %v2148
      %2490 = vmatpush1.bf16.msra.mxu0 %v2147
      %2491 = vmatprep.mubr.bf16.mxu0 %v1368
      %2492 = vmatmul.mubr.bf16.gmra.mrb[0].mxu0 %v1365
      %v2493 = vpop.f32.mrb[0].mxu0
      %v2494 = vadd.f32 %v2451, %v2493
      %v2495 = vpop.f32.mrb[0].mxu0
      %v2496 = vadd.f32 %v2453, %v2495
      %v2497 = vpop.f32.mrb[0].mxu0
      %v2498 = vadd.f32 %v2455, %v2497
      %v2499 = vpop.f32.mrb[0].mxu0
      %v2500 = vadd.f32 %v2457, %v2499
      %2501 = vdwg.mxu0
      %2502 = vmatprep.subr.bf16.mxu0 %v2150
      %2503 = vmatpush1.bf16.msra.mxu0 %v2149
      %2504 = vmatprep.subr.bf16.mxu0 %v2152
      %2505 = vmatpush1.bf16.msra.mxu0 %v2151
      %2506 = vmatprep.subr.bf16.mxu0 %v2154
      %2507 = vmatpush1.bf16.msra.mxu0 %v2153
      %2508 = vmatprep.subr.bf16.mxu0 %v2156
      %2509 = vmatpush1.bf16.msra.mxu0 %v2155
      %2510 = vmatprep.subr.bf16.mxu0 %v2158
      %2511 = vmatpush1.bf16.msra.mxu0 %v2157
      %2512 = vmatprep.subr.bf16.mxu0 %v2160
      %2513 = vmatpush1.bf16.msra.mxu0 %v2159
      %2514 = vmatprep.subr.bf16.mxu0 %v2162
      %2515 = vmatpush1.bf16.msra.mxu0 %v2161
      %2516 = vmatprep.subr.bf16.mxu0 %v2164
      %2517 = vmatpush1.bf16.msra.mxu0 %v2163
      %2518 = vmatprep.subr.bf16.mxu0 %v2166
      %2519 = vmatpush1.bf16.msra.mxu0 %v2165
      %2520 = vmatprep.subr.bf16.mxu0 %v2168
      %2521 = vmatpush1.bf16.msra.mxu0 %v2167
      %2522 = vmatprep.subr.bf16.mxu0 %v2170
      %2523 = vmatpush1.bf16.msra.mxu0 %v2169
      %2524 = vmatprep.subr.bf16.mxu0 %v2172
      %2525 = vmatpush1.bf16.msra.mxu0 %v2171
      %2526 = vmatprep.subr.bf16.mxu0 %v2174
      %2527 = vmatpush1.bf16.msra.mxu0 %v2173
      %2528 = vmatprep.subr.bf16.mxu0 %v2176
      %2529 = vmatpush1.bf16.msra.mxu0 %v2175
      %2530 = vmatprep.subr.bf16.mxu0 %v2178
      %2531 = vmatpush1.bf16.msra.mxu0 %v2177
      %2532 = vmatprep.subr.bf16.mxu0 %v2180
      %2533 = vmatpush1.bf16.msra.mxu0 %v2179
      %2534 = vmatprep.mubr.bf16.mxu0 %v1389
      %2535 = vmatmul.mubr.bf16.gmra.mrb[0].mxu0 %v1380
      %v2536 = vpop.f32.mrb[0].mxu0
      %v2537 = vadd.f32 %v2494, %v2536
      %v2538 = vpop.f32.mrb[0].mxu0
      %v2539 = vadd.f32 %v2496, %v2538
      %v2540 = vpop.f32.mrb[0].mxu0
      %v2541 = vadd.f32 %v2498, %v2540
      %v2542 = vpop.f32.mrb[0].mxu0
      %v2543 = vadd.f32 %v2500, %v2542
      %2544 = vdwg.mxu0
      %2545 = vmatprep.subr.bf16.mxu0 %v2182
      %2546 = vmatpush1.bf16.msra.mxu0 %v2181
      %2547 = vmatprep.subr.bf16.mxu0 %v2184
      %2548 = vmatpush1.bf16.msra.mxu0 %v2183
      %2549 = vmatprep.subr.bf16.mxu0 %v2186
      %2550 = vmatpush1.bf16.msra.mxu0 %v2185
      %2551 = vmatprep.subr.bf16.mxu0 %v2188
      %2552 = vmatpush1.bf16.msra.mxu0 %v2187
      %2553 = vmatprep.subr.bf16.mxu0 %v2190
      %2554 = vmatpush1.bf16.msra.mxu0 %v2189
      %2555 = vmatprep.subr.bf16.mxu0 %v2192
      %2556 = vmatpush1.bf16.msra.mxu0 %v2191
      %2557 = vmatprep.subr.bf16.mxu0 %v2194
      %2558 = vmatpush1.bf16.msra.mxu0 %v2193
      %2559 = vmatprep.subr.bf16.mxu0 %v2196
      %2560 = vmatpush1.bf16.msra.mxu0 %v2195
      %2561 = vmatprep.subr.bf16.mxu0 %v2198
      %2562 = vmatpush1.bf16.msra.mxu0 %v2197
      %2563 = vmatprep.subr.bf16.mxu0 %v2200
      %2564 = vmatpush1.bf16.msra.mxu0 %v2199
      %2565 = vmatprep.subr.bf16.mxu0 %v2202
      %2566 = vmatpush1.bf16.msra.mxu0 %v2201
      %2567 = vmatprep.subr.bf16.mxu0 %v2204
      %2568 = vmatpush1.bf16.msra.mxu0 %v2203
      %2569 = vmatprep.subr.bf16.mxu0 %v2206
      %2570 = vmatpush1.bf16.msra.mxu0 %v2205
      %2571 = vmatprep.subr.bf16.mxu0 %v2208
      %2572 = vmatpush1.bf16.msra.mxu0 %v2207
      %2573 = vmatprep.subr.bf16.mxu0 %v2210
      %2574 = vmatpush1.bf16.msra.mxu0 %v2209
      %2575 = vmatprep.subr.bf16.mxu0 %v2212
      %2576 = vmatpush1.bf16.msra.mxu0 %v2211
      %2577 = vmatprep.mubr.bf16.mxu0 %v1398
      %2578 = vmatmul.mubr.bf16.gmra.mrb[0].mxu0 %v1395
      %v2579 = vpop.f32.mrb[0].mxu0
      %v2580 = vadd.f32 %v2537, %v2579
      %v2581 = vpop.f32.mrb[0].mxu0
      %v2582 = vadd.f32 %v2539, %v2581
      %v2583 = vpop.f32.mrb[0].mxu0
      %v2584 = vadd.f32 %v2541, %v2583
      %v2585 = vpop.f32.mrb[0].mxu0
      %v2586 = vadd.f32 %v2543, %v2585
      %2587 = vdwg.mxu0
      %v2588 = vmax.f32 %v2580, 0.0
      %v2589 = vmax.f32 %v2582, 0.0
      %v2590 = vmax.f32 %v2584, 0.0
      %v2591 = vmax.f32 %v2586, 0.0
      %v2592 = vpack.c.bf16 %v2590, %v2588
      %v2593 = vpack.c.bf16 %v2591, %v2589
      %v2596 = vunpack.c.l.b16 %v2592
      %v2597 = vunpack.c.l.b16 %v2593
      %v2598 = vunpack.c.h.b16 %v2592
      %v2599 = vunpack.c.h.b16 %v2593
      %v2600 = vpack.c.b16 %v2597, %v2596
      %v2601 = vpack.c.b16 %v2599, %v2598
      %v2602 = vrot.slane %v2600, 7
      %v2603 = vrot.slane %v2602, 4
      %v2604 = vrot.slane %v2601, 7
      %v2605 = vsel %vm1305, %v2603, %v2604
      %v2606 = vrot.slane %v2604, 4
      %2610 = vst [vmem:[#allocation2] sm:$0xee] %v2602
      %2611 = vst [vmem:[#allocation2 + $0x8] sm:$0xff] %v2605
      %2612 = vst [vmem:[#allocation2 + $0x10] sm:$0x11] %v2606
      %v2613 = vld [vmem:[#allocation2] sm:$0xff]
      %v2614 = vld [vmem:[#allocation2 + $0x8] sm:$0xff]
      %v2615 = vld [vmem:[#allocation2 + $0x10] sm:$0x33]
      %v2618 = vunpack.c.l.b16 %v2613
      %v2619 = vunpack.c.h.b16 %v2613
      %v2620 = vunpack.c.l.b16 %v2614
      %v2621 = vunpack.c.h.b16 %v2614
      %v2622 = vpack.c.b16 %v2620, %v2618
      %v2623 = vpack.c.b16 %v2621, %v2619
      %v2627 = vunpack.c.l.b16 %v2615
      %v2628 = vunpack.c.h.b16 %v2615
      %v2629 = vpack.c.b16 %v2627, %v2627
      %v2630 = vpack.c.b16 %v2628, %v2628
      %v2632 = vshrl.u32 %v2622, 16
      %v2634 = vshll.u32 %v2622, 16
      %v2636 = vrot.slane %v2634, 1
      %v2637 = vor.u32 %v2632, %v2636
      %v2639 = vshll.u32 %v2629, 16
      %v2641 = vrot.slane %v2639, 1
      %v2642 = vsel %vm1335, %v2637, %v2641
      %v2644 = vshrl.u32 %v2623, 16
      %v2646 = vshll.u32 %v2623, 16
      %v2648 = vrot.slane %v2646, 1
      %v2649 = vor.u32 %v2644, %v2648
      %v2651 = vshll.u32 %v2630, 16
      %v2653 = vrot.slane %v2651, 1
      %v2654 = vsel %vm1335, %v2649, %v2653
      %v2657 = vrot.slane %v2622, 1
      %v2658 = vrot.slane %v2629, 1
      %v2659 = vsel %vm1362, %v2657, %v2658
      %v2660 = vrot.slane %v2623, 1
      %v2661 = vrot.slane %v2630, 1
      %v2662 = vsel %vm1362, %v2660, %v2661
      %v2665 = vrot.slane %v2632, 1
      %v2666 = vrot.slane %v2634, 2
      %v2667 = vor.u32 %v2665, %v2666
      %v2668 = vshrl.u32 %v2629, 16
      %v2670 = vrot.slane %v2668, 1
      %v2671 = vrot.slane %v2639, 2
      %v2672 = vor.u32 %v2670, %v2671
      %v2673 = vsel %vm1371, %v2667, %v2672
      %v2674 = vrot.slane %v2644, 1
      %v2675 = vrot.slane %v2646, 2
      %v2676 = vor.u32 %v2674, %v2675
      %v2677 = vshrl.u32 %v2630, 16
      %v2679 = vrot.slane %v2677, 1
      %v2680 = vrot.slane %v2651, 2
      %v2681 = vor.u32 %v2679, %v2680
      %v2682 = vsel %vm1371, %v2676, %v2681
      %v2685 = vrot.slane %v2622, 2
      %v2686 = vrot.slane %v2629, 2
      %v2687 = vsel %vm1392, %v2685, %v2686
      %v2688 = vrot.slane %v2623, 2
      %v2689 = vrot.slane %v2630, 2
      %v2690 = vsel %vm1392, %v2688, %v2689
      %v2693 = vld [vmem:[%s11] sm:$0xff]
      %v2694 = vld [vmem:[%s11 + $0x8] sm:$0xff]
      %v2695 = vld [vmem:[%s11 + $0x10] sm:$0xff]
      %v2696 = vld [vmem:[%s11 + $0x18] sm:$0xff]
      %v2697 = vld [vmem:[%s11 + $0x20] sm:$0xff]
      %v2698 = vld [vmem:[%s11 + $0x28] sm:$0xff]
      %v2699 = vld [vmem:[%s11 + $0x30] sm:$0xff]
      %v2700 = vld [vmem:[%s11 + $0x38] sm:$0xff]
      %v2701 = vld [vmem:[%s11 + $0x40] sm:$0xff]
      %v2702 = vld [vmem:[%s11 + $0x48] sm:$0xff]
      %v2703 = vld [vmem:[%s11 + $0x50] sm:$0xff]
      %v2704 = vld [vmem:[%s11 + $0x58] sm:$0xff]
      %v2705 = vld [vmem:[%s11 + $0x60] sm:$0xff]
      %v2706 = vld [vmem:[%s11 + $0x68] sm:$0xff]
      %v2707 = vld [vmem:[%s11 + $0x70] sm:$0xff]
      %v2708 = vld [vmem:[%s11 + $0x78] sm:$0xff]
      %v2709 = vld [vmem:[%s11 + $0x80] sm:$0xff]
      %v2710 = vld [vmem:[%s11 + $0x88] sm:$0xff]
      %v2711 = vld [vmem:[%s11 + $0x90] sm:$0xff]
      %v2712 = vld [vmem:[%s11 + $0x98] sm:$0xff]
      %v2713 = vld [vmem:[%s11 + $0xa0] sm:$0xff]
      %v2714 = vld [vmem:[%s11 + $0xa8] sm:$0xff]
      %v2715 = vld [vmem:[%s11 + $0xb0] sm:$0xff]
      %v2716 = vld [vmem:[%s11 + $0xb8] sm:$0xff]
      %v2717 = vld [vmem:[%s11 + $0xc0] sm:$0xff]
      %v2718 = vld [vmem:[%s11 + $0xc8] sm:$0xff]
      %v2719 = vld [vmem:[%s11 + $0xd0] sm:$0xff]
      %v2720 = vld [vmem:[%s11 + $0xd8] sm:$0xff]
      %v2721 = vld [vmem:[%s11 + $0xe0] sm:$0xff]
      %v2722 = vld [vmem:[%s11 + $0xe8] sm:$0xff]
      %v2723 = vld [vmem:[%s11 + $0xf0] sm:$0xff]
      %v2724 = vld [vmem:[%s11 + $0xf8] sm:$0xff]
      %v2725 = vld [vmem:[%s11 + $0x100] sm:$0xff]
      %v2726 = vld [vmem:[%s11 + $0x108] sm:$0xff]
      %v2727 = vld [vmem:[%s11 + $0x110] sm:$0xff]
      %v2728 = vld [vmem:[%s11 + $0x118] sm:$0xff]
      %v2729 = vld [vmem:[%s11 + $0x120] sm:$0xff]
      %v2730 = vld [vmem:[%s11 + $0x128] sm:$0xff]
      %v2731 = vld [vmem:[%s11 + $0x130] sm:$0xff]
      %v2732 = vld [vmem:[%s11 + $0x138] sm:$0xff]
      %v2733 = vld [vmem:[%s11 + $0x140] sm:$0xff]
      %v2734 = vld [vmem:[%s11 + $0x148] sm:$0xff]
      %v2735 = vld [vmem:[%s11 + $0x150] sm:$0xff]
      %v2736 = vld [vmem:[%s11 + $0x158] sm:$0xff]
      %v2737 = vld [vmem:[%s11 + $0x160] sm:$0xff]
      %v2738 = vld [vmem:[%s11 + $0x168] sm:$0xff]
      %v2739 = vld [vmem:[%s11 + $0x170] sm:$0xff]
      %v2740 = vld [vmem:[%s11 + $0x178] sm:$0xff]
      %v2741 = vld [vmem:[%s11 + $0x180] sm:$0xff]
      %v2742 = vld [vmem:[%s11 + $0x188] sm:$0xff]
      %v2743 = vld [vmem:[%s11 + $0x190] sm:$0xff]
      %v2744 = vld [vmem:[%s11 + $0x198] sm:$0xff]
      %v2745 = vld [vmem:[%s11 + $0x1a0] sm:$0xff]
      %v2746 = vld [vmem:[%s11 + $0x1a8] sm:$0xff]
      %v2747 = vld [vmem:[%s11 + $0x1b0] sm:$0xff]
      %v2748 = vld [vmem:[%s11 + $0x1b8] sm:$0xff]
      %v2749 = vld [vmem:[%s11 + $0x1c0] sm:$0xff]
      %v2750 = vld [vmem:[%s11 + $0x1c8] sm:$0xff]
      %v2751 = vld [vmem:[%s11 + $0x1d0] sm:$0xff]
      %v2752 = vld [vmem:[%s11 + $0x1d8] sm:$0xff]
      %v2753 = vld [vmem:[%s11 + $0x1e0] sm:$0xff]
      %v2754 = vld [vmem:[%s11 + $0x1e8] sm:$0xff]
      %v2755 = vld [vmem:[%s11 + $0x1f0] sm:$0xff]
      %v2756 = vld [vmem:[%s11 + $0x1f8] sm:$0xff]
      %v2757 = vld [vmem:[%s11 + $0x200] sm:$0xff]
      %v2758 = vld [vmem:[%s11 + $0x208] sm:$0xff]
      %v2759 = vld [vmem:[%s11 + $0x210] sm:$0xff]
      %v2760 = vld [vmem:[%s11 + $0x218] sm:$0xff]
      %v2761 = vld [vmem:[%s11 + $0x220] sm:$0xff]
      %v2762 = vld [vmem:[%s11 + $0x228] sm:$0xff]
      %v2763 = vld [vmem:[%s11 + $0x230] sm:$0xff]
      %v2764 = vld [vmem:[%s11 + $0x238] sm:$0xff]
      %v2765 = vld [vmem:[%s11 + $0x240] sm:$0xff]
      %v2766 = vld [vmem:[%s11 + $0x248] sm:$0xff]
      %v2767 = vld [vmem:[%s11 + $0x250] sm:$0xff]
      %v2768 = vld [vmem:[%s11 + $0x258] sm:$0xff]
      %v2769 = vld [vmem:[%s11 + $0x260] sm:$0xff]
      %v2770 = vld [vmem:[%s11 + $0x268] sm:$0xff]
      %v2771 = vld [vmem:[%s11 + $0x270] sm:$0xff]
      %v2772 = vld [vmem:[%s11 + $0x278] sm:$0xff]
      %v2773 = vld [vmem:[%s11 + $0x280] sm:$0xff]
      %v2774 = vld [vmem:[%s11 + $0x288] sm:$0xff]
      %v2775 = vld [vmem:[%s11 + $0x290] sm:$0xff]
      %v2776 = vld [vmem:[%s11 + $0x298] sm:$0xff]
      %v2777 = vld [vmem:[%s11 + $0x2a0] sm:$0xff]
      %v2778 = vld [vmem:[%s11 + $0x2a8] sm:$0xff]
      %v2779 = vld [vmem:[%s11 + $0x2b0] sm:$0xff]
      %v2780 = vld [vmem:[%s11 + $0x2b8] sm:$0xff]
      %v2781 = vld [vmem:[%s11 + $0x2c0] sm:$0xff]
      %v2782 = vld [vmem:[%s11 + $0x2c8] sm:$0xff]
      %v2783 = vld [vmem:[%s11 + $0x2d0] sm:$0xff]
      %v2784 = vld [vmem:[%s11 + $0x2d8] sm:$0xff]
      %v2785 = vld [vmem:[%s11 + $0x2e0] sm:$0xff]
      %v2786 = vld [vmem:[%s11 + $0x2e8] sm:$0xff]
      %v2787 = vld [vmem:[%s11 + $0x2f0] sm:$0xff]
      %v2788 = vld [vmem:[%s11 + $0x2f8] sm:$0xff]
      %v2789 = vld [vmem:[%s11 + $0x300] sm:$0xff]
      %v2790 = vld [vmem:[%s11 + $0x308] sm:$0xff]
      %v2791 = vld [vmem:[%s11 + $0x310] sm:$0xff]
      %v2792 = vld [vmem:[%s11 + $0x318] sm:$0xff]
      %v2793 = vld [vmem:[%s11 + $0x320] sm:$0xff]
      %v2794 = vld [vmem:[%s11 + $0x328] sm:$0xff]
      %v2795 = vld [vmem:[%s11 + $0x330] sm:$0xff]
      %v2796 = vld [vmem:[%s11 + $0x338] sm:$0xff]
      %v2797 = vld [vmem:[%s11 + $0x340] sm:$0xff]
      %v2798 = vld [vmem:[%s11 + $0x348] sm:$0xff]
      %v2799 = vld [vmem:[%s11 + $0x350] sm:$0xff]
      %v2800 = vld [vmem:[%s11 + $0x358] sm:$0xff]
      %v2801 = vld [vmem:[%s11 + $0x360] sm:$0xff]
      %v2802 = vld [vmem:[%s11 + $0x368] sm:$0xff]
      %v2803 = vld [vmem:[%s11 + $0x370] sm:$0xff]
      %v2804 = vld [vmem:[%s11 + $0x378] sm:$0xff]
      %v2805 = vld [vmem:[%s11 + $0x380] sm:$0xff]
      %v2806 = vld [vmem:[%s11 + $0x388] sm:$0xff]
      %v2807 = vld [vmem:[%s11 + $0x390] sm:$0xff]
      %v2808 = vld [vmem:[%s11 + $0x398] sm:$0xff]
      %v2809 = vld [vmem:[%s11 + $0x3a0] sm:$0xff]
      %v2810 = vld [vmem:[%s11 + $0x3a8] sm:$0xff]
      %v2811 = vld [vmem:[%s11 + $0x3b0] sm:$0xff]
      %v2812 = vld [vmem:[%s11 + $0x3b8] sm:$0xff]
      %v2813 = vld [vmem:[%s11 + $0x3c0] sm:$0xff]
      %v2814 = vld [vmem:[%s11 + $0x3c8] sm:$0xff]
      %v2815 = vld [vmem:[%s11 + $0x3d0] sm:$0xff]
      %v2816 = vld [vmem:[%s11 + $0x3d8] sm:$0xff]
      %v2817 = vld [vmem:[%s11 + $0x3e0] sm:$0xff]
      %v2818 = vld [vmem:[%s11 + $0x3e8] sm:$0xff]
      %v2819 = vld [vmem:[%s11 + $0x3f0] sm:$0xff]
      %v2820 = vld [vmem:[%s11 + $0x3f8] sm:$0xff]
      %v2821 = vld [vmem:[%s11 + $0x400] sm:$0xff]
      %v2822 = vld [vmem:[%s11 + $0x408] sm:$0xff]
      %v2823 = vld [vmem:[%s11 + $0x410] sm:$0xff]
      %v2824 = vld [vmem:[%s11 + $0x418] sm:$0xff]
      %v2825 = vld [vmem:[%s11 + $0x420] sm:$0xff]
      %v2826 = vld [vmem:[%s11 + $0x428] sm:$0xff]
      %v2827 = vld [vmem:[%s11 + $0x430] sm:$0xff]
      %v2828 = vld [vmem:[%s11 + $0x438] sm:$0xff]
      %v2829 = vld [vmem:[%s11 + $0x440] sm:$0xff]
      %v2830 = vld [vmem:[%s11 + $0x448] sm:$0xff]
      %v2831 = vld [vmem:[%s11 + $0x450] sm:$0xff]
      %v2832 = vld [vmem:[%s11 + $0x458] sm:$0xff]
      %v2833 = vld [vmem:[%s11 + $0x460] sm:$0xff]
      %v2834 = vld [vmem:[%s11 + $0x468] sm:$0xff]
      %v2835 = vld [vmem:[%s11 + $0x470] sm:$0xff]
      %v2836 = vld [vmem:[%s11 + $0x478] sm:$0xff]
      %v2837 = vld [vmem:[%s11 + $0x480] sm:$0xff]
      %v2838 = vld [vmem:[%s11 + $0x488] sm:$0xff]
      %v2839 = vld [vmem:[%s11 + $0x490] sm:$0xff]
      %v2840 = vld [vmem:[%s11 + $0x498] sm:$0xff]
      %v2841 = vld [vmem:[%s11 + $0x4a0] sm:$0xff]
      %v2842 = vld [vmem:[%s11 + $0x4a8] sm:$0xff]
      %v2843 = vld [vmem:[%s11 + $0x4b0] sm:$0xff]
      %v2844 = vld [vmem:[%s11 + $0x4b8] sm:$0xff]
      %v2845 = vld [vmem:[%s11 + $0x4c0] sm:$0xff]
      %v2846 = vld [vmem:[%s11 + $0x4c8] sm:$0xff]
      %v2847 = vld [vmem:[%s11 + $0x4d0] sm:$0xff]
      %v2848 = vld [vmem:[%s11 + $0x4d8] sm:$0xff]
      %v2849 = vld [vmem:[%s11 + $0x4e0] sm:$0xff]
      %v2850 = vld [vmem:[%s11 + $0x4e8] sm:$0xff]
      %v2851 = vld [vmem:[%s11 + $0x4f0] sm:$0xff]
      %v2852 = vld [vmem:[%s11 + $0x4f8] sm:$0xff]
      %v2853 = vld [vmem:[%s13] sm:$0x3]
      %v2855 = vlaneseq
      %v2856 = vshrl.u32 %v2855, 7
      %v2857 = vsub.s32 0, %v2856
      %v2858 = vrot.slane %v2853, %v2857
      %v2859 = vlaneseq
      %v2860 = vshrl.u32 %v2859, 7
      %v2861 = vsub.s32 1, %v2860
      %v2862 = vrot.slane %v2853, %v2861
      %v3025 = vunpack.c.l.b16 %v2693
      %v3026 = vunpack.c.h.b16 %v2693
      %v3027 = vunpack.c.l.b16 %v2694
      %v3028 = vunpack.c.h.b16 %v2694
      %v3029 = vunpack.c.l.b16 %v2695
      %v3030 = vunpack.c.h.b16 %v2695
      %v3031 = vunpack.c.l.b16 %v2696
      %v3032 = vunpack.c.h.b16 %v2696
      %v3033 = vunpack.c.l.b16 %v2697
      %v3034 = vunpack.c.h.b16 %v2697
      %v3035 = vunpack.c.l.b16 %v2698
      %v3036 = vunpack.c.h.b16 %v2698
      %v3037 = vunpack.c.l.b16 %v2699
      %v3038 = vunpack.c.h.b16 %v2699
      %v3039 = vunpack.c.l.b16 %v2700
      %v3040 = vunpack.c.h.b16 %v2700
      %v3041 = vunpack.c.l.b16 %v2701
      %v3042 = vunpack.c.h.b16 %v2701
      %v3043 = vunpack.c.l.b16 %v2702
      %v3044 = vunpack.c.h.b16 %v2702
      %v3045 = vunpack.c.l.b16 %v2703
      %v3046 = vunpack.c.h.b16 %v2703
      %v3047 = vunpack.c.l.b16 %v2704
      %v3048 = vunpack.c.h.b16 %v2704
      %v3049 = vunpack.c.l.b16 %v2705
      %v3050 = vunpack.c.h.b16 %v2705
      %v3051 = vunpack.c.l.b16 %v2706
      %v3052 = vunpack.c.h.b16 %v2706
      %v3053 = vunpack.c.l.b16 %v2707
      %v3054 = vunpack.c.h.b16 %v2707
      %v3055 = vunpack.c.l.b16 %v2708
      %v3056 = vunpack.c.h.b16 %v2708
      %v3057 = vunpack.c.l.b16 %v2709
      %v3058 = vunpack.c.h.b16 %v2709
      %v3059 = vunpack.c.l.b16 %v2710
      %v3060 = vunpack.c.h.b16 %v2710
      %v3061 = vunpack.c.l.b16 %v2711
      %v3062 = vunpack.c.h.b16 %v2711
      %v3063 = vunpack.c.l.b16 %v2712
      %v3064 = vunpack.c.h.b16 %v2712
      %v3065 = vunpack.c.l.b16 %v2713
      %v3066 = vunpack.c.h.b16 %v2713
      %v3067 = vunpack.c.l.b16 %v2714
      %v3068 = vunpack.c.h.b16 %v2714
      %v3069 = vunpack.c.l.b16 %v2715
      %v3070 = vunpack.c.h.b16 %v2715
      %v3071 = vunpack.c.l.b16 %v2716
      %v3072 = vunpack.c.h.b16 %v2716
      %v3073 = vunpack.c.l.b16 %v2717
      %v3074 = vunpack.c.h.b16 %v2717
      %v3075 = vunpack.c.l.b16 %v2718
      %v3076 = vunpack.c.h.b16 %v2718
      %v3077 = vunpack.c.l.b16 %v2719
      %v3078 = vunpack.c.h.b16 %v2719
      %v3079 = vunpack.c.l.b16 %v2720
      %v3080 = vunpack.c.h.b16 %v2720
      %v3081 = vunpack.c.l.b16 %v2721
      %v3082 = vunpack.c.h.b16 %v2721
      %v3083 = vunpack.c.l.b16 %v2722
      %v3084 = vunpack.c.h.b16 %v2722
      %v3085 = vunpack.c.l.b16 %v2723
      %v3086 = vunpack.c.h.b16 %v2723
      %v3087 = vunpack.c.l.b16 %v2724
      %v3088 = vunpack.c.h.b16 %v2724
      %v3089 = vunpack.c.l.b16 %v2725
      %v3090 = vunpack.c.h.b16 %v2725
      %v3091 = vunpack.c.l.b16 %v2726
      %v3092 = vunpack.c.h.b16 %v2726
      %v3093 = vunpack.c.l.b16 %v2727
      %v3094 = vunpack.c.h.b16 %v2727
      %v3095 = vunpack.c.l.b16 %v2728
      %v3096 = vunpack.c.h.b16 %v2728
      %v3097 = vunpack.c.l.b16 %v2729
      %v3098 = vunpack.c.h.b16 %v2729
      %v3099 = vunpack.c.l.b16 %v2730
      %v3100 = vunpack.c.h.b16 %v2730
      %v3101 = vunpack.c.l.b16 %v2731
      %v3102 = vunpack.c.h.b16 %v2731
      %v3103 = vunpack.c.l.b16 %v2732
      %v3104 = vunpack.c.h.b16 %v2732
      %v3105 = vunpack.c.l.b16 %v2733
      %v3106 = vunpack.c.h.b16 %v2733
      %v3107 = vunpack.c.l.b16 %v2734
      %v3108 = vunpack.c.h.b16 %v2734
      %v3109 = vunpack.c.l.b16 %v2735
      %v3110 = vunpack.c.h.b16 %v2735
      %v3111 = vunpack.c.l.b16 %v2736
      %v3112 = vunpack.c.h.b16 %v2736
      %v3113 = vunpack.c.l.b16 %v2737
      %v3114 = vunpack.c.h.b16 %v2737
      %v3115 = vunpack.c.l.b16 %v2738
      %v3116 = vunpack.c.h.b16 %v2738
      %v3117 = vunpack.c.l.b16 %v2739
      %v3118 = vunpack.c.h.b16 %v2739
      %v3119 = vunpack.c.l.b16 %v2740
      %v3120 = vunpack.c.h.b16 %v2740
      %v3121 = vunpack.c.l.b16 %v2741
      %v3122 = vunpack.c.h.b16 %v2741
      %v3123 = vunpack.c.l.b16 %v2742
      %v3124 = vunpack.c.h.b16 %v2742
      %v3125 = vunpack.c.l.b16 %v2743
      %v3126 = vunpack.c.h.b16 %v2743
      %v3127 = vunpack.c.l.b16 %v2744
      %v3128 = vunpack.c.h.b16 %v2744
      %v3129 = vunpack.c.l.b16 %v2745
      %v3130 = vunpack.c.h.b16 %v2745
      %v3131 = vunpack.c.l.b16 %v2746
      %v3132 = vunpack.c.h.b16 %v2746
      %v3133 = vunpack.c.l.b16 %v2747
      %v3134 = vunpack.c.h.b16 %v2747
      %v3135 = vunpack.c.l.b16 %v2748
      %v3136 = vunpack.c.h.b16 %v2748
      %v3137 = vunpack.c.l.b16 %v2749
      %v3138 = vunpack.c.h.b16 %v2749
      %v3139 = vunpack.c.l.b16 %v2750
      %v3140 = vunpack.c.h.b16 %v2750
      %v3141 = vunpack.c.l.b16 %v2751
      %v3142 = vunpack.c.h.b16 %v2751
      %v3143 = vunpack.c.l.b16 %v2752
      %v3144 = vunpack.c.h.b16 %v2752
      %v3145 = vunpack.c.l.b16 %v2753
      %v3146 = vunpack.c.h.b16 %v2753
      %v3147 = vunpack.c.l.b16 %v2754
      %v3148 = vunpack.c.h.b16 %v2754
      %v3149 = vunpack.c.l.b16 %v2755
      %v3150 = vunpack.c.h.b16 %v2755
      %v3151 = vunpack.c.l.b16 %v2756
      %v3152 = vunpack.c.h.b16 %v2756
      %v3153 = vunpack.c.l.b16 %v2757
      %v3154 = vunpack.c.h.b16 %v2757
      %v3155 = vunpack.c.l.b16 %v2758
      %v3156 = vunpack.c.h.b16 %v2758
      %v3157 = vunpack.c.l.b16 %v2759
      %v3158 = vunpack.c.h.b16 %v2759
      %v3159 = vunpack.c.l.b16 %v2760
      %v3160 = vunpack.c.h.b16 %v2760
      %v3161 = vunpack.c.l.b16 %v2761
      %v3162 = vunpack.c.h.b16 %v2761
      %v3163 = vunpack.c.l.b16 %v2762
      %v3164 = vunpack.c.h.b16 %v2762
      %v3165 = vunpack.c.l.b16 %v2763
      %v3166 = vunpack.c.h.b16 %v2763
      %v3167 = vunpack.c.l.b16 %v2764
      %v3168 = vunpack.c.h.b16 %v2764
      %v3169 = vunpack.c.l.b16 %v2765
      %v3170 = vunpack.c.h.b16 %v2765
      %v3171 = vunpack.c.l.b16 %v2766
      %v3172 = vunpack.c.h.b16 %v2766
      %v3173 = vunpack.c.l.b16 %v2767
      %v3174 = vunpack.c.h.b16 %v2767
      %v3175 = vunpack.c.l.b16 %v2768
      %v3176 = vunpack.c.h.b16 %v2768
      %v3177 = vunpack.c.l.b16 %v2769
      %v3178 = vunpack.c.h.b16 %v2769
      %v3179 = vunpack.c.l.b16 %v2770
      %v3180 = vunpack.c.h.b16 %v2770
      %v3181 = vunpack.c.l.b16 %v2771
      %v3182 = vunpack.c.h.b16 %v2771
      %v3183 = vunpack.c.l.b16 %v2772
      %v3184 = vunpack.c.h.b16 %v2772
      %v3185 = vunpack.c.l.b16 %v2773
      %v3186 = vunpack.c.h.b16 %v2773
      %v3187 = vunpack.c.l.b16 %v2774
      %v3188 = vunpack.c.h.b16 %v2774
      %v3189 = vunpack.c.l.b16 %v2775
      %v3190 = vunpack.c.h.b16 %v2775
      %v3191 = vunpack.c.l.b16 %v2776
      %v3192 = vunpack.c.h.b16 %v2776
      %v3193 = vunpack.c.l.b16 %v2777
      %v3194 = vunpack.c.h.b16 %v2777
      %v3195 = vunpack.c.l.b16 %v2778
      %v3196 = vunpack.c.h.b16 %v2778
      %v3197 = vunpack.c.l.b16 %v2779
      %v3198 = vunpack.c.h.b16 %v2779
      %v3199 = vunpack.c.l.b16 %v2780
      %v3200 = vunpack.c.h.b16 %v2780
      %v3201 = vunpack.c.l.b16 %v2781
      %v3202 = vunpack.c.h.b16 %v2781
      %v3203 = vunpack.c.l.b16 %v2782
      %v3204 = vunpack.c.h.b16 %v2782
      %v3205 = vunpack.c.l.b16 %v2783
      %v3206 = vunpack.c.h.b16 %v2783
      %v3207 = vunpack.c.l.b16 %v2784
      %v3208 = vunpack.c.h.b16 %v2784
      %v3209 = vunpack.c.l.b16 %v2785
      %v3210 = vunpack.c.h.b16 %v2785
      %v3211 = vunpack.c.l.b16 %v2786
      %v3212 = vunpack.c.h.b16 %v2786
      %v3213 = vunpack.c.l.b16 %v2787
      %v3214 = vunpack.c.h.b16 %v2787
      %v3215 = vunpack.c.l.b16 %v2788
      %v3216 = vunpack.c.h.b16 %v2788
      %v3217 = vunpack.c.l.b16 %v2789
      %v3218 = vunpack.c.h.b16 %v2789
      %v3219 = vunpack.c.l.b16 %v2790
      %v3220 = vunpack.c.h.b16 %v2790
      %v3221 = vunpack.c.l.b16 %v2791
      %v3222 = vunpack.c.h.b16 %v2791
      %v3223 = vunpack.c.l.b16 %v2792
      %v3224 = vunpack.c.h.b16 %v2792
      %v3225 = vunpack.c.l.b16 %v2793
      %v3226 = vunpack.c.h.b16 %v2793
      %v3227 = vunpack.c.l.b16 %v2794
      %v3228 = vunpack.c.h.b16 %v2794
      %v3229 = vunpack.c.l.b16 %v2795
      %v3230 = vunpack.c.h.b16 %v2795
      %v3231 = vunpack.c.l.b16 %v2796
      %v3232 = vunpack.c.h.b16 %v2796
      %v3233 = vunpack.c.l.b16 %v2797
      %v3234 = vunpack.c.h.b16 %v2797
      %v3235 = vunpack.c.l.b16 %v2798
      %v3236 = vunpack.c.h.b16 %v2798
      %v3237 = vunpack.c.l.b16 %v2799
      %v3238 = vunpack.c.h.b16 %v2799
      %v3239 = vunpack.c.l.b16 %v2800
      %v3240 = vunpack.c.h.b16 %v2800
      %v3241 = vunpack.c.l.b16 %v2801
      %v3242 = vunpack.c.h.b16 %v2801
      %v3243 = vunpack.c.l.b16 %v2802
      %v3244 = vunpack.c.h.b16 %v2802
      %v3245 = vunpack.c.l.b16 %v2803
      %v3246 = vunpack.c.h.b16 %v2803
      %v3247 = vunpack.c.l.b16 %v2804
      %v3248 = vunpack.c.h.b16 %v2804
      %v3249 = vunpack.c.l.b16 %v2805
      %v3250 = vunpack.c.h.b16 %v2805
      %v3251 = vunpack.c.l.b16 %v2806
      %v3252 = vunpack.c.h.b16 %v2806
      %v3253 = vunpack.c.l.b16 %v2807
      %v3254 = vunpack.c.h.b16 %v2807
      %v3255 = vunpack.c.l.b16 %v2808
      %v3256 = vunpack.c.h.b16 %v2808
      %v3257 = vunpack.c.l.b16 %v2809
      %v3258 = vunpack.c.h.b16 %v2809
      %v3259 = vunpack.c.l.b16 %v2810
      %v3260 = vunpack.c.h.b16 %v2810
      %v3261 = vunpack.c.l.b16 %v2811
      %v3262 = vunpack.c.h.b16 %v2811
      %v3263 = vunpack.c.l.b16 %v2812
      %v3264 = vunpack.c.h.b16 %v2812
      %v3265 = vunpack.c.l.b16 %v2813
      %v3266 = vunpack.c.h.b16 %v2813
      %v3267 = vunpack.c.l.b16 %v2814
      %v3268 = vunpack.c.h.b16 %v2814
      %v3269 = vunpack.c.l.b16 %v2815
      %v3270 = vunpack.c.h.b16 %v2815
      %v3271 = vunpack.c.l.b16 %v2816
      %v3272 = vunpack.c.h.b16 %v2816
      %v3273 = vunpack.c.l.b16 %v2817
      %v3274 = vunpack.c.h.b16 %v2817
      %v3275 = vunpack.c.l.b16 %v2818
      %v3276 = vunpack.c.h.b16 %v2818
      %v3277 = vunpack.c.l.b16 %v2819
      %v3278 = vunpack.c.h.b16 %v2819
      %v3279 = vunpack.c.l.b16 %v2820
      %v3280 = vunpack.c.h.b16 %v2820
      %v3281 = vunpack.c.l.b16 %v2821
      %v3282 = vunpack.c.h.b16 %v2821
      %v3283 = vunpack.c.l.b16 %v2822
      %v3284 = vunpack.c.h.b16 %v2822
      %v3285 = vunpack.c.l.b16 %v2823
      %v3286 = vunpack.c.h.b16 %v2823
      %v3287 = vunpack.c.l.b16 %v2824
      %v3288 = vunpack.c.h.b16 %v2824
      %v3289 = vunpack.c.l.b16 %v2825
      %v3290 = vunpack.c.h.b16 %v2825
      %v3291 = vunpack.c.l.b16 %v2826
      %v3292 = vunpack.c.h.b16 %v2826
      %v3293 = vunpack.c.l.b16 %v2827
      %v3294 = vunpack.c.h.b16 %v2827
      %v3295 = vunpack.c.l.b16 %v2828
      %v3296 = vunpack.c.h.b16 %v2828
      %v3297 = vunpack.c.l.b16 %v2829
      %v3298 = vunpack.c.h.b16 %v2829
      %v3299 = vunpack.c.l.b16 %v2830
      %v3300 = vunpack.c.h.b16 %v2830
      %v3301 = vunpack.c.l.b16 %v2831
      %v3302 = vunpack.c.h.b16 %v2831
      %v3303 = vunpack.c.l.b16 %v2832
      %v3304 = vunpack.c.h.b16 %v2832
      %v3305 = vunpack.c.l.b16 %v2833
      %v3306 = vunpack.c.h.b16 %v2833
      %v3307 = vunpack.c.l.b16 %v2834
      %v3308 = vunpack.c.h.b16 %v2834
      %v3309 = vunpack.c.l.b16 %v2835
      %v3310 = vunpack.c.h.b16 %v2835
      %v3311 = vunpack.c.l.b16 %v2836
      %v3312 = vunpack.c.h.b16 %v2836
      %v3313 = vunpack.c.l.b16 %v2837
      %v3314 = vunpack.c.h.b16 %v2837
      %v3315 = vunpack.c.l.b16 %v2838
      %v3316 = vunpack.c.h.b16 %v2838
      %v3317 = vunpack.c.l.b16 %v2839
      %v3318 = vunpack.c.h.b16 %v2839
      %v3319 = vunpack.c.l.b16 %v2840
      %v3320 = vunpack.c.h.b16 %v2840
      %v3321 = vunpack.c.l.b16 %v2841
      %v3322 = vunpack.c.h.b16 %v2841
      %v3323 = vunpack.c.l.b16 %v2842
      %v3324 = vunpack.c.h.b16 %v2842
      %v3325 = vunpack.c.l.b16 %v2843
      %v3326 = vunpack.c.h.b16 %v2843
      %v3327 = vunpack.c.l.b16 %v2844
      %v3328 = vunpack.c.h.b16 %v2844
      %v3329 = vunpack.c.l.b16 %v2845
      %v3330 = vunpack.c.h.b16 %v2845
      %v3331 = vunpack.c.l.b16 %v2846
      %v3332 = vunpack.c.h.b16 %v2846
      %v3333 = vunpack.c.l.b16 %v2847
      %v3334 = vunpack.c.h.b16 %v2847
      %v3335 = vunpack.c.l.b16 %v2848
      %v3336 = vunpack.c.h.b16 %v2848
      %v3337 = vunpack.c.l.b16 %v2849
      %v3338 = vunpack.c.h.b16 %v2849
      %v3339 = vunpack.c.l.b16 %v2850
      %v3340 = vunpack.c.h.b16 %v2850
      %v3341 = vunpack.c.l.b16 %v2851
      %v3342 = vunpack.c.h.b16 %v2851
      %v3343 = vunpack.c.l.b16 %v2852
      %v3344 = vunpack.c.h.b16 %v2852
      %v3345 = vpack.c.b16 %v3027, %v3025
      %v3346 = vpack.c.b16 %v3028, %v3026
      %v3347 = vpack.c.b16 %v3031, %v3029
      %v3348 = vpack.c.b16 %v3032, %v3030
      %v3349 = vpack.c.b16 %v3035, %v3033
      %v3350 = vpack.c.b16 %v3036, %v3034
      %v3351 = vpack.c.b16 %v3039, %v3037
      %v3352 = vpack.c.b16 %v3040, %v3038
      %v3353 = vpack.c.b16 %v3043, %v3041
      %v3354 = vpack.c.b16 %v3044, %v3042
      %v3355 = vpack.c.b16 %v3047, %v3045
      %v3356 = vpack.c.b16 %v3048, %v3046
      %v3357 = vpack.c.b16 %v3051, %v3049
      %v3358 = vpack.c.b16 %v3052, %v3050
      %v3359 = vpack.c.b16 %v3055, %v3053
      %v3360 = vpack.c.b16 %v3056, %v3054
      %v3361 = vpack.c.b16 %v3059, %v3057
      %v3362 = vpack.c.b16 %v3060, %v3058
      %v3363 = vpack.c.b16 %v3063, %v3061
      %v3364 = vpack.c.b16 %v3064, %v3062
      %v3365 = vpack.c.b16 %v3067, %v3065
      %v3366 = vpack.c.b16 %v3068, %v3066
      %v3367 = vpack.c.b16 %v3071, %v3069
      %v3368 = vpack.c.b16 %v3072, %v3070
      %v3369 = vpack.c.b16 %v3075, %v3073
      %v3370 = vpack.c.b16 %v3076, %v3074
      %v3371 = vpack.c.b16 %v3079, %v3077
      %v3372 = vpack.c.b16 %v3080, %v3078
      %v3373 = vpack.c.b16 %v3083, %v3081
      %v3374 = vpack.c.b16 %v3084, %v3082
      %v3375 = vpack.c.b16 %v3087, %v3085
      %v3376 = vpack.c.b16 %v3088, %v3086
      %v3377 = vpack.c.b16 %v3091, %v3089
      %v3378 = vpack.c.b16 %v3092, %v3090
      %v3379 = vpack.c.b16 %v3095, %v3093
      %v3380 = vpack.c.b16 %v3096, %v3094
      %v3381 = vpack.c.b16 %v3099, %v3097
      %v3382 = vpack.c.b16 %v3100, %v3098
      %v3383 = vpack.c.b16 %v3103, %v3101
      %v3384 = vpack.c.b16 %v3104, %v3102
      %v3385 = vpack.c.b16 %v3107, %v3105
      %v3386 = vpack.c.b16 %v3108, %v3106
      %v3387 = vpack.c.b16 %v3111, %v3109
      %v3388 = vpack.c.b16 %v3112, %v3110
      %v3389 = vpack.c.b16 %v3115, %v3113
      %v3390 = vpack.c.b16 %v3116, %v3114
      %v3391 = vpack.c.b16 %v3119, %v3117
      %v3392 = vpack.c.b16 %v3120, %v3118
      %v3393 = vpack.c.b16 %v3123, %v3121
      %v3394 = vpack.c.b16 %v3124, %v3122
      %v3395 = vpack.c.b16 %v3127, %v3125
      %v3396 = vpack.c.b16 %v3128, %v3126
      %v3397 = vpack.c.b16 %v3131, %v3129
      %v3398 = vpack.c.b16 %v3132, %v3130
      %v3399 = vpack.c.b16 %v3135, %v3133
      %v3400 = vpack.c.b16 %v3136, %v3134
      %v3401 = vpack.c.b16 %v3139, %v3137
      %v3402 = vpack.c.b16 %v3140, %v3138
      %v3403 = vpack.c.b16 %v3143, %v3141
      %v3404 = vpack.c.b16 %v3144, %v3142
      %v3405 = vpack.c.b16 %v3147, %v3145
      %v3406 = vpack.c.b16 %v3148, %v3146
      %v3407 = vpack.c.b16 %v3151, %v3149
      %v3408 = vpack.c.b16 %v3152, %v3150
      %v3409 = vpack.c.b16 %v3155, %v3153
      %v3410 = vpack.c.b16 %v3156, %v3154
      %v3411 = vpack.c.b16 %v3159, %v3157
      %v3412 = vpack.c.b16 %v3160, %v3158
      %v3413 = vpack.c.b16 %v3163, %v3161
      %v3414 = vpack.c.b16 %v3164, %v3162
      %v3415 = vpack.c.b16 %v3167, %v3165
      %v3416 = vpack.c.b16 %v3168, %v3166
      %v3417 = vpack.c.b16 %v3171, %v3169
      %v3418 = vpack.c.b16 %v3172, %v3170
      %v3419 = vpack.c.b16 %v3175, %v3173
      %v3420 = vpack.c.b16 %v3176, %v3174
      %v3421 = vpack.c.b16 %v3179, %v3177
      %v3422 = vpack.c.b16 %v3180, %v3178
      %v3423 = vpack.c.b16 %v3183, %v3181
      %v3424 = vpack.c.b16 %v3184, %v3182
      %v3425 = vpack.c.b16 %v3187, %v3185
      %v3426 = vpack.c.b16 %v3188, %v3186
      %v3427 = vpack.c.b16 %v3191, %v3189
      %v3428 = vpack.c.b16 %v3192, %v3190
      %v3429 = vpack.c.b16 %v3195, %v3193
      %v3430 = vpack.c.b16 %v3196, %v3194
      %v3431 = vpack.c.b16 %v3199, %v3197
      %v3432 = vpack.c.b16 %v3200, %v3198
      %v3433 = vpack.c.b16 %v3203, %v3201
      %v3434 = vpack.c.b16 %v3204, %v3202
      %v3435 = vpack.c.b16 %v3207, %v3205
      %v3436 = vpack.c.b16 %v3208, %v3206
      %v3437 = vpack.c.b16 %v3211, %v3209
      %v3438 = vpack.c.b16 %v3212, %v3210
      %v3439 = vpack.c.b16 %v3215, %v3213
      %v3440 = vpack.c.b16 %v3216, %v3214
      %v3441 = vpack.c.b16 %v3219, %v3217
      %v3442 = vpack.c.b16 %v3220, %v3218
      %v3443 = vpack.c.b16 %v3223, %v3221
      %v3444 = vpack.c.b16 %v3224, %v3222
      %v3445 = vpack.c.b16 %v3227, %v3225
      %v3446 = vpack.c.b16 %v3228, %v3226
      %v3447 = vpack.c.b16 %v3231, %v3229
      %v3448 = vpack.c.b16 %v3232, %v3230
      %v3449 = vpack.c.b16 %v3235, %v3233
      %v3450 = vpack.c.b16 %v3236, %v3234
      %v3451 = vpack.c.b16 %v3239, %v3237
      %v3452 = vpack.c.b16 %v3240, %v3238
      %v3453 = vpack.c.b16 %v3243, %v3241
      %v3454 = vpack.c.b16 %v3244, %v3242
      %v3455 = vpack.c.b16 %v3247, %v3245
      %v3456 = vpack.c.b16 %v3248, %v3246
      %v3457 = vpack.c.b16 %v3251, %v3249
      %v3458 = vpack.c.b16 %v3252, %v3250
      %v3459 = vpack.c.b16 %v3255, %v3253
      %v3460 = vpack.c.b16 %v3256, %v3254
      %v3461 = vpack.c.b16 %v3259, %v3257
      %v3462 = vpack.c.b16 %v3260, %v3258
      %v3463 = vpack.c.b16 %v3263, %v3261
      %v3464 = vpack.c.b16 %v3264, %v3262
      %v3465 = vpack.c.b16 %v3267, %v3265
      %v3466 = vpack.c.b16 %v3268, %v3266
      %v3467 = vpack.c.b16 %v3271, %v3269
      %v3468 = vpack.c.b16 %v3272, %v3270
      %v3469 = vpack.c.b16 %v3275, %v3273
      %v3470 = vpack.c.b16 %v3276, %v3274
      %v3471 = vpack.c.b16 %v3279, %v3277
      %v3472 = vpack.c.b16 %v3280, %v3278
      %v3473 = vpack.c.b16 %v3283, %v3281
      %v3474 = vpack.c.b16 %v3284, %v3282
      %v3475 = vpack.c.b16 %v3287, %v3285
      %v3476 = vpack.c.b16 %v3288, %v3286
      %v3477 = vpack.c.b16 %v3291, %v3289
      %v3478 = vpack.c.b16 %v3292, %v3290
      %v3479 = vpack.c.b16 %v3295, %v3293
      %v3480 = vpack.c.b16 %v3296, %v3294
      %v3481 = vpack.c.b16 %v3299, %v3297
      %v3482 = vpack.c.b16 %v3300, %v3298
      %v3483 = vpack.c.b16 %v3303, %v3301
      %v3484 = vpack.c.b16 %v3304, %v3302
      %v3485 = vpack.c.b16 %v3307, %v3305
      %v3486 = vpack.c.b16 %v3308, %v3306
      %v3487 = vpack.c.b16 %v3311, %v3309
      %v3488 = vpack.c.b16 %v3312, %v3310
      %v3489 = vpack.c.b16 %v3315, %v3313
      %v3490 = vpack.c.b16 %v3316, %v3314
      %v3491 = vpack.c.b16 %v3319, %v3317
      %v3492 = vpack.c.b16 %v3320, %v3318
      %v3493 = vpack.c.b16 %v3323, %v3321
      %v3494 = vpack.c.b16 %v3324, %v3322
      %v3495 = vpack.c.b16 %v3327, %v3325
      %v3496 = vpack.c.b16 %v3328, %v3326
      %v3497 = vpack.c.b16 %v3331, %v3329
      %v3498 = vpack.c.b16 %v3332, %v3330
      %v3499 = vpack.c.b16 %v3335, %v3333
      %v3500 = vpack.c.b16 %v3336, %v3334
      %v3501 = vpack.c.b16 %v3339, %v3337
      %v3502 = vpack.c.b16 %v3340, %v3338
      %v3503 = vpack.c.b16 %v3343, %v3341
      %v3504 = vpack.c.b16 %v3344, %v3342
      %3665 = vmatprep.subr.bf16.mxu0 %v3346
      %3666 = vmatpush1.bf16.msra.mxu0 %v3345
      %3667 = vmatprep.subr.bf16.mxu0 %v3348
      %3668 = vmatpush1.bf16.msra.mxu0 %v3347
      %3669 = vmatprep.subr.bf16.mxu0 %v3350
      %3670 = vmatpush1.bf16.msra.mxu0 %v3349
      %3671 = vmatprep.subr.bf16.mxu0 %v3352
      %3672 = vmatpush1.bf16.msra.mxu0 %v3351
      %3673 = vmatprep.subr.bf16.mxu0 %v3354
      %3674 = vmatpush1.bf16.msra.mxu0 %v3353
      %3675 = vmatprep.subr.bf16.mxu0 %v3356
      %3676 = vmatpush1.bf16.msra.mxu0 %v3355
      %3677 = vmatprep.subr.bf16.mxu0 %v3358
      %3678 = vmatpush1.bf16.msra.mxu0 %v3357
      %3679 = vmatprep.subr.bf16.mxu0 %v3360
      %3680 = vmatpush1.bf16.msra.mxu0 %v3359
      %3681 = vmatprep.subr.bf16.mxu0 %v3362
      %3682 = vmatpush1.bf16.msra.mxu0 %v3361
      %3683 = vmatprep.subr.bf16.mxu0 %v3364
      %3684 = vmatpush1.bf16.msra.mxu0 %v3363
      %3685 = vmatprep.subr.bf16.mxu0 %v3366
      %3686 = vmatpush1.bf16.msra.mxu0 %v3365
      %3687 = vmatprep.subr.bf16.mxu0 %v3368
      %3688 = vmatpush1.bf16.msra.mxu0 %v3367
      %3689 = vmatprep.subr.bf16.mxu0 %v3370
      %3690 = vmatpush1.bf16.msra.mxu0 %v3369
      %3691 = vmatprep.subr.bf16.mxu0 %v3372
      %3692 = vmatpush1.bf16.msra.mxu0 %v3371
      %3693 = vmatprep.subr.bf16.mxu0 %v3374
      %3694 = vmatpush1.bf16.msra.mxu0 %v3373
      %3695 = vmatprep.subr.bf16.mxu0 %v3376
      %3696 = vmatpush1.bf16.msra.mxu0 %v3375
      %3697 = vmatprep.mubr.bf16.mxu0 %v2623
      %3698 = vmatmul.mubr.bf16.gmra.mrb[0].mxu0 %v2622
      %v3699 = vpop.f32.mrb[0].mxu0
      %v3700 = vadd.f32 %v2858, %v3699
      %v3701 = vpop.f32.mrb[0].mxu0
      %v3702 = vadd.f32 %v2862, %v3701
      %v3703 = vpop.f32.mrb[0].mxu0
      %v3704 = vadd.f32 %v2858, %v3703
      %v3705 = vpop.f32.mrb[0].mxu0
      %v3706 = vadd.f32 %v2862, %v3705
      %3707 = vdwg.mxu0
      %3708 = vmatprep.subr.bf16.mxu0 %v3378
      %3709 = vmatpush1.bf16.msra.mxu0 %v3377
      %3710 = vmatprep.subr.bf16.mxu0 %v3380
      %3711 = vmatpush1.bf16.msra.mxu0 %v3379
      %3712 = vmatprep.subr.bf16.mxu0 %v3382
      %3713 = vmatpush1.bf16.msra.mxu0 %v3381
      %3714 = vmatprep.subr.bf16.mxu0 %v3384
      %3715 = vmatpush1.bf16.msra.mxu0 %v3383
      %3716 = vmatprep.subr.bf16.mxu0 %v3386
      %3717 = vmatpush1.bf16.msra.mxu0 %v3385
      %3718 = vmatprep.subr.bf16.mxu0 %v3388
      %3719 = vmatpush1.bf16.msra.mxu0 %v3387
      %3720 = vmatprep.subr.bf16.mxu0 %v3390
      %3721 = vmatpush1.bf16.msra.mxu0 %v3389
      %3722 = vmatprep.subr.bf16.mxu0 %v3392
      %3723 = vmatpush1.bf16.msra.mxu0 %v3391
      %3724 = vmatprep.subr.bf16.mxu0 %v3394
      %3725 = vmatpush1.bf16.msra.mxu0 %v3393
      %3726 = vmatprep.subr.bf16.mxu0 %v3396
      %3727 = vmatpush1.bf16.msra.mxu0 %v3395
      %3728 = vmatprep.subr.bf16.mxu0 %v3398
      %3729 = vmatpush1.bf16.msra.mxu0 %v3397
      %3730 = vmatprep.subr.bf16.mxu0 %v3400
      %3731 = vmatpush1.bf16.msra.mxu0 %v3399
      %3732 = vmatprep.subr.bf16.mxu0 %v3402
      %3733 = vmatpush1.bf16.msra.mxu0 %v3401
      %3734 = vmatprep.subr.bf16.mxu0 %v3404
      %3735 = vmatpush1.bf16.msra.mxu0 %v3403
      %3736 = vmatprep.subr.bf16.mxu0 %v3406
      %3737 = vmatpush1.bf16.msra.mxu0 %v3405
      %3738 = vmatprep.subr.bf16.mxu0 %v3408
      %3739 = vmatpush1.bf16.msra.mxu0 %v3407
      %3740 = vmatprep.mubr.bf16.mxu0 %v2654
      %3741 = vmatmul.mubr.bf16.gmra.mrb[0].mxu0 %v2642
      %v3742 = vpop.f32.mrb[0].mxu0
      %v3743 = vadd.f32 %v3700, %v3742
      %v3744 = vpop.f32.mrb[0].mxu0
      %v3745 = vadd.f32 %v3702, %v3744
      %v3746 = vpop.f32.mrb[0].mxu0
      %v3747 = vadd.f32 %v3704, %v3746
      %v3748 = vpop.f32.mrb[0].mxu0
      %v3749 = vadd.f32 %v3706, %v3748
      %3750 = vdwg.mxu0
      %3751 = vmatprep.subr.bf16.mxu0 %v3410
      %3752 = vmatpush1.bf16.msra.mxu0 %v3409
      %3753 = vmatprep.subr.bf16.mxu0 %v3412
      %3754 = vmatpush1.bf16.msra.mxu0 %v3411
      %3755 = vmatprep.subr.bf16.mxu0 %v3414
      %3756 = vmatpush1.bf16.msra.mxu0 %v3413
      %3757 = vmatprep.subr.bf16.mxu0 %v3416
      %3758 = vmatpush1.bf16.msra.mxu0 %v3415
      %3759 = vmatprep.subr.bf16.mxu0 %v3418
      %3760 = vmatpush1.bf16.msra.mxu0 %v3417
      %3761 = vmatprep.subr.bf16.mxu0 %v3420
      %3762 = vmatpush1.bf16.msra.mxu0 %v3419
      %3763 = vmatprep.subr.bf16.mxu0 %v3422
      %3764 = vmatpush1.bf16.msra.mxu0 %v3421
      %3765 = vmatprep.subr.bf16.mxu0 %v3424
      %3766 = vmatpush1.bf16.msra.mxu0 %v3423
      %3767 = vmatprep.subr.bf16.mxu0 %v3426
      %3768 = vmatpush1.bf16.msra.mxu0 %v3425
      %3769 = vmatprep.subr.bf16.mxu0 %v3428
      %3770 = vmatpush1.bf16.msra.mxu0 %v3427
      %3771 = vmatprep.subr.bf16.mxu0 %v3430
      %3772 = vmatpush1.bf16.msra.mxu0 %v3429
      %3773 = vmatprep.subr.bf16.mxu0 %v3432
      %3774 = vmatpush1.bf16.msra.mxu0 %v3431
      %3775 = vmatprep.subr.bf16.mxu0 %v3434
      %3776 = vmatpush1.bf16.msra.mxu0 %v3433
      %3777 = vmatprep.subr.bf16.mxu0 %v3436
      %3778 = vmatpush1.bf16.msra.mxu0 %v3435
      %3779 = vmatprep.subr.bf16.mxu0 %v3438
      %3780 = vmatpush1.bf16.msra.mxu0 %v3437
      %3781 = vmatprep.subr.bf16.mxu0 %v3440
      %3782 = vmatpush1.bf16.msra.mxu0 %v3439
      %3783 = vmatprep.mubr.bf16.mxu0 %v2662
      %3784 = vmatmul.mubr.bf16.gmra.mrb[0].mxu0 %v2659
      %v3785 = vpop.f32.mrb[0].mxu0
      %v3786 = vadd.f32 %v3743, %v3785
      %v3787 = vpop.f32.mrb[0].mxu0
      %v3788 = vadd.f32 %v3745, %v3787
      %v3789 = vpop.f32.mrb[0].mxu0
      %v3790 = vadd.f32 %v3747, %v3789
      %v3791 = vpop.f32.mrb[0].mxu0
      %v3792 = vadd.f32 %v3749, %v3791
      %3793 = vdwg.mxu0
      %3794 = vmatprep.subr.bf16.mxu0 %v3442
      %3795 = vmatpush1.bf16.msra.mxu0 %v3441
      %3796 = vmatprep.subr.bf16.mxu0 %v3444
      %3797 = vmatpush1.bf16.msra.mxu0 %v3443
      %3798 = vmatprep.subr.bf16.mxu0 %v3446
      %3799 = vmatpush1.bf16.msra.mxu0 %v3445
      %3800 = vmatprep.subr.bf16.mxu0 %v3448
      %3801 = vmatpush1.bf16.msra.mxu0 %v3447
      %3802 = vmatprep.subr.bf16.mxu0 %v3450
      %3803 = vmatpush1.bf16.msra.mxu0 %v3449
      %3804 = vmatprep.subr.bf16.mxu0 %v3452
      %3805 = vmatpush1.bf16.msra.mxu0 %v3451
      %3806 = vmatprep.subr.bf16.mxu0 %v3454
      %3807 = vmatpush1.bf16.msra.mxu0 %v3453
      %3808 = vmatprep.subr.bf16.mxu0 %v3456
      %3809 = vmatpush1.bf16.msra.mxu0 %v3455
      %3810 = vmatprep.subr.bf16.mxu0 %v3458
      %3811 = vmatpush1.bf16.msra.mxu0 %v3457
      %3812 = vmatprep.subr.bf16.mxu0 %v3460
      %3813 = vmatpush1.bf16.msra.mxu0 %v3459
      %3814 = vmatprep.subr.bf16.mxu0 %v3462
      %3815 = vmatpush1.bf16.msra.mxu0 %v3461
      %3816 = vmatprep.subr.bf16.mxu0 %v3464
      %3817 = vmatpush1.bf16.msra.mxu0 %v3463
      %3818 = vmatprep.subr.bf16.mxu0 %v3466
      %3819 = vmatpush1.bf16.msra.mxu0 %v3465
      %3820 = vmatprep.subr.bf16.mxu0 %v3468
      %3821 = vmatpush1.bf16.msra.mxu0 %v3467
      %3822 = vmatprep.subr.bf16.mxu0 %v3470
      %3823 = vmatpush1.bf16.msra.mxu0 %v3469
      %3824 = vmatprep.subr.bf16.mxu0 %v3472
      %3825 = vmatpush1.bf16.msra.mxu0 %v3471
      %3826 = vmatprep.mubr.bf16.mxu0 %v2682
      %3827 = vmatmul.mubr.bf16.gmra.mrb[0].mxu0 %v2673
      %v3828 = vpop.f32.mrb[0].mxu0
      %v3829 = vadd.f32 %v3786, %v3828
      %v3830 = vpop.f32.mrb[0].mxu0
      %v3831 = vadd.f32 %v3788, %v3830
      %v3832 = vpop.f32.mrb[0].mxu0
      %v3833 = vadd.f32 %v3790, %v3832
      %v3834 = vpop.f32.mrb[0].mxu0
      %v3835 = vadd.f32 %v3792, %v3834
      %3836 = vdwg.mxu0
      %3837 = vmatprep.subr.bf16.mxu0 %v3474
      %3838 = vmatpush1.bf16.msra.mxu0 %v3473
      %3839 = vmatprep.subr.bf16.mxu0 %v3476
      %3840 = vmatpush1.bf16.msra.mxu0 %v3475
      %3841 = vmatprep.subr.bf16.mxu0 %v3478
      %3842 = vmatpush1.bf16.msra.mxu0 %v3477
      %3843 = vmatprep.subr.bf16.mxu0 %v3480
      %3844 = vmatpush1.bf16.msra.mxu0 %v3479
      %3845 = vmatprep.subr.bf16.mxu0 %v3482
      %3846 = vmatpush1.bf16.msra.mxu0 %v3481
      %3847 = vmatprep.subr.bf16.mxu0 %v3484
      %3848 = vmatpush1.bf16.msra.mxu0 %v3483
      %3849 = vmatprep.subr.bf16.mxu0 %v3486
      %3850 = vmatpush1.bf16.msra.mxu0 %v3485
      %3851 = vmatprep.subr.bf16.mxu0 %v3488
      %3852 = vmatpush1.bf16.msra.mxu0 %v3487
      %3853 = vmatprep.subr.bf16.mxu0 %v3490
      %3854 = vmatpush1.bf16.msra.mxu0 %v3489
      %3855 = vmatprep.subr.bf16.mxu0 %v3492
      %3856 = vmatpush1.bf16.msra.mxu0 %v3491
      %3857 = vmatprep.subr.bf16.mxu0 %v3494
      %3858 = vmatpush1.bf16.msra.mxu0 %v3493
      %3859 = vmatprep.subr.bf16.mxu0 %v3496
      %3860 = vmatpush1.bf16.msra.mxu0 %v3495
      %3861 = vmatprep.subr.bf16.mxu0 %v3498
      %3862 = vmatpush1.bf16.msra.mxu0 %v3497
      %3863 = vmatprep.subr.bf16.mxu0 %v3500
      %3864 = vmatpush1.bf16.msra.mxu0 %v3499
      %3865 = vmatprep.subr.bf16.mxu0 %v3502
      %3866 = vmatpush1.bf16.msra.mxu0 %v3501
      %3867 = vmatprep.subr.bf16.mxu0 %v3504
      %3868 = vmatpush1.bf16.msra.mxu0 %v3503
      %3869 = vmatprep.mubr.bf16.mxu0 %v2690
      %3870 = vmatmul.mubr.bf16.gmra.mrb[0].mxu0 %v2687
      %v3871 = vpop.f32.mrb[0].mxu0
      %v3872 = vadd.f32 %v3829, %v3871
      %v3873 = vpop.f32.mrb[0].mxu0
      %v3874 = vadd.f32 %v3831, %v3873
      %v3875 = vpop.f32.mrb[0].mxu0
      %v3876 = vadd.f32 %v3833, %v3875
      %v3877 = vpop.f32.mrb[0].mxu0
      %v3878 = vadd.f32 %v3835, %v3877
      %3879 = vdwg.mxu0
      %v3880 = vmax.f32 %v3872, 0.0
      %v3881 = vmax.f32 %v3874, 0.0
      %v3882 = vmax.f32 %v3876, 0.0
      %v3883 = vmax.f32 %v3878, 0.0
      %v3884 = vpack.c.bf16 %v3882, %v3880
      %v3885 = vpack.c.bf16 %v3883, %v3881
      %v3888 = vunpack.c.l.b16 %v3884
      %v3889 = vunpack.c.l.b16 %v3885
      %v3890 = vunpack.c.h.b16 %v3884
      %v3891 = vunpack.c.h.b16 %v3885
      %v3892 = vpack.c.b16 %v3889, %v3888
      %v3893 = vpack.c.b16 %v3891, %v3890
      %v3894 = vrot.slane %v3892, 7
      %v3895 = vrot.slane %v3894, 4
      %v3896 = vrot.slane %v3893, 7
      %v3897 = vsel %vm1305, %v3895, %v3896
      %v3898 = vrot.slane %v3896, 4
      %3902 = vst [vmem:[#allocation2] sm:$0xee] %v3894
      %3903 = vst [vmem:[#allocation2 + $0x8] sm:$0xff] %v3897
      %3904 = vst [vmem:[#allocation2 + $0x10] sm:$0x11] %v3898
      %v3905 = vld [vmem:[#allocation2] sm:$0xff]
      %v3906 = vld [vmem:[#allocation2 + $0x8] sm:$0xff]
      %v3907 = vld [vmem:[#allocation2 + $0x10] sm:$0x33]
      %v3910 = vunpack.c.l.b16 %v3905
      %v3911 = vunpack.c.h.b16 %v3905
      %v3912 = vunpack.c.l.b16 %v3906
      %v3913 = vunpack.c.h.b16 %v3906
      %v3914 = vpack.c.b16 %v3912, %v3910
      %v3915 = vpack.c.b16 %v3913, %v3911
      %v3919 = vunpack.c.l.b16 %v3907
      %v3920 = vunpack.c.h.b16 %v3907
      %v3921 = vpack.c.b16 %v3919, %v3919
      %v3922 = vpack.c.b16 %v3920, %v3920
      %v3924 = vshrl.u32 %v3914, 16
      %v3926 = vshll.u32 %v3914, 16
      %v3928 = vrot.slane %v3926, 1
      %v3929 = vor.u32 %v3924, %v3928
      %v3931 = vshll.u32 %v3921, 16
      %v3933 = vrot.slane %v3931, 1
      %v3934 = vsel %vm1335, %v3929, %v3933
      %v3936 = vshrl.u32 %v3915, 16
      %v3938 = vshll.u32 %v3915, 16
      %v3940 = vrot.slane %v3938, 1
      %v3941 = vor.u32 %v3936, %v3940
      %v3943 = vshll.u32 %v3922, 16
      %v3945 = vrot.slane %v3943, 1
      %v3946 = vsel %vm1335, %v3941, %v3945
      %v3949 = vrot.slane %v3914, 1
      %v3950 = vrot.slane %v3921, 1
      %v3951 = vsel %vm1362, %v3949, %v3950
      %v3952 = vrot.slane %v3915, 1
      %v3953 = vrot.slane %v3922, 1
      %v3954 = vsel %vm1362, %v3952, %v3953
      %v3957 = vrot.slane %v3924, 1
      %v3958 = vrot.slane %v3926, 2
      %v3959 = vor.u32 %v3957, %v3958
      %v3960 = vshrl.u32 %v3921, 16
      %v3962 = vrot.slane %v3960, 1
      %v3963 = vrot.slane %v3931, 2
      %v3964 = vor.u32 %v3962, %v3963
      %v3965 = vsel %vm1371, %v3959, %v3964
      %v3966 = vrot.slane %v3936, 1
      %v3967 = vrot.slane %v3938, 2
      %v3968 = vor.u32 %v3966, %v3967
      %v3969 = vshrl.u32 %v3922, 16
      %v3971 = vrot.slane %v3969, 1
      %v3972 = vrot.slane %v3943, 2
      %v3973 = vor.u32 %v3971, %v3972
      %v3974 = vsel %vm1371, %v3968, %v3973
      %v3977 = vrot.slane %v3914, 2
      %v3978 = vrot.slane %v3921, 2
      %v3979 = vsel %vm1392, %v3977, %v3978
      %v3980 = vrot.slane %v3915, 2
      %v3981 = vrot.slane %v3922, 2
      %v3982 = vsel %vm1392, %v3980, %v3981
      %v3985 = vld [vmem:[%s15] sm:$0xff]
      %v3986 = vld [vmem:[%s15 + $0x8] sm:$0xff]
      %v3987 = vld [vmem:[%s15 + $0x10] sm:$0xff]
      %v3988 = vld [vmem:[%s15 + $0x18] sm:$0xff]
      %v3989 = vld [vmem:[%s15 + $0x20] sm:$0xff]
      %v3990 = vld [vmem:[%s15 + $0x28] sm:$0xff]
      %v3991 = vld [vmem:[%s15 + $0x30] sm:$0xff]
      %v3992 = vld [vmem:[%s15 + $0x38] sm:$0xff]
      %v3993 = vld [vmem:[%s15 + $0x40] sm:$0xff]
      %v3994 = vld [vmem:[%s15 + $0x48] sm:$0xff]
      %v3995 = vld [vmem:[%s15 + $0x50] sm:$0xff]
      %v3996 = vld [vmem:[%s15 + $0x58] sm:$0xff]
      %v3997 = vld [vmem:[%s15 + $0x60] sm:$0xff]
      %v3998 = vld [vmem:[%s15 + $0x68] sm:$0xff]
      %v3999 = vld [vmem:[%s15 + $0x70] sm:$0xff]
      %v4000 = vld [vmem:[%s15 + $0x78] sm:$0xff]
      %v4001 = vld [vmem:[%s15 + $0x80] sm:$0xff]
      %v4002 = vld [vmem:[%s15 + $0x88] sm:$0xff]
      %v4003 = vld [vmem:[%s15 + $0x90] sm:$0xff]
      %v4004 = vld [vmem:[%s15 + $0x98] sm:$0xff]
      %v4005 = vld [vmem:[%s15 + $0xa0] sm:$0xff]
      %v4006 = vld [vmem:[%s15 + $0xa8] sm:$0xff]
      %v4007 = vld [vmem:[%s15 + $0xb0] sm:$0xff]
      %v4008 = vld [vmem:[%s15 + $0xb8] sm:$0xff]
      %v4009 = vld [vmem:[%s15 + $0xc0] sm:$0xff]
      %v4010 = vld [vmem:[%s15 + $0xc8] sm:$0xff]
      %v4011 = vld [vmem:[%s15 + $0xd0] sm:$0xff]
      %v4012 = vld [vmem:[%s15 + $0xd8] sm:$0xff]
      %v4013 = vld [vmem:[%s15 + $0xe0] sm:$0xff]
      %v4014 = vld [vmem:[%s15 + $0xe8] sm:$0xff]
      %v4015 = vld [vmem:[%s15 + $0xf0] sm:$0xff]
      %v4016 = vld [vmem:[%s15 + $0xf8] sm:$0xff]
      %v4017 = vld [vmem:[%s15 + $0x100] sm:$0xff]
      %v4018 = vld [vmem:[%s15 + $0x108] sm:$0xff]
      %v4019 = vld [vmem:[%s15 + $0x110] sm:$0xff]
      %v4020 = vld [vmem:[%s15 + $0x118] sm:$0xff]
      %v4021 = vld [vmem:[%s15 + $0x120] sm:$0xff]
      %v4022 = vld [vmem:[%s15 + $0x128] sm:$0xff]
      %v4023 = vld [vmem:[%s15 + $0x130] sm:$0xff]
      %v4024 = vld [vmem:[%s15 + $0x138] sm:$0xff]
      %v4025 = vld [vmem:[%s15 + $0x140] sm:$0xff]
      %v4026 = vld [vmem:[%s15 + $0x148] sm:$0xff]
      %v4027 = vld [vmem:[%s15 + $0x150] sm:$0xff]
      %v4028 = vld [vmem:[%s15 + $0x158] sm:$0xff]
      %v4029 = vld [vmem:[%s15 + $0x160] sm:$0xff]
      %v4030 = vld [vmem:[%s15 + $0x168] sm:$0xff]
      %v4031 = vld [vmem:[%s15 + $0x170] sm:$0xff]
      %v4032 = vld [vmem:[%s15 + $0x178] sm:$0xff]
      %v4033 = vld [vmem:[%s15 + $0x180] sm:$0xff]
      %v4034 = vld [vmem:[%s15 + $0x188] sm:$0xff]
      %v4035 = vld [vmem:[%s15 + $0x190] sm:$0xff]
      %v4036 = vld [vmem:[%s15 + $0x198] sm:$0xff]
      %v4037 = vld [vmem:[%s15 + $0x1a0] sm:$0xff]
      %v4038 = vld [vmem:[%s15 + $0x1a8] sm:$0xff]
      %v4039 = vld [vmem:[%s15 + $0x1b0] sm:$0xff]
      %v4040 = vld [vmem:[%s15 + $0x1b8] sm:$0xff]
      %v4041 = vld [vmem:[%s15 + $0x1c0] sm:$0xff]
      %v4042 = vld [vmem:[%s15 + $0x1c8] sm:$0xff]
      %v4043 = vld [vmem:[%s15 + $0x1d0] sm:$0xff]
      %v4044 = vld [vmem:[%s15 + $0x1d8] sm:$0xff]
      %v4045 = vld [vmem:[%s15 + $0x1e0] sm:$0xff]
      %v4046 = vld [vmem:[%s15 + $0x1e8] sm:$0xff]
      %v4047 = vld [vmem:[%s15 + $0x1f0] sm:$0xff]
      %v4048 = vld [vmem:[%s15 + $0x1f8] sm:$0xff]
      %v4049 = vld [vmem:[%s15 + $0x200] sm:$0xff]
      %v4050 = vld [vmem:[%s15 + $0x208] sm:$0xff]
      %v4051 = vld [vmem:[%s15 + $0x210] sm:$0xff]
      %v4052 = vld [vmem:[%s15 + $0x218] sm:$0xff]
      %v4053 = vld [vmem:[%s15 + $0x220] sm:$0xff]
      %v4054 = vld [vmem:[%s15 + $0x228] sm:$0xff]
      %v4055 = vld [vmem:[%s15 + $0x230] sm:$0xff]
      %v4056 = vld [vmem:[%s15 + $0x238] sm:$0xff]
      %v4057 = vld [vmem:[%s15 + $0x240] sm:$0xff]
      %v4058 = vld [vmem:[%s15 + $0x248] sm:$0xff]
      %v4059 = vld [vmem:[%s15 + $0x250] sm:$0xff]
      %v4060 = vld [vmem:[%s15 + $0x258] sm:$0xff]
      %v4061 = vld [vmem:[%s15 + $0x260] sm:$0xff]
      %v4062 = vld [vmem:[%s15 + $0x268] sm:$0xff]
      %v4063 = vld [vmem:[%s15 + $0x270] sm:$0xff]
      %v4064 = vld [vmem:[%s15 + $0x278] sm:$0xff]
      %v4065 = vld [vmem:[%s15 + $0x280] sm:$0xff]
      %v4066 = vld [vmem:[%s15 + $0x288] sm:$0xff]
      %v4067 = vld [vmem:[%s15 + $0x290] sm:$0xff]
      %v4068 = vld [vmem:[%s15 + $0x298] sm:$0xff]
      %v4069 = vld [vmem:[%s15 + $0x2a0] sm:$0xff]
      %v4070 = vld [vmem:[%s15 + $0x2a8] sm:$0xff]
      %v4071 = vld [vmem:[%s15 + $0x2b0] sm:$0xff]
      %v4072 = vld [vmem:[%s15 + $0x2b8] sm:$0xff]
      %v4073 = vld [vmem:[%s15 + $0x2c0] sm:$0xff]
      %v4074 = vld [vmem:[%s15 + $0x2c8] sm:$0xff]
      %v4075 = vld [vmem:[%s15 + $0x2d0] sm:$0xff]
      %v4076 = vld [vmem:[%s15 + $0x2d8] sm:$0xff]
      %v4077 = vld [vmem:[%s15 + $0x2e0] sm:$0xff]
      %v4078 = vld [vmem:[%s15 + $0x2e8] sm:$0xff]
      %v4079 = vld [vmem:[%s15 + $0x2f0] sm:$0xff]
      %v4080 = vld [vmem:[%s15 + $0x2f8] sm:$0xff]
      %v4081 = vld [vmem:[%s15 + $0x300] sm:$0xff]
      %v4082 = vld [vmem:[%s15 + $0x308] sm:$0xff]
      %v4083 = vld [vmem:[%s15 + $0x310] sm:$0xff]
      %v4084 = vld [vmem:[%s15 + $0x318] sm:$0xff]
      %v4085 = vld [vmem:[%s15 + $0x320] sm:$0xff]
      %v4086 = vld [vmem:[%s15 + $0x328] sm:$0xff]
      %v4087 = vld [vmem:[%s15 + $0x330] sm:$0xff]
      %v4088 = vld [vmem:[%s15 + $0x338] sm:$0xff]
      %v4089 = vld [vmem:[%s15 + $0x340] sm:$0xff]
      %v4090 = vld [vmem:[%s15 + $0x348] sm:$0xff]
      %v4091 = vld [vmem:[%s15 + $0x350] sm:$0xff]
      %v4092 = vld [vmem:[%s15 + $0x358] sm:$0xff]
      %v4093 = vld [vmem:[%s15 + $0x360] sm:$0xff]
      %v4094 = vld [vmem:[%s15 + $0x368] sm:$0xff]
      %v4095 = vld [vmem:[%s15 + $0x370] sm:$0xff]
      %v4096 = vld [vmem:[%s15 + $0x378] sm:$0xff]
      %v4097 = vld [vmem:[%s15 + $0x380] sm:$0xff]
      %v4098 = vld [vmem:[%s15 + $0x388] sm:$0xff]
      %v4099 = vld [vmem:[%s15 + $0x390] sm:$0xff]
      %v4100 = vld [vmem:[%s15 + $0x398] sm:$0xff]
      %v4101 = vld [vmem:[%s15 + $0x3a0] sm:$0xff]
      %v4102 = vld [vmem:[%s15 + $0x3a8] sm:$0xff]
      %v4103 = vld [vmem:[%s15 + $0x3b0] sm:$0xff]
      %v4104 = vld [vmem:[%s15 + $0x3b8] sm:$0xff]
      %v4105 = vld [vmem:[%s15 + $0x3c0] sm:$0xff]
      %v4106 = vld [vmem:[%s15 + $0x3c8] sm:$0xff]
      %v4107 = vld [vmem:[%s15 + $0x3d0] sm:$0xff]
      %v4108 = vld [vmem:[%s15 + $0x3d8] sm:$0xff]
      %v4109 = vld [vmem:[%s15 + $0x3e0] sm:$0xff]
      %v4110 = vld [vmem:[%s15 + $0x3e8] sm:$0xff]
      %v4111 = vld [vmem:[%s15 + $0x3f0] sm:$0xff]
      %v4112 = vld [vmem:[%s15 + $0x3f8] sm:$0xff]
      %v4113 = vld [vmem:[%s15 + $0x400] sm:$0xff]
      %v4114 = vld [vmem:[%s15 + $0x408] sm:$0xff]
      %v4115 = vld [vmem:[%s15 + $0x410] sm:$0xff]
      %v4116 = vld [vmem:[%s15 + $0x418] sm:$0xff]
      %v4117 = vld [vmem:[%s15 + $0x420] sm:$0xff]
      %v4118 = vld [vmem:[%s15 + $0x428] sm:$0xff]
      %v4119 = vld [vmem:[%s15 + $0x430] sm:$0xff]
      %v4120 = vld [vmem:[%s15 + $0x438] sm:$0xff]
      %v4121 = vld [vmem:[%s15 + $0x440] sm:$0xff]
      %v4122 = vld [vmem:[%s15 + $0x448] sm:$0xff]
      %v4123 = vld [vmem:[%s15 + $0x450] sm:$0xff]
      %v4124 = vld [vmem:[%s15 + $0x458] sm:$0xff]
      %v4125 = vld [vmem:[%s15 + $0x460] sm:$0xff]
      %v4126 = vld [vmem:[%s15 + $0x468] sm:$0xff]
      %v4127 = vld [vmem:[%s15 + $0x470] sm:$0xff]
      %v4128 = vld [vmem:[%s15 + $0x478] sm:$0xff]
      %v4129 = vld [vmem:[%s15 + $0x480] sm:$0xff]
      %v4130 = vld [vmem:[%s15 + $0x488] sm:$0xff]
      %v4131 = vld [vmem:[%s15 + $0x490] sm:$0xff]
      %v4132 = vld [vmem:[%s15 + $0x498] sm:$0xff]
      %v4133 = vld [vmem:[%s15 + $0x4a0] sm:$0xff]
      %v4134 = vld [vmem:[%s15 + $0x4a8] sm:$0xff]
      %v4135 = vld [vmem:[%s15 + $0x4b0] sm:$0xff]
      %v4136 = vld [vmem:[%s15 + $0x4b8] sm:$0xff]
      %v4137 = vld [vmem:[%s15 + $0x4c0] sm:$0xff]
      %v4138 = vld [vmem:[%s15 + $0x4c8] sm:$0xff]
      %v4139 = vld [vmem:[%s15 + $0x4d0] sm:$0xff]
      %v4140 = vld [vmem:[%s15 + $0x4d8] sm:$0xff]
      %v4141 = vld [vmem:[%s15 + $0x4e0] sm:$0xff]
      %v4142 = vld [vmem:[%s15 + $0x4e8] sm:$0xff]
      %v4143 = vld [vmem:[%s15 + $0x4f0] sm:$0xff]
      %v4144 = vld [vmem:[%s15 + $0x4f8] sm:$0xff]
      %v4145 = vld [vmem:[%s17] sm:$0x3]
      %v4147 = vlaneseq
      %v4148 = vshrl.u32 %v4147, 7
      %v4149 = vsub.s32 0, %v4148
      %v4150 = vrot.slane %v4145, %v4149
      %v4151 = vlaneseq
      %v4152 = vshrl.u32 %v4151, 7
      %v4153 = vsub.s32 1, %v4152
      %v4154 = vrot.slane %v4145, %v4153
      %v4317 = vunpack.c.l.b16 %v3985
      %v4318 = vunpack.c.h.b16 %v3985
      %v4319 = vunpack.c.l.b16 %v3986
      %v4320 = vunpack.c.h.b16 %v3986
      %v4321 = vunpack.c.l.b16 %v3987
      %v4322 = vunpack.c.h.b16 %v3987
      %v4323 = vunpack.c.l.b16 %v3988
      %v4324 = vunpack.c.h.b16 %v3988
      %v4325 = vunpack.c.l.b16 %v3989
      %v4326 = vunpack.c.h.b16 %v3989
      %v4327 = vunpack.c.l.b16 %v3990
      %v4328 = vunpack.c.h.b16 %v3990
      %v4329 = vunpack.c.l.b16 %v3991
      %v4330 = vunpack.c.h.b16 %v3991
      %v4331 = vunpack.c.l.b16 %v3992
      %v4332 = vunpack.c.h.b16 %v3992
      %v4333 = vunpack.c.l.b16 %v3993
      %v4334 = vunpack.c.h.b16 %v3993
      %v4335 = vunpack.c.l.b16 %v3994
      %v4336 = vunpack.c.h.b16 %v3994
      %v4337 = vunpack.c.l.b16 %v3995
      %v4338 = vunpack.c.h.b16 %v3995
      %v4339 = vunpack.c.l.b16 %v3996
      %v4340 = vunpack.c.h.b16 %v3996
      %v4341 = vunpack.c.l.b16 %v3997
      %v4342 = vunpack.c.h.b16 %v3997
      %v4343 = vunpack.c.l.b16 %v3998
      %v4344 = vunpack.c.h.b16 %v3998
      %v4345 = vunpack.c.l.b16 %v3999
      %v4346 = vunpack.c.h.b16 %v3999
      %v4347 = vunpack.c.l.b16 %v4000
      %v4348 = vunpack.c.h.b16 %v4000
      %v4349 = vunpack.c.l.b16 %v4001
      %v4350 = vunpack.c.h.b16 %v4001
      %v4351 = vunpack.c.l.b16 %v4002
      %v4352 = vunpack.c.h.b16 %v4002
      %v4353 = vunpack.c.l.b16 %v4003
      %v4354 = vunpack.c.h.b16 %v4003
      %v4355 = vunpack.c.l.b16 %v4004
      %v4356 = vunpack.c.h.b16 %v4004
      %v4357 = vunpack.c.l.b16 %v4005
      %v4358 = vunpack.c.h.b16 %v4005
      %v4359 = vunpack.c.l.b16 %v4006
      %v4360 = vunpack.c.h.b16 %v4006
      %v4361 = vunpack.c.l.b16 %v4007
      %v4362 = vunpack.c.h.b16 %v4007
      %v4363 = vunpack.c.l.b16 %v4008
      %v4364 = vunpack.c.h.b16 %v4008
      %v4365 = vunpack.c.l.b16 %v4009
      %v4366 = vunpack.c.h.b16 %v4009
      %v4367 = vunpack.c.l.b16 %v4010
      %v4368 = vunpack.c.h.b16 %v4010
      %v4369 = vunpack.c.l.b16 %v4011
      %v4370 = vunpack.c.h.b16 %v4011
      %v4371 = vunpack.c.l.b16 %v4012
      %v4372 = vunpack.c.h.b16 %v4012
      %v4373 = vunpack.c.l.b16 %v4013
      %v4374 = vunpack.c.h.b16 %v4013
      %v4375 = vunpack.c.l.b16 %v4014
      %v4376 = vunpack.c.h.b16 %v4014
      %v4377 = vunpack.c.l.b16 %v4015
      %v4378 = vunpack.c.h.b16 %v4015
      %v4379 = vunpack.c.l.b16 %v4016
      %v4380 = vunpack.c.h.b16 %v4016
      %v4381 = vunpack.c.l.b16 %v4017
      %v4382 = vunpack.c.h.b16 %v4017
      %v4383 = vunpack.c.l.b16 %v4018
      %v4384 = vunpack.c.h.b16 %v4018
      %v4385 = vunpack.c.l.b16 %v4019
      %v4386 = vunpack.c.h.b16 %v4019
      %v4387 = vunpack.c.l.b16 %v4020
      %v4388 = vunpack.c.h.b16 %v4020
      %v4389 = vunpack.c.l.b16 %v4021
      %v4390 = vunpack.c.h.b16 %v4021
      %v4391 = vunpack.c.l.b16 %v4022
      %v4392 = vunpack.c.h.b16 %v4022
      %v4393 = vunpack.c.l.b16 %v4023
      %v4394 = vunpack.c.h.b16 %v4023
      %v4395 = vunpack.c.l.b16 %v4024
      %v4396 = vunpack.c.h.b16 %v4024
      %v4397 = vunpack.c.l.b16 %v4025
      %v4398 = vunpack.c.h.b16 %v4025
      %v4399 = vunpack.c.l.b16 %v4026
      %v4400 = vunpack.c.h.b16 %v4026
      %v4401 = vunpack.c.l.b16 %v4027
      %v4402 = vunpack.c.h.b16 %v4027
      %v4403 = vunpack.c.l.b16 %v4028
      %v4404 = vunpack.c.h.b16 %v4028
      %v4405 = vunpack.c.l.b16 %v4029
      %v4406 = vunpack.c.h.b16 %v4029
      %v4407 = vunpack.c.l.b16 %v4030
      %v4408 = vunpack.c.h.b16 %v4030
      %v4409 = vunpack.c.l.b16 %v4031
      %v4410 = vunpack.c.h.b16 %v4031
      %v4411 = vunpack.c.l.b16 %v4032
      %v4412 = vunpack.c.h.b16 %v4032
      %v4413 = vunpack.c.l.b16 %v4033
      %v4414 = vunpack.c.h.b16 %v4033
      %v4415 = vunpack.c.l.b16 %v4034
      %v4416 = vunpack.c.h.b16 %v4034
      %v4417 = vunpack.c.l.b16 %v4035
      %v4418 = vunpack.c.h.b16 %v4035
      %v4419 = vunpack.c.l.b16 %v4036
      %v4420 = vunpack.c.h.b16 %v4036
      %v4421 = vunpack.c.l.b16 %v4037
      %v4422 = vunpack.c.h.b16 %v4037
      %v4423 = vunpack.c.l.b16 %v4038
      %v4424 = vunpack.c.h.b16 %v4038
      %v4425 = vunpack.c.l.b16 %v4039
      %v4426 = vunpack.c.h.b16 %v4039
      %v4427 = vunpack.c.l.b16 %v4040
      %v4428 = vunpack.c.h.b16 %v4040
      %v4429 = vunpack.c.l.b16 %v4041
      %v4430 = vunpack.c.h.b16 %v4041
      %v4431 = vunpack.c.l.b16 %v4042
      %v4432 = vunpack.c.h.b16 %v4042
      %v4433 = vunpack.c.l.b16 %v4043
      %v4434 = vunpack.c.h.b16 %v4043
      %v4435 = vunpack.c.l.b16 %v4044
      %v4436 = vunpack.c.h.b16 %v4044
      %v4437 = vunpack.c.l.b16 %v4045
      %v4438 = vunpack.c.h.b16 %v4045
      %v4439 = vunpack.c.l.b16 %v4046
      %v4440 = vunpack.c.h.b16 %v4046
      %v4441 = vunpack.c.l.b16 %v4047
      %v4442 = vunpack.c.h.b16 %v4047
      %v4443 = vunpack.c.l.b16 %v4048
      %v4444 = vunpack.c.h.b16 %v4048
      %v4445 = vunpack.c.l.b16 %v4049
      %v4446 = vunpack.c.h.b16 %v4049
      %v4447 = vunpack.c.l.b16 %v4050
      %v4448 = vunpack.c.h.b16 %v4050
      %v4449 = vunpack.c.l.b16 %v4051
      %v4450 = vunpack.c.h.b16 %v4051
      %v4451 = vunpack.c.l.b16 %v4052
      %v4452 = vunpack.c.h.b16 %v4052
      %v4453 = vunpack.c.l.b16 %v4053
      %v4454 = vunpack.c.h.b16 %v4053
      %v4455 = vunpack.c.l.b16 %v4054
      %v4456 = vunpack.c.h.b16 %v4054
      %v4457 = vunpack.c.l.b16 %v4055
      %v4458 = vunpack.c.h.b16 %v4055
      %v4459 = vunpack.c.l.b16 %v4056
      %v4460 = vunpack.c.h.b16 %v4056
      %v4461 = vunpack.c.l.b16 %v4057
      %v4462 = vunpack.c.h.b16 %v4057
      %v4463 = vunpack.c.l.b16 %v4058
      %v4464 = vunpack.c.h.b16 %v4058
      %v4465 = vunpack.c.l.b16 %v4059
      %v4466 = vunpack.c.h.b16 %v4059
      %v4467 = vunpack.c.l.b16 %v4060
      %v4468 = vunpack.c.h.b16 %v4060
      %v4469 = vunpack.c.l.b16 %v4061
      %v4470 = vunpack.c.h.b16 %v4061
      %v4471 = vunpack.c.l.b16 %v4062
      %v4472 = vunpack.c.h.b16 %v4062
      %v4473 = vunpack.c.l.b16 %v4063
      %v4474 = vunpack.c.h.b16 %v4063
      %v4475 = vunpack.c.l.b16 %v4064
      %v4476 = vunpack.c.h.b16 %v4064
      %v4477 = vunpack.c.l.b16 %v4065
      %v4478 = vunpack.c.h.b16 %v4065
      %v4479 = vunpack.c.l.b16 %v4066
      %v4480 = vunpack.c.h.b16 %v4066
      %v4481 = vunpack.c.l.b16 %v4067
      %v4482 = vunpack.c.h.b16 %v4067
      %v4483 = vunpack.c.l.b16 %v4068
      %v4484 = vunpack.c.h.b16 %v4068
      %v4485 = vunpack.c.l.b16 %v4069
      %v4486 = vunpack.c.h.b16 %v4069
      %v4487 = vunpack.c.l.b16 %v4070
      %v4488 = vunpack.c.h.b16 %v4070
      %v4489 = vunpack.c.l.b16 %v4071
      %v4490 = vunpack.c.h.b16 %v4071
      %v4491 = vunpack.c.l.b16 %v4072
      %v4492 = vunpack.c.h.b16 %v4072
      %v4493 = vunpack.c.l.b16 %v4073
      %v4494 = vunpack.c.h.b16 %v4073
      %v4495 = vunpack.c.l.b16 %v4074
      %v4496 = vunpack.c.h.b16 %v4074
      %v4497 = vunpack.c.l.b16 %v4075
      %v4498 = vunpack.c.h.b16 %v4075
      %v4499 = vunpack.c.l.b16 %v4076
      %v4500 = vunpack.c.h.b16 %v4076
      %v4501 = vunpack.c.l.b16 %v4077
      %v4502 = vunpack.c.h.b16 %v4077
      %v4503 = vunpack.c.l.b16 %v4078
      %v4504 = vunpack.c.h.b16 %v4078
      %v4505 = vunpack.c.l.b16 %v4079
      %v4506 = vunpack.c.h.b16 %v4079
      %v4507 = vunpack.c.l.b16 %v4080
      %v4508 = vunpack.c.h.b16 %v4080
      %v4509 = vunpack.c.l.b16 %v4081
      %v4510 = vunpack.c.h.b16 %v4081
      %v4511 = vunpack.c.l.b16 %v4082
      %v4512 = vunpack.c.h.b16 %v4082
      %v4513 = vunpack.c.l.b16 %v4083
      %v4514 = vunpack.c.h.b16 %v4083
      %v4515 = vunpack.c.l.b16 %v4084
      %v4516 = vunpack.c.h.b16 %v4084
      %v4517 = vunpack.c.l.b16 %v4085
      %v4518 = vunpack.c.h.b16 %v4085
      %v4519 = vunpack.c.l.b16 %v4086
      %v4520 = vunpack.c.h.b16 %v4086
      %v4521 = vunpack.c.l.b16 %v4087
      %v4522 = vunpack.c.h.b16 %v4087
      %v4523 = vunpack.c.l.b16 %v4088
      %v4524 = vunpack.c.h.b16 %v4088
      %v4525 = vunpack.c.l.b16 %v4089
      %v4526 = vunpack.c.h.b16 %v4089
      %v4527 = vunpack.c.l.b16 %v4090
      %v4528 = vunpack.c.h.b16 %v4090
      %v4529 = vunpack.c.l.b16 %v4091
      %v4530 = vunpack.c.h.b16 %v4091
      %v4531 = vunpack.c.l.b16 %v4092
      %v4532 = vunpack.c.h.b16 %v4092
      %v4533 = vunpack.c.l.b16 %v4093
      %v4534 = vunpack.c.h.b16 %v4093
      %v4535 = vunpack.c.l.b16 %v4094
      %v4536 = vunpack.c.h.b16 %v4094
      %v4537 = vunpack.c.l.b16 %v4095
      %v4538 = vunpack.c.h.b16 %v4095
      %v4539 = vunpack.c.l.b16 %v4096
      %v4540 = vunpack.c.h.b16 %v4096
      %v4541 = vunpack.c.l.b16 %v4097
      %v4542 = vunpack.c.h.b16 %v4097
      %v4543 = vunpack.c.l.b16 %v4098
      %v4544 = vunpack.c.h.b16 %v4098
      %v4545 = vunpack.c.l.b16 %v4099
      %v4546 = vunpack.c.h.b16 %v4099
      %v4547 = vunpack.c.l.b16 %v4100
      %v4548 = vunpack.c.h.b16 %v4100
      %v4549 = vunpack.c.l.b16 %v4101
      %v4550 = vunpack.c.h.b16 %v4101
      %v4551 = vunpack.c.l.b16 %v4102
      %v4552 = vunpack.c.h.b16 %v4102
      %v4553 = vunpack.c.l.b16 %v4103
      %v4554 = vunpack.c.h.b16 %v4103
      %v4555 = vunpack.c.l.b16 %v4104
      %v4556 = vunpack.c.h.b16 %v4104
      %v4557 = vunpack.c.l.b16 %v4105
      %v4558 = vunpack.c.h.b16 %v4105
      %v4559 = vunpack.c.l.b16 %v4106
      %v4560 = vunpack.c.h.b16 %v4106
      %v4561 = vunpack.c.l.b16 %v4107
      %v4562 = vunpack.c.h.b16 %v4107
      %v4563 = vunpack.c.l.b16 %v4108
      %v4564 = vunpack.c.h.b16 %v4108
      %v4565 = vunpack.c.l.b16 %v4109
      %v4566 = vunpack.c.h.b16 %v4109
      %v4567 = vunpack.c.l.b16 %v4110
      %v4568 = vunpack.c.h.b16 %v4110
      %v4569 = vunpack.c.l.b16 %v4111
      %v4570 = vunpack.c.h.b16 %v4111
      %v4571 = vunpack.c.l.b16 %v4112
      %v4572 = vunpack.c.h.b16 %v4112
      %v4573 = vunpack.c.l.b16 %v4113
      %v4574 = vunpack.c.h.b16 %v4113
      %v4575 = vunpack.c.l.b16 %v4114
      %v4576 = vunpack.c.h.b16 %v4114
      %v4577 = vunpack.c.l.b16 %v4115
      %v4578 = vunpack.c.h.b16 %v4115
      %v4579 = vunpack.c.l.b16 %v4116
      %v4580 = vunpack.c.h.b16 %v4116
      %v4581 = vunpack.c.l.b16 %v4117
      %v4582 = vunpack.c.h.b16 %v4117
      %v4583 = vunpack.c.l.b16 %v4118
      %v4584 = vunpack.c.h.b16 %v4118
      %v4585 = vunpack.c.l.b16 %v4119
      %v4586 = vunpack.c.h.b16 %v4119
      %v4587 = vunpack.c.l.b16 %v4120
      %v4588 = vunpack.c.h.b16 %v4120
      %v4589 = vunpack.c.l.b16 %v4121
      %v4590 = vunpack.c.h.b16 %v4121
      %v4591 = vunpack.c.l.b16 %v4122
      %v4592 = vunpack.c.h.b16 %v4122
      %v4593 = vunpack.c.l.b16 %v4123
      %v4594 = vunpack.c.h.b16 %v4123
      %v4595 = vunpack.c.l.b16 %v4124
      %v4596 = vunpack.c.h.b16 %v4124
      %v4597 = vunpack.c.l.b16 %v4125
      %v4598 = vunpack.c.h.b16 %v4125
      %v4599 = vunpack.c.l.b16 %v4126
      %v4600 = vunpack.c.h.b16 %v4126
      %v4601 = vunpack.c.l.b16 %v4127
      %v4602 = vunpack.c.h.b16 %v4127
      %v4603 = vunpack.c.l.b16 %v4128
      %v4604 = vunpack.c.h.b16 %v4128
      %v4605 = vunpack.c.l.b16 %v4129
      %v4606 = vunpack.c.h.b16 %v4129
      %v4607 = vunpack.c.l.b16 %v4130
      %v4608 = vunpack.c.h.b16 %v4130
      %v4609 = vunpack.c.l.b16 %v4131
      %v4610 = vunpack.c.h.b16 %v4131
      %v4611 = vunpack.c.l.b16 %v4132
      %v4612 = vunpack.c.h.b16 %v4132
      %v4613 = vunpack.c.l.b16 %v4133
      %v4614 = vunpack.c.h.b16 %v4133
      %v4615 = vunpack.c.l.b16 %v4134
      %v4616 = vunpack.c.h.b16 %v4134
      %v4617 = vunpack.c.l.b16 %v4135
      %v4618 = vunpack.c.h.b16 %v4135
      %v4619 = vunpack.c.l.b16 %v4136
      %v4620 = vunpack.c.h.b16 %v4136
      %v4621 = vunpack.c.l.b16 %v4137
      %v4622 = vunpack.c.h.b16 %v4137
      %v4623 = vunpack.c.l.b16 %v4138
      %v4624 = vunpack.c.h.b16 %v4138
      %v4625 = vunpack.c.l.b16 %v4139
      %v4626 = vunpack.c.h.b16 %v4139
      %v4627 = vunpack.c.l.b16 %v4140
      %v4628 = vunpack.c.h.b16 %v4140
      %v4629 = vunpack.c.l.b16 %v4141
      %v4630 = vunpack.c.h.b16 %v4141
      %v4631 = vunpack.c.l.b16 %v4142
      %v4632 = vunpack.c.h.b16 %v4142
      %v4633 = vunpack.c.l.b16 %v4143
      %v4634 = vunpack.c.h.b16 %v4143
      %v4635 = vunpack.c.l.b16 %v4144
      %v4636 = vunpack.c.h.b16 %v4144
      %v4637 = vpack.c.b16 %v4319, %v4317
      %v4638 = vpack.c.b16 %v4320, %v4318
      %v4639 = vpack.c.b16 %v4323, %v4321
      %v4640 = vpack.c.b16 %v4324, %v4322
      %v4641 = vpack.c.b16 %v4327, %v4325
      %v4642 = vpack.c.b16 %v4328, %v4326
      %v4643 = vpack.c.b16 %v4331, %v4329
      %v4644 = vpack.c.b16 %v4332, %v4330
      %v4645 = vpack.c.b16 %v4335, %v4333
      %v4646 = vpack.c.b16 %v4336, %v4334
      %v4647 = vpack.c.b16 %v4339, %v4337
      %v4648 = vpack.c.b16 %v4340, %v4338
      %v4649 = vpack.c.b16 %v4343, %v4341
      %v4650 = vpack.c.b16 %v4344, %v4342
      %v4651 = vpack.c.b16 %v4347, %v4345
      %v4652 = vpack.c.b16 %v4348, %v4346
      %v4653 = vpack.c.b16 %v4351, %v4349
      %v4654 = vpack.c.b16 %v4352, %v4350
      %v4655 = vpack.c.b16 %v4355, %v4353
      %v4656 = vpack.c.b16 %v4356, %v4354
      %v4657 = vpack.c.b16 %v4359, %v4357
      %v4658 = vpack.c.b16 %v4360, %v4358
      %v4659 = vpack.c.b16 %v4363, %v4361
      %v4660 = vpack.c.b16 %v4364, %v4362
      %v4661 = vpack.c.b16 %v4367, %v4365
      %v4662 = vpack.c.b16 %v4368, %v4366
      %v4663 = vpack.c.b16 %v4371, %v4369
      %v4664 = vpack.c.b16 %v4372, %v4370
      %v4665 = vpack.c.b16 %v4375, %v4373
      %v4666 = vpack.c.b16 %v4376, %v4374
      %v4667 = vpack.c.b16 %v4379, %v4377
      %v4668 = vpack.c.b16 %v4380, %v4378
      %v4669 = vpack.c.b16 %v4383, %v4381
      %v4670 = vpack.c.b16 %v4384, %v4382
      %v4671 = vpack.c.b16 %v4387, %v4385
      %v4672 = vpack.c.b16 %v4388, %v4386
      %v4673 = vpack.c.b16 %v4391, %v4389
      %v4674 = vpack.c.b16 %v4392, %v4390
      %v4675 = vpack.c.b16 %v4395, %v4393
      %v4676 = vpack.c.b16 %v4396, %v4394
      %v4677 = vpack.c.b16 %v4399, %v4397
      %v4678 = vpack.c.b16 %v4400, %v4398
      %v4679 = vpack.c.b16 %v4403, %v4401
      %v4680 = vpack.c.b16 %v4404, %v4402
      %v4681 = vpack.c.b16 %v4407, %v4405
      %v4682 = vpack.c.b16 %v4408, %v4406
      %v4683 = vpack.c.b16 %v4411, %v4409
      %v4684 = vpack.c.b16 %v4412, %v4410
      %v4685 = vpack.c.b16 %v4415, %v4413
      %v4686 = vpack.c.b16 %v4416, %v4414
      %v4687 = vpack.c.b16 %v4419, %v4417
      %v4688 = vpack.c.b16 %v4420, %v4418
      %v4689 = vpack.c.b16 %v4423, %v4421
      %v4690 = vpack.c.b16 %v4424, %v4422
      %v4691 = vpack.c.b16 %v4427, %v4425
      %v4692 = vpack.c.b16 %v4428, %v4426
      %v4693 = vpack.c.b16 %v4431, %v4429
      %v4694 = vpack.c.b16 %v4432, %v4430
      %v4695 = vpack.c.b16 %v4435, %v4433
      %v4696 = vpack.c.b16 %v4436, %v4434
      %v4697 = vpack.c.b16 %v4439, %v4437
      %v4698 = vpack.c.b16 %v4440, %v4438
      %v4699 = vpack.c.b16 %v4443, %v4441
      %v4700 = vpack.c.b16 %v4444, %v4442
      %v4701 = vpack.c.b16 %v4447, %v4445
      %v4702 = vpack.c.b16 %v4448, %v4446
      %v4703 = vpack.c.b16 %v4451, %v4449
      %v4704 = vpack.c.b16 %v4452, %v4450
      %v4705 = vpack.c.b16 %v4455, %v4453
      %v4706 = vpack.c.b16 %v4456, %v4454
      %v4707 = vpack.c.b16 %v4459, %v4457
      %v4708 = vpack.c.b16 %v4460, %v4458
      %v4709 = vpack.c.b16 %v4463, %v4461
      %v4710 = vpack.c.b16 %v4464, %v4462
      %v4711 = vpack.c.b16 %v4467, %v4465
      %v4712 = vpack.c.b16 %v4468, %v4466
      %v4713 = vpack.c.b16 %v4471, %v4469
      %v4714 = vpack.c.b16 %v4472, %v4470
      %v4715 = vpack.c.b16 %v4475, %v4473
      %v4716 = vpack.c.b16 %v4476, %v4474
      %v4717 = vpack.c.b16 %v4479, %v4477
      %v4718 = vpack.c.b16 %v4480, %v4478
      %v4719 = vpack.c.b16 %v4483, %v4481
      %v4720 = vpack.c.b16 %v4484, %v4482
      %v4721 = vpack.c.b16 %v4487, %v4485
      %v4722 = vpack.c.b16 %v4488, %v4486
      %v4723 = vpack.c.b16 %v4491, %v4489
      %v4724 = vpack.c.b16 %v4492, %v4490
      %v4725 = vpack.c.b16 %v4495, %v4493
      %v4726 = vpack.c.b16 %v4496, %v4494
      %v4727 = vpack.c.b16 %v4499, %v4497
      %v4728 = vpack.c.b16 %v4500, %v4498
      %v4729 = vpack.c.b16 %v4503, %v4501
      %v4730 = vpack.c.b16 %v4504, %v4502
      %v4731 = vpack.c.b16 %v4507, %v4505
      %v4732 = vpack.c.b16 %v4508, %v4506
      %v4733 = vpack.c.b16 %v4511, %v4509
      %v4734 = vpack.c.b16 %v4512, %v4510
      %v4735 = vpack.c.b16 %v4515, %v4513
      %v4736 = vpack.c.b16 %v4516, %v4514
      %v4737 = vpack.c.b16 %v4519, %v4517
      %v4738 = vpack.c.b16 %v4520, %v4518
      %v4739 = vpack.c.b16 %v4523, %v4521
      %v4740 = vpack.c.b16 %v4524, %v4522
      %v4741 = vpack.c.b16 %v4527, %v4525
      %v4742 = vpack.c.b16 %v4528, %v4526
      %v4743 = vpack.c.b16 %v4531, %v4529
      %v4744 = vpack.c.b16 %v4532, %v4530
      %v4745 = vpack.c.b16 %v4535, %v4533
      %v4746 = vpack.c.b16 %v4536, %v4534
      %v4747 = vpack.c.b16 %v4539, %v4537
      %v4748 = vpack.c.b16 %v4540, %v4538
      %v4749 = vpack.c.b16 %v4543, %v4541
      %v4750 = vpack.c.b16 %v4544, %v4542
      %v4751 = vpack.c.b16 %v4547, %v4545
      %v4752 = vpack.c.b16 %v4548, %v4546
      %v4753 = vpack.c.b16 %v4551, %v4549
      %v4754 = vpack.c.b16 %v4552, %v4550
      %v4755 = vpack.c.b16 %v4555, %v4553
      %v4756 = vpack.c.b16 %v4556, %v4554
      %v4757 = vpack.c.b16 %v4559, %v4557
      %v4758 = vpack.c.b16 %v4560, %v4558
      %v4759 = vpack.c.b16 %v4563, %v4561
      %v4760 = vpack.c.b16 %v4564, %v4562
      %v4761 = vpack.c.b16 %v4567, %v4565
      %v4762 = vpack.c.b16 %v4568, %v4566
      %v4763 = vpack.c.b16 %v4571, %v4569
      %v4764 = vpack.c.b16 %v4572, %v4570
      %v4765 = vpack.c.b16 %v4575, %v4573
      %v4766 = vpack.c.b16 %v4576, %v4574
      %v4767 = vpack.c.b16 %v4579, %v4577
      %v4768 = vpack.c.b16 %v4580, %v4578
      %v4769 = vpack.c.b16 %v4583, %v4581
      %v4770 = vpack.c.b16 %v4584, %v4582
      %v4771 = vpack.c.b16 %v4587, %v4585
      %v4772 = vpack.c.b16 %v4588, %v4586
      %v4773 = vpack.c.b16 %v4591, %v4589
      %v4774 = vpack.c.b16 %v4592, %v4590
      %v4775 = vpack.c.b16 %v4595, %v4593
      %v4776 = vpack.c.b16 %v4596, %v4594
      %v4777 = vpack.c.b16 %v4599, %v4597
      %v4778 = vpack.c.b16 %v4600, %v4598
      %v4779 = vpack.c.b16 %v4603, %v4601
      %v4780 = vpack.c.b16 %v4604, %v4602
      %v4781 = vpack.c.b16 %v4607, %v4605
      %v4782 = vpack.c.b16 %v4608, %v4606
      %v4783 = vpack.c.b16 %v4611, %v4609
      %v4784 = vpack.c.b16 %v4612, %v4610
      %v4785 = vpack.c.b16 %v4615, %v4613
      %v4786 = vpack.c.b16 %v4616, %v4614
      %v4787 = vpack.c.b16 %v4619, %v4617
      %v4788 = vpack.c.b16 %v4620, %v4618
      %v4789 = vpack.c.b16 %v4623, %v4621
      %v4790 = vpack.c.b16 %v4624, %v4622
      %v4791 = vpack.c.b16 %v4627, %v4625
      %v4792 = vpack.c.b16 %v4628, %v4626
      %v4793 = vpack.c.b16 %v4631, %v4629
      %v4794 = vpack.c.b16 %v4632, %v4630
      %v4795 = vpack.c.b16 %v4635, %v4633
      %v4796 = vpack.c.b16 %v4636, %v4634
      %4957 = vmatprep.subr.bf16.mxu0 %v4638
      %4958 = vmatpush1.bf16.msra.mxu0 %v4637
      %4959 = vmatprep.subr.bf16.mxu0 %v4640
      %4960 = vmatpush1.bf16.msra.mxu0 %v4639
      %4961 = vmatprep.subr.bf16.mxu0 %v4642
      %4962 = vmatpush1.bf16.msra.mxu0 %v4641
      %4963 = vmatprep.subr.bf16.mxu0 %v4644
      %4964 = vmatpush1.bf16.msra.mxu0 %v4643
      %4965 = vmatprep.subr.bf16.mxu0 %v4646
      %4966 = vmatpush1.bf16.msra.mxu0 %v4645
      %4967 = vmatprep.subr.bf16.mxu0 %v4648
      %4968 = vmatpush1.bf16.msra.mxu0 %v4647
      %4969 = vmatprep.subr.bf16.mxu0 %v4650
      %4970 = vmatpush1.bf16.msra.mxu0 %v4649
      %4971 = vmatprep.subr.bf16.mxu0 %v4652
      %4972 = vmatpush1.bf16.msra.mxu0 %v4651
      %4973 = vmatprep.subr.bf16.mxu0 %v4654
      %4974 = vmatpush1.bf16.msra.mxu0 %v4653
      %4975 = vmatprep.subr.bf16.mxu0 %v4656
      %4976 = vmatpush1.bf16.msra.mxu0 %v4655
      %4977 = vmatprep.subr.bf16.mxu0 %v4658
      %4978 = vmatpush1.bf16.msra.mxu0 %v4657
      %4979 = vmatprep.subr.bf16.mxu0 %v4660
      %4980 = vmatpush1.bf16.msra.mxu0 %v4659
      %4981 = vmatprep.subr.bf16.mxu0 %v4662
      %4982 = vmatpush1.bf16.msra.mxu0 %v4661
      %4983 = vmatprep.subr.bf16.mxu0 %v4664
      %4984 = vmatpush1.bf16.msra.mxu0 %v4663
      %4985 = vmatprep.subr.bf16.mxu0 %v4666
      %4986 = vmatpush1.bf16.msra.mxu0 %v4665
      %4987 = vmatprep.subr.bf16.mxu0 %v4668
      %4988 = vmatpush1.bf16.msra.mxu0 %v4667
      %4989 = vmatprep.mubr.bf16.mxu0 %v3915
      %4990 = vmatmul.mubr.bf16.gmra.mrb[0].mxu0 %v3914
      %v4991 = vpop.f32.mrb[0].mxu0
      %v4992 = vadd.f32 %v4150, %v4991
      %v4993 = vpop.f32.mrb[0].mxu0
      %v4994 = vadd.f32 %v4154, %v4993
      %v4995 = vpop.f32.mrb[0].mxu0
      %v4996 = vadd.f32 %v4150, %v4995
      %v4997 = vpop.f32.mrb[0].mxu0
      %v4998 = vadd.f32 %v4154, %v4997
      %4999 = vdwg.mxu0
      %5000 = vmatprep.subr.bf16.mxu0 %v4670
      %5001 = vmatpush1.bf16.msra.mxu0 %v4669
      %5002 = vmatprep.subr.bf16.mxu0 %v4672
      %5003 = vmatpush1.bf16.msra.mxu0 %v4671
      %5004 = vmatprep.subr.bf16.mxu0 %v4674
      %5005 = vmatpush1.bf16.msra.mxu0 %v4673
      %5006 = vmatprep.subr.bf16.mxu0 %v4676
      %5007 = vmatpush1.bf16.msra.mxu0 %v4675
      %5008 = vmatprep.subr.bf16.mxu0 %v4678
      %5009 = vmatpush1.bf16.msra.mxu0 %v4677
      %5010 = vmatprep.subr.bf16.mxu0 %v4680
      %5011 = vmatpush1.bf16.msra.mxu0 %v4679
      %5012 = vmatprep.subr.bf16.mxu0 %v4682
      %5013 = vmatpush1.bf16.msra.mxu0 %v4681
      %5014 = vmatprep.subr.bf16.mxu0 %v4684
      %5015 = vmatpush1.bf16.msra.mxu0 %v4683
      %5016 = vmatprep.subr.bf16.mxu0 %v4686
      %5017 = vmatpush1.bf16.msra.mxu0 %v4685
      %5018 = vmatprep.subr.bf16.mxu0 %v4688
      %5019 = vmatpush1.bf16.msra.mxu0 %v4687
      %5020 = vmatprep.subr.bf16.mxu0 %v4690
      %5021 = vmatpush1.bf16.msra.mxu0 %v4689
      %5022 = vmatprep.subr.bf16.mxu0 %v4692
      %5023 = vmatpush1.bf16.msra.mxu0 %v4691
      %5024 = vmatprep.subr.bf16.mxu0 %v4694
      %5025 = vmatpush1.bf16.msra.mxu0 %v4693
      %5026 = vmatprep.subr.bf16.mxu0 %v4696
      %5027 = vmatpush1.bf16.msra.mxu0 %v4695
      %5028 = vmatprep.subr.bf16.mxu0 %v4698
      %5029 = vmatpush1.bf16.msra.mxu0 %v4697
      %5030 = vmatprep.subr.bf16.mxu0 %v4700
      %5031 = vmatpush1.bf16.msra.mxu0 %v4699
      %5032 = vmatprep.mubr.bf16.mxu0 %v3946
      %5033 = vmatmul.mubr.bf16.gmra.mrb[0].mxu0 %v3934
      %v5034 = vpop.f32.mrb[0].mxu0
      %v5035 = vadd.f32 %v4992, %v5034
      %v5036 = vpop.f32.mrb[0].mxu0
      %v5037 = vadd.f32 %v4994, %v5036
      %v5038 = vpop.f32.mrb[0].mxu0
      %v5039 = vadd.f32 %v4996, %v5038
      %v5040 = vpop.f32.mrb[0].mxu0
      %v5041 = vadd.f32 %v4998, %v5040
      %5042 = vdwg.mxu0
      %5043 = vmatprep.subr.bf16.mxu0 %v4702
      %5044 = vmatpush1.bf16.msra.mxu0 %v4701
      %5045 = vmatprep.subr.bf16.mxu0 %v4704
      %5046 = vmatpush1.bf16.msra.mxu0 %v4703
      %5047 = vmatprep.subr.bf16.mxu0 %v4706
      %5048 = vmatpush1.bf16.msra.mxu0 %v4705
      %5049 = vmatprep.subr.bf16.mxu0 %v4708
      %5050 = vmatpush1.bf16.msra.mxu0 %v4707
      %5051 = vmatprep.subr.bf16.mxu0 %v4710
      %5052 = vmatpush1.bf16.msra.mxu0 %v4709
      %5053 = vmatprep.subr.bf16.mxu0 %v4712
      %5054 = vmatpush1.bf16.msra.mxu0 %v4711
      %5055 = vmatprep.subr.bf16.mxu0 %v4714
      %5056 = vmatpush1.bf16.msra.mxu0 %v4713
      %5057 = vmatprep.subr.bf16.mxu0 %v4716
      %5058 = vmatpush1.bf16.msra.mxu0 %v4715
      %5059 = vmatprep.subr.bf16.mxu0 %v4718
      %5060 = vmatpush1.bf16.msra.mxu0 %v4717
      %5061 = vmatprep.subr.bf16.mxu0 %v4720
      %5062 = vmatpush1.bf16.msra.mxu0 %v4719
      %5063 = vmatprep.subr.bf16.mxu0 %v4722
      %5064 = vmatpush1.bf16.msra.mxu0 %v4721
      %5065 = vmatprep.subr.bf16.mxu0 %v4724
      %5066 = vmatpush1.bf16.msra.mxu0 %v4723
      %5067 = vmatprep.subr.bf16.mxu0 %v4726
      %5068 = vmatpush1.bf16.msra.mxu0 %v4725
      %5069 = vmatprep.subr.bf16.mxu0 %v4728
      %5070 = vmatpush1.bf16.msra.mxu0 %v4727
      %5071 = vmatprep.subr.bf16.mxu0 %v4730
      %5072 = vmatpush1.bf16.msra.mxu0 %v4729
      %5073 = vmatprep.subr.bf16.mxu0 %v4732
      %5074 = vmatpush1.bf16.msra.mxu0 %v4731
      %5075 = vmatprep.mubr.bf16.mxu0 %v3954
      %5076 = vmatmul.mubr.bf16.gmra.mrb[0].mxu0 %v3951
      %v5077 = vpop.f32.mrb[0].mxu0
      %v5078 = vadd.f32 %v5035, %v5077
      %v5079 = vpop.f32.mrb[0].mxu0
      %v5080 = vadd.f32 %v5037, %v5079
      %v5081 = vpop.f32.mrb[0].mxu0
      %v5082 = vadd.f32 %v5039, %v5081
      %v5083 = vpop.f32.mrb[0].mxu0
      %v5084 = vadd.f32 %v5041, %v5083
      %5085 = vdwg.mxu0
      %5086 = vmatprep.subr.bf16.mxu0 %v4734
      %5087 = vmatpush1.bf16.msra.mxu0 %v4733
      %5088 = vmatprep.subr.bf16.mxu0 %v4736
      %5089 = vmatpush1.bf16.msra.mxu0 %v4735
      %5090 = vmatprep.subr.bf16.mxu0 %v4738
      %5091 = vmatpush1.bf16.msra.mxu0 %v4737
      %5092 = vmatprep.subr.bf16.mxu0 %v4740
      %5093 = vmatpush1.bf16.msra.mxu0 %v4739
      %5094 = vmatprep.subr.bf16.mxu0 %v4742
      %5095 = vmatpush1.bf16.msra.mxu0 %v4741
      %5096 = vmatprep.subr.bf16.mxu0 %v4744
      %5097 = vmatpush1.bf16.msra.mxu0 %v4743
      %5098 = vmatprep.subr.bf16.mxu0 %v4746
      %5099 = vmatpush1.bf16.msra.mxu0 %v4745
      %5100 = vmatprep.subr.bf16.mxu0 %v4748
      %5101 = vmatpush1.bf16.msra.mxu0 %v4747
      %5102 = vmatprep.subr.bf16.mxu0 %v4750
      %5103 = vmatpush1.bf16.msra.mxu0 %v4749
      %5104 = vmatprep.subr.bf16.mxu0 %v4752
      %5105 = vmatpush1.bf16.msra.mxu0 %v4751
      %5106 = vmatprep.subr.bf16.mxu0 %v4754
      %5107 = vmatpush1.bf16.msra.mxu0 %v4753
      %5108 = vmatprep.subr.bf16.mxu0 %v4756
      %5109 = vmatpush1.bf16.msra.mxu0 %v4755
      %5110 = vmatprep.subr.bf16.mxu0 %v4758
      %5111 = vmatpush1.bf16.msra.mxu0 %v4757
      %5112 = vmatprep.subr.bf16.mxu0 %v4760
      %5113 = vmatpush1.bf16.msra.mxu0 %v4759
      %5114 = vmatprep.subr.bf16.mxu0 %v4762
      %5115 = vmatpush1.bf16.msra.mxu0 %v4761
      %5116 = vmatprep.subr.bf16.mxu0 %v4764
      %5117 = vmatpush1.bf16.msra.mxu0 %v4763
      %5118 = vmatprep.mubr.bf16.mxu0 %v3974
      %5119 = vmatmul.mubr.bf16.gmra.mrb[0].mxu0 %v3965
      %v5120 = vpop.f32.mrb[0].mxu0
      %v5121 = vadd.f32 %v5078, %v5120
      %v5122 = vpop.f32.mrb[0].mxu0
      %v5123 = vadd.f32 %v5080, %v5122
      %v5124 = vpop.f32.mrb[0].mxu0
      %v5125 = vadd.f32 %v5082, %v5124
      %v5126 = vpop.f32.mrb[0].mxu0
      %v5127 = vadd.f32 %v5084, %v5126
      %5128 = vdwg.mxu0
      %5129 = vmatprep.subr.bf16.mxu0 %v4766
      %5130 = vmatpush1.bf16.msra.mxu0 %v4765
      %5131 = vmatprep.subr.bf16.mxu0 %v4768
      %5132 = vmatpush1.bf16.msra.mxu0 %v4767
      %5133 = vmatprep.subr.bf16.mxu0 %v4770
      %5134 = vmatpush1.bf16.msra.mxu0 %v4769
      %5135 = vmatprep.subr.bf16.mxu0 %v4772
      %5136 = vmatpush1.bf16.msra.mxu0 %v4771
      %5137 = vmatprep.subr.bf16.mxu0 %v4774
      %5138 = vmatpush1.bf16.msra.mxu0 %v4773
      %5139 = vmatprep.subr.bf16.mxu0 %v4776
      %5140 = vmatpush1.bf16.msra.mxu0 %v4775
      %5141 = vmatprep.subr.bf16.mxu0 %v4778
      %5142 = vmatpush1.bf16.msra.mxu0 %v4777
      %5143 = vmatprep.subr.bf16.mxu0 %v4780
      %5144 = vmatpush1.bf16.msra.mxu0 %v4779
      %5145 = vmatprep.subr.bf16.mxu0 %v4782
      %5146 = vmatpush1.bf16.msra.mxu0 %v4781
      %5147 = vmatprep.subr.bf16.mxu0 %v4784
      %5148 = vmatpush1.bf16.msra.mxu0 %v4783
      %5149 = vmatprep.subr.bf16.mxu0 %v4786
      %5150 = vmatpush1.bf16.msra.mxu0 %v4785
      %5151 = vmatprep.subr.bf16.mxu0 %v4788
      %5152 = vmatpush1.bf16.msra.mxu0 %v4787
      %5153 = vmatprep.subr.bf16.mxu0 %v4790
      %5154 = vmatpush1.bf16.msra.mxu0 %v4789
      %5155 = vmatprep.subr.bf16.mxu0 %v4792
      %5156 = vmatpush1.bf16.msra.mxu0 %v4791
      %5157 = vmatprep.subr.bf16.mxu0 %v4794
      %5158 = vmatpush1.bf16.msra.mxu0 %v4793
      %5159 = vmatprep.subr.bf16.mxu0 %v4796
      %5160 = vmatpush1.bf16.msra.mxu0 %v4795
      %5161 = vmatprep.mubr.bf16.mxu0 %v3982
      %5162 = vmatmul.mubr.bf16.gmra.mrb[0].mxu0 %v3979
      %v5163 = vpop.f32.mrb[0].mxu0
      %v5164 = vadd.f32 %v5121, %v5163
      %v5165 = vpop.f32.mrb[0].mxu0
      %v5166 = vadd.f32 %v5123, %v5165
      %v5167 = vpop.f32.mrb[0].mxu0
      %v5168 = vadd.f32 %v5125, %v5167
      %v5169 = vpop.f32.mrb[0].mxu0
      %v5170 = vadd.f32 %v5127, %v5169
      %5171 = vdwg.mxu0
      %v5172 = vmax.f32 %v5164, 0.0
      %v5173 = vmax.f32 %v5166, 0.0
      %v5174 = vmax.f32 %v5168, 0.0
      %v5175 = vmax.f32 %v5170, 0.0
      %v5176 = vld [vmem:[%s19] sm:$0xff]
      %v5177 = vld [vmem:[%s19 + $0x8] sm:$0xff]
      %v5178 = vld [vmem:[%s19 + $0x10] sm:$0xff]
      %v5179 = vld [vmem:[%s19 + $0x18] sm:$0xff]
      %v5180 = vld [vmem:[%s19 + $0x20] sm:$0xff]
      %v5181 = vld [vmem:[%s19 + $0x28] sm:$0xff]
      %v5182 = vld [vmem:[%s19 + $0x30] sm:$0xff]
      %v5183 = vld [vmem:[%s19 + $0x38] sm:$0xff]
      %v5184 = vld [vmem:[%s19 + $0x40] sm:$0xff]
      %v5185 = vld [vmem:[%s19 + $0x48] sm:$0xff]
      %v5186 = vld [vmem:[%s19 + $0x50] sm:$0xff]
      %v5187 = vld [vmem:[%s19 + $0x58] sm:$0xff]
      %v5188 = vld [vmem:[%s19 + $0x60] sm:$0xff]
      %v5189 = vld [vmem:[%s19 + $0x68] sm:$0xff]
      %v5190 = vld [vmem:[%s19 + $0x70] sm:$0xff]
      %v5191 = vld [vmem:[%s19 + $0x78] sm:$0xff]
      %v5192 = vld [vmem:[%s19 + $0x80] sm:$0xff]
      %v5193 = vld [vmem:[%s19 + $0x88] sm:$0xff]
      %v5194 = vld [vmem:[%s19 + $0x90] sm:$0xff]
      %v5195 = vld [vmem:[%s19 + $0x98] sm:$0xff]
      %v5196 = vld [vmem:[%s21] sm:$0x3]
      %v5198 = vlaneseq
      %v5199 = vshrl.u32 %v5198, 7
      %v5200 = vsub.s32 0, %v5199
      %v5201 = vrot.slane %v5196, %v5200
      %v5202 = vlaneseq
      %v5203 = vshrl.u32 %v5202, 7
      %v5204 = vsub.s32 1, %v5203
      %v5205 = vrot.slane %v5196, %v5204
      %v5228 = vunpack.c.l.b16 %v5176
      %v5229 = vunpack.c.h.b16 %v5176
      %v5230 = vunpack.c.l.b16 %v5177
      %v5231 = vunpack.c.h.b16 %v5177
      %v5232 = vunpack.c.l.b16 %v5178
      %v5233 = vunpack.c.h.b16 %v5178
      %v5234 = vunpack.c.l.b16 %v5179
      %v5235 = vunpack.c.h.b16 %v5179
      %v5236 = vunpack.c.l.b16 %v5180
      %v5237 = vunpack.c.h.b16 %v5180
      %v5238 = vunpack.c.l.b16 %v5181
      %v5239 = vunpack.c.h.b16 %v5181
      %v5240 = vunpack.c.l.b16 %v5182
      %v5241 = vunpack.c.h.b16 %v5182
      %v5242 = vunpack.c.l.b16 %v5183
      %v5243 = vunpack.c.h.b16 %v5183
      %v5244 = vunpack.c.l.b16 %v5184
      %v5245 = vunpack.c.h.b16 %v5184
      %v5246 = vunpack.c.l.b16 %v5185
      %v5247 = vunpack.c.h.b16 %v5185
      %v5248 = vunpack.c.l.b16 %v5186
      %v5249 = vunpack.c.h.b16 %v5186
      %v5250 = vunpack.c.l.b16 %v5187
      %v5251 = vunpack.c.h.b16 %v5187
      %v5252 = vunpack.c.l.b16 %v5188
      %v5253 = vunpack.c.h.b16 %v5188
      %v5254 = vunpack.c.l.b16 %v5189
      %v5255 = vunpack.c.h.b16 %v5189
      %v5256 = vunpack.c.l.b16 %v5190
      %v5257 = vunpack.c.h.b16 %v5190
      %v5258 = vunpack.c.l.b16 %v5191
      %v5259 = vunpack.c.h.b16 %v5191
      %v5260 = vunpack.c.l.b16 %v5192
      %v5261 = vunpack.c.h.b16 %v5192
      %v5262 = vunpack.c.l.b16 %v5193
      %v5263 = vunpack.c.h.b16 %v5193
      %v5264 = vunpack.c.l.b16 %v5194
      %v5265 = vunpack.c.h.b16 %v5194
      %v5266 = vunpack.c.l.b16 %v5195
      %v5267 = vunpack.c.h.b16 %v5195
      %v5268 = vpack.c.b16 %v5230, %v5228
      %v5269 = vpack.c.b16 %v5231, %v5229
      %v5270 = vpack.c.b16 %v5234, %v5232
      %v5271 = vpack.c.b16 %v5235, %v5233
      %v5272 = vpack.c.b16 %v5238, %v5236
      %v5273 = vpack.c.b16 %v5239, %v5237
      %v5274 = vpack.c.b16 %v5242, %v5240
      %v5275 = vpack.c.b16 %v5243, %v5241
      %v5276 = vpack.c.b16 %v5246, %v5244
      %v5277 = vpack.c.b16 %v5247, %v5245
      %v5278 = vpack.c.b16 %v5250, %v5248
      %v5279 = vpack.c.b16 %v5251, %v5249
      %v5280 = vpack.c.b16 %v5254, %v5252
      %v5281 = vpack.c.b16 %v5255, %v5253
      %v5282 = vpack.c.b16 %v5258, %v5256
      %v5283 = vpack.c.b16 %v5259, %v5257
      %v5284 = vpack.c.b16 %v5262, %v5260
      %v5285 = vpack.c.b16 %v5263, %v5261
      %v5286 = vpack.c.b16 %v5266, %v5264
      %v5287 = vpack.c.b16 %v5267, %v5265
      %5308 = vmatprep.subr.bf16.mxu0 %v5269
      %5309 = vmatpush1.bf16.msra.mxu0 %v5268
      %5310 = vmatprep.subr.bf16.mxu0 %v5271
      %5311 = vmatpush1.bf16.msra.mxu0 %v5270
      %5312 = vmatprep.subr.bf16.mxu0 %v5273
      %5313 = vmatpush1.bf16.msra.mxu0 %v5272
      %5314 = vmatprep.subr.bf16.mxu0 %v5275
      %5315 = vmatpush1.bf16.msra.mxu0 %v5274
      %5316 = vmatprep.subr.bf16.mxu0 %v5277
      %5317 = vmatpush1.bf16.msra.mxu0 %v5276
      %5318 = vmatprep.subr.bf16.mxu0 %v5279
      %5319 = vmatpush1.bf16.msra.mxu0 %v5278
      %5320 = vmatprep.subr.bf16.mxu0 %v5281
      %5321 = vmatpush1.bf16.msra.mxu0 %v5280
      %5322 = vmatprep.subr.bf16.mxu0 %v5283
      %5323 = vmatpush1.bf16.msra.mxu0 %v5282
      %5324 = vmatprep.subr.bf16.mxu0 %v5285
      %5325 = vmatpush1.bf16.msra.mxu0 %v5284
      %5326 = vmatprep.subr.bf16.mxu0 %v5287
      %5327 = vmatpush1.bf16.msra.mxu0 %v5286
      %5328 = vmatprep.subr.bf16.mxu0 0
      %5329 = vmatpush1.bf16.msra.mxu0 0
      %5330 = vmatprep.subr.bf16.mxu0 0
      %5331 = vmatpush1.bf16.msra.mxu0 0
      %5332 = vmatprep.subr.bf16.mxu0 0
      %5333 = vmatpush1.bf16.msra.mxu0 0
      %5334 = vmatprep.subr.bf16.mxu0 0
      %5335 = vmatpush1.bf16.msra.mxu0 0
      %5336 = vmatprep.subr.bf16.mxu0 0
      %5337 = vmatpush1.bf16.msra.mxu0 0
      %5338 = vmatprep.subr.bf16.mxu0 0
      %5339 = vmatpush1.bf16.msra.mxu0 0
      %5340 = vmatprep.mubr.bf16.mxu0 %v1244
      %5341 = vmatmul.mubr.bf16.gmra.mrb[0].mxu0 %v1139
      %v5342 = vpop.f32.mrb[0].mxu0
      %v5343 = vadd.f32 %v5201, %v5342
      %v5344 = vpop.f32.mrb[0].mxu0
      %v5345 = vadd.f32 %v5205, %v5344
      %v5346 = vpop.f32.mrb[0].mxu0
      %v5347 = vadd.f32 %v5201, %v5346
      %v5348 = vpop.f32.mrb[0].mxu0
      %v5349 = vadd.f32 %v5205, %v5348
      %5350 = vdwg.mxu0
      %v5351 = vmax.f32 %v5343, 0.0
      %v5352 = vmax.f32 %v5345, 0.0
      %v5353 = vmax.f32 %v5347, 0.0
      %v5354 = vmax.f32 %v5349, 0.0
      %v5355 = vpack.c.bf16 %v5353, %v5351
      %v5356 = vpack.c.bf16 %v5354, %v5352
      %v5359 = vunpack.c.l.b16 %v5355
      %v5360 = vunpack.c.l.b16 %v5356
      %v5361 = vunpack.c.h.b16 %v5355
      %v5362 = vunpack.c.h.b16 %v5356
      %v5363 = vpack.c.b16 %v5360, %v5359
      %v5364 = vpack.c.b16 %v5362, %v5361
      %v5365 = vrot.slane %v5363, 7
      %v5366 = vrot.slane %v5365, 4
      %v5367 = vrot.slane %v5364, 7
      %v5368 = vsel %vm1305, %v5366, %v5367
      %v5369 = vrot.slane %v5367, 4
      %5373 = vst [vmem:[#allocation2] sm:$0xee] %v5365
      %5374 = vst [vmem:[#allocation2 + $0x8] sm:$0xff] %v5368
      %5375 = vst [vmem:[#allocation2 + $0x10] sm:$0x11] %v5369
      %v5376 = vld [vmem:[#allocation2] sm:$0xff]
      %v5377 = vld [vmem:[#allocation2 + $0x8] sm:$0xff]
      %v5378 = vld [vmem:[#allocation2 + $0x10] sm:$0x33]
      %v5382 = vunpack.c.l.b16 %v5376
      %v5383 = vunpack.c.h.b16 %v5376
      %v5384 = vunpack.c.l.b16 %v5377
      %v5385 = vunpack.c.h.b16 %v5377
      %v5386 = vunpack.c.l.b16 %v5378
      %v5387 = vunpack.c.h.b16 %v5378
      %v5388 = vpack.c.b16 %v5384, %v5382
      %v5389 = vpack.c.b16 %v5385, %v5383
      %v5390 = vpack.c.b16 %v5386, %v5386
      %v5391 = vpack.c.b16 %v5387, %v5387
      %v5393 = vshrl.u32 %v5388, 16
      %v5395 = vshll.u32 %v5388, 16
      %v5397 = vrot.slane %v5395, 1
      %v5398 = vor.u32 %v5393, %v5397
      %v5400 = vshll.u32 %v5390, 16
      %v5402 = vrot.slane %v5400, 1
      %v5403 = vsel %vm1335, %v5398, %v5402
      %v5405 = vshrl.u32 %v5389, 16
      %v5407 = vshll.u32 %v5389, 16
      %v5409 = vrot.slane %v5407, 1
      %v5410 = vor.u32 %v5405, %v5409
      %v5412 = vshll.u32 %v5391, 16
      %v5414 = vrot.slane %v5412, 1
      %v5415 = vsel %vm1335, %v5410, %v5414
      %v5416 = vshrl.u32 %v5390, 16
      %v5418 = vshrl.u32 %v5391, 16
      %v5420 = vrot.slane %v5388, 1
      %v5421 = vrot.slane %v5390, 1
      %v5422 = vsel %vm1362, %v5420, %v5421
      %v5423 = vrot.slane %v5389, 1
      %v5424 = vrot.slane %v5391, 1
      %v5425 = vsel %vm1362, %v5423, %v5424
      %v5426 = vld [vmem:[%s23] sm:$0xff]
      %v5427 = vld [vmem:[%s23 + $0x8] sm:$0xff]
      %v5428 = vld [vmem:[%s23 + $0x10] sm:$0xff]
      %v5429 = vld [vmem:[%s23 + $0x18] sm:$0xff]
      %v5430 = vld [vmem:[%s23 + $0x20] sm:$0xff]
      %v5431 = vld [vmem:[%s23 + $0x28] sm:$0xff]
      %v5432 = vld [vmem:[%s23 + $0x30] sm:$0xff]
      %v5433 = vld [vmem:[%s23 + $0x38] sm:$0xff]
      %v5434 = vld [vmem:[%s23 + $0x40] sm:$0xff]
      %v5435 = vld [vmem:[%s23 + $0x48] sm:$0xff]
      %v5436 = vld [vmem:[%s23 + $0x50] sm:$0xff]
      %v5437 = vld [vmem:[%s23 + $0x58] sm:$0xff]
      %v5438 = vld [vmem:[%s23 + $0x60] sm:$0xff]
      %v5439 = vld [vmem:[%s23 + $0x68] sm:$0xff]
      %v5440 = vld [vmem:[%s23 + $0x70] sm:$0xff]
      %v5441 = vld [vmem:[%s23 + $0x78] sm:$0xff]
      %v5442 = vld [vmem:[%s23 + $0x80] sm:$0xff]
      %v5443 = vld [vmem:[%s23 + $0x88] sm:$0xff]
      %v5444 = vld [vmem:[%s23 + $0x90] sm:$0xff]
      %v5445 = vld [vmem:[%s23 + $0x98] sm:$0xff]
      %v5446 = vld [vmem:[%s23 + $0xa0] sm:$0xff]
      %v5447 = vld [vmem:[%s23 + $0xa8] sm:$0xff]
      %v5448 = vld [vmem:[%s23 + $0xb0] sm:$0xff]
      %v5449 = vld [vmem:[%s23 + $0xb8] sm:$0xff]
      %v5450 = vld [vmem:[%s23 + $0xc0] sm:$0xff]
      %v5451 = vld [vmem:[%s23 + $0xc8] sm:$0xff]
      %v5452 = vld [vmem:[%s23 + $0xd0] sm:$0xff]
      %v5453 = vld [vmem:[%s23 + $0xd8] sm:$0xff]
      %v5454 = vld [vmem:[%s23 + $0xe0] sm:$0xff]
      %v5455 = vld [vmem:[%s23 + $0xe8] sm:$0xff]
      %v5456 = vld [vmem:[%s23 + $0xf0] sm:$0xff]
      %v5457 = vld [vmem:[%s23 + $0xf8] sm:$0xff]
      %v5458 = vld [vmem:[%s23 + $0x100] sm:$0xff]
      %v5459 = vld [vmem:[%s23 + $0x108] sm:$0xff]
      %v5460 = vld [vmem:[%s23 + $0x110] sm:$0xff]
      %v5461 = vld [vmem:[%s23 + $0x118] sm:$0xff]
      %v5462 = vld [vmem:[%s23 + $0x120] sm:$0xff]
      %v5463 = vld [vmem:[%s23 + $0x128] sm:$0xff]
      %v5464 = vld [vmem:[%s23 + $0x130] sm:$0xff]
      %v5465 = vld [vmem:[%s23 + $0x138] sm:$0xff]
      %v5466 = vld [vmem:[%s23 + $0x140] sm:$0xff]
      %v5467 = vld [vmem:[%s23 + $0x148] sm:$0xff]
      %v5468 = vld [vmem:[%s23 + $0x150] sm:$0xff]
      %v5469 = vld [vmem:[%s23 + $0x158] sm:$0xff]
      %v5470 = vld [vmem:[%s23 + $0x160] sm:$0xff]
      %v5471 = vld [vmem:[%s23 + $0x168] sm:$0xff]
      %v5472 = vld [vmem:[%s23 + $0x170] sm:$0xff]
      %v5473 = vld [vmem:[%s23 + $0x178] sm:$0xff]
      %v5474 = vld [vmem:[%s23 + $0x180] sm:$0xff]
      %v5475 = vld [vmem:[%s23 + $0x188] sm:$0xff]
      %v5476 = vld [vmem:[%s23 + $0x190] sm:$0xff]
      %v5477 = vld [vmem:[%s23 + $0x198] sm:$0xff]
      %v5478 = vld [vmem:[%s23 + $0x1a0] sm:$0xff]
      %v5479 = vld [vmem:[%s23 + $0x1a8] sm:$0xff]
      %v5480 = vld [vmem:[%s23 + $0x1b0] sm:$0xff]
      %v5481 = vld [vmem:[%s23 + $0x1b8] sm:$0xff]
      %v5482 = vld [vmem:[%s23 + $0x1c0] sm:$0xff]
      %v5483 = vld [vmem:[%s23 + $0x1c8] sm:$0xff]
      %v5484 = vld [vmem:[%s23 + $0x1d0] sm:$0xff]
      %v5485 = vld [vmem:[%s23 + $0x1d8] sm:$0xff]
      %v5486 = vld [vmem:[%s23 + $0x1e0] sm:$0xff]
      %v5487 = vld [vmem:[%s23 + $0x1e8] sm:$0xff]
      %v5488 = vld [vmem:[%s23 + $0x1f0] sm:$0xff]
      %v5489 = vld [vmem:[%s23 + $0x1f8] sm:$0xff]
      %v5490 = vld [vmem:[%s23 + $0x200] sm:$0xff]
      %v5491 = vld [vmem:[%s23 + $0x208] sm:$0xff]
      %v5492 = vld [vmem:[%s23 + $0x210] sm:$0xff]
      %v5493 = vld [vmem:[%s23 + $0x218] sm:$0xff]
      %v5494 = vld [vmem:[%s23 + $0x220] sm:$0xff]
      %v5495 = vld [vmem:[%s23 + $0x228] sm:$0xff]
      %v5496 = vld [vmem:[%s23 + $0x230] sm:$0xff]
      %v5497 = vld [vmem:[%s23 + $0x238] sm:$0xff]
      %v5498 = vld [vmem:[%s23 + $0x240] sm:$0xff]
      %v5499 = vld [vmem:[%s23 + $0x248] sm:$0xff]
      %v5500 = vld [vmem:[%s23 + $0x250] sm:$0xff]
      %v5501 = vld [vmem:[%s23 + $0x258] sm:$0xff]
      %v5502 = vld [vmem:[%s23 + $0x260] sm:$0xff]
      %v5503 = vld [vmem:[%s23 + $0x268] sm:$0xff]
      %v5504 = vld [vmem:[%s23 + $0x270] sm:$0xff]
      %v5505 = vld [vmem:[%s23 + $0x278] sm:$0xff]
      %v5506 = vld [vmem:[%s23 + $0x280] sm:$0xff]
      %v5507 = vld [vmem:[%s23 + $0x288] sm:$0xff]
      %v5508 = vld [vmem:[%s23 + $0x290] sm:$0xff]
      %v5509 = vld [vmem:[%s23 + $0x298] sm:$0xff]
      %v5510 = vld [vmem:[%s23 + $0x2a0] sm:$0xff]
      %v5511 = vld [vmem:[%s23 + $0x2a8] sm:$0xff]
      %v5512 = vld [vmem:[%s23 + $0x2b0] sm:$0xff]
      %v5513 = vld [vmem:[%s23 + $0x2b8] sm:$0xff]
      %v5514 = vld [vmem:[%s23 + $0x2c0] sm:$0xff]
      %v5515 = vld [vmem:[%s23 + $0x2c8] sm:$0xff]
      %v5516 = vld [vmem:[%s23 + $0x2d0] sm:$0xff]
      %v5517 = vld [vmem:[%s23 + $0x2d8] sm:$0xff]
      %v5518 = vld [vmem:[%s23 + $0x2e0] sm:$0xff]
      %v5519 = vld [vmem:[%s23 + $0x2e8] sm:$0xff]
      %v5520 = vld [vmem:[%s23 + $0x2f0] sm:$0xff]
      %v5521 = vld [vmem:[%s23 + $0x2f8] sm:$0xff]
      %v5522 = vld [vmem:[%s25] sm:$0x3]
      %v5524 = vlaneseq
      %v5525 = vshrl.u32 %v5524, 7
      %v5526 = vsub.s32 0, %v5525
      %v5527 = vrot.slane %v5522, %v5526
      %v5528 = vlaneseq
      %v5529 = vshrl.u32 %v5528, 7
      %v5530 = vsub.s32 1, %v5529
      %v5531 = vrot.slane %v5522, %v5530
      %v5535 = vshrl.u32 %v5403, 16
      %v5537 = vshll.u32 %v5403, 16
      %v5539 = vrot.slane %v5537, 1
      %v5540 = vor.u32 %v5535, %v5539
      %v5542 = vshll.u32 %v5416, 16
      %v5544 = vrot.slane %v5542, 1
      %v5545 = vsel %vm1335, %v5540, %v5544
      %v5547 = vshrl.u32 %v5415, 16
      %v5549 = vshll.u32 %v5415, 16
      %v5551 = vrot.slane %v5549, 1
      %v5552 = vor.u32 %v5547, %v5551
      %v5554 = vshll.u32 %v5418, 16
      %v5556 = vrot.slane %v5554, 1
      %v5557 = vsel %vm1335, %v5552, %v5556
      %v5559 = vshrl.u32 %v5422, 16
      %v5561 = vshll.u32 %v5422, 16
      %v5563 = vrot.slane %v5561, 1
      %v5564 = vor.u32 %v5559, %v5563
      %v5566 = vshll.u32 %v5421, 16
      %v5568 = vrot.slane %v5566, 1
      %v5569 = vsel %vm1335, %v5564, %v5568
      %v5571 = vshrl.u32 %v5425, 16
      %v5573 = vshll.u32 %v5425, 16
      %v5575 = vrot.slane %v5573, 1
      %v5576 = vor.u32 %v5571, %v5575
      %v5578 = vshll.u32 %v5424, 16
      %v5580 = vrot.slane %v5578, 1
      %v5581 = vsel %vm1335, %v5576, %v5580
      %v5684 = vunpack.c.l.b16 %v5426
      %v5685 = vunpack.c.h.b16 %v5426
      %v5686 = vunpack.c.l.b16 %v5427
      %v5687 = vunpack.c.h.b16 %v5427
      %v5688 = vunpack.c.l.b16 %v5428
      %v5689 = vunpack.c.h.b16 %v5428
      %v5690 = vunpack.c.l.b16 %v5429
      %v5691 = vunpack.c.h.b16 %v5429
      %v5692 = vunpack.c.l.b16 %v5430
      %v5693 = vunpack.c.h.b16 %v5430
      %v5694 = vunpack.c.l.b16 %v5431
      %v5695 = vunpack.c.h.b16 %v5431
      %v5696 = vunpack.c.l.b16 %v5432
      %v5697 = vunpack.c.h.b16 %v5432
      %v5698 = vunpack.c.l.b16 %v5433
      %v5699 = vunpack.c.h.b16 %v5433
      %v5700 = vunpack.c.l.b16 %v5434
      %v5701 = vunpack.c.h.b16 %v5434
      %v5702 = vunpack.c.l.b16 %v5435
      %v5703 = vunpack.c.h.b16 %v5435
      %v5704 = vunpack.c.l.b16 %v5436
      %v5705 = vunpack.c.h.b16 %v5436
      %v5706 = vunpack.c.l.b16 %v5437
      %v5707 = vunpack.c.h.b16 %v5437
      %v5708 = vunpack.c.l.b16 %v5438
      %v5709 = vunpack.c.h.b16 %v5438
      %v5710 = vunpack.c.l.b16 %v5439
      %v5711 = vunpack.c.h.b16 %v5439
      %v5712 = vunpack.c.l.b16 %v5440
      %v5713 = vunpack.c.h.b16 %v5440
      %v5714 = vunpack.c.l.b16 %v5441
      %v5715 = vunpack.c.h.b16 %v5441
      %v5716 = vunpack.c.l.b16 %v5442
      %v5717 = vunpack.c.h.b16 %v5442
      %v5718 = vunpack.c.l.b16 %v5443
      %v5719 = vunpack.c.h.b16 %v5443
      %v5720 = vunpack.c.l.b16 %v5444
      %v5721 = vunpack.c.h.b16 %v5444
      %v5722 = vunpack.c.l.b16 %v5445
      %v5723 = vunpack.c.h.b16 %v5445
      %v5724 = vunpack.c.l.b16 %v5446
      %v5725 = vunpack.c.h.b16 %v5446
      %v5726 = vunpack.c.l.b16 %v5447
      %v5727 = vunpack.c.h.b16 %v5447
      %v5728 = vunpack.c.l.b16 %v5448
      %v5729 = vunpack.c.h.b16 %v5448
      %v5730 = vunpack.c.l.b16 %v5449
      %v5731 = vunpack.c.h.b16 %v5449
      %v5732 = vunpack.c.l.b16 %v5450
      %v5733 = vunpack.c.h.b16 %v5450
      %v5734 = vunpack.c.l.b16 %v5451
      %v5735 = vunpack.c.h.b16 %v5451
      %v5736 = vunpack.c.l.b16 %v5452
      %v5737 = vunpack.c.h.b16 %v5452
      %v5738 = vunpack.c.l.b16 %v5453
      %v5739 = vunpack.c.h.b16 %v5453
      %v5740 = vunpack.c.l.b16 %v5454
      %v5741 = vunpack.c.h.b16 %v5454
      %v5742 = vunpack.c.l.b16 %v5455
      %v5743 = vunpack.c.h.b16 %v5455
      %v5744 = vunpack.c.l.b16 %v5456
      %v5745 = vunpack.c.h.b16 %v5456
      %v5746 = vunpack.c.l.b16 %v5457
      %v5747 = vunpack.c.h.b16 %v5457
      %v5748 = vunpack.c.l.b16 %v5458
      %v5749 = vunpack.c.h.b16 %v5458
      %v5750 = vunpack.c.l.b16 %v5459
      %v5751 = vunpack.c.h.b16 %v5459
      %v5752 = vunpack.c.l.b16 %v5460
      %v5753 = vunpack.c.h.b16 %v5460
      %v5754 = vunpack.c.l.b16 %v5461
      %v5755 = vunpack.c.h.b16 %v5461
      %v5756 = vunpack.c.l.b16 %v5462
      %v5757 = vunpack.c.h.b16 %v5462
      %v5758 = vunpack.c.l.b16 %v5463
      %v5759 = vunpack.c.h.b16 %v5463
      %v5760 = vunpack.c.l.b16 %v5464
      %v5761 = vunpack.c.h.b16 %v5464
      %v5762 = vunpack.c.l.b16 %v5465
      %v5763 = vunpack.c.h.b16 %v5465
      %v5764 = vunpack.c.l.b16 %v5466
      %v5765 = vunpack.c.h.b16 %v5466
      %v5766 = vunpack.c.l.b16 %v5467
      %v5767 = vunpack.c.h.b16 %v5467
      %v5768 = vunpack.c.l.b16 %v5468
      %v5769 = vunpack.c.h.b16 %v5468
      %v5770 = vunpack.c.l.b16 %v5469
      %v5771 = vunpack.c.h.b16 %v5469
      %v5772 = vunpack.c.l.b16 %v5470
      %v5773 = vunpack.c.h.b16 %v5470
      %v5774 = vunpack.c.l.b16 %v5471
      %v5775 = vunpack.c.h.b16 %v5471
      %v5776 = vunpack.c.l.b16 %v5472
      %v5777 = vunpack.c.h.b16 %v5472
      %v5778 = vunpack.c.l.b16 %v5473
      %v5779 = vunpack.c.h.b16 %v5473
      %v5780 = vunpack.c.l.b16 %v5474
      %v5781 = vunpack.c.h.b16 %v5474
      %v5782 = vunpack.c.l.b16 %v5475
      %v5783 = vunpack.c.h.b16 %v5475
      %v5784 = vunpack.c.l.b16 %v5476
      %v5785 = vunpack.c.h.b16 %v5476
      %v5786 = vunpack.c.l.b16 %v5477
      %v5787 = vunpack.c.h.b16 %v5477
      %v5788 = vunpack.c.l.b16 %v5478
      %v5789 = vunpack.c.h.b16 %v5478
      %v5790 = vunpack.c.l.b16 %v5479
      %v5791 = vunpack.c.h.b16 %v5479
      %v5792 = vunpack.c.l.b16 %v5480
      %v5793 = vunpack.c.h.b16 %v5480
      %v5794 = vunpack.c.l.b16 %v5481
      %v5795 = vunpack.c.h.b16 %v5481
      %v5796 = vunpack.c.l.b16 %v5482
      %v5797 = vunpack.c.h.b16 %v5482
      %v5798 = vunpack.c.l.b16 %v5483
      %v5799 = vunpack.c.h.b16 %v5483
      %v5800 = vunpack.c.l.b16 %v5484
      %v5801 = vunpack.c.h.b16 %v5484
      %v5802 = vunpack.c.l.b16 %v5485
      %v5803 = vunpack.c.h.b16 %v5485
      %v5804 = vunpack.c.l.b16 %v5486
      %v5805 = vunpack.c.h.b16 %v5486
      %v5806 = vunpack.c.l.b16 %v5487
      %v5807 = vunpack.c.h.b16 %v5487
      %v5808 = vunpack.c.l.b16 %v5488
      %v5809 = vunpack.c.h.b16 %v5488
      %v5810 = vunpack.c.l.b16 %v5489
      %v5811 = vunpack.c.h.b16 %v5489
      %v5812 = vunpack.c.l.b16 %v5490
      %v5813 = vunpack.c.h.b16 %v5490
      %v5814 = vunpack.c.l.b16 %v5491
      %v5815 = vunpack.c.h.b16 %v5491
      %v5816 = vunpack.c.l.b16 %v5492
      %v5817 = vunpack.c.h.b16 %v5492
      %v5818 = vunpack.c.l.b16 %v5493
      %v5819 = vunpack.c.h.b16 %v5493
      %v5820 = vunpack.c.l.b16 %v5494
      %v5821 = vunpack.c.h.b16 %v5494
      %v5822 = vunpack.c.l.b16 %v5495
      %v5823 = vunpack.c.h.b16 %v5495
      %v5824 = vunpack.c.l.b16 %v5496
      %v5825 = vunpack.c.h.b16 %v5496
      %v5826 = vunpack.c.l.b16 %v5497
      %v5827 = vunpack.c.h.b16 %v5497
      %v5828 = vunpack.c.l.b16 %v5498
      %v5829 = vunpack.c.h.b16 %v5498
      %v5830 = vunpack.c.l.b16 %v5499
      %v5831 = vunpack.c.h.b16 %v5499
      %v5832 = vunpack.c.l.b16 %v5500
      %v5833 = vunpack.c.h.b16 %v5500
      %v5834 = vunpack.c.l.b16 %v5501
      %v5835 = vunpack.c.h.b16 %v5501
      %v5836 = vunpack.c.l.b16 %v5502
      %v5837 = vunpack.c.h.b16 %v5502
      %v5838 = vunpack.c.l.b16 %v5503
      %v5839 = vunpack.c.h.b16 %v5503
      %v5840 = vunpack.c.l.b16 %v5504
      %v5841 = vunpack.c.h.b16 %v5504
      %v5842 = vunpack.c.l.b16 %v5505
      %v5843 = vunpack.c.h.b16 %v5505
      %v5844 = vunpack.c.l.b16 %v5506
      %v5845 = vunpack.c.h.b16 %v5506
      %v5846 = vunpack.c.l.b16 %v5507
      %v5847 = vunpack.c.h.b16 %v5507
      %v5848 = vunpack.c.l.b16 %v5508
      %v5849 = vunpack.c.h.b16 %v5508
      %v5850 = vunpack.c.l.b16 %v5509
      %v5851 = vunpack.c.h.b16 %v5509
      %v5852 = vunpack.c.l.b16 %v5510
      %v5853 = vunpack.c.h.b16 %v5510
      %v5854 = vunpack.c.l.b16 %v5511
      %v5855 = vunpack.c.h.b16 %v5511
      %v5856 = vunpack.c.l.b16 %v5512
      %v5857 = vunpack.c.h.b16 %v5512
      %v5858 = vunpack.c.l.b16 %v5513
      %v5859 = vunpack.c.h.b16 %v5513
      %v5860 = vunpack.c.l.b16 %v5514
      %v5861 = vunpack.c.h.b16 %v5514
      %v5862 = vunpack.c.l.b16 %v5515
      %v5863 = vunpack.c.h.b16 %v5515
      %v5864 = vunpack.c.l.b16 %v5516
      %v5865 = vunpack.c.h.b16 %v5516
      %v5866 = vunpack.c.l.b16 %v5517
      %v5867 = vunpack.c.h.b16 %v5517
      %v5868 = vunpack.c.l.b16 %v5518
      %v5869 = vunpack.c.h.b16 %v5518
      %v5870 = vunpack.c.l.b16 %v5519
      %v5871 = vunpack.c.h.b16 %v5519
      %v5872 = vunpack.c.l.b16 %v5520
      %v5873 = vunpack.c.h.b16 %v5520
      %v5874 = vunpack.c.l.b16 %v5521
      %v5875 = vunpack.c.h.b16 %v5521
      %v5876 = vpack.c.b16 %v5686, %v5684
      %v5877 = vpack.c.b16 %v5687, %v5685
      %v5878 = vpack.c.b16 %v5690, %v5688
      %v5879 = vpack.c.b16 %v5691, %v5689
      %v5880 = vpack.c.b16 %v5694, %v5692
      %v5881 = vpack.c.b16 %v5695, %v5693
      %v5882 = vpack.c.b16 %v5698, %v5696
      %v5883 = vpack.c.b16 %v5699, %v5697
      %v5884 = vpack.c.b16 %v5702, %v5700
      %v5885 = vpack.c.b16 %v5703, %v5701
      %v5886 = vpack.c.b16 %v5706, %v5704
      %v5887 = vpack.c.b16 %v5707, %v5705
      %v5888 = vpack.c.b16 %v5710, %v5708
      %v5889 = vpack.c.b16 %v5711, %v5709
      %v5890 = vpack.c.b16 %v5714, %v5712
      %v5891 = vpack.c.b16 %v5715, %v5713
      %v5892 = vpack.c.b16 %v5718, %v5716
      %v5893 = vpack.c.b16 %v5719, %v5717
      %v5894 = vpack.c.b16 %v5722, %v5720
      %v5895 = vpack.c.b16 %v5723, %v5721
      %v5896 = vpack.c.b16 %v5726, %v5724
      %v5897 = vpack.c.b16 %v5727, %v5725
      %v5898 = vpack.c.b16 %v5730, %v5728
      %v5899 = vpack.c.b16 %v5731, %v5729
      %v5900 = vpack.c.b16 %v5734, %v5732
      %v5901 = vpack.c.b16 %v5735, %v5733
      %v5902 = vpack.c.b16 %v5738, %v5736
      %v5903 = vpack.c.b16 %v5739, %v5737
      %v5904 = vpack.c.b16 %v5742, %v5740
      %v5905 = vpack.c.b16 %v5743, %v5741
      %v5906 = vpack.c.b16 %v5746, %v5744
      %v5907 = vpack.c.b16 %v5747, %v5745
      %v5908 = vpack.c.b16 %v5750, %v5748
      %v5909 = vpack.c.b16 %v5751, %v5749
      %v5910 = vpack.c.b16 %v5754, %v5752
      %v5911 = vpack.c.b16 %v5755, %v5753
      %v5912 = vpack.c.b16 %v5758, %v5756
      %v5913 = vpack.c.b16 %v5759, %v5757
      %v5914 = vpack.c.b16 %v5762, %v5760
      %v5915 = vpack.c.b16 %v5763, %v5761
      %v5916 = vpack.c.b16 %v5766, %v5764
      %v5917 = vpack.c.b16 %v5767, %v5765
      %v5918 = vpack.c.b16 %v5770, %v5768
      %v5919 = vpack.c.b16 %v5771, %v5769
      %v5920 = vpack.c.b16 %v5774, %v5772
      %v5921 = vpack.c.b16 %v5775, %v5773
      %v5922 = vpack.c.b16 %v5778, %v5776
      %v5923 = vpack.c.b16 %v5779, %v5777
      %v5924 = vpack.c.b16 %v5782, %v5780
      %v5925 = vpack.c.b16 %v5783, %v5781
      %v5926 = vpack.c.b16 %v5786, %v5784
      %v5927 = vpack.c.b16 %v5787, %v5785
      %v5928 = vpack.c.b16 %v5790, %v5788
      %v5929 = vpack.c.b16 %v5791, %v5789
      %v5930 = vpack.c.b16 %v5794, %v5792
      %v5931 = vpack.c.b16 %v5795, %v5793
      %v5932 = vpack.c.b16 %v5798, %v5796
      %v5933 = vpack.c.b16 %v5799, %v5797
      %v5934 = vpack.c.b16 %v5802, %v5800
      %v5935 = vpack.c.b16 %v5803, %v5801
      %v5936 = vpack.c.b16 %v5806, %v5804
      %v5937 = vpack.c.b16 %v5807, %v5805
      %v5938 = vpack.c.b16 %v5810, %v5808
      %v5939 = vpack.c.b16 %v5811, %v5809
      %v5940 = vpack.c.b16 %v5814, %v5812
      %v5941 = vpack.c.b16 %v5815, %v5813
      %v5942 = vpack.c.b16 %v5818, %v5816
      %v5943 = vpack.c.b16 %v5819, %v5817
      %v5944 = vpack.c.b16 %v5822, %v5820
      %v5945 = vpack.c.b16 %v5823, %v5821
      %v5946 = vpack.c.b16 %v5826, %v5824
      %v5947 = vpack.c.b16 %v5827, %v5825
      %v5948 = vpack.c.b16 %v5830, %v5828
      %v5949 = vpack.c.b16 %v5831, %v5829
      %v5950 = vpack.c.b16 %v5834, %v5832
      %v5951 = vpack.c.b16 %v5835, %v5833
      %v5952 = vpack.c.b16 %v5838, %v5836
      %v5953 = vpack.c.b16 %v5839, %v5837
      %v5954 = vpack.c.b16 %v5842, %v5840
      %v5955 = vpack.c.b16 %v5843, %v5841
      %v5956 = vpack.c.b16 %v5846, %v5844
      %v5957 = vpack.c.b16 %v5847, %v5845
      %v5958 = vpack.c.b16 %v5850, %v5848
      %v5959 = vpack.c.b16 %v5851, %v5849
      %v5960 = vpack.c.b16 %v5854, %v5852
      %v5961 = vpack.c.b16 %v5855, %v5853
      %v5962 = vpack.c.b16 %v5858, %v5856
      %v5963 = vpack.c.b16 %v5859, %v5857
      %v5964 = vpack.c.b16 %v5862, %v5860
      %v5965 = vpack.c.b16 %v5863, %v5861
      %v5966 = vpack.c.b16 %v5866, %v5864
      %v5967 = vpack.c.b16 %v5867, %v5865
      %v5968 = vpack.c.b16 %v5870, %v5868
      %v5969 = vpack.c.b16 %v5871, %v5869
      %v5970 = vpack.c.b16 %v5874, %v5872
      %v5971 = vpack.c.b16 %v5875, %v5873
      %6068 = vmatprep.subr.bf16.mxu0 %v5877
      %6069 = vmatpush1.bf16.msra.mxu0 %v5876
      %6070 = vmatprep.subr.bf16.mxu0 %v5879
      %6071 = vmatpush1.bf16.msra.mxu0 %v5878
      %6072 = vmatprep.subr.bf16.mxu0 %v5881
      %6073 = vmatpush1.bf16.msra.mxu0 %v5880
      %6074 = vmatprep.subr.bf16.mxu0 %v5883
      %6075 = vmatpush1.bf16.msra.mxu0 %v5882
      %6076 = vmatprep.subr.bf16.mxu0 %v5885
      %6077 = vmatpush1.bf16.msra.mxu0 %v5884
      %6078 = vmatprep.subr.bf16.mxu0 %v5887
      %6079 = vmatpush1.bf16.msra.mxu0 %v5886
      %6080 = vmatprep.subr.bf16.mxu0 %v5889
      %6081 = vmatpush1.bf16.msra.mxu0 %v5888
      %6082 = vmatprep.subr.bf16.mxu0 %v5891
      %6083 = vmatpush1.bf16.msra.mxu0 %v5890
      %6084 = vmatprep.subr.bf16.mxu0 %v5893
      %6085 = vmatpush1.bf16.msra.mxu0 %v5892
      %6086 = vmatprep.subr.bf16.mxu0 %v5895
      %6087 = vmatpush1.bf16.msra.mxu0 %v5894
      %6088 = vmatprep.subr.bf16.mxu0 %v5897
      %6089 = vmatpush1.bf16.msra.mxu0 %v5896
      %6090 = vmatprep.subr.bf16.mxu0 %v5899
      %6091 = vmatpush1.bf16.msra.mxu0 %v5898
      %6092 = vmatprep.subr.bf16.mxu0 %v5901
      %6093 = vmatpush1.bf16.msra.mxu0 %v5900
      %6094 = vmatprep.subr.bf16.mxu0 %v5903
      %6095 = vmatpush1.bf16.msra.mxu0 %v5902
      %6096 = vmatprep.subr.bf16.mxu0 %v5905
      %6097 = vmatpush1.bf16.msra.mxu0 %v5904
      %6098 = vmatprep.subr.bf16.mxu0 %v5907
      %6099 = vmatpush1.bf16.msra.mxu0 %v5906
      %6100 = vmatprep.mubr.bf16.mxu0 %v5415
      %6101 = vmatmul.mubr.bf16.gmra.mrb[0].mxu0 %v5403
      %v6102 = vpop.f32.mrb[0].mxu0
      %v6103 = vadd.f32 %v5527, %v6102
      %v6104 = vpop.f32.mrb[0].mxu0
      %v6105 = vadd.f32 %v5531, %v6104
      %v6106 = vpop.f32.mrb[0].mxu0
      %v6107 = vadd.f32 %v5527, %v6106
      %v6108 = vpop.f32.mrb[0].mxu0
      %v6109 = vadd.f32 %v5531, %v6108
      %6110 = vdwg.mxu0
      %6111 = vmatprep.subr.bf16.mxu0 %v5909
      %6112 = vmatpush1.bf16.msra.mxu0 %v5908
      %6113 = vmatprep.subr.bf16.mxu0 %v5911
      %6114 = vmatpush1.bf16.msra.mxu0 %v5910
      %6115 = vmatprep.subr.bf16.mxu0 %v5913
      %6116 = vmatpush1.bf16.msra.mxu0 %v5912
      %6117 = vmatprep.subr.bf16.mxu0 %v5915
      %6118 = vmatpush1.bf16.msra.mxu0 %v5914
      %6119 = vmatprep.subr.bf16.mxu0 %v5917
      %6120 = vmatpush1.bf16.msra.mxu0 %v5916
      %6121 = vmatprep.subr.bf16.mxu0 %v5919
      %6122 = vmatpush1.bf16.msra.mxu0 %v5918
      %6123 = vmatprep.subr.bf16.mxu0 %v5921
      %6124 = vmatpush1.bf16.msra.mxu0 %v5920
      %6125 = vmatprep.subr.bf16.mxu0 %v5923
      %6126 = vmatpush1.bf16.msra.mxu0 %v5922
      %6127 = vmatprep.subr.bf16.mxu0 %v5925
      %6128 = vmatpush1.bf16.msra.mxu0 %v5924
      %6129 = vmatprep.subr.bf16.mxu0 %v5927
      %6130 = vmatpush1.bf16.msra.mxu0 %v5926
      %6131 = vmatprep.subr.bf16.mxu0 %v5929
      %6132 = vmatpush1.bf16.msra.mxu0 %v5928
      %6133 = vmatprep.subr.bf16.mxu0 %v5931
      %6134 = vmatpush1.bf16.msra.mxu0 %v5930
      %6135 = vmatprep.subr.bf16.mxu0 %v5933
      %6136 = vmatpush1.bf16.msra.mxu0 %v5932
      %6137 = vmatprep.subr.bf16.mxu0 %v5935
      %6138 = vmatpush1.bf16.msra.mxu0 %v5934
      %6139 = vmatprep.subr.bf16.mxu0 %v5937
      %6140 = vmatpush1.bf16.msra.mxu0 %v5936
      %6141 = vmatprep.subr.bf16.mxu0 %v5939
      %6142 = vmatpush1.bf16.msra.mxu0 %v5938
      %6143 = vmatprep.mubr.bf16.mxu0 %v5557
      %6144 = vmatmul.mubr.bf16.gmra.mrb[0].mxu0 %v5545
      %v6145 = vpop.f32.mrb[0].mxu0
      %v6146 = vadd.f32 %v6103, %v6145
      %v6147 = vpop.f32.mrb[0].mxu0
      %v6148 = vadd.f32 %v6105, %v6147
      %v6149 = vpop.f32.mrb[0].mxu0
      %v6150 = vadd.f32 %v6107, %v6149
      %v6151 = vpop.f32.mrb[0].mxu0
      %v6152 = vadd.f32 %v6109, %v6151
      %6153 = vdwg.mxu0
      %6154 = vmatprep.subr.bf16.mxu0 %v5941
      %6155 = vmatpush1.bf16.msra.mxu0 %v5940
      %6156 = vmatprep.subr.bf16.mxu0 %v5943
      %6157 = vmatpush1.bf16.msra.mxu0 %v5942
      %6158 = vmatprep.subr.bf16.mxu0 %v5945
      %6159 = vmatpush1.bf16.msra.mxu0 %v5944
      %6160 = vmatprep.subr.bf16.mxu0 %v5947
      %6161 = vmatpush1.bf16.msra.mxu0 %v5946
      %6162 = vmatprep.subr.bf16.mxu0 %v5949
      %6163 = vmatpush1.bf16.msra.mxu0 %v5948
      %6164 = vmatprep.subr.bf16.mxu0 %v5951
      %6165 = vmatpush1.bf16.msra.mxu0 %v5950
      %6166 = vmatprep.subr.bf16.mxu0 %v5953
      %6167 = vmatpush1.bf16.msra.mxu0 %v5952
      %6168 = vmatprep.subr.bf16.mxu0 %v5955
      %6169 = vmatpush1.bf16.msra.mxu0 %v5954
      %6170 = vmatprep.subr.bf16.mxu0 %v5957
      %6171 = vmatpush1.bf16.msra.mxu0 %v5956
      %6172 = vmatprep.subr.bf16.mxu0 %v5959
      %6173 = vmatpush1.bf16.msra.mxu0 %v5958
      %6174 = vmatprep.subr.bf16.mxu0 %v5961
      %6175 = vmatpush1.bf16.msra.mxu0 %v5960
      %6176 = vmatprep.subr.bf16.mxu0 %v5963
      %6177 = vmatpush1.bf16.msra.mxu0 %v5962
      %6178 = vmatprep.subr.bf16.mxu0 %v5965
      %6179 = vmatpush1.bf16.msra.mxu0 %v5964
      %6180 = vmatprep.subr.bf16.mxu0 %v5967
      %6181 = vmatpush1.bf16.msra.mxu0 %v5966
      %6182 = vmatprep.subr.bf16.mxu0 %v5969
      %6183 = vmatpush1.bf16.msra.mxu0 %v5968
      %6184 = vmatprep.subr.bf16.mxu0 %v5971
      %6185 = vmatpush1.bf16.msra.mxu0 %v5970
      %6186 = vmatprep.mubr.bf16.mxu0 %v5581
      %6187 = vmatmul.mubr.bf16.gmra.mrb[0].mxu0 %v5569
      %v6188 = vpop.f32.mrb[0].mxu0
      %v6189 = vadd.f32 %v6146, %v6188
      %v6190 = vpop.f32.mrb[0].mxu0
      %v6191 = vadd.f32 %v6148, %v6190
      %v6192 = vpop.f32.mrb[0].mxu0
      %v6193 = vadd.f32 %v6150, %v6192
      %v6194 = vpop.f32.mrb[0].mxu0
      %v6195 = vadd.f32 %v6152, %v6194
      %6196 = vdwg.mxu0
      %v6197 = vmax.f32 %v6189, 0.0
      %v6198 = vmax.f32 %v6191, 0.0
      %v6199 = vmax.f32 %v6193, 0.0
      %v6200 = vmax.f32 %v6195, 0.0
      %v6201 = vpack.c.bf16 %v6199, %v6197
      %v6202 = vpack.c.bf16 %v6200, %v6198
      %v6205 = vunpack.c.l.b16 %v6201
      %v6206 = vunpack.c.l.b16 %v6202
      %v6207 = vunpack.c.h.b16 %v6201
      %v6208 = vunpack.c.h.b16 %v6202
      %v6209 = vpack.c.b16 %v6206, %v6205
      %v6210 = vpack.c.b16 %v6208, %v6207
      %v6211 = vrot.slane %v6209, 7
      %v6212 = vrot.slane %v6211, 4
      %v6213 = vrot.slane %v6210, 7
      %v6214 = vsel %vm1305, %v6212, %v6213
      %v6215 = vrot.slane %v6213, 4
      %6219 = vst [vmem:[#allocation2] sm:$0xee] %v6211
      %6220 = vst [vmem:[#allocation2 + $0x8] sm:$0xff] %v6214
      %6221 = vst [vmem:[#allocation2 + $0x10] sm:$0x11] %v6215
      %v6222 = vld [vmem:[#allocation2] sm:$0xff]
      %v6223 = vld [vmem:[#allocation2 + $0x8] sm:$0xff]
      %v6224 = vld [vmem:[#allocation2 + $0x10] sm:$0x33]
      %v6228 = vunpack.c.l.b16 %v6222
      %v6229 = vunpack.c.h.b16 %v6222
      %v6230 = vunpack.c.l.b16 %v6223
      %v6231 = vunpack.c.h.b16 %v6223
      %v6232 = vunpack.c.l.b16 %v6224
      %v6233 = vunpack.c.h.b16 %v6224
      %v6234 = vpack.c.b16 %v6230, %v6228
      %v6235 = vpack.c.b16 %v6231, %v6229
      %v6236 = vpack.c.b16 %v6232, %v6232
      %v6237 = vpack.c.b16 %v6233, %v6233
      %v6239 = vshrl.u32 %v6234, 16
      %v6241 = vshll.u32 %v6234, 16
      %v6243 = vrot.slane %v6241, 1
      %v6244 = vor.u32 %v6239, %v6243
      %v6246 = vshll.u32 %v6236, 16
      %v6248 = vrot.slane %v6246, 1
      %v6249 = vsel %vm1335, %v6244, %v6248
      %v6251 = vshrl.u32 %v6235, 16
      %v6253 = vshll.u32 %v6235, 16
      %v6255 = vrot.slane %v6253, 1
      %v6256 = vor.u32 %v6251, %v6255
      %v6258 = vshll.u32 %v6237, 16
      %v6260 = vrot.slane %v6258, 1
      %v6261 = vsel %vm1335, %v6256, %v6260
      %v6262 = vshrl.u32 %v6236, 16
      %v6264 = vshrl.u32 %v6237, 16
      %v6266 = vrot.slane %v6234, 1
      %v6267 = vrot.slane %v6236, 1
      %v6268 = vsel %vm1362, %v6266, %v6267
      %v6269 = vrot.slane %v6235, 1
      %v6270 = vrot.slane %v6237, 1
      %v6271 = vsel %vm1362, %v6269, %v6270
      %v6272 = vld [vmem:[%s27] sm:$0xff]
      %v6273 = vld [vmem:[%s27 + $0x8] sm:$0xff]
      %v6274 = vld [vmem:[%s27 + $0x10] sm:$0xff]
      %v6275 = vld [vmem:[%s27 + $0x18] sm:$0xff]
      %v6276 = vld [vmem:[%s27 + $0x20] sm:$0xff]
      %v6277 = vld [vmem:[%s27 + $0x28] sm:$0xff]
      %v6278 = vld [vmem:[%s27 + $0x30] sm:$0xff]
      %v6279 = vld [vmem:[%s27 + $0x38] sm:$0xff]
      %v6280 = vld [vmem:[%s27 + $0x40] sm:$0xff]
      %v6281 = vld [vmem:[%s27 + $0x48] sm:$0xff]
      %v6282 = vld [vmem:[%s27 + $0x50] sm:$0xff]
      %v6283 = vld [vmem:[%s27 + $0x58] sm:$0xff]
      %v6284 = vld [vmem:[%s27 + $0x60] sm:$0xff]
      %v6285 = vld [vmem:[%s27 + $0x68] sm:$0xff]
      %v6286 = vld [vmem:[%s27 + $0x70] sm:$0xff]
      %v6287 = vld [vmem:[%s27 + $0x78] sm:$0xff]
      %v6288 = vld [vmem:[%s27 + $0x80] sm:$0xff]
      %v6289 = vld [vmem:[%s27 + $0x88] sm:$0xff]
      %v6290 = vld [vmem:[%s27 + $0x90] sm:$0xff]
      %v6291 = vld [vmem:[%s27 + $0x98] sm:$0xff]
      %v6292 = vld [vmem:[%s27 + $0xa0] sm:$0xff]
      %v6293 = vld [vmem:[%s27 + $0xa8] sm:$0xff]
      %v6294 = vld [vmem:[%s27 + $0xb0] sm:$0xff]
      %v6295 = vld [vmem:[%s27 + $0xb8] sm:$0xff]
      %v6296 = vld [vmem:[%s27 + $0xc0] sm:$0xff]
      %v6297 = vld [vmem:[%s27 + $0xc8] sm:$0xff]
      %v6298 = vld [vmem:[%s27 + $0xd0] sm:$0xff]
      %v6299 = vld [vmem:[%s27 + $0xd8] sm:$0xff]
      %v6300 = vld [vmem:[%s27 + $0xe0] sm:$0xff]
      %v6301 = vld [vmem:[%s27 + $0xe8] sm:$0xff]
      %v6302 = vld [vmem:[%s27 + $0xf0] sm:$0xff]
      %v6303 = vld [vmem:[%s27 + $0xf8] sm:$0xff]
      %v6304 = vld [vmem:[%s27 + $0x100] sm:$0xff]
      %v6305 = vld [vmem:[%s27 + $0x108] sm:$0xff]
      %v6306 = vld [vmem:[%s27 + $0x110] sm:$0xff]
      %v6307 = vld [vmem:[%s27 + $0x118] sm:$0xff]
      %v6308 = vld [vmem:[%s27 + $0x120] sm:$0xff]
      %v6309 = vld [vmem:[%s27 + $0x128] sm:$0xff]
      %v6310 = vld [vmem:[%s27 + $0x130] sm:$0xff]
      %v6311 = vld [vmem:[%s27 + $0x138] sm:$0xff]
      %v6312 = vld [vmem:[%s27 + $0x140] sm:$0xff]
      %v6313 = vld [vmem:[%s27 + $0x148] sm:$0xff]
      %v6314 = vld [vmem:[%s27 + $0x150] sm:$0xff]
      %v6315 = vld [vmem:[%s27 + $0x158] sm:$0xff]
      %v6316 = vld [vmem:[%s27 + $0x160] sm:$0xff]
      %v6317 = vld [vmem:[%s27 + $0x168] sm:$0xff]
      %v6318 = vld [vmem:[%s27 + $0x170] sm:$0xff]
      %v6319 = vld [vmem:[%s27 + $0x178] sm:$0xff]
      %v6320 = vld [vmem:[%s27 + $0x180] sm:$0xff]
      %v6321 = vld [vmem:[%s27 + $0x188] sm:$0xff]
      %v6322 = vld [vmem:[%s27 + $0x190] sm:$0xff]
      %v6323 = vld [vmem:[%s27 + $0x198] sm:$0xff]
      %v6324 = vld [vmem:[%s27 + $0x1a0] sm:$0xff]
      %v6325 = vld [vmem:[%s27 + $0x1a8] sm:$0xff]
      %v6326 = vld [vmem:[%s27 + $0x1b0] sm:$0xff]
      %v6327 = vld [vmem:[%s27 + $0x1b8] sm:$0xff]
      %v6328 = vld [vmem:[%s27 + $0x1c0] sm:$0xff]
      %v6329 = vld [vmem:[%s27 + $0x1c8] sm:$0xff]
      %v6330 = vld [vmem:[%s27 + $0x1d0] sm:$0xff]
      %v6331 = vld [vmem:[%s27 + $0x1d8] sm:$0xff]
      %v6332 = vld [vmem:[%s27 + $0x1e0] sm:$0xff]
      %v6333 = vld [vmem:[%s27 + $0x1e8] sm:$0xff]
      %v6334 = vld [vmem:[%s27 + $0x1f0] sm:$0xff]
      %v6335 = vld [vmem:[%s27 + $0x1f8] sm:$0xff]
      %v6336 = vld [vmem:[%s27 + $0x200] sm:$0xff]
      %v6337 = vld [vmem:[%s27 + $0x208] sm:$0xff]
      %v6338 = vld [vmem:[%s27 + $0x210] sm:$0xff]
      %v6339 = vld [vmem:[%s27 + $0x218] sm:$0xff]
      %v6340 = vld [vmem:[%s27 + $0x220] sm:$0xff]
      %v6341 = vld [vmem:[%s27 + $0x228] sm:$0xff]
      %v6342 = vld [vmem:[%s27 + $0x230] sm:$0xff]
      %v6343 = vld [vmem:[%s27 + $0x238] sm:$0xff]
      %v6344 = vld [vmem:[%s27 + $0x240] sm:$0xff]
      %v6345 = vld [vmem:[%s27 + $0x248] sm:$0xff]
      %v6346 = vld [vmem:[%s27 + $0x250] sm:$0xff]
      %v6347 = vld [vmem:[%s27 + $0x258] sm:$0xff]
      %v6348 = vld [vmem:[%s27 + $0x260] sm:$0xff]
      %v6349 = vld [vmem:[%s27 + $0x268] sm:$0xff]
      %v6350 = vld [vmem:[%s27 + $0x270] sm:$0xff]
      %v6351 = vld [vmem:[%s27 + $0x278] sm:$0xff]
      %v6352 = vld [vmem:[%s27 + $0x280] sm:$0xff]
      %v6353 = vld [vmem:[%s27 + $0x288] sm:$0xff]
      %v6354 = vld [vmem:[%s27 + $0x290] sm:$0xff]
      %v6355 = vld [vmem:[%s27 + $0x298] sm:$0xff]
      %v6356 = vld [vmem:[%s27 + $0x2a0] sm:$0xff]
      %v6357 = vld [vmem:[%s27 + $0x2a8] sm:$0xff]
      %v6358 = vld [vmem:[%s27 + $0x2b0] sm:$0xff]
      %v6359 = vld [vmem:[%s27 + $0x2b8] sm:$0xff]
      %v6360 = vld [vmem:[%s27 + $0x2c0] sm:$0xff]
      %v6361 = vld [vmem:[%s27 + $0x2c8] sm:$0xff]
      %v6362 = vld [vmem:[%s27 + $0x2d0] sm:$0xff]
      %v6363 = vld [vmem:[%s27 + $0x2d8] sm:$0xff]
      %v6364 = vld [vmem:[%s27 + $0x2e0] sm:$0xff]
      %v6365 = vld [vmem:[%s27 + $0x2e8] sm:$0xff]
      %v6366 = vld [vmem:[%s27 + $0x2f0] sm:$0xff]
      %v6367 = vld [vmem:[%s27 + $0x2f8] sm:$0xff]
      %v6368 = vld [vmem:[%s29] sm:$0x3]
      %v6370 = vlaneseq
      %v6371 = vshrl.u32 %v6370, 7
      %v6372 = vsub.s32 0, %v6371
      %v6373 = vrot.slane %v6368, %v6372
      %v6374 = vlaneseq
      %v6375 = vshrl.u32 %v6374, 7
      %v6376 = vsub.s32 1, %v6375
      %v6377 = vrot.slane %v6368, %v6376
      %v6381 = vshrl.u32 %v6249, 16
      %v6383 = vshll.u32 %v6249, 16
      %v6385 = vrot.slane %v6383, 1
      %v6386 = vor.u32 %v6381, %v6385
      %v6388 = vshll.u32 %v6262, 16
      %v6390 = vrot.slane %v6388, 1
      %v6391 = vsel %vm1335, %v6386, %v6390
      %v6393 = vshrl.u32 %v6261, 16
      %v6395 = vshll.u32 %v6261, 16
      %v6397 = vrot.slane %v6395, 1
      %v6398 = vor.u32 %v6393, %v6397
      %v6400 = vshll.u32 %v6264, 16
      %v6402 = vrot.slane %v6400, 1
      %v6403 = vsel %vm1335, %v6398, %v6402
      %v6405 = vshrl.u32 %v6268, 16
      %v6407 = vshll.u32 %v6268, 16
      %v6409 = vrot.slane %v6407, 1
      %v6410 = vor.u32 %v6405, %v6409
      %v6412 = vshll.u32 %v6267, 16
      %v6414 = vrot.slane %v6412, 1
      %v6415 = vsel %vm1335, %v6410, %v6414
      %v6417 = vshrl.u32 %v6271, 16
      %v6419 = vshll.u32 %v6271, 16
      %v6421 = vrot.slane %v6419, 1
      %v6422 = vor.u32 %v6417, %v6421
      %v6424 = vshll.u32 %v6270, 16
      %v6426 = vrot.slane %v6424, 1
      %v6427 = vsel %vm1335, %v6422, %v6426
      %v6530 = vunpack.c.l.b16 %v6272
      %v6531 = vunpack.c.h.b16 %v6272
      %v6532 = vunpack.c.l.b16 %v6273
      %v6533 = vunpack.c.h.b16 %v6273
      %v6534 = vunpack.c.l.b16 %v6274
      %v6535 = vunpack.c.h.b16 %v6274
      %v6536 = vunpack.c.l.b16 %v6275
      %v6537 = vunpack.c.h.b16 %v6275
      %v6538 = vunpack.c.l.b16 %v6276
      %v6539 = vunpack.c.h.b16 %v6276
      %v6540 = vunpack.c.l.b16 %v6277
      %v6541 = vunpack.c.h.b16 %v6277
      %v6542 = vunpack.c.l.b16 %v6278
      %v6543 = vunpack.c.h.b16 %v6278
      %v6544 = vunpack.c.l.b16 %v6279
      %v6545 = vunpack.c.h.b16 %v6279
      %v6546 = vunpack.c.l.b16 %v6280
      %v6547 = vunpack.c.h.b16 %v6280
      %v6548 = vunpack.c.l.b16 %v6281
      %v6549 = vunpack.c.h.b16 %v6281
      %v6550 = vunpack.c.l.b16 %v6282
      %v6551 = vunpack.c.h.b16 %v6282
      %v6552 = vunpack.c.l.b16 %v6283
      %v6553 = vunpack.c.h.b16 %v6283
      %v6554 = vunpack.c.l.b16 %v6284
      %v6555 = vunpack.c.h.b16 %v6284
      %v6556 = vunpack.c.l.b16 %v6285
      %v6557 = vunpack.c.h.b16 %v6285
      %v6558 = vunpack.c.l.b16 %v6286
      %v6559 = vunpack.c.h.b16 %v6286
      %v6560 = vunpack.c.l.b16 %v6287
      %v6561 = vunpack.c.h.b16 %v6287
      %v6562 = vunpack.c.l.b16 %v6288
      %v6563 = vunpack.c.h.b16 %v6288
      %v6564 = vunpack.c.l.b16 %v6289
      %v6565 = vunpack.c.h.b16 %v6289
      %v6566 = vunpack.c.l.b16 %v6290
      %v6567 = vunpack.c.h.b16 %v6290
      %v6568 = vunpack.c.l.b16 %v6291
      %v6569 = vunpack.c.h.b16 %v6291
      %v6570 = vunpack.c.l.b16 %v6292
      %v6571 = vunpack.c.h.b16 %v6292
      %v6572 = vunpack.c.l.b16 %v6293
      %v6573 = vunpack.c.h.b16 %v6293
      %v6574 = vunpack.c.l.b16 %v6294
      %v6575 = vunpack.c.h.b16 %v6294
      %v6576 = vunpack.c.l.b16 %v6295
      %v6577 = vunpack.c.h.b16 %v6295
      %v6578 = vunpack.c.l.b16 %v6296
      %v6579 = vunpack.c.h.b16 %v6296
      %v6580 = vunpack.c.l.b16 %v6297
      %v6581 = vunpack.c.h.b16 %v6297
      %v6582 = vunpack.c.l.b16 %v6298
      %v6583 = vunpack.c.h.b16 %v6298
      %v6584 = vunpack.c.l.b16 %v6299
      %v6585 = vunpack.c.h.b16 %v6299
      %v6586 = vunpack.c.l.b16 %v6300
      %v6587 = vunpack.c.h.b16 %v6300
      %v6588 = vunpack.c.l.b16 %v6301
      %v6589 = vunpack.c.h.b16 %v6301
      %v6590 = vunpack.c.l.b16 %v6302
      %v6591 = vunpack.c.h.b16 %v6302
      %v6592 = vunpack.c.l.b16 %v6303
      %v6593 = vunpack.c.h.b16 %v6303
      %v6594 = vunpack.c.l.b16 %v6304
      %v6595 = vunpack.c.h.b16 %v6304
      %v6596 = vunpack.c.l.b16 %v6305
      %v6597 = vunpack.c.h.b16 %v6305
      %v6598 = vunpack.c.l.b16 %v6306
      %v6599 = vunpack.c.h.b16 %v6306
      %v6600 = vunpack.c.l.b16 %v6307
      %v6601 = vunpack.c.h.b16 %v6307
      %v6602 = vunpack.c.l.b16 %v6308
      %v6603 = vunpack.c.h.b16 %v6308
      %v6604 = vunpack.c.l.b16 %v6309
      %v6605 = vunpack.c.h.b16 %v6309
      %v6606 = vunpack.c.l.b16 %v6310
      %v6607 = vunpack.c.h.b16 %v6310
      %v6608 = vunpack.c.l.b16 %v6311
      %v6609 = vunpack.c.h.b16 %v6311
      %v6610 = vunpack.c.l.b16 %v6312
      %v6611 = vunpack.c.h.b16 %v6312
      %v6612 = vunpack.c.l.b16 %v6313
      %v6613 = vunpack.c.h.b16 %v6313
      %v6614 = vunpack.c.l.b16 %v6314
      %v6615 = vunpack.c.h.b16 %v6314
      %v6616 = vunpack.c.l.b16 %v6315
      %v6617 = vunpack.c.h.b16 %v6315
      %v6618 = vunpack.c.l.b16 %v6316
      %v6619 = vunpack.c.h.b16 %v6316
      %v6620 = vunpack.c.l.b16 %v6317
      %v6621 = vunpack.c.h.b16 %v6317
      %v6622 = vunpack.c.l.b16 %v6318
      %v6623 = vunpack.c.h.b16 %v6318
      %v6624 = vunpack.c.l.b16 %v6319
      %v6625 = vunpack.c.h.b16 %v6319
      %v6626 = vunpack.c.l.b16 %v6320
      %v6627 = vunpack.c.h.b16 %v6320
      %v6628 = vunpack.c.l.b16 %v6321
      %v6629 = vunpack.c.h.b16 %v6321
      %v6630 = vunpack.c.l.b16 %v6322
      %v6631 = vunpack.c.h.b16 %v6322
      %v6632 = vunpack.c.l.b16 %v6323
      %v6633 = vunpack.c.h.b16 %v6323
      %v6634 = vunpack.c.l.b16 %v6324
      %v6635 = vunpack.c.h.b16 %v6324
      %v6636 = vunpack.c.l.b16 %v6325
      %v6637 = vunpack.c.h.b16 %v6325
      %v6638 = vunpack.c.l.b16 %v6326
      %v6639 = vunpack.c.h.b16 %v6326
      %v6640 = vunpack.c.l.b16 %v6327
      %v6641 = vunpack.c.h.b16 %v6327
      %v6642 = vunpack.c.l.b16 %v6328
      %v6643 = vunpack.c.h.b16 %v6328
      %v6644 = vunpack.c.l.b16 %v6329
      %v6645 = vunpack.c.h.b16 %v6329
      %v6646 = vunpack.c.l.b16 %v6330
      %v6647 = vunpack.c.h.b16 %v6330
      %v6648 = vunpack.c.l.b16 %v6331
      %v6649 = vunpack.c.h.b16 %v6331
      %v6650 = vunpack.c.l.b16 %v6332
      %v6651 = vunpack.c.h.b16 %v6332
      %v6652 = vunpack.c.l.b16 %v6333
      %v6653 = vunpack.c.h.b16 %v6333
      %v6654 = vunpack.c.l.b16 %v6334
      %v6655 = vunpack.c.h.b16 %v6334
      %v6656 = vunpack.c.l.b16 %v6335
      %v6657 = vunpack.c.h.b16 %v6335
      %v6658 = vunpack.c.l.b16 %v6336
      %v6659 = vunpack.c.h.b16 %v6336
      %v6660 = vunpack.c.l.b16 %v6337
      %v6661 = vunpack.c.h.b16 %v6337
      %v6662 = vunpack.c.l.b16 %v6338
      %v6663 = vunpack.c.h.b16 %v6338
      %v6664 = vunpack.c.l.b16 %v6339
      %v6665 = vunpack.c.h.b16 %v6339
      %v6666 = vunpack.c.l.b16 %v6340
      %v6667 = vunpack.c.h.b16 %v6340
      %v6668 = vunpack.c.l.b16 %v6341
      %v6669 = vunpack.c.h.b16 %v6341
      %v6670 = vunpack.c.l.b16 %v6342
      %v6671 = vunpack.c.h.b16 %v6342
      %v6672 = vunpack.c.l.b16 %v6343
      %v6673 = vunpack.c.h.b16 %v6343
      %v6674 = vunpack.c.l.b16 %v6344
      %v6675 = vunpack.c.h.b16 %v6344
      %v6676 = vunpack.c.l.b16 %v6345
      %v6677 = vunpack.c.h.b16 %v6345
      %v6678 = vunpack.c.l.b16 %v6346
      %v6679 = vunpack.c.h.b16 %v6346
      %v6680 = vunpack.c.l.b16 %v6347
      %v6681 = vunpack.c.h.b16 %v6347
      %v6682 = vunpack.c.l.b16 %v6348
      %v6683 = vunpack.c.h.b16 %v6348
      %v6684 = vunpack.c.l.b16 %v6349
      %v6685 = vunpack.c.h.b16 %v6349
      %v6686 = vunpack.c.l.b16 %v6350
      %v6687 = vunpack.c.h.b16 %v6350
      %v6688 = vunpack.c.l.b16 %v6351
      %v6689 = vunpack.c.h.b16 %v6351
      %v6690 = vunpack.c.l.b16 %v6352
      %v6691 = vunpack.c.h.b16 %v6352
      %v6692 = vunpack.c.l.b16 %v6353
      %v6693 = vunpack.c.h.b16 %v6353
      %v6694 = vunpack.c.l.b16 %v6354
      %v6695 = vunpack.c.h.b16 %v6354
      %v6696 = vunpack.c.l.b16 %v6355
      %v6697 = vunpack.c.h.b16 %v6355
      %v6698 = vunpack.c.l.b16 %v6356
      %v6699 = vunpack.c.h.b16 %v6356
      %v6700 = vunpack.c.l.b16 %v6357
      %v6701 = vunpack.c.h.b16 %v6357
      %v6702 = vunpack.c.l.b16 %v6358
      %v6703 = vunpack.c.h.b16 %v6358
      %v6704 = vunpack.c.l.b16 %v6359
      %v6705 = vunpack.c.h.b16 %v6359
      %v6706 = vunpack.c.l.b16 %v6360
      %v6707 = vunpack.c.h.b16 %v6360
      %v6708 = vunpack.c.l.b16 %v6361
      %v6709 = vunpack.c.h.b16 %v6361
      %v6710 = vunpack.c.l.b16 %v6362
      %v6711 = vunpack.c.h.b16 %v6362
      %v6712 = vunpack.c.l.b16 %v6363
      %v6713 = vunpack.c.h.b16 %v6363
      %v6714 = vunpack.c.l.b16 %v6364
      %v6715 = vunpack.c.h.b16 %v6364
      %v6716 = vunpack.c.l.b16 %v6365
      %v6717 = vunpack.c.h.b16 %v6365
      %v6718 = vunpack.c.l.b16 %v6366
      %v6719 = vunpack.c.h.b16 %v6366
      %v6720 = vunpack.c.l.b16 %v6367
      %v6721 = vunpack.c.h.b16 %v6367
      %v6722 = vpack.c.b16 %v6532, %v6530
      %v6723 = vpack.c.b16 %v6533, %v6531
      %v6724 = vpack.c.b16 %v6536, %v6534
      %v6725 = vpack.c.b16 %v6537, %v6535
      %v6726 = vpack.c.b16 %v6540, %v6538
      %v6727 = vpack.c.b16 %v6541, %v6539
      %v6728 = vpack.c.b16 %v6544, %v6542
      %v6729 = vpack.c.b16 %v6545, %v6543
      %v6730 = vpack.c.b16 %v6548, %v6546
      %v6731 = vpack.c.b16 %v6549, %v6547
      %v6732 = vpack.c.b16 %v6552, %v6550
      %v6733 = vpack.c.b16 %v6553, %v6551
      %v6734 = vpack.c.b16 %v6556, %v6554
      %v6735 = vpack.c.b16 %v6557, %v6555
      %v6736 = vpack.c.b16 %v6560, %v6558
      %v6737 = vpack.c.b16 %v6561, %v6559
      %v6738 = vpack.c.b16 %v6564, %v6562
      %v6739 = vpack.c.b16 %v6565, %v6563
      %v6740 = vpack.c.b16 %v6568, %v6566
      %v6741 = vpack.c.b16 %v6569, %v6567
      %v6742 = vpack.c.b16 %v6572, %v6570
      %v6743 = vpack.c.b16 %v6573, %v6571
      %v6744 = vpack.c.b16 %v6576, %v6574
      %v6745 = vpack.c.b16 %v6577, %v6575
      %v6746 = vpack.c.b16 %v6580, %v6578
      %v6747 = vpack.c.b16 %v6581, %v6579
      %v6748 = vpack.c.b16 %v6584, %v6582
      %v6749 = vpack.c.b16 %v6585, %v6583
      %v6750 = vpack.c.b16 %v6588, %v6586
      %v6751 = vpack.c.b16 %v6589, %v6587
      %v6752 = vpack.c.b16 %v6592, %v6590
      %v6753 = vpack.c.b16 %v6593, %v6591
      %v6754 = vpack.c.b16 %v6596, %v6594
      %v6755 = vpack.c.b16 %v6597, %v6595
      %v6756 = vpack.c.b16 %v6600, %v6598
      %v6757 = vpack.c.b16 %v6601, %v6599
      %v6758 = vpack.c.b16 %v6604, %v6602
      %v6759 = vpack.c.b16 %v6605, %v6603
      %v6760 = vpack.c.b16 %v6608, %v6606
      %v6761 = vpack.c.b16 %v6609, %v6607
      %v6762 = vpack.c.b16 %v6612, %v6610
      %v6763 = vpack.c.b16 %v6613, %v6611
      %v6764 = vpack.c.b16 %v6616, %v6614
      %v6765 = vpack.c.b16 %v6617, %v6615
      %v6766 = vpack.c.b16 %v6620, %v6618
      %v6767 = vpack.c.b16 %v6621, %v6619
      %v6768 = vpack.c.b16 %v6624, %v6622
      %v6769 = vpack.c.b16 %v6625, %v6623
      %v6770 = vpack.c.b16 %v6628, %v6626
      %v6771 = vpack.c.b16 %v6629, %v6627
      %v6772 = vpack.c.b16 %v6632, %v6630
      %v6773 = vpack.c.b16 %v6633, %v6631
      %v6774 = vpack.c.b16 %v6636, %v6634
      %v6775 = vpack.c.b16 %v6637, %v6635
      %v6776 = vpack.c.b16 %v6640, %v6638
      %v6777 = vpack.c.b16 %v6641, %v6639
      %v6778 = vpack.c.b16 %v6644, %v6642
      %v6779 = vpack.c.b16 %v6645, %v6643
      %v6780 = vpack.c.b16 %v6648, %v6646
      %v6781 = vpack.c.b16 %v6649, %v6647
      %v6782 = vpack.c.b16 %v6652, %v6650
      %v6783 = vpack.c.b16 %v6653, %v6651
      %v6784 = vpack.c.b16 %v6656, %v6654
      %v6785 = vpack.c.b16 %v6657, %v6655
      %v6786 = vpack.c.b16 %v6660, %v6658
      %v6787 = vpack.c.b16 %v6661, %v6659
      %v6788 = vpack.c.b16 %v6664, %v6662
      %v6789 = vpack.c.b16 %v6665, %v6663
      %v6790 = vpack.c.b16 %v6668, %v6666
      %v6791 = vpack.c.b16 %v6669, %v6667
      %v6792 = vpack.c.b16 %v6672, %v6670
      %v6793 = vpack.c.b16 %v6673, %v6671
      %v6794 = vpack.c.b16 %v6676, %v6674
      %v6795 = vpack.c.b16 %v6677, %v6675
      %v6796 = vpack.c.b16 %v6680, %v6678
      %v6797 = vpack.c.b16 %v6681, %v6679
      %v6798 = vpack.c.b16 %v6684, %v6682
      %v6799 = vpack.c.b16 %v6685, %v6683
      %v6800 = vpack.c.b16 %v6688, %v6686
      %v6801 = vpack.c.b16 %v6689, %v6687
      %v6802 = vpack.c.b16 %v6692, %v6690
      %v6803 = vpack.c.b16 %v6693, %v6691
      %v6804 = vpack.c.b16 %v6696, %v6694
      %v6805 = vpack.c.b16 %v6697, %v6695
      %v6806 = vpack.c.b16 %v6700, %v6698
      %v6807 = vpack.c.b16 %v6701, %v6699
      %v6808 = vpack.c.b16 %v6704, %v6702
      %v6809 = vpack.c.b16 %v6705, %v6703
      %v6810 = vpack.c.b16 %v6708, %v6706
      %v6811 = vpack.c.b16 %v6709, %v6707
      %v6812 = vpack.c.b16 %v6712, %v6710
      %v6813 = vpack.c.b16 %v6713, %v6711
      %v6814 = vpack.c.b16 %v6716, %v6714
      %v6815 = vpack.c.b16 %v6717, %v6715
      %v6816 = vpack.c.b16 %v6720, %v6718
      %v6817 = vpack.c.b16 %v6721, %v6719
      %6914 = vmatprep.subr.bf16.mxu0 %v6723
      %6915 = vmatpush1.bf16.msra.mxu0 %v6722
      %6916 = vmatprep.subr.bf16.mxu0 %v6725
      %6917 = vmatpush1.bf16.msra.mxu0 %v6724
      %6918 = vmatprep.subr.bf16.mxu0 %v6727
      %6919 = vmatpush1.bf16.msra.mxu0 %v6726
      %6920 = vmatprep.subr.bf16.mxu0 %v6729
      %6921 = vmatpush1.bf16.msra.mxu0 %v6728
      %6922 = vmatprep.subr.bf16.mxu0 %v6731
      %6923 = vmatpush1.bf16.msra.mxu0 %v6730
      %6924 = vmatprep.subr.bf16.mxu0 %v6733
      %6925 = vmatpush1.bf16.msra.mxu0 %v6732
      %6926 = vmatprep.subr.bf16.mxu0 %v6735
      %6927 = vmatpush1.bf16.msra.mxu0 %v6734
      %6928 = vmatprep.subr.bf16.mxu0 %v6737
      %6929 = vmatpush1.bf16.msra.mxu0 %v6736
      %6930 = vmatprep.subr.bf16.mxu0 %v6739
      %6931 = vmatpush1.bf16.msra.mxu0 %v6738
      %6932 = vmatprep.subr.bf16.mxu0 %v6741
      %6933 = vmatpush1.bf16.msra.mxu0 %v6740
      %6934 = vmatprep.subr.bf16.mxu0 %v6743
      %6935 = vmatpush1.bf16.msra.mxu0 %v6742
      %6936 = vmatprep.subr.bf16.mxu0 %v6745
      %6937 = vmatpush1.bf16.msra.mxu0 %v6744
      %6938 = vmatprep.subr.bf16.mxu0 %v6747
      %6939 = vmatpush1.bf16.msra.mxu0 %v6746
      %6940 = vmatprep.subr.bf16.mxu0 %v6749
      %6941 = vmatpush1.bf16.msra.mxu0 %v6748
      %6942 = vmatprep.subr.bf16.mxu0 %v6751
      %6943 = vmatpush1.bf16.msra.mxu0 %v6750
      %6944 = vmatprep.subr.bf16.mxu0 %v6753
      %6945 = vmatpush1.bf16.msra.mxu0 %v6752
      %6946 = vmatprep.mubr.bf16.mxu0 %v6261
      %6947 = vmatmul.mubr.bf16.gmra.mrb[0].mxu0 %v6249
      %v6948 = vpop.f32.mrb[0].mxu0
      %v6949 = vadd.f32 %v6373, %v6948
      %v6950 = vpop.f32.mrb[0].mxu0
      %v6951 = vadd.f32 %v6377, %v6950
      %v6952 = vpop.f32.mrb[0].mxu0
      %v6953 = vadd.f32 %v6373, %v6952
      %v6954 = vpop.f32.mrb[0].mxu0
      %v6955 = vadd.f32 %v6377, %v6954
      %6956 = vdwg.mxu0
      %6957 = vmatprep.subr.bf16.mxu0 %v6755
      %6958 = vmatpush1.bf16.msra.mxu0 %v6754
      %6959 = vmatprep.subr.bf16.mxu0 %v6757
      %6960 = vmatpush1.bf16.msra.mxu0 %v6756
      %6961 = vmatprep.subr.bf16.mxu0 %v6759
      %6962 = vmatpush1.bf16.msra.mxu0 %v6758
      %6963 = vmatprep.subr.bf16.mxu0 %v6761
      %6964 = vmatpush1.bf16.msra.mxu0 %v6760
      %6965 = vmatprep.subr.bf16.mxu0 %v6763
      %6966 = vmatpush1.bf16.msra.mxu0 %v6762
      %6967 = vmatprep.subr.bf16.mxu0 %v6765
      %6968 = vmatpush1.bf16.msra.mxu0 %v6764
      %6969 = vmatprep.subr.bf16.mxu0 %v6767
      %6970 = vmatpush1.bf16.msra.mxu0 %v6766
      %6971 = vmatprep.subr.bf16.mxu0 %v6769
      %6972 = vmatpush1.bf16.msra.mxu0 %v6768
      %6973 = vmatprep.subr.bf16.mxu0 %v6771
      %6974 = vmatpush1.bf16.msra.mxu0 %v6770
      %6975 = vmatprep.subr.bf16.mxu0 %v6773
      %6976 = vmatpush1.bf16.msra.mxu0 %v6772
      %6977 = vmatprep.subr.bf16.mxu0 %v6775
      %6978 = vmatpush1.bf16.msra.mxu0 %v6774
      %6979 = vmatprep.subr.bf16.mxu0 %v6777
      %6980 = vmatpush1.bf16.msra.mxu0 %v6776
      %6981 = vmatprep.subr.bf16.mxu0 %v6779
      %6982 = vmatpush1.bf16.msra.mxu0 %v6778
      %6983 = vmatprep.subr.bf16.mxu0 %v6781
      %6984 = vmatpush1.bf16.msra.mxu0 %v6780
      %6985 = vmatprep.subr.bf16.mxu0 %v6783
      %6986 = vmatpush1.bf16.msra.mxu0 %v6782
      %6987 = vmatprep.subr.bf16.mxu0 %v6785
      %6988 = vmatpush1.bf16.msra.mxu0 %v6784
      %6989 = vmatprep.mubr.bf16.mxu0 %v6403
      %6990 = vmatmul.mubr.bf16.gmra.mrb[0].mxu0 %v6391
      %v6991 = vpop.f32.mrb[0].mxu0
      %v6992 = vadd.f32 %v6949, %v6991
      %v6993 = vpop.f32.mrb[0].mxu0
      %v6994 = vadd.f32 %v6951, %v6993
      %v6995 = vpop.f32.mrb[0].mxu0
      %v6996 = vadd.f32 %v6953, %v6995
      %v6997 = vpop.f32.mrb[0].mxu0
      %v6998 = vadd.f32 %v6955, %v6997
      %6999 = vdwg.mxu0
      %7000 = vmatprep.subr.bf16.mxu0 %v6787
      %7001 = vmatpush1.bf16.msra.mxu0 %v6786
      %7002 = vmatprep.subr.bf16.mxu0 %v6789
      %7003 = vmatpush1.bf16.msra.mxu0 %v6788
      %7004 = vmatprep.subr.bf16.mxu0 %v6791
      %7005 = vmatpush1.bf16.msra.mxu0 %v6790
      %7006 = vmatprep.subr.bf16.mxu0 %v6793
      %7007 = vmatpush1.bf16.msra.mxu0 %v6792
      %7008 = vmatprep.subr.bf16.mxu0 %v6795
      %7009 = vmatpush1.bf16.msra.mxu0 %v6794
      %7010 = vmatprep.subr.bf16.mxu0 %v6797
      %7011 = vmatpush1.bf16.msra.mxu0 %v6796
      %7012 = vmatprep.subr.bf16.mxu0 %v6799
      %7013 = vmatpush1.bf16.msra.mxu0 %v6798
      %7014 = vmatprep.subr.bf16.mxu0 %v6801
      %7015 = vmatpush1.bf16.msra.mxu0 %v6800
      %7016 = vmatprep.subr.bf16.mxu0 %v6803
      %7017 = vmatpush1.bf16.msra.mxu0 %v6802
      %7018 = vmatprep.subr.bf16.mxu0 %v6805
      %7019 = vmatpush1.bf16.msra.mxu0 %v6804
      %7020 = vmatprep.subr.bf16.mxu0 %v6807
      %7021 = vmatpush1.bf16.msra.mxu0 %v6806
      %7022 = vmatprep.subr.bf16.mxu0 %v6809
      %7023 = vmatpush1.bf16.msra.mxu0 %v6808
      %7024 = vmatprep.subr.bf16.mxu0 %v6811
      %7025 = vmatpush1.bf16.msra.mxu0 %v6810
      %7026 = vmatprep.subr.bf16.mxu0 %v6813
      %7027 = vmatpush1.bf16.msra.mxu0 %v6812
      %7028 = vmatprep.subr.bf16.mxu0 %v6815
      %7029 = vmatpush1.bf16.msra.mxu0 %v6814
      %7030 = vmatprep.subr.bf16.mxu0 %v6817
      %7031 = vmatpush1.bf16.msra.mxu0 %v6816
      %7032 = vmatprep.mubr.bf16.mxu0 %v6427
      %7033 = vmatmul.mubr.bf16.gmra.mrb[0].mxu0 %v6415
      %v7034 = vpop.f32.mrb[0].mxu0
      %v7035 = vadd.f32 %v6992, %v7034
      %v7036 = vpop.f32.mrb[0].mxu0
      %v7037 = vadd.f32 %v6994, %v7036
      %v7038 = vpop.f32.mrb[0].mxu0
      %v7039 = vadd.f32 %v6996, %v7038
      %v7040 = vpop.f32.mrb[0].mxu0
      %v7041 = vadd.f32 %v6998, %v7040
      %7042 = vdwg.mxu0
      %v7043 = vmax.f32 %v7035, 0.0
      %v7044 = vmax.f32 %v7037, 0.0
      %v7045 = vmax.f32 %v7039, 0.0
      %v7046 = vmax.f32 %v7041, 0.0
      %v7047 = vpack.c.bf16 %v7045, %v7043
      %v7048 = vpack.c.bf16 %v7046, %v7044
      %v7051 = vunpack.c.l.b16 %v7047
      %v7052 = vunpack.c.l.b16 %v7048
      %v7053 = vunpack.c.h.b16 %v7047
      %v7054 = vunpack.c.h.b16 %v7048
      %v7055 = vpack.c.b16 %v7052, %v7051
      %v7056 = vpack.c.b16 %v7054, %v7053
      %v7057 = vrot.slane %v7055, 7
      %v7058 = vrot.slane %v7057, 4
      %v7059 = vrot.slane %v7056, 7
      %v7060 = vsel %vm1305, %v7058, %v7059
      %v7061 = vrot.slane %v7059, 4
      %7065 = vst [vmem:[#allocation2] sm:$0xee] %v7057
      %7066 = vst [vmem:[#allocation2 + $0x8] sm:$0xff] %v7060
      %7067 = vst [vmem:[#allocation2 + $0x10] sm:$0x11] %v7061
      %v7068 = vld [vmem:[#allocation2] sm:$0xff]
      %v7069 = vld [vmem:[#allocation2 + $0x8] sm:$0xff]
      %v7070 = vld [vmem:[#allocation2 + $0x10] sm:$0x33]
      %v7074 = vunpack.c.l.b16 %v7068
      %v7075 = vunpack.c.h.b16 %v7068
      %v7076 = vunpack.c.l.b16 %v7069
      %v7077 = vunpack.c.h.b16 %v7069
      %v7078 = vunpack.c.l.b16 %v7070
      %v7079 = vunpack.c.h.b16 %v7070
      %v7080 = vpack.c.b16 %v7076, %v7074
      %v7081 = vpack.c.b16 %v7077, %v7075
      %v7082 = vpack.c.b16 %v7078, %v7078
      %v7083 = vpack.c.b16 %v7079, %v7079
      %v7085 = vshrl.u32 %v7080, 16
      %v7087 = vshll.u32 %v7080, 16
      %v7089 = vrot.slane %v7087, 1
      %v7090 = vor.u32 %v7085, %v7089
      %v7092 = vshll.u32 %v7082, 16
      %v7094 = vrot.slane %v7092, 1
      %v7095 = vsel %vm1335, %v7090, %v7094
      %v7097 = vshrl.u32 %v7081, 16
      %v7099 = vshll.u32 %v7081, 16
      %v7101 = vrot.slane %v7099, 1
      %v7102 = vor.u32 %v7097, %v7101
      %v7104 = vshll.u32 %v7083, 16
      %v7106 = vrot.slane %v7104, 1
      %v7107 = vsel %vm1335, %v7102, %v7106
      %v7108 = vshrl.u32 %v7082, 16
      %v7110 = vshrl.u32 %v7083, 16
      %v7112 = vrot.slane %v7080, 1
      %v7113 = vrot.slane %v7082, 1
      %v7114 = vsel %vm1362, %v7112, %v7113
      %v7115 = vrot.slane %v7081, 1
      %v7116 = vrot.slane %v7083, 1
      %v7117 = vsel %vm1362, %v7115, %v7116
      %v7118 = vld [vmem:[%s31] sm:$0xff]
      %v7119 = vld [vmem:[%s31 + $0x8] sm:$0xff]
      %v7120 = vld [vmem:[%s31 + $0x10] sm:$0xff]
      %v7121 = vld [vmem:[%s31 + $0x18] sm:$0xff]
      %v7122 = vld [vmem:[%s31 + $0x20] sm:$0xff]
      %v7123 = vld [vmem:[%s31 + $0x28] sm:$0xff]
      %v7124 = vld [vmem:[%s31 + $0x30] sm:$0xff]
      %v7125 = vld [vmem:[%s31 + $0x38] sm:$0xff]
      %v7126 = vld [vmem:[%s31 + $0x40] sm:$0xff]
      %v7127 = vld [vmem:[%s31 + $0x48] sm:$0xff]
      %v7128 = vld [vmem:[%s31 + $0x50] sm:$0xff]
      %v7129 = vld [vmem:[%s31 + $0x58] sm:$0xff]
      %v7130 = vld [vmem:[%s31 + $0x60] sm:$0xff]
      %v7131 = vld [vmem:[%s31 + $0x68] sm:$0xff]
      %v7132 = vld [vmem:[%s31 + $0x70] sm:$0xff]
      %v7133 = vld [vmem:[%s31 + $0x78] sm:$0xff]
      %v7134 = vld [vmem:[%s31 + $0x80] sm:$0xff]
      %v7135 = vld [vmem:[%s31 + $0x88] sm:$0xff]
      %v7136 = vld [vmem:[%s31 + $0x90] sm:$0xff]
      %v7137 = vld [vmem:[%s31 + $0x98] sm:$0xff]
      %v7138 = vld [vmem:[%s31 + $0xa0] sm:$0xff]
      %v7139 = vld [vmem:[%s31 + $0xa8] sm:$0xff]
      %v7140 = vld [vmem:[%s31 + $0xb0] sm:$0xff]
      %v7141 = vld [vmem:[%s31 + $0xb8] sm:$0xff]
      %v7142 = vld [vmem:[%s31 + $0xc0] sm:$0xff]
      %v7143 = vld [vmem:[%s31 + $0xc8] sm:$0xff]
      %v7144 = vld [vmem:[%s31 + $0xd0] sm:$0xff]
      %v7145 = vld [vmem:[%s31 + $0xd8] sm:$0xff]
      %v7146 = vld [vmem:[%s31 + $0xe0] sm:$0xff]
      %v7147 = vld [vmem:[%s31 + $0xe8] sm:$0xff]
      %v7148 = vld [vmem:[%s31 + $0xf0] sm:$0xff]
      %v7149 = vld [vmem:[%s31 + $0xf8] sm:$0xff]
      %v7150 = vld [vmem:[%s31 + $0x100] sm:$0xff]
      %v7151 = vld [vmem:[%s31 + $0x108] sm:$0xff]
      %v7152 = vld [vmem:[%s31 + $0x110] sm:$0xff]
      %v7153 = vld [vmem:[%s31 + $0x118] sm:$0xff]
      %v7154 = vld [vmem:[%s31 + $0x120] sm:$0xff]
      %v7155 = vld [vmem:[%s31 + $0x128] sm:$0xff]
      %v7156 = vld [vmem:[%s31 + $0x130] sm:$0xff]
      %v7157 = vld [vmem:[%s31 + $0x138] sm:$0xff]
      %v7158 = vld [vmem:[%s31 + $0x140] sm:$0xff]
      %v7159 = vld [vmem:[%s31 + $0x148] sm:$0xff]
      %v7160 = vld [vmem:[%s31 + $0x150] sm:$0xff]
      %v7161 = vld [vmem:[%s31 + $0x158] sm:$0xff]
      %v7162 = vld [vmem:[%s31 + $0x160] sm:$0xff]
      %v7163 = vld [vmem:[%s31 + $0x168] sm:$0xff]
      %v7164 = vld [vmem:[%s31 + $0x170] sm:$0xff]
      %v7165 = vld [vmem:[%s31 + $0x178] sm:$0xff]
      %v7166 = vld [vmem:[%s31 + $0x180] sm:$0xff]
      %v7167 = vld [vmem:[%s31 + $0x188] sm:$0xff]
      %v7168 = vld [vmem:[%s31 + $0x190] sm:$0xff]
      %v7169 = vld [vmem:[%s31 + $0x198] sm:$0xff]
      %v7170 = vld [vmem:[%s31 + $0x1a0] sm:$0xff]
      %v7171 = vld [vmem:[%s31 + $0x1a8] sm:$0xff]
      %v7172 = vld [vmem:[%s31 + $0x1b0] sm:$0xff]
      %v7173 = vld [vmem:[%s31 + $0x1b8] sm:$0xff]
      %v7174 = vld [vmem:[%s31 + $0x1c0] sm:$0xff]
      %v7175 = vld [vmem:[%s31 + $0x1c8] sm:$0xff]
      %v7176 = vld [vmem:[%s31 + $0x1d0] sm:$0xff]
      %v7177 = vld [vmem:[%s31 + $0x1d8] sm:$0xff]
      %v7178 = vld [vmem:[%s31 + $0x1e0] sm:$0xff]
      %v7179 = vld [vmem:[%s31 + $0x1e8] sm:$0xff]
      %v7180 = vld [vmem:[%s31 + $0x1f0] sm:$0xff]
      %v7181 = vld [vmem:[%s31 + $0x1f8] sm:$0xff]
      %v7182 = vld [vmem:[%s31 + $0x200] sm:$0xff]
      %v7183 = vld [vmem:[%s31 + $0x208] sm:$0xff]
      %v7184 = vld [vmem:[%s31 + $0x210] sm:$0xff]
      %v7185 = vld [vmem:[%s31 + $0x218] sm:$0xff]
      %v7186 = vld [vmem:[%s31 + $0x220] sm:$0xff]
      %v7187 = vld [vmem:[%s31 + $0x228] sm:$0xff]
      %v7188 = vld [vmem:[%s31 + $0x230] sm:$0xff]
      %v7189 = vld [vmem:[%s31 + $0x238] sm:$0xff]
      %v7190 = vld [vmem:[%s31 + $0x240] sm:$0xff]
      %v7191 = vld [vmem:[%s31 + $0x248] sm:$0xff]
      %v7192 = vld [vmem:[%s31 + $0x250] sm:$0xff]
      %v7193 = vld [vmem:[%s31 + $0x258] sm:$0xff]
      %v7194 = vld [vmem:[%s31 + $0x260] sm:$0xff]
      %v7195 = vld [vmem:[%s31 + $0x268] sm:$0xff]
      %v7196 = vld [vmem:[%s31 + $0x270] sm:$0xff]
      %v7197 = vld [vmem:[%s31 + $0x278] sm:$0xff]
      %v7198 = vld [vmem:[%s31 + $0x280] sm:$0xff]
      %v7199 = vld [vmem:[%s31 + $0x288] sm:$0xff]
      %v7200 = vld [vmem:[%s31 + $0x290] sm:$0xff]
      %v7201 = vld [vmem:[%s31 + $0x298] sm:$0xff]
      %v7202 = vld [vmem:[%s31 + $0x2a0] sm:$0xff]
      %v7203 = vld [vmem:[%s31 + $0x2a8] sm:$0xff]
      %v7204 = vld [vmem:[%s31 + $0x2b0] sm:$0xff]
      %v7205 = vld [vmem:[%s31 + $0x2b8] sm:$0xff]
      %v7206 = vld [vmem:[%s31 + $0x2c0] sm:$0xff]
      %v7207 = vld [vmem:[%s31 + $0x2c8] sm:$0xff]
      %v7208 = vld [vmem:[%s31 + $0x2d0] sm:$0xff]
      %v7209 = vld [vmem:[%s31 + $0x2d8] sm:$0xff]
      %v7210 = vld [vmem:[%s31 + $0x2e0] sm:$0xff]
      %v7211 = vld [vmem:[%s31 + $0x2e8] sm:$0xff]
      %v7212 = vld [vmem:[%s31 + $0x2f0] sm:$0xff]
      %v7213 = vld [vmem:[%s31 + $0x2f8] sm:$0xff]
      %v7214 = vld [vmem:[%s33] sm:$0x3]
      %v7216 = vlaneseq
      %v7217 = vshrl.u32 %v7216, 7
      %v7218 = vsub.s32 0, %v7217
      %v7219 = vrot.slane %v7214, %v7218
      %v7220 = vlaneseq
      %v7221 = vshrl.u32 %v7220, 7
      %v7222 = vsub.s32 1, %v7221
      %v7223 = vrot.slane %v7214, %v7222
      %v7227 = vshrl.u32 %v7095, 16
      %v7229 = vshll.u32 %v7095, 16
      %v7231 = vrot.slane %v7229, 1
      %v7232 = vor.u32 %v7227, %v7231
      %v7234 = vshll.u32 %v7108, 16
      %v7236 = vrot.slane %v7234, 1
      %v7237 = vsel %vm1335, %v7232, %v7236
      %v7239 = vshrl.u32 %v7107, 16
      %v7241 = vshll.u32 %v7107, 16
      %v7243 = vrot.slane %v7241, 1
      %v7244 = vor.u32 %v7239, %v7243
      %v7246 = vshll.u32 %v7110, 16
      %v7248 = vrot.slane %v7246, 1
      %v7249 = vsel %vm1335, %v7244, %v7248
      %v7251 = vshrl.u32 %v7114, 16
      %v7253 = vshll.u32 %v7114, 16
      %v7255 = vrot.slane %v7253, 1
      %v7256 = vor.u32 %v7251, %v7255
      %v7258 = vshll.u32 %v7113, 16
      %v7260 = vrot.slane %v7258, 1
      %v7261 = vsel %vm1335, %v7256, %v7260
      %v7263 = vshrl.u32 %v7117, 16
      %v7265 = vshll.u32 %v7117, 16
      %v7267 = vrot.slane %v7265, 1
      %v7268 = vor.u32 %v7263, %v7267
      %v7270 = vshll.u32 %v7116, 16
      %v7272 = vrot.slane %v7270, 1
      %v7273 = vsel %vm1335, %v7268, %v7272
      %v7376 = vunpack.c.l.b16 %v7118
      %v7377 = vunpack.c.h.b16 %v7118
      %v7378 = vunpack.c.l.b16 %v7119
      %v7379 = vunpack.c.h.b16 %v7119
      %v7380 = vunpack.c.l.b16 %v7120
      %v7381 = vunpack.c.h.b16 %v7120
      %v7382 = vunpack.c.l.b16 %v7121
      %v7383 = vunpack.c.h.b16 %v7121
      %v7384 = vunpack.c.l.b16 %v7122
      %v7385 = vunpack.c.h.b16 %v7122
      %v7386 = vunpack.c.l.b16 %v7123
      %v7387 = vunpack.c.h.b16 %v7123
      %v7388 = vunpack.c.l.b16 %v7124
      %v7389 = vunpack.c.h.b16 %v7124
      %v7390 = vunpack.c.l.b16 %v7125
      %v7391 = vunpack.c.h.b16 %v7125
      %v7392 = vunpack.c.l.b16 %v7126
      %v7393 = vunpack.c.h.b16 %v7126
      %v7394 = vunpack.c.l.b16 %v7127
      %v7395 = vunpack.c.h.b16 %v7127
      %v7396 = vunpack.c.l.b16 %v7128
      %v7397 = vunpack.c.h.b16 %v7128
      %v7398 = vunpack.c.l.b16 %v7129
      %v7399 = vunpack.c.h.b16 %v7129
      %v7400 = vunpack.c.l.b16 %v7130
      %v7401 = vunpack.c.h.b16 %v7130
      %v7402 = vunpack.c.l.b16 %v7131
      %v7403 = vunpack.c.h.b16 %v7131
      %v7404 = vunpack.c.l.b16 %v7132
      %v7405 = vunpack.c.h.b16 %v7132
      %v7406 = vunpack.c.l.b16 %v7133
      %v7407 = vunpack.c.h.b16 %v7133
      %v7408 = vunpack.c.l.b16 %v7134
      %v7409 = vunpack.c.h.b16 %v7134
      %v7410 = vunpack.c.l.b16 %v7135
      %v7411 = vunpack.c.h.b16 %v7135
      %v7412 = vunpack.c.l.b16 %v7136
      %v7413 = vunpack.c.h.b16 %v7136
      %v7414 = vunpack.c.l.b16 %v7137
      %v7415 = vunpack.c.h.b16 %v7137
      %v7416 = vunpack.c.l.b16 %v7138
      %v7417 = vunpack.c.h.b16 %v7138
      %v7418 = vunpack.c.l.b16 %v7139
      %v7419 = vunpack.c.h.b16 %v7139
      %v7420 = vunpack.c.l.b16 %v7140
      %v7421 = vunpack.c.h.b16 %v7140
      %v7422 = vunpack.c.l.b16 %v7141
      %v7423 = vunpack.c.h.b16 %v7141
      %v7424 = vunpack.c.l.b16 %v7142
      %v7425 = vunpack.c.h.b16 %v7142
      %v7426 = vunpack.c.l.b16 %v7143
      %v7427 = vunpack.c.h.b16 %v7143
      %v7428 = vunpack.c.l.b16 %v7144
      %v7429 = vunpack.c.h.b16 %v7144
      %v7430 = vunpack.c.l.b16 %v7145
      %v7431 = vunpack.c.h.b16 %v7145
      %v7432 = vunpack.c.l.b16 %v7146
      %v7433 = vunpack.c.h.b16 %v7146
      %v7434 = vunpack.c.l.b16 %v7147
      %v7435 = vunpack.c.h.b16 %v7147
      %v7436 = vunpack.c.l.b16 %v7148
      %v7437 = vunpack.c.h.b16 %v7148
      %v7438 = vunpack.c.l.b16 %v7149
      %v7439 = vunpack.c.h.b16 %v7149
      %v7440 = vunpack.c.l.b16 %v7150
      %v7441 = vunpack.c.h.b16 %v7150
      %v7442 = vunpack.c.l.b16 %v7151
      %v7443 = vunpack.c.h.b16 %v7151
      %v7444 = vunpack.c.l.b16 %v7152
      %v7445 = vunpack.c.h.b16 %v7152
      %v7446 = vunpack.c.l.b16 %v7153
      %v7447 = vunpack.c.h.b16 %v7153
      %v7448 = vunpack.c.l.b16 %v7154
      %v7449 = vunpack.c.h.b16 %v7154
      %v7450 = vunpack.c.l.b16 %v7155
      %v7451 = vunpack.c.h.b16 %v7155
      %v7452 = vunpack.c.l.b16 %v7156
      %v7453 = vunpack.c.h.b16 %v7156
      %v7454 = vunpack.c.l.b16 %v7157
      %v7455 = vunpack.c.h.b16 %v7157
      %v7456 = vunpack.c.l.b16 %v7158
      %v7457 = vunpack.c.h.b16 %v7158
      %v7458 = vunpack.c.l.b16 %v7159
      %v7459 = vunpack.c.h.b16 %v7159
      %v7460 = vunpack.c.l.b16 %v7160
      %v7461 = vunpack.c.h.b16 %v7160
      %v7462 = vunpack.c.l.b16 %v7161
      %v7463 = vunpack.c.h.b16 %v7161
      %v7464 = vunpack.c.l.b16 %v7162
      %v7465 = vunpack.c.h.b16 %v7162
      %v7466 = vunpack.c.l.b16 %v7163
      %v7467 = vunpack.c.h.b16 %v7163
      %v7468 = vunpack.c.l.b16 %v7164
      %v7469 = vunpack.c.h.b16 %v7164
      %v7470 = vunpack.c.l.b16 %v7165
      %v7471 = vunpack.c.h.b16 %v7165
      %v7472 = vunpack.c.l.b16 %v7166
      %v7473 = vunpack.c.h.b16 %v7166
      %v7474 = vunpack.c.l.b16 %v7167
      %v7475 = vunpack.c.h.b16 %v7167
      %v7476 = vunpack.c.l.b16 %v7168
      %v7477 = vunpack.c.h.b16 %v7168
      %v7478 = vunpack.c.l.b16 %v7169
      %v7479 = vunpack.c.h.b16 %v7169
      %v7480 = vunpack.c.l.b16 %v7170
      %v7481 = vunpack.c.h.b16 %v7170
      %v7482 = vunpack.c.l.b16 %v7171
      %v7483 = vunpack.c.h.b16 %v7171
      %v7484 = vunpack.c.l.b16 %v7172
      %v7485 = vunpack.c.h.b16 %v7172
      %v7486 = vunpack.c.l.b16 %v7173
      %v7487 = vunpack.c.h.b16 %v7173
      %v7488 = vunpack.c.l.b16 %v7174
      %v7489 = vunpack.c.h.b16 %v7174
      %v7490 = vunpack.c.l.b16 %v7175
      %v7491 = vunpack.c.h.b16 %v7175
      %v7492 = vunpack.c.l.b16 %v7176
      %v7493 = vunpack.c.h.b16 %v7176
      %v7494 = vunpack.c.l.b16 %v7177
      %v7495 = vunpack.c.h.b16 %v7177
      %v7496 = vunpack.c.l.b16 %v7178
      %v7497 = vunpack.c.h.b16 %v7178
      %v7498 = vunpack.c.l.b16 %v7179
      %v7499 = vunpack.c.h.b16 %v7179
      %v7500 = vunpack.c.l.b16 %v7180
      %v7501 = vunpack.c.h.b16 %v7180
      %v7502 = vunpack.c.l.b16 %v7181
      %v7503 = vunpack.c.h.b16 %v7181
      %v7504 = vunpack.c.l.b16 %v7182
      %v7505 = vunpack.c.h.b16 %v7182
      %v7506 = vunpack.c.l.b16 %v7183
      %v7507 = vunpack.c.h.b16 %v7183
      %v7508 = vunpack.c.l.b16 %v7184
      %v7509 = vunpack.c.h.b16 %v7184
      %v7510 = vunpack.c.l.b16 %v7185
      %v7511 = vunpack.c.h.b16 %v7185
      %v7512 = vunpack.c.l.b16 %v7186
      %v7513 = vunpack.c.h.b16 %v7186
      %v7514 = vunpack.c.l.b16 %v7187
      %v7515 = vunpack.c.h.b16 %v7187
      %v7516 = vunpack.c.l.b16 %v7188
      %v7517 = vunpack.c.h.b16 %v7188
      %v7518 = vunpack.c.l.b16 %v7189
      %v7519 = vunpack.c.h.b16 %v7189
      %v7520 = vunpack.c.l.b16 %v7190
      %v7521 = vunpack.c.h.b16 %v7190
      %v7522 = vunpack.c.l.b16 %v7191
      %v7523 = vunpack.c.h.b16 %v7191
      %v7524 = vunpack.c.l.b16 %v7192
      %v7525 = vunpack.c.h.b16 %v7192
      %v7526 = vunpack.c.l.b16 %v7193
      %v7527 = vunpack.c.h.b16 %v7193
      %v7528 = vunpack.c.l.b16 %v7194
      %v7529 = vunpack.c.h.b16 %v7194
      %v7530 = vunpack.c.l.b16 %v7195
      %v7531 = vunpack.c.h.b16 %v7195
      %v7532 = vunpack.c.l.b16 %v7196
      %v7533 = vunpack.c.h.b16 %v7196
      %v7534 = vunpack.c.l.b16 %v7197
      %v7535 = vunpack.c.h.b16 %v7197
      %v7536 = vunpack.c.l.b16 %v7198
      %v7537 = vunpack.c.h.b16 %v7198
      %v7538 = vunpack.c.l.b16 %v7199
      %v7539 = vunpack.c.h.b16 %v7199
      %v7540 = vunpack.c.l.b16 %v7200
      %v7541 = vunpack.c.h.b16 %v7200
      %v7542 = vunpack.c.l.b16 %v7201
      %v7543 = vunpack.c.h.b16 %v7201
      %v7544 = vunpack.c.l.b16 %v7202
      %v7545 = vunpack.c.h.b16 %v7202
      %v7546 = vunpack.c.l.b16 %v7203
      %v7547 = vunpack.c.h.b16 %v7203
      %v7548 = vunpack.c.l.b16 %v7204
      %v7549 = vunpack.c.h.b16 %v7204
      %v7550 = vunpack.c.l.b16 %v7205
      %v7551 = vunpack.c.h.b16 %v7205
      %v7552 = vunpack.c.l.b16 %v7206
      %v7553 = vunpack.c.h.b16 %v7206
      %v7554 = vunpack.c.l.b16 %v7207
      %v7555 = vunpack.c.h.b16 %v7207
      %v7556 = vunpack.c.l.b16 %v7208
      %v7557 = vunpack.c.h.b16 %v7208
      %v7558 = vunpack.c.l.b16 %v7209
      %v7559 = vunpack.c.h.b16 %v7209
      %v7560 = vunpack.c.l.b16 %v7210
      %v7561 = vunpack.c.h.b16 %v7210
      %v7562 = vunpack.c.l.b16 %v7211
      %v7563 = vunpack.c.h.b16 %v7211
      %v7564 = vunpack.c.l.b16 %v7212
      %v7565 = vunpack.c.h.b16 %v7212
      %v7566 = vunpack.c.l.b16 %v7213
      %v7567 = vunpack.c.h.b16 %v7213
      %v7568 = vpack.c.b16 %v7378, %v7376
      %v7569 = vpack.c.b16 %v7379, %v7377
      %v7570 = vpack.c.b16 %v7382, %v7380
      %v7571 = vpack.c.b16 %v7383, %v7381
      %v7572 = vpack.c.b16 %v7386, %v7384
      %v7573 = vpack.c.b16 %v7387, %v7385
      %v7574 = vpack.c.b16 %v7390, %v7388
      %v7575 = vpack.c.b16 %v7391, %v7389
      %v7576 = vpack.c.b16 %v7394, %v7392
      %v7577 = vpack.c.b16 %v7395, %v7393
      %v7578 = vpack.c.b16 %v7398, %v7396
      %v7579 = vpack.c.b16 %v7399, %v7397
      %v7580 = vpack.c.b16 %v7402, %v7400
      %v7581 = vpack.c.b16 %v7403, %v7401
      %v7582 = vpack.c.b16 %v7406, %v7404
      %v7583 = vpack.c.b16 %v7407, %v7405
      %v7584 = vpack.c.b16 %v7410, %v7408
      %v7585 = vpack.c.b16 %v7411, %v7409
      %v7586 = vpack.c.b16 %v7414, %v7412
      %v7587 = vpack.c.b16 %v7415, %v7413
      %v7588 = vpack.c.b16 %v7418, %v7416
      %v7589 = vpack.c.b16 %v7419, %v7417
      %v7590 = vpack.c.b16 %v7422, %v7420
      %v7591 = vpack.c.b16 %v7423, %v7421
      %v7592 = vpack.c.b16 %v7426, %v7424
      %v7593 = vpack.c.b16 %v7427, %v7425
      %v7594 = vpack.c.b16 %v7430, %v7428
      %v7595 = vpack.c.b16 %v7431, %v7429
      %v7596 = vpack.c.b16 %v7434, %v7432
      %v7597 = vpack.c.b16 %v7435, %v7433
      %v7598 = vpack.c.b16 %v7438, %v7436
      %v7599 = vpack.c.b16 %v7439, %v7437
      %v7600 = vpack.c.b16 %v7442, %v7440
      %v7601 = vpack.c.b16 %v7443, %v7441
      %v7602 = vpack.c.b16 %v7446, %v7444
      %v7603 = vpack.c.b16 %v7447, %v7445
      %v7604 = vpack.c.b16 %v7450, %v7448
      %v7605 = vpack.c.b16 %v7451, %v7449
      %v7606 = vpack.c.b16 %v7454, %v7452
      %v7607 = vpack.c.b16 %v7455, %v7453
      %v7608 = vpack.c.b16 %v7458, %v7456
      %v7609 = vpack.c.b16 %v7459, %v7457
      %v7610 = vpack.c.b16 %v7462, %v7460
      %v7611 = vpack.c.b16 %v7463, %v7461
      %v7612 = vpack.c.b16 %v7466, %v7464
      %v7613 = vpack.c.b16 %v7467, %v7465
      %v7614 = vpack.c.b16 %v7470, %v7468
      %v7615 = vpack.c.b16 %v7471, %v7469
      %v7616 = vpack.c.b16 %v7474, %v7472
      %v7617 = vpack.c.b16 %v7475, %v7473
      %v7618 = vpack.c.b16 %v7478, %v7476
      %v7619 = vpack.c.b16 %v7479, %v7477
      %v7620 = vpack.c.b16 %v7482, %v7480
      %v7621 = vpack.c.b16 %v7483, %v7481
      %v7622 = vpack.c.b16 %v7486, %v7484
      %v7623 = vpack.c.b16 %v7487, %v7485
      %v7624 = vpack.c.b16 %v7490, %v7488
      %v7625 = vpack.c.b16 %v7491, %v7489
      %v7626 = vpack.c.b16 %v7494, %v7492
      %v7627 = vpack.c.b16 %v7495, %v7493
      %v7628 = vpack.c.b16 %v7498, %v7496
      %v7629 = vpack.c.b16 %v7499, %v7497
      %v7630 = vpack.c.b16 %v7502, %v7500
      %v7631 = vpack.c.b16 %v7503, %v7501
      %v7632 = vpack.c.b16 %v7506, %v7504
      %v7633 = vpack.c.b16 %v7507, %v7505
      %v7634 = vpack.c.b16 %v7510, %v7508
      %v7635 = vpack.c.b16 %v7511, %v7509
      %v7636 = vpack.c.b16 %v7514, %v7512
      %v7637 = vpack.c.b16 %v7515, %v7513
      %v7638 = vpack.c.b16 %v7518, %v7516
      %v7639 = vpack.c.b16 %v7519, %v7517
      %v7640 = vpack.c.b16 %v7522, %v7520
      %v7641 = vpack.c.b16 %v7523, %v7521
      %v7642 = vpack.c.b16 %v7526, %v7524
      %v7643 = vpack.c.b16 %v7527, %v7525
      %v7644 = vpack.c.b16 %v7530, %v7528
      %v7645 = vpack.c.b16 %v7531, %v7529
      %v7646 = vpack.c.b16 %v7534, %v7532
      %v7647 = vpack.c.b16 %v7535, %v7533
      %v7648 = vpack.c.b16 %v7538, %v7536
      %v7649 = vpack.c.b16 %v7539, %v7537
      %v7650 = vpack.c.b16 %v7542, %v7540
      %v7651 = vpack.c.b16 %v7543, %v7541
      %v7652 = vpack.c.b16 %v7546, %v7544
      %v7653 = vpack.c.b16 %v7547, %v7545
      %v7654 = vpack.c.b16 %v7550, %v7548
      %v7655 = vpack.c.b16 %v7551, %v7549
      %v7656 = vpack.c.b16 %v7554, %v7552
      %v7657 = vpack.c.b16 %v7555, %v7553
      %v7658 = vpack.c.b16 %v7558, %v7556
      %v7659 = vpack.c.b16 %v7559, %v7557
      %v7660 = vpack.c.b16 %v7562, %v7560
      %v7661 = vpack.c.b16 %v7563, %v7561
      %v7662 = vpack.c.b16 %v7566, %v7564
      %v7663 = vpack.c.b16 %v7567, %v7565
      %7760 = vmatprep.subr.bf16.mxu0 %v7569
      %7761 = vmatpush1.bf16.msra.mxu0 %v7568
      %7762 = vmatprep.subr.bf16.mxu0 %v7571
      %7763 = vmatpush1.bf16.msra.mxu0 %v7570
      %7764 = vmatprep.subr.bf16.mxu0 %v7573
      %7765 = vmatpush1.bf16.msra.mxu0 %v7572
      %7766 = vmatprep.subr.bf16.mxu0 %v7575
      %7767 = vmatpush1.bf16.msra.mxu0 %v7574
      %7768 = vmatprep.subr.bf16.mxu0 %v7577
      %7769 = vmatpush1.bf16.msra.mxu0 %v7576
      %7770 = vmatprep.subr.bf16.mxu0 %v7579
      %7771 = vmatpush1.bf16.msra.mxu0 %v7578
      %7772 = vmatprep.subr.bf16.mxu0 %v7581
      %7773 = vmatpush1.bf16.msra.mxu0 %v7580
      %7774 = vmatprep.subr.bf16.mxu0 %v7583
      %7775 = vmatpush1.bf16.msra.mxu0 %v7582
      %7776 = vmatprep.subr.bf16.mxu0 %v7585
      %7777 = vmatpush1.bf16.msra.mxu0 %v7584
      %7778 = vmatprep.subr.bf16.mxu0 %v7587
      %7779 = vmatpush1.bf16.msra.mxu0 %v7586
      %7780 = vmatprep.subr.bf16.mxu0 %v7589
      %7781 = vmatpush1.bf16.msra.mxu0 %v7588
      %7782 = vmatprep.subr.bf16.mxu0 %v7591
      %7783 = vmatpush1.bf16.msra.mxu0 %v7590
      %7784 = vmatprep.subr.bf16.mxu0 %v7593
      %7785 = vmatpush1.bf16.msra.mxu0 %v7592
      %7786 = vmatprep.subr.bf16.mxu0 %v7595
      %7787 = vmatpush1.bf16.msra.mxu0 %v7594
      %7788 = vmatprep.subr.bf16.mxu0 %v7597
      %7789 = vmatpush1.bf16.msra.mxu0 %v7596
      %7790 = vmatprep.subr.bf16.mxu0 %v7599
      %7791 = vmatpush1.bf16.msra.mxu0 %v7598
      %7792 = vmatprep.mubr.bf16.mxu0 %v7107
      %7793 = vmatmul.mubr.bf16.gmra.mrb[0].mxu0 %v7095
      %v7794 = vpop.f32.mrb[0].mxu0
      %v7795 = vadd.f32 %v7219, %v7794
      %v7796 = vpop.f32.mrb[0].mxu0
      %v7797 = vadd.f32 %v7223, %v7796
      %v7798 = vpop.f32.mrb[0].mxu0
      %v7799 = vadd.f32 %v7219, %v7798
      %v7800 = vpop.f32.mrb[0].mxu0
      %v7801 = vadd.f32 %v7223, %v7800
      %7802 = vdwg.mxu0
      %7803 = vmatprep.subr.bf16.mxu0 %v7601
      %7804 = vmatpush1.bf16.msra.mxu0 %v7600
      %7805 = vmatprep.subr.bf16.mxu0 %v7603
      %7806 = vmatpush1.bf16.msra.mxu0 %v7602
      %7807 = vmatprep.subr.bf16.mxu0 %v7605
      %7808 = vmatpush1.bf16.msra.mxu0 %v7604
      %7809 = vmatprep.subr.bf16.mxu0 %v7607
      %7810 = vmatpush1.bf16.msra.mxu0 %v7606
      %7811 = vmatprep.subr.bf16.mxu0 %v7609
      %7812 = vmatpush1.bf16.msra.mxu0 %v7608
      %7813 = vmatprep.subr.bf16.mxu0 %v7611
      %7814 = vmatpush1.bf16.msra.mxu0 %v7610
      %7815 = vmatprep.subr.bf16.mxu0 %v7613
      %7816 = vmatpush1.bf16.msra.mxu0 %v7612
      %7817 = vmatprep.subr.bf16.mxu0 %v7615
      %7818 = vmatpush1.bf16.msra.mxu0 %v7614
      %7819 = vmatprep.subr.bf16.mxu0 %v7617
      %7820 = vmatpush1.bf16.msra.mxu0 %v7616
      %7821 = vmatprep.subr.bf16.mxu0 %v7619
      %7822 = vmatpush1.bf16.msra.mxu0 %v7618
      %7823 = vmatprep.subr.bf16.mxu0 %v7621
      %7824 = vmatpush1.bf16.msra.mxu0 %v7620
      %7825 = vmatprep.subr.bf16.mxu0 %v7623
      %7826 = vmatpush1.bf16.msra.mxu0 %v7622
      %7827 = vmatprep.subr.bf16.mxu0 %v7625
      %7828 = vmatpush1.bf16.msra.mxu0 %v7624
      %7829 = vmatprep.subr.bf16.mxu0 %v7627
      %7830 = vmatpush1.bf16.msra.mxu0 %v7626
      %7831 = vmatprep.subr.bf16.mxu0 %v7629
      %7832 = vmatpush1.bf16.msra.mxu0 %v7628
      %7833 = vmatprep.subr.bf16.mxu0 %v7631
      %7834 = vmatpush1.bf16.msra.mxu0 %v7630
      %7835 = vmatprep.mubr.bf16.mxu0 %v7249
      %7836 = vmatmul.mubr.bf16.gmra.mrb[0].mxu0 %v7237
      %v7837 = vpop.f32.mrb[0].mxu0
      %v7838 = vadd.f32 %v7795, %v7837
      %v7839 = vpop.f32.mrb[0].mxu0
      %v7840 = vadd.f32 %v7797, %v7839
      %v7841 = vpop.f32.mrb[0].mxu0
      %v7842 = vadd.f32 %v7799, %v7841
      %v7843 = vpop.f32.mrb[0].mxu0
      %v7844 = vadd.f32 %v7801, %v7843
      %7845 = vdwg.mxu0
      %7846 = vmatprep.subr.bf16.mxu0 %v7633
      %7847 = vmatpush1.bf16.msra.mxu0 %v7632
      %7848 = vmatprep.subr.bf16.mxu0 %v7635
      %7849 = vmatpush1.bf16.msra.mxu0 %v7634
      %7850 = vmatprep.subr.bf16.mxu0 %v7637
      %7851 = vmatpush1.bf16.msra.mxu0 %v7636
      %7852 = vmatprep.subr.bf16.mxu0 %v7639
      %7853 = vmatpush1.bf16.msra.mxu0 %v7638
      %7854 = vmatprep.subr.bf16.mxu0 %v7641
      %7855 = vmatpush1.bf16.msra.mxu0 %v7640
      %7856 = vmatprep.subr.bf16.mxu0 %v7643
      %7857 = vmatpush1.bf16.msra.mxu0 %v7642
      %7858 = vmatprep.subr.bf16.mxu0 %v7645
      %7859 = vmatpush1.bf16.msra.mxu0 %v7644
      %7860 = vmatprep.subr.bf16.mxu0 %v7647
      %7861 = vmatpush1.bf16.msra.mxu0 %v7646
      %7862 = vmatprep.subr.bf16.mxu0 %v7649
      %7863 = vmatpush1.bf16.msra.mxu0 %v7648
      %7864 = vmatprep.subr.bf16.mxu0 %v7651
      %7865 = vmatpush1.bf16.msra.mxu0 %v7650
      %7866 = vmatprep.subr.bf16.mxu0 %v7653
      %7867 = vmatpush1.bf16.msra.mxu0 %v7652
      %7868 = vmatprep.subr.bf16.mxu0 %v7655
      %7869 = vmatpush1.bf16.msra.mxu0 %v7654
      %7870 = vmatprep.subr.bf16.mxu0 %v7657
      %7871 = vmatpush1.bf16.msra.mxu0 %v7656
      %7872 = vmatprep.subr.bf16.mxu0 %v7659
      %7873 = vmatpush1.bf16.msra.mxu0 %v7658
      %7874 = vmatprep.subr.bf16.mxu0 %v7661
      %7875 = vmatpush1.bf16.msra.mxu0 %v7660
      %7876 = vmatprep.subr.bf16.mxu0 %v7663
      %7877 = vmatpush1.bf16.msra.mxu0 %v7662
      %7878 = vmatprep.mubr.bf16.mxu0 %v7273
      %7879 = vmatmul.mubr.bf16.gmra.mrb[0].mxu0 %v7261
      %v7880 = vpop.f32.mrb[0].mxu0
      %v7881 = vadd.f32 %v7838, %v7880
      %v7882 = vpop.f32.mrb[0].mxu0
      %v7883 = vadd.f32 %v7840, %v7882
      %v7884 = vpop.f32.mrb[0].mxu0
      %v7885 = vadd.f32 %v7842, %v7884
      %v7886 = vpop.f32.mrb[0].mxu0
      %v7887 = vadd.f32 %v7844, %v7886
      %7888 = vdwg.mxu0
      %v7889 = vmax.f32 %v7881, 0.0
      %v7890 = vmax.f32 %v7883, 0.0
      %v7891 = vmax.f32 %v7885, 0.0
      %v7892 = vmax.f32 %v7887, 0.0
      %v7893 = vpack.c.bf16 %v7891, %v7889
      %v7894 = vpack.c.bf16 %v7892, %v7890
      %v7897 = vunpack.c.l.b16 %v7893
      %v7898 = vunpack.c.l.b16 %v7894
      %v7899 = vunpack.c.h.b16 %v7893
      %v7900 = vunpack.c.h.b16 %v7894
      %v7901 = vpack.c.b16 %v7898, %v7897
      %v7902 = vpack.c.b16 %v7900, %v7899
      %v7903 = vrot.slane %v7901, 7
      %v7904 = vrot.slane %v7903, 4
      %v7905 = vrot.slane %v7902, 7
      %v7906 = vsel %vm1305, %v7904, %v7905
      %v7907 = vrot.slane %v7905, 4
      %7911 = vst [vmem:[#allocation2] sm:$0xee] %v7903
      %7912 = vst [vmem:[#allocation2 + $0x8] sm:$0xff] %v7906
      %7913 = vst [vmem:[#allocation2 + $0x10] sm:$0x11] %v7907
      %v7914 = vld [vmem:[#allocation2] sm:$0xff]
      %v7915 = vld [vmem:[#allocation2 + $0x8] sm:$0xff]
      %v7916 = vld [vmem:[#allocation2 + $0x10] sm:$0x33]
      %v7920 = vunpack.c.l.b16 %v7914
      %v7921 = vunpack.c.h.b16 %v7914
      %v7922 = vunpack.c.l.b16 %v7915
      %v7923 = vunpack.c.h.b16 %v7915
      %v7924 = vunpack.c.l.b16 %v7916
      %v7925 = vunpack.c.h.b16 %v7916
      %v7926 = vpack.c.b16 %v7922, %v7920
      %v7927 = vpack.c.b16 %v7923, %v7921
      %v7928 = vpack.c.b16 %v7924, %v7924
      %v7929 = vpack.c.b16 %v7925, %v7925
      %v7931 = vshrl.u32 %v7926, 16
      %v7933 = vshll.u32 %v7926, 16
      %v7935 = vrot.slane %v7933, 1
      %v7936 = vor.u32 %v7931, %v7935
      %v7938 = vshll.u32 %v7928, 16
      %v7940 = vrot.slane %v7938, 1
      %v7941 = vsel %vm1335, %v7936, %v7940
      %v7943 = vshrl.u32 %v7927, 16
      %v7945 = vshll.u32 %v7927, 16
      %v7947 = vrot.slane %v7945, 1
      %v7948 = vor.u32 %v7943, %v7947
      %v7950 = vshll.u32 %v7929, 16
      %v7952 = vrot.slane %v7950, 1
      %v7953 = vsel %vm1335, %v7948, %v7952
      %v7954 = vshrl.u32 %v7928, 16
      %v7956 = vshrl.u32 %v7929, 16
      %v7958 = vrot.slane %v7926, 1
      %v7959 = vrot.slane %v7928, 1
      %v7960 = vsel %vm1362, %v7958, %v7959
      %v7961 = vrot.slane %v7927, 1
      %v7962 = vrot.slane %v7929, 1
      %v7963 = vsel %vm1362, %v7961, %v7962
      %v7964 = vld [vmem:[%s35] sm:$0xff]
      %v7965 = vld [vmem:[%s35 + $0x8] sm:$0xff]
      %v7966 = vld [vmem:[%s35 + $0x10] sm:$0xff]
      %v7967 = vld [vmem:[%s35 + $0x18] sm:$0xff]
      %v7968 = vld [vmem:[%s35 + $0x20] sm:$0xff]
      %v7969 = vld [vmem:[%s35 + $0x28] sm:$0xff]
      %v7970 = vld [vmem:[%s35 + $0x30] sm:$0xff]
      %v7971 = vld [vmem:[%s35 + $0x38] sm:$0xff]
      %v7972 = vld [vmem:[%s35 + $0x40] sm:$0xff]
      %v7973 = vld [vmem:[%s35 + $0x48] sm:$0xff]
      %v7974 = vld [vmem:[%s35 + $0x50] sm:$0xff]
      %v7975 = vld [vmem:[%s35 + $0x58] sm:$0xff]
      %v7976 = vld [vmem:[%s35 + $0x60] sm:$0xff]
      %v7977 = vld [vmem:[%s35 + $0x68] sm:$0xff]
      %v7978 = vld [vmem:[%s35 + $0x70] sm:$0xff]
      %v7979 = vld [vmem:[%s35 + $0x78] sm:$0xff]
      %v7980 = vld [vmem:[%s35 + $0x80] sm:$0xff]
      %v7981 = vld [vmem:[%s35 + $0x88] sm:$0xff]
      %v7982 = vld [vmem:[%s35 + $0x90] sm:$0xff]
      %v7983 = vld [vmem:[%s35 + $0x98] sm:$0xff]
      %v7984 = vld [vmem:[%s35 + $0xa0] sm:$0xff]
      %v7985 = vld [vmem:[%s35 + $0xa8] sm:$0xff]
      %v7986 = vld [vmem:[%s35 + $0xb0] sm:$0xff]
      %v7987 = vld [vmem:[%s35 + $0xb8] sm:$0xff]
      %v7988 = vld [vmem:[%s35 + $0xc0] sm:$0xff]
      %v7989 = vld [vmem:[%s35 + $0xc8] sm:$0xff]
      %v7990 = vld [vmem:[%s35 + $0xd0] sm:$0xff]
      %v7991 = vld [vmem:[%s35 + $0xd8] sm:$0xff]
      %v7992 = vld [vmem:[%s35 + $0xe0] sm:$0xff]
      %v7993 = vld [vmem:[%s35 + $0xe8] sm:$0xff]
      %v7994 = vld [vmem:[%s35 + $0xf0] sm:$0xff]
      %v7995 = vld [vmem:[%s35 + $0xf8] sm:$0xff]
      %v7996 = vld [vmem:[%s35 + $0x100] sm:$0xff]
      %v7997 = vld [vmem:[%s35 + $0x108] sm:$0xff]
      %v7998 = vld [vmem:[%s35 + $0x110] sm:$0xff]
      %v7999 = vld [vmem:[%s35 + $0x118] sm:$0xff]
      %v8000 = vld [vmem:[%s35 + $0x120] sm:$0xff]
      %v8001 = vld [vmem:[%s35 + $0x128] sm:$0xff]
      %v8002 = vld [vmem:[%s35 + $0x130] sm:$0xff]
      %v8003 = vld [vmem:[%s35 + $0x138] sm:$0xff]
      %v8004 = vld [vmem:[%s35 + $0x140] sm:$0xff]
      %v8005 = vld [vmem:[%s35 + $0x148] sm:$0xff]
      %v8006 = vld [vmem:[%s35 + $0x150] sm:$0xff]
      %v8007 = vld [vmem:[%s35 + $0x158] sm:$0xff]
      %v8008 = vld [vmem:[%s35 + $0x160] sm:$0xff]
      %v8009 = vld [vmem:[%s35 + $0x168] sm:$0xff]
      %v8010 = vld [vmem:[%s35 + $0x170] sm:$0xff]
      %v8011 = vld [vmem:[%s35 + $0x178] sm:$0xff]
      %v8012 = vld [vmem:[%s35 + $0x180] sm:$0xff]
      %v8013 = vld [vmem:[%s35 + $0x188] sm:$0xff]
      %v8014 = vld [vmem:[%s35 + $0x190] sm:$0xff]
      %v8015 = vld [vmem:[%s35 + $0x198] sm:$0xff]
      %v8016 = vld [vmem:[%s35 + $0x1a0] sm:$0xff]
      %v8017 = vld [vmem:[%s35 + $0x1a8] sm:$0xff]
      %v8018 = vld [vmem:[%s35 + $0x1b0] sm:$0xff]
      %v8019 = vld [vmem:[%s35 + $0x1b8] sm:$0xff]
      %v8020 = vld [vmem:[%s35 + $0x1c0] sm:$0xff]
      %v8021 = vld [vmem:[%s35 + $0x1c8] sm:$0xff]
      %v8022 = vld [vmem:[%s35 + $0x1d0] sm:$0xff]
      %v8023 = vld [vmem:[%s35 + $0x1d8] sm:$0xff]
      %v8024 = vld [vmem:[%s35 + $0x1e0] sm:$0xff]
      %v8025 = vld [vmem:[%s35 + $0x1e8] sm:$0xff]
      %v8026 = vld [vmem:[%s35 + $0x1f0] sm:$0xff]
      %v8027 = vld [vmem:[%s35 + $0x1f8] sm:$0xff]
      %v8028 = vld [vmem:[%s35 + $0x200] sm:$0xff]
      %v8029 = vld [vmem:[%s35 + $0x208] sm:$0xff]
      %v8030 = vld [vmem:[%s35 + $0x210] sm:$0xff]
      %v8031 = vld [vmem:[%s35 + $0x218] sm:$0xff]
      %v8032 = vld [vmem:[%s35 + $0x220] sm:$0xff]
      %v8033 = vld [vmem:[%s35 + $0x228] sm:$0xff]
      %v8034 = vld [vmem:[%s35 + $0x230] sm:$0xff]
      %v8035 = vld [vmem:[%s35 + $0x238] sm:$0xff]
      %v8036 = vld [vmem:[%s35 + $0x240] sm:$0xff]
      %v8037 = vld [vmem:[%s35 + $0x248] sm:$0xff]
      %v8038 = vld [vmem:[%s35 + $0x250] sm:$0xff]
      %v8039 = vld [vmem:[%s35 + $0x258] sm:$0xff]
      %v8040 = vld [vmem:[%s35 + $0x260] sm:$0xff]
      %v8041 = vld [vmem:[%s35 + $0x268] sm:$0xff]
      %v8042 = vld [vmem:[%s35 + $0x270] sm:$0xff]
      %v8043 = vld [vmem:[%s35 + $0x278] sm:$0xff]
      %v8044 = vld [vmem:[%s35 + $0x280] sm:$0xff]
      %v8045 = vld [vmem:[%s35 + $0x288] sm:$0xff]
      %v8046 = vld [vmem:[%s35 + $0x290] sm:$0xff]
      %v8047 = vld [vmem:[%s35 + $0x298] sm:$0xff]
      %v8048 = vld [vmem:[%s35 + $0x2a0] sm:$0xff]
      %v8049 = vld [vmem:[%s35 + $0x2a8] sm:$0xff]
      %v8050 = vld [vmem:[%s35 + $0x2b0] sm:$0xff]
      %v8051 = vld [vmem:[%s35 + $0x2b8] sm:$0xff]
      %v8052 = vld [vmem:[%s35 + $0x2c0] sm:$0xff]
      %v8053 = vld [vmem:[%s35 + $0x2c8] sm:$0xff]
      %v8054 = vld [vmem:[%s35 + $0x2d0] sm:$0xff]
      %v8055 = vld [vmem:[%s35 + $0x2d8] sm:$0xff]
      %v8056 = vld [vmem:[%s35 + $0x2e0] sm:$0xff]
      %v8057 = vld [vmem:[%s35 + $0x2e8] sm:$0xff]
      %v8058 = vld [vmem:[%s35 + $0x2f0] sm:$0xff]
      %v8059 = vld [vmem:[%s35 + $0x2f8] sm:$0xff]
      %v8060 = vld [vmem:[%s37] sm:$0x3]
      %v8062 = vlaneseq
      %v8063 = vshrl.u32 %v8062, 7
      %v8064 = vsub.s32 0, %v8063
      %v8065 = vrot.slane %v8060, %v8064
      %v8066 = vlaneseq
      %v8067 = vshrl.u32 %v8066, 7
      %v8068 = vsub.s32 1, %v8067
      %v8069 = vrot.slane %v8060, %v8068
      %v8073 = vshrl.u32 %v7941, 16
      %v8075 = vshll.u32 %v7941, 16
      %v8077 = vrot.slane %v8075, 1
      %v8078 = vor.u32 %v8073, %v8077
      %v8080 = vshll.u32 %v7954, 16
      %v8082 = vrot.slane %v8080, 1
      %v8083 = vsel %vm1335, %v8078, %v8082
      %v8085 = vshrl.u32 %v7953, 16
      %v8087 = vshll.u32 %v7953, 16
      %v8089 = vrot.slane %v8087, 1
      %v8090 = vor.u32 %v8085, %v8089
      %v8092 = vshll.u32 %v7956, 16
      %v8094 = vrot.slane %v8092, 1
      %v8095 = vsel %vm1335, %v8090, %v8094
      %v8097 = vshrl.u32 %v7960, 16
      %v8099 = vshll.u32 %v7960, 16
      %v8101 = vrot.slane %v8099, 1
      %v8102 = vor.u32 %v8097, %v8101
      %v8104 = vshll.u32 %v7959, 16
      %v8106 = vrot.slane %v8104, 1
      %v8107 = vsel %vm1335, %v8102, %v8106
      %v8109 = vshrl.u32 %v7963, 16
      %v8111 = vshll.u32 %v7963, 16
      %v8113 = vrot.slane %v8111, 1
      %v8114 = vor.u32 %v8109, %v8113
      %v8116 = vshll.u32 %v7962, 16
      %v8118 = vrot.slane %v8116, 1
      %v8119 = vsel %vm1335, %v8114, %v8118
      %v8222 = vunpack.c.l.b16 %v7964
      %v8223 = vunpack.c.h.b16 %v7964
      %v8224 = vunpack.c.l.b16 %v7965
      %v8225 = vunpack.c.h.b16 %v7965
      %v8226 = vunpack.c.l.b16 %v7966
      %v8227 = vunpack.c.h.b16 %v7966
      %v8228 = vunpack.c.l.b16 %v7967
      %v8229 = vunpack.c.h.b16 %v7967
      %v8230 = vunpack.c.l.b16 %v7968
      %v8231 = vunpack.c.h.b16 %v7968
      %v8232 = vunpack.c.l.b16 %v7969
      %v8233 = vunpack.c.h.b16 %v7969
      %v8234 = vunpack.c.l.b16 %v7970
      %v8235 = vunpack.c.h.b16 %v7970
      %v8236 = vunpack.c.l.b16 %v7971
      %v8237 = vunpack.c.h.b16 %v7971
      %v8238 = vunpack.c.l.b16 %v7972
      %v8239 = vunpack.c.h.b16 %v7972
      %v8240 = vunpack.c.l.b16 %v7973
      %v8241 = vunpack.c.h.b16 %v7973
      %v8242 = vunpack.c.l.b16 %v7974
      %v8243 = vunpack.c.h.b16 %v7974
      %v8244 = vunpack.c.l.b16 %v7975
      %v8245 = vunpack.c.h.b16 %v7975
      %v8246 = vunpack.c.l.b16 %v7976
      %v8247 = vunpack.c.h.b16 %v7976
      %v8248 = vunpack.c.l.b16 %v7977
      %v8249 = vunpack.c.h.b16 %v7977
      %v8250 = vunpack.c.l.b16 %v7978
      %v8251 = vunpack.c.h.b16 %v7978
      %v8252 = vunpack.c.l.b16 %v7979
      %v8253 = vunpack.c.h.b16 %v7979
      %v8254 = vunpack.c.l.b16 %v7980
      %v8255 = vunpack.c.h.b16 %v7980
      %v8256 = vunpack.c.l.b16 %v7981
      %v8257 = vunpack.c.h.b16 %v7981
      %v8258 = vunpack.c.l.b16 %v7982
      %v8259 = vunpack.c.h.b16 %v7982
      %v8260 = vunpack.c.l.b16 %v7983
      %v8261 = vunpack.c.h.b16 %v7983
      %v8262 = vunpack.c.l.b16 %v7984
      %v8263 = vunpack.c.h.b16 %v7984
      %v8264 = vunpack.c.l.b16 %v7985
      %v8265 = vunpack.c.h.b16 %v7985
      %v8266 = vunpack.c.l.b16 %v7986
      %v8267 = vunpack.c.h.b16 %v7986
      %v8268 = vunpack.c.l.b16 %v7987
      %v8269 = vunpack.c.h.b16 %v7987
      %v8270 = vunpack.c.l.b16 %v7988
      %v8271 = vunpack.c.h.b16 %v7988
      %v8272 = vunpack.c.l.b16 %v7989
      %v8273 = vunpack.c.h.b16 %v7989
      %v8274 = vunpack.c.l.b16 %v7990
      %v8275 = vunpack.c.h.b16 %v7990
      %v8276 = vunpack.c.l.b16 %v7991
      %v8277 = vunpack.c.h.b16 %v7991
      %v8278 = vunpack.c.l.b16 %v7992
      %v8279 = vunpack.c.h.b16 %v7992
      %v8280 = vunpack.c.l.b16 %v7993
      %v8281 = vunpack.c.h.b16 %v7993
      %v8282 = vunpack.c.l.b16 %v7994
      %v8283 = vunpack.c.h.b16 %v7994
      %v8284 = vunpack.c.l.b16 %v7995
      %v8285 = vunpack.c.h.b16 %v7995
      %v8286 = vunpack.c.l.b16 %v7996
      %v8287 = vunpack.c.h.b16 %v7996
      %v8288 = vunpack.c.l.b16 %v7997
      %v8289 = vunpack.c.h.b16 %v7997
      %v8290 = vunpack.c.l.b16 %v7998
      %v8291 = vunpack.c.h.b16 %v7998
      %v8292 = vunpack.c.l.b16 %v7999
      %v8293 = vunpack.c.h.b16 %v7999
      %v8294 = vunpack.c.l.b16 %v8000
      %v8295 = vunpack.c.h.b16 %v8000
      %v8296 = vunpack.c.l.b16 %v8001
      %v8297 = vunpack.c.h.b16 %v8001
      %v8298 = vunpack.c.l.b16 %v8002
      %v8299 = vunpack.c.h.b16 %v8002
      %v8300 = vunpack.c.l.b16 %v8003
      %v8301 = vunpack.c.h.b16 %v8003
      %v8302 = vunpack.c.l.b16 %v8004
      %v8303 = vunpack.c.h.b16 %v8004
      %v8304 = vunpack.c.l.b16 %v8005
      %v8305 = vunpack.c.h.b16 %v8005
      %v8306 = vunpack.c.l.b16 %v8006
      %v8307 = vunpack.c.h.b16 %v8006
      %v8308 = vunpack.c.l.b16 %v8007
      %v8309 = vunpack.c.h.b16 %v8007
      %v8310 = vunpack.c.l.b16 %v8008
      %v8311 = vunpack.c.h.b16 %v8008
      %v8312 = vunpack.c.l.b16 %v8009
      %v8313 = vunpack.c.h.b16 %v8009
      %v8314 = vunpack.c.l.b16 %v8010
      %v8315 = vunpack.c.h.b16 %v8010
      %v8316 = vunpack.c.l.b16 %v8011
      %v8317 = vunpack.c.h.b16 %v8011
      %v8318 = vunpack.c.l.b16 %v8012
      %v8319 = vunpack.c.h.b16 %v8012
      %v8320 = vunpack.c.l.b16 %v8013
      %v8321 = vunpack.c.h.b16 %v8013
      %v8322 = vunpack.c.l.b16 %v8014
      %v8323 = vunpack.c.h.b16 %v8014
      %v8324 = vunpack.c.l.b16 %v8015
      %v8325 = vunpack.c.h.b16 %v8015
      %v8326 = vunpack.c.l.b16 %v8016
      %v8327 = vunpack.c.h.b16 %v8016
      %v8328 = vunpack.c.l.b16 %v8017
      %v8329 = vunpack.c.h.b16 %v8017
      %v8330 = vunpack.c.l.b16 %v8018
      %v8331 = vunpack.c.h.b16 %v8018
      %v8332 = vunpack.c.l.b16 %v8019
      %v8333 = vunpack.c.h.b16 %v8019
      %v8334 = vunpack.c.l.b16 %v8020
      %v8335 = vunpack.c.h.b16 %v8020
      %v8336 = vunpack.c.l.b16 %v8021
      %v8337 = vunpack.c.h.b16 %v8021
      %v8338 = vunpack.c.l.b16 %v8022
      %v8339 = vunpack.c.h.b16 %v8022
      %v8340 = vunpack.c.l.b16 %v8023
      %v8341 = vunpack.c.h.b16 %v8023
      %v8342 = vunpack.c.l.b16 %v8024
      %v8343 = vunpack.c.h.b16 %v8024
      %v8344 = vunpack.c.l.b16 %v8025
      %v8345 = vunpack.c.h.b16 %v8025
      %v8346 = vunpack.c.l.b16 %v8026
      %v8347 = vunpack.c.h.b16 %v8026
      %v8348 = vunpack.c.l.b16 %v8027
      %v8349 = vunpack.c.h.b16 %v8027
      %v8350 = vunpack.c.l.b16 %v8028
      %v8351 = vunpack.c.h.b16 %v8028
      %v8352 = vunpack.c.l.b16 %v8029
      %v8353 = vunpack.c.h.b16 %v8029
      %v8354 = vunpack.c.l.b16 %v8030
      %v8355 = vunpack.c.h.b16 %v8030
      %v8356 = vunpack.c.l.b16 %v8031
      %v8357 = vunpack.c.h.b16 %v8031
      %v8358 = vunpack.c.l.b16 %v8032
      %v8359 = vunpack.c.h.b16 %v8032
      %v8360 = vunpack.c.l.b16 %v8033
      %v8361 = vunpack.c.h.b16 %v8033
      %v8362 = vunpack.c.l.b16 %v8034
      %v8363 = vunpack.c.h.b16 %v8034
      %v8364 = vunpack.c.l.b16 %v8035
      %v8365 = vunpack.c.h.b16 %v8035
      %v8366 = vunpack.c.l.b16 %v8036
      %v8367 = vunpack.c.h.b16 %v8036
      %v8368 = vunpack.c.l.b16 %v8037
      %v8369 = vunpack.c.h.b16 %v8037
      %v8370 = vunpack.c.l.b16 %v8038
      %v8371 = vunpack.c.h.b16 %v8038
      %v8372 = vunpack.c.l.b16 %v8039
      %v8373 = vunpack.c.h.b16 %v8039
      %v8374 = vunpack.c.l.b16 %v8040
      %v8375 = vunpack.c.h.b16 %v8040
      %v8376 = vunpack.c.l.b16 %v8041
      %v8377 = vunpack.c.h.b16 %v8041
      %v8378 = vunpack.c.l.b16 %v8042
      %v8379 = vunpack.c.h.b16 %v8042
      %v8380 = vunpack.c.l.b16 %v8043
      %v8381 = vunpack.c.h.b16 %v8043
      %v8382 = vunpack.c.l.b16 %v8044
      %v8383 = vunpack.c.h.b16 %v8044
      %v8384 = vunpack.c.l.b16 %v8045
      %v8385 = vunpack.c.h.b16 %v8045
      %v8386 = vunpack.c.l.b16 %v8046
      %v8387 = vunpack.c.h.b16 %v8046
      %v8388 = vunpack.c.l.b16 %v8047
      %v8389 = vunpack.c.h.b16 %v8047
      %v8390 = vunpack.c.l.b16 %v8048
      %v8391 = vunpack.c.h.b16 %v8048
      %v8392 = vunpack.c.l.b16 %v8049
      %v8393 = vunpack.c.h.b16 %v8049
      %v8394 = vunpack.c.l.b16 %v8050
      %v8395 = vunpack.c.h.b16 %v8050
      %v8396 = vunpack.c.l.b16 %v8051
      %v8397 = vunpack.c.h.b16 %v8051
      %v8398 = vunpack.c.l.b16 %v8052
      %v8399 = vunpack.c.h.b16 %v8052
      %v8400 = vunpack.c.l.b16 %v8053
      %v8401 = vunpack.c.h.b16 %v8053
      %v8402 = vunpack.c.l.b16 %v8054
      %v8403 = vunpack.c.h.b16 %v8054
      %v8404 = vunpack.c.l.b16 %v8055
      %v8405 = vunpack.c.h.b16 %v8055
      %v8406 = vunpack.c.l.b16 %v8056
      %v8407 = vunpack.c.h.b16 %v8056
      %v8408 = vunpack.c.l.b16 %v8057
      %v8409 = vunpack.c.h.b16 %v8057
      %v8410 = vunpack.c.l.b16 %v8058
      %v8411 = vunpack.c.h.b16 %v8058
      %v8412 = vunpack.c.l.b16 %v8059
      %v8413 = vunpack.c.h.b16 %v8059
      %v8414 = vpack.c.b16 %v8224, %v8222
      %v8415 = vpack.c.b16 %v8225, %v8223
      %v8416 = vpack.c.b16 %v8228, %v8226
      %v8417 = vpack.c.b16 %v8229, %v8227
      %v8418 = vpack.c.b16 %v8232, %v8230
      %v8419 = vpack.c.b16 %v8233, %v8231
      %v8420 = vpack.c.b16 %v8236, %v8234
      %v8421 = vpack.c.b16 %v8237, %v8235
      %v8422 = vpack.c.b16 %v8240, %v8238
      %v8423 = vpack.c.b16 %v8241, %v8239
      %v8424 = vpack.c.b16 %v8244, %v8242
      %v8425 = vpack.c.b16 %v8245, %v8243
      %v8426 = vpack.c.b16 %v8248, %v8246
      %v8427 = vpack.c.b16 %v8249, %v8247
      %v8428 = vpack.c.b16 %v8252, %v8250
      %v8429 = vpack.c.b16 %v8253, %v8251
      %v8430 = vpack.c.b16 %v8256, %v8254
      %v8431 = vpack.c.b16 %v8257, %v8255
      %v8432 = vpack.c.b16 %v8260, %v8258
      %v8433 = vpack.c.b16 %v8261, %v8259
      %v8434 = vpack.c.b16 %v8264, %v8262
      %v8435 = vpack.c.b16 %v8265, %v8263
      %v8436 = vpack.c.b16 %v8268, %v8266
      %v8437 = vpack.c.b16 %v8269, %v8267
      %v8438 = vpack.c.b16 %v8272, %v8270
      %v8439 = vpack.c.b16 %v8273, %v8271
      %v8440 = vpack.c.b16 %v8276, %v8274
      %v8441 = vpack.c.b16 %v8277, %v8275
      %v8442 = vpack.c.b16 %v8280, %v8278
      %v8443 = vpack.c.b16 %v8281, %v8279
      %v8444 = vpack.c.b16 %v8284, %v8282
      %v8445 = vpack.c.b16 %v8285, %v8283
      %v8446 = vpack.c.b16 %v8288, %v8286
      %v8447 = vpack.c.b16 %v8289, %v8287
      %v8448 = vpack.c.b16 %v8292, %v8290
      %v8449 = vpack.c.b16 %v8293, %v8291
      %v8450 = vpack.c.b16 %v8296, %v8294
      %v8451 = vpack.c.b16 %v8297, %v8295
      %v8452 = vpack.c.b16 %v8300, %v8298
      %v8453 = vpack.c.b16 %v8301, %v8299
      %v8454 = vpack.c.b16 %v8304, %v8302
      %v8455 = vpack.c.b16 %v8305, %v8303
      %v8456 = vpack.c.b16 %v8308, %v8306
      %v8457 = vpack.c.b16 %v8309, %v8307
      %v8458 = vpack.c.b16 %v8312, %v8310
      %v8459 = vpack.c.b16 %v8313, %v8311
      %v8460 = vpack.c.b16 %v8316, %v8314
      %v8461 = vpack.c.b16 %v8317, %v8315
      %v8462 = vpack.c.b16 %v8320, %v8318
      %v8463 = vpack.c.b16 %v8321, %v8319
      %v8464 = vpack.c.b16 %v8324, %v8322
      %v8465 = vpack.c.b16 %v8325, %v8323
      %v8466 = vpack.c.b16 %v8328, %v8326
      %v8467 = vpack.c.b16 %v8329, %v8327
      %v8468 = vpack.c.b16 %v8332, %v8330
      %v8469 = vpack.c.b16 %v8333, %v8331
      %v8470 = vpack.c.b16 %v8336, %v8334
      %v8471 = vpack.c.b16 %v8337, %v8335
      %v8472 = vpack.c.b16 %v8340, %v8338
      %v8473 = vpack.c.b16 %v8341, %v8339
      %v8474 = vpack.c.b16 %v8344, %v8342
      %v8475 = vpack.c.b16 %v8345, %v8343
      %v8476 = vpack.c.b16 %v8348, %v8346
      %v8477 = vpack.c.b16 %v8349, %v8347
      %v8478 = vpack.c.b16 %v8352, %v8350
      %v8479 = vpack.c.b16 %v8353, %v8351
      %v8480 = vpack.c.b16 %v8356, %v8354
      %v8481 = vpack.c.b16 %v8357, %v8355
      %v8482 = vpack.c.b16 %v8360, %v8358
      %v8483 = vpack.c.b16 %v8361, %v8359
      %v8484 = vpack.c.b16 %v8364, %v8362
      %v8485 = vpack.c.b16 %v8365, %v8363
      %v8486 = vpack.c.b16 %v8368, %v8366
      %v8487 = vpack.c.b16 %v8369, %v8367
      %v8488 = vpack.c.b16 %v8372, %v8370
      %v8489 = vpack.c.b16 %v8373, %v8371
      %v8490 = vpack.c.b16 %v8376, %v8374
      %v8491 = vpack.c.b16 %v8377, %v8375
      %v8492 = vpack.c.b16 %v8380, %v8378
      %v8493 = vpack.c.b16 %v8381, %v8379
      %v8494 = vpack.c.b16 %v8384, %v8382
      %v8495 = vpack.c.b16 %v8385, %v8383
      %v8496 = vpack.c.b16 %v8388, %v8386
      %v8497 = vpack.c.b16 %v8389, %v8387
      %v8498 = vpack.c.b16 %v8392, %v8390
      %v8499 = vpack.c.b16 %v8393, %v8391
      %v8500 = vpack.c.b16 %v8396, %v8394
      %v8501 = vpack.c.b16 %v8397, %v8395
      %v8502 = vpack.c.b16 %v8400, %v8398
      %v8503 = vpack.c.b16 %v8401, %v8399
      %v8504 = vpack.c.b16 %v8404, %v8402
      %v8505 = vpack.c.b16 %v8405, %v8403
      %v8506 = vpack.c.b16 %v8408, %v8406
      %v8507 = vpack.c.b16 %v8409, %v8407
      %v8508 = vpack.c.b16 %v8412, %v8410
      %v8509 = vpack.c.b16 %v8413, %v8411
      %8606 = vmatprep.subr.bf16.mxu0 %v8415
      %8607 = vmatpush1.bf16.msra.mxu0 %v8414
      %8608 = vmatprep.subr.bf16.mxu0 %v8417
      %8609 = vmatpush1.bf16.msra.mxu0 %v8416
      %8610 = vmatprep.subr.bf16.mxu0 %v8419
      %8611 = vmatpush1.bf16.msra.mxu0 %v8418
      %8612 = vmatprep.subr.bf16.mxu0 %v8421
      %8613 = vmatpush1.bf16.msra.mxu0 %v8420
      %8614 = vmatprep.subr.bf16.mxu0 %v8423
      %8615 = vmatpush1.bf16.msra.mxu0 %v8422
      %8616 = vmatprep.subr.bf16.mxu0 %v8425
      %8617 = vmatpush1.bf16.msra.mxu0 %v8424
      %8618 = vmatprep.subr.bf16.mxu0 %v8427
      %8619 = vmatpush1.bf16.msra.mxu0 %v8426
      %8620 = vmatprep.subr.bf16.mxu0 %v8429
      %8621 = vmatpush1.bf16.msra.mxu0 %v8428
      %8622 = vmatprep.subr.bf16.mxu0 %v8431
      %8623 = vmatpush1.bf16.msra.mxu0 %v8430
      %8624 = vmatprep.subr.bf16.mxu0 %v8433
      %8625 = vmatpush1.bf16.msra.mxu0 %v8432
      %8626 = vmatprep.subr.bf16.mxu0 %v8435
      %8627 = vmatpush1.bf16.msra.mxu0 %v8434
      %8628 = vmatprep.subr.bf16.mxu0 %v8437
      %8629 = vmatpush1.bf16.msra.mxu0 %v8436
      %8630 = vmatprep.subr.bf16.mxu0 %v8439
      %8631 = vmatpush1.bf16.msra.mxu0 %v8438
      %8632 = vmatprep.subr.bf16.mxu0 %v8441
      %8633 = vmatpush1.bf16.msra.mxu0 %v8440
      %8634 = vmatprep.subr.bf16.mxu0 %v8443
      %8635 = vmatpush1.bf16.msra.mxu0 %v8442
      %8636 = vmatprep.subr.bf16.mxu0 %v8445
      %8637 = vmatpush1.bf16.msra.mxu0 %v8444
      %8638 = vmatprep.mubr.bf16.mxu0 %v7953
      %8639 = vmatmul.mubr.bf16.gmra.mrb[0].mxu0 %v7941
      %v8640 = vpop.f32.mrb[0].mxu0
      %v8641 = vadd.f32 %v8065, %v8640
      %v8642 = vpop.f32.mrb[0].mxu0
      %v8643 = vadd.f32 %v8069, %v8642
      %v8644 = vpop.f32.mrb[0].mxu0
      %v8645 = vadd.f32 %v8065, %v8644
      %v8646 = vpop.f32.mrb[0].mxu0
      %v8647 = vadd.f32 %v8069, %v8646
      %8648 = vdwg.mxu0
      %8649 = vmatprep.subr.bf16.mxu0 %v8447
      %8650 = vmatpush1.bf16.msra.mxu0 %v8446
      %8651 = vmatprep.subr.bf16.mxu0 %v8449
      %8652 = vmatpush1.bf16.msra.mxu0 %v8448
      %8653 = vmatprep.subr.bf16.mxu0 %v8451
      %8654 = vmatpush1.bf16.msra.mxu0 %v8450
      %8655 = vmatprep.subr.bf16.mxu0 %v8453
      %8656 = vmatpush1.bf16.msra.mxu0 %v8452
      %8657 = vmatprep.subr.bf16.mxu0 %v8455
      %8658 = vmatpush1.bf16.msra.mxu0 %v8454
      %8659 = vmatprep.subr.bf16.mxu0 %v8457
      %8660 = vmatpush1.bf16.msra.mxu0 %v8456
      %8661 = vmatprep.subr.bf16.mxu0 %v8459
      %8662 = vmatpush1.bf16.msra.mxu0 %v8458
      %8663 = vmatprep.subr.bf16.mxu0 %v8461
      %8664 = vmatpush1.bf16.msra.mxu0 %v8460
      %8665 = vmatprep.subr.bf16.mxu0 %v8463
      %8666 = vmatpush1.bf16.msra.mxu0 %v8462
      %8667 = vmatprep.subr.bf16.mxu0 %v8465
      %8668 = vmatpush1.bf16.msra.mxu0 %v8464
      %8669 = vmatprep.subr.bf16.mxu0 %v8467
      %8670 = vmatpush1.bf16.msra.mxu0 %v8466
      %8671 = vmatprep.subr.bf16.mxu0 %v8469
      %8672 = vmatpush1.bf16.msra.mxu0 %v8468
      %8673 = vmatprep.subr.bf16.mxu0 %v8471
      %8674 = vmatpush1.bf16.msra.mxu0 %v8470
      %8675 = vmatprep.subr.bf16.mxu0 %v8473
      %8676 = vmatpush1.bf16.msra.mxu0 %v8472
      %8677 = vmatprep.subr.bf16.mxu0 %v8475
      %8678 = vmatpush1.bf16.msra.mxu0 %v8474
      %8679 = vmatprep.subr.bf16.mxu0 %v8477
      %8680 = vmatpush1.bf16.msra.mxu0 %v8476
      %8681 = vmatprep.mubr.bf16.mxu0 %v8095
      %8682 = vmatmul.mubr.bf16.gmra.mrb[0].mxu0 %v8083
      %v8683 = vpop.f32.mrb[0].mxu0
      %v8684 = vadd.f32 %v8641, %v8683
      %v8685 = vpop.f32.mrb[0].mxu0
      %v8686 = vadd.f32 %v8643, %v8685
      %v8687 = vpop.f32.mrb[0].mxu0
      %v8688 = vadd.f32 %v8645, %v8687
      %v8689 = vpop.f32.mrb[0].mxu0
      %v8690 = vadd.f32 %v8647, %v8689
      %8691 = vdwg.mxu0
      %8692 = vmatprep.subr.bf16.mxu0 %v8479
      %8693 = vmatpush1.bf16.msra.mxu0 %v8478
      %8694 = vmatprep.subr.bf16.mxu0 %v8481
      %8695 = vmatpush1.bf16.msra.mxu0 %v8480
      %8696 = vmatprep.subr.bf16.mxu0 %v8483
      %8697 = vmatpush1.bf16.msra.mxu0 %v8482
      %8698 = vmatprep.subr.bf16.mxu0 %v8485
      %8699 = vmatpush1.bf16.msra.mxu0 %v8484
      %8700 = vmatprep.subr.bf16.mxu0 %v8487
      %8701 = vmatpush1.bf16.msra.mxu0 %v8486
      %8702 = vmatprep.subr.bf16.mxu0 %v8489
      %8703 = vmatpush1.bf16.msra.mxu0 %v8488
      %8704 = vmatprep.subr.bf16.mxu0 %v8491
      %8705 = vmatpush1.bf16.msra.mxu0 %v8490
      %8706 = vmatprep.subr.bf16.mxu0 %v8493
      %8707 = vmatpush1.bf16.msra.mxu0 %v8492
      %8708 = vmatprep.subr.bf16.mxu0 %v8495
      %8709 = vmatpush1.bf16.msra.mxu0 %v8494
      %8710 = vmatprep.subr.bf16.mxu0 %v8497
      %8711 = vmatpush1.bf16.msra.mxu0 %v8496
      %8712 = vmatprep.subr.bf16.mxu0 %v8499
      %8713 = vmatpush1.bf16.msra.mxu0 %v8498
      %8714 = vmatprep.subr.bf16.mxu0 %v8501
      %8715 = vmatpush1.bf16.msra.mxu0 %v8500
      %8716 = vmatprep.subr.bf16.mxu0 %v8503
      %8717 = vmatpush1.bf16.msra.mxu0 %v8502
      %8718 = vmatprep.subr.bf16.mxu0 %v8505
      %8719 = vmatpush1.bf16.msra.mxu0 %v8504
      %8720 = vmatprep.subr.bf16.mxu0 %v8507
      %8721 = vmatpush1.bf16.msra.mxu0 %v8506
      %8722 = vmatprep.subr.bf16.mxu0 %v8509
      %8723 = vmatpush1.bf16.msra.mxu0 %v8508
      %8724 = vmatprep.mubr.bf16.mxu0 %v8119
      %8725 = vmatmul.mubr.bf16.gmra.mrb[0].mxu0 %v8107
      %v8726 = vpop.f32.mrb[0].mxu0
      %v8727 = vadd.f32 %v8684, %v8726
      %v8728 = vpop.f32.mrb[0].mxu0
      %v8729 = vadd.f32 %v8686, %v8728
      %v8730 = vpop.f32.mrb[0].mxu0
      %v8731 = vadd.f32 %v8688, %v8730
      %v8732 = vpop.f32.mrb[0].mxu0
      %v8733 = vadd.f32 %v8690, %v8732
      %8734 = vdwg.mxu0
      %v8735 = vmax.f32 %v8727, 0.0
      %v8736 = vmax.f32 %v8729, 0.0
      %v8737 = vmax.f32 %v8731, 0.0
      %v8738 = vmax.f32 %v8733, 0.0
      %v8739 = vpack.c.bf16 %v5174, %v5172
      %v8740 = vpack.c.bf16 %v5175, %v5173
      %v8741 = vpack.c.bf16 %v8737, %v8735
      %v8742 = vpack.c.bf16 %v8738, %v8736
      %v8743 = vld [vmem:[%s39] sm:$0xff]
      %v8744 = vld [vmem:[%s39 + $0x8] sm:$0xff]
      %v8745 = vld [vmem:[%s39 + $0x10] sm:$0xff]
      %v8746 = vld [vmem:[%s39 + $0x18] sm:$0xff]
      %v8747 = vld [vmem:[%s39 + $0x20] sm:$0xff]
      %v8748 = vld [vmem:[%s39 + $0x28] sm:$0xff]
      %v8749 = vld [vmem:[%s39 + $0x30] sm:$0xff]
      %v8750 = vld [vmem:[%s39 + $0x38] sm:$0xff]
      %v8751 = vld [vmem:[%s39 + $0x40] sm:$0xff]
      %v8752 = vld [vmem:[%s39 + $0x48] sm:$0xff]
      %v8753 = vld [vmem:[%s39 + $0x50] sm:$0xff]
      %v8754 = vld [vmem:[%s39 + $0x58] sm:$0xff]
      %v8755 = vld [vmem:[%s39 + $0x60] sm:$0xff]
      %v8756 = vld [vmem:[%s39 + $0x68] sm:$0xff]
      %v8757 = vld [vmem:[%s39 + $0x70] sm:$0xff]
      %v8758 = vld [vmem:[%s39 + $0x78] sm:$0xff]
      %v8759 = vld [vmem:[%s39 + $0x80] sm:$0xff]
      %v8760 = vld [vmem:[%s39 + $0x88] sm:$0xff]
      %v8761 = vld [vmem:[%s39 + $0x90] sm:$0xff]
      %v8762 = vld [vmem:[%s39 + $0x98] sm:$0xff]
      %v8763 = vld [vmem:[%s39 + $0xa0] sm:$0xff]
      %v8764 = vld [vmem:[%s39 + $0xa8] sm:$0xff]
      %v8765 = vld [vmem:[%s39 + $0xb0] sm:$0xff]
      %v8766 = vld [vmem:[%s39 + $0xb8] sm:$0xff]
      %v8767 = vld [vmem:[%s39 + $0xc0] sm:$0xff]
      %v8768 = vld [vmem:[%s39 + $0xc8] sm:$0xff]
      %v8769 = vld [vmem:[%s39 + $0xd0] sm:$0xff]
      %v8770 = vld [vmem:[%s39 + $0xd8] sm:$0xff]
      %v8771 = vld [vmem:[%s39 + $0xe0] sm:$0xff]
      %v8772 = vld [vmem:[%s39 + $0xe8] sm:$0xff]
      %v8773 = vld [vmem:[%s39 + $0xf0] sm:$0xff]
      %v8774 = vld [vmem:[%s39 + $0xf8] sm:$0xff]
      %v8807 = vunpack.c.l.b16 %v8743
      %v8808 = vunpack.c.h.b16 %v8743
      %v8809 = vunpack.c.l.b16 %v8744
      %v8810 = vunpack.c.h.b16 %v8744
      %v8811 = vunpack.c.l.b16 %v8745
      %v8812 = vunpack.c.h.b16 %v8745
      %v8813 = vunpack.c.l.b16 %v8746
      %v8814 = vunpack.c.h.b16 %v8746
      %v8815 = vunpack.c.l.b16 %v8747
      %v8816 = vunpack.c.h.b16 %v8747
      %v8817 = vunpack.c.l.b16 %v8748
      %v8818 = vunpack.c.h.b16 %v8748
      %v8819 = vunpack.c.l.b16 %v8749
      %v8820 = vunpack.c.h.b16 %v8749
      %v8821 = vunpack.c.l.b16 %v8750
      %v8822 = vunpack.c.h.b16 %v8750
      %v8823 = vunpack.c.l.b16 %v8751
      %v8824 = vunpack.c.h.b16 %v8751
      %v8825 = vunpack.c.l.b16 %v8752
      %v8826 = vunpack.c.h.b16 %v8752
      %v8827 = vunpack.c.l.b16 %v8753
      %v8828 = vunpack.c.h.b16 %v8753
      %v8829 = vunpack.c.l.b16 %v8754
      %v8830 = vunpack.c.h.b16 %v8754
      %v8831 = vunpack.c.l.b16 %v8755
      %v8832 = vunpack.c.h.b16 %v8755
      %v8833 = vunpack.c.l.b16 %v8756
      %v8834 = vunpack.c.h.b16 %v8756
      %v8835 = vunpack.c.l.b16 %v8757
      %v8836 = vunpack.c.h.b16 %v8757
      %v8837 = vunpack.c.l.b16 %v8758
      %v8838 = vunpack.c.h.b16 %v8758
      %v8839 = vunpack.c.l.b16 %v8759
      %v8840 = vunpack.c.h.b16 %v8759
      %v8841 = vunpack.c.l.b16 %v8760
      %v8842 = vunpack.c.h.b16 %v8760
      %v8843 = vunpack.c.l.b16 %v8761
      %v8844 = vunpack.c.h.b16 %v8761
      %v8845 = vunpack.c.l.b16 %v8762
      %v8846 = vunpack.c.h.b16 %v8762
      %v8847 = vunpack.c.l.b16 %v8763
      %v8848 = vunpack.c.h.b16 %v8763
      %v8849 = vunpack.c.l.b16 %v8764
      %v8850 = vunpack.c.h.b16 %v8764
      %v8851 = vunpack.c.l.b16 %v8765
      %v8852 = vunpack.c.h.b16 %v8765
      %v8853 = vunpack.c.l.b16 %v8766
      %v8854 = vunpack.c.h.b16 %v8766
      %v8855 = vunpack.c.l.b16 %v8767
      %v8856 = vunpack.c.h.b16 %v8767
      %v8857 = vunpack.c.l.b16 %v8768
      %v8858 = vunpack.c.h.b16 %v8768
      %v8859 = vunpack.c.l.b16 %v8769
      %v8860 = vunpack.c.h.b16 %v8769
      %v8861 = vunpack.c.l.b16 %v8770
      %v8862 = vunpack.c.h.b16 %v8770
      %v8863 = vunpack.c.l.b16 %v8771
      %v8864 = vunpack.c.h.b16 %v8771
      %v8865 = vunpack.c.l.b16 %v8772
      %v8866 = vunpack.c.h.b16 %v8772
      %v8867 = vunpack.c.l.b16 %v8773
      %v8868 = vunpack.c.h.b16 %v8773
      %v8869 = vunpack.c.l.b16 %v8774
      %v8870 = vunpack.c.h.b16 %v8774
      %v8871 = vpack.c.b16 %v8809, %v8807
      %v8872 = vpack.c.b16 %v8810, %v8808
      %v8873 = vpack.c.b16 %v8813, %v8811
      %v8874 = vpack.c.b16 %v8814, %v8812
      %v8875 = vpack.c.b16 %v8817, %v8815
      %v8876 = vpack.c.b16 %v8818, %v8816
      %v8877 = vpack.c.b16 %v8821, %v8819
      %v8878 = vpack.c.b16 %v8822, %v8820
      %v8879 = vpack.c.b16 %v8825, %v8823
      %v8880 = vpack.c.b16 %v8826, %v8824
      %v8881 = vpack.c.b16 %v8829, %v8827
      %v8882 = vpack.c.b16 %v8830, %v8828
      %v8883 = vpack.c.b16 %v8833, %v8831
      %v8884 = vpack.c.b16 %v8834, %v8832
      %v8885 = vpack.c.b16 %v8837, %v8835
      %v8886 = vpack.c.b16 %v8838, %v8836
      %v8887 = vpack.c.b16 %v8841, %v8839
      %v8888 = vpack.c.b16 %v8842, %v8840
      %v8889 = vpack.c.b16 %v8845, %v8843
      %v8890 = vpack.c.b16 %v8846, %v8844
      %v8891 = vpack.c.b16 %v8849, %v8847
      %v8892 = vpack.c.b16 %v8850, %v8848
      %v8893 = vpack.c.b16 %v8853, %v8851
      %v8894 = vpack.c.b16 %v8854, %v8852
      %v8895 = vpack.c.b16 %v8857, %v8855
      %v8896 = vpack.c.b16 %v8858, %v8856
      %v8897 = vpack.c.b16 %v8861, %v8859
      %v8898 = vpack.c.b16 %v8862, %v8860
      %v8899 = vpack.c.b16 %v8865, %v8863
      %v8900 = vpack.c.b16 %v8866, %v8864
      %v8901 = vpack.c.b16 %v8869, %v8867
      %v8902 = vpack.c.b16 %v8870, %v8868
      %8935 = vmatprep.subr.bf16.mxu0 %v8872
      %8936 = vmatpush1.bf16.msra.mxu0 %v8871
      %8937 = vmatprep.subr.bf16.mxu0 %v8874
      %8938 = vmatpush1.bf16.msra.mxu0 %v8873
      %8939 = vmatprep.subr.bf16.mxu0 %v8876
      %8940 = vmatpush1.bf16.msra.mxu0 %v8875
      %8941 = vmatprep.subr.bf16.mxu0 %v8878
      %8942 = vmatpush1.bf16.msra.mxu0 %v8877
      %8943 = vmatprep.subr.bf16.mxu0 %v8880
      %8944 = vmatpush1.bf16.msra.mxu0 %v8879
      %8945 = vmatprep.subr.bf16.mxu0 %v8882
      %8946 = vmatpush1.bf16.msra.mxu0 %v8881
      %8947 = vmatprep.subr.bf16.mxu0 %v8884
      %8948 = vmatpush1.bf16.msra.mxu0 %v8883
      %8949 = vmatprep.subr.bf16.mxu0 %v8886
      %8950 = vmatpush1.bf16.msra.mxu0 %v8885
      %8951 = vmatprep.subr.bf16.mxu0 %v8888
      %8952 = vmatpush1.bf16.msra.mxu0 %v8887
      %8953 = vmatprep.subr.bf16.mxu0 %v8890
      %8954 = vmatpush1.bf16.msra.mxu0 %v8889
      %8955 = vmatprep.subr.bf16.mxu0 %v8892
      %8956 = vmatpush1.bf16.msra.mxu0 %v8891
      %8957 = vmatprep.subr.bf16.mxu0 %v8894
      %8958 = vmatpush1.bf16.msra.mxu0 %v8893
      %8959 = vmatprep.subr.bf16.mxu0 %v8896
      %8960 = vmatpush1.bf16.msra.mxu0 %v8895
      %8961 = vmatprep.subr.bf16.mxu0 %v8898
      %8962 = vmatpush1.bf16.msra.mxu0 %v8897
      %8963 = vmatprep.subr.bf16.mxu0 %v8900
      %8964 = vmatpush1.bf16.msra.mxu0 %v8899
      %8965 = vmatprep.subr.bf16.mxu0 %v8902
      %8966 = vmatpush1.bf16.msra.mxu0 %v8901
      %8967 = vmatprep.mubr.bf16.mxu0 %v8742
      %8968 = vmatmul.mubr.bf16.gmra.mrb[0].mxu0 %v8741
      %v8969 = vpop.f32.mrb[0].mxu0
      %v8970 = vadd.f32 0.0, %v8969
      %v8971 = vpop.f32.mrb[0].mxu0
      %v8972 = vadd.f32 0.0, %v8971
      %v8973 = vpop.f32.mrb[0].mxu0
      %v8974 = vadd.f32 0.0, %v8973
      %v8975 = vpop.f32.mrb[0].mxu0
      %v8976 = vadd.f32 0.0, %v8975
      %8977 = vdwg.mxu0
      %v8978 = vmax.f32 %v8970, 0.0
      %v8979 = vmax.f32 %v8972, 0.0
      %v8980 = vmax.f32 %v8974, 0.0
      %v8981 = vmax.f32 %v8976, 0.0
      %v8982 = vpack.c.bf16 %v8980, %v8978
      %v8983 = vpack.c.bf16 %v8981, %v8979
      %8984 = vmatprep.subr.bf16.mxu0 %v8983
      %8985 = vmatpush1.bf16.xpose.msra.mxu0 %v8982
      %8986 = vmatprep.subr.bf16.mxu0 0
      %8987 = vmatpush1.bf16.xpose.msra.mxu0 0
      %8988 = vmatprep.subr.bf16.mxu0 0
      %8989 = vmatpush1.bf16.xpose.msra.mxu0 0
      %8990 = vmatprep.subr.bf16.mxu0 0
      %8991 = vmatpush1.bf16.xpose.msra.mxu0 0
      %8992 = vmatprep.subr.bf16.mxu0 0
      %8993 = vmatpush1.bf16.xpose.msra.mxu0 0
      %8994 = vmatprep.subr.bf16.mxu0 0
      %8995 = vmatpush1.bf16.xpose.msra.mxu0 0
      %8996 = vmatprep.subr.bf16.mxu0 0
      %8997 = vmatpush1.bf16.xpose.msra.mxu0 0
      %8998 = vmatprep.subr.bf16.mxu0 0
      %8999 = vmatpush1.bf16.xpose.msra.mxu0 0
      %9000 = vmatprep.subr.bf16.mxu0 0
      %9001 = vmatpush1.bf16.xpose.msra.mxu0 0
      %9002 = vmatprep.subr.bf16.mxu0 0
      %9003 = vmatpush1.bf16.xpose.msra.mxu0 0
      %9004 = vmatprep.subr.bf16.mxu0 0
      %9005 = vmatpush1.bf16.xpose.msra.mxu0 0
      %9006 = vmatprep.subr.bf16.mxu0 0
      %9007 = vmatpush1.bf16.xpose.msra.mxu0 0
      %9008 = vmatprep.subr.bf16.mxu0 0
      %9009 = vmatpush1.bf16.xpose.msra.mxu0 0
      %9010 = vmatprep.subr.bf16.mxu0 0
      %9011 = vmatpush1.bf16.xpose.msra.mxu0 0
      %9012 = vmatprep.subr.bf16.mxu0 0
      %9013 = vmatpush1.bf16.xpose.msra.mxu0 0
      %9014 = vmatprep.subr.bf16.mxu0 0
      %9015 = vmatpush1.bf16.xpose.msra.mxu0 0
      %9016 = vmatprep.mubr.bf16.mxu0 %v8740
      %9017 = vmatmul.mubr.bf16.gmra.mrb[0].mxu0 %v8739
      %v9018 = vpop.f32.mrb[0].mxu0
      %v9019 = vadd.f32 0.0, %v9018
      %v9020 = vpop.f32.mrb[0].mxu0
      %v9021 = vpop.f32.mrb[0].mxu0
      %v9022 = vadd.f32 0.0, %v9021
      %v9023 = vpop.f32.mrb[0].mxu0
      %9024 = vdwg.mxu0
      %v9025 = vmax.f32 %v9019, 0.0
      %v9026 = vmax.f32 %v9022, 0.0
      %vm9027 = vcmask 130048
      %v9028 = vsel %vm9027, %v9025, -inf
      %v9029 = vsel %vm9027, %v9026, -inf
      %v9030 = vmax.f32 %v9028, %v9029
      %v9031 = vrot.slane %v9030, 4
      %v9032 = vmax.f32 %v9030, %v9031
      %v9033 = vrot.slane %v9032, 2
      %v9034 = vmax.f32 %v9032, %v9033
      %v9035 = vrot.slane %v9034, 1
      %v9036 = vmax.f32 %v9034, %v9035
      %v9037 = vsub.f32 %v9025, %v9036
      %v9038 = vsub.f32 %v9026, %v9036
      %v9039 = vmul.f32 %v9037, 1.442695
      %v9040 = vpow.pop %v9039
      %v9041 = vmul.f32 %v9038, 1.442695
      %v9042 = vpow.pop %v9041
      %v9043 = vsel %vm9027, %v9040, 0.0
      %v9044 = vsel %vm9027, %v9042, 0.0
      %v9045 = vadd.f32 %v9043, %v9044
      %v9046 = vrot.slane %v9045, 4
      %v9047 = vadd.f32 %v9045, %v9046
      %v9048 = vrot.slane %v9047, 2
      %v9049 = vadd.f32 %v9047, %v9048
      %v9050 = vrot.slane %v9049, 1
      %v9051 = vadd.f32 %v9049, %v9050
      %v9052 = vrcp.pop %v9051
      %v9053 = vmul.f32 %v9040, %v9052
      %v9054 = vmul.f32 %v9042, %v9052
      %v9055 = vpack.c.bf16 %v9054, %v9053
      %v9057 = vsel %vm9027, %v9055, 0
      %9059 = vmatprep.subr.bf16.mxu0 %v8742
      %9060 = vmatpush1.bf16.msra.mxu0 %v8741
      %9061 = vmatprep.subr.bf16.mxu0 0
      %9062 = vmatpush1.bf16.msra.mxu0 0
      %9063 = vmatprep.subr.bf16.mxu0 0
      %9064 = vmatpush1.bf16.msra.mxu0 0
      %9065 = vmatprep.subr.bf16.mxu0 0
      %9066 = vmatpush1.bf16.msra.mxu0 0
      %9067 = vmatprep.subr.bf16.mxu0 0
      %9068 = vmatpush1.bf16.msra.mxu0 0
      %9069 = vmatprep.subr.bf16.mxu0 0
      %9070 = vmatpush1.bf16.msra.mxu0 0
      %9071 = vmatprep.subr.bf16.mxu0 0
      %9072 = vmatpush1.bf16.msra.mxu0 0
      %9073 = vmatprep.subr.bf16.mxu0 0
      %9074 = vmatpush1.bf16.msra.mxu0 0
      %9075 = vmatprep.subr.bf16.mxu0 0
      %9076 = vmatpush1.bf16.msra.mxu0 0
      %9077 = vmatprep.subr.bf16.mxu0 0
      %9078 = vmatpush1.bf16.msra.mxu0 0
      %9079 = vmatprep.subr.bf16.mxu0 0
      %9080 = vmatpush1.bf16.msra.mxu0 0
      %9081 = vmatprep.subr.bf16.mxu0 0
      %9082 = vmatpush1.bf16.msra.mxu0 0
      %9083 = vmatprep.subr.bf16.mxu0 0
      %9084 = vmatpush1.bf16.msra.mxu0 0
      %9085 = vmatprep.subr.bf16.mxu0 0
      %9086 = vmatpush1.bf16.msra.mxu0 0
      %9087 = vmatprep.subr.bf16.mxu0 0
      %9088 = vmatpush1.bf16.msra.mxu0 0
      %9089 = vmatprep.subr.bf16.mxu0 0
      %9090 = vmatpush1.bf16.msra.mxu0 0
      %9091 = vmatprep.mubr.bf16.mxu0 0
      %9092 = vmatmul.mubr.bf16.gmra.mrb[0].mxu0 %v9057
      %v9093 = vpop.f32.mrb[0].mxu0
      %v9094 = vadd.f32 0.0, %v9093
      %v9095 = vpop.f32.mrb[0].mxu0
      %v9096 = vadd.f32 0.0, %v9095
      %v9097 = vpop.f32.mrb[0].mxu0
      %v9098 = vadd.f32 0.0, %v9097
      %v9099 = vpop.f32.mrb[0].mxu0
      %v9100 = vadd.f32 0.0, %v9099
      %9101 = vdwg.mxu0
      %v9102 = vpack.c.bf16 %v9098, %v9094
      %v9103 = vpack.c.bf16 %v9100, %v9096
      %v9104 = vld [vmem:[%s41] sm:$0xf]
      %v9105 = vld [vmem:[%s41 + $0x4] sm:$0xf]
      %v9106 = vld [vmem:[%s41 + $0x8] sm:$0xf]
      %v9107 = vld [vmem:[%s41 + $0xc] sm:$0xf]
      %v9108 = vld [vmem:[%s41 + $0x10] sm:$0xf]
      %v9109 = vld [vmem:[%s41 + $0x14] sm:$0xf]
      %v9110 = vld [vmem:[%s41 + $0x18] sm:$0xf]
      %v9111 = vld [vmem:[%s41 + $0x1c] sm:$0xf]
      %v9112 = vld [vmem:[%s41 + $0x20] sm:$0xf]
      %v9113 = vld [vmem:[%s41 + $0x24] sm:$0xf]
      %v9114 = vld [vmem:[%s41 + $0x28] sm:$0xf]
      %v9115 = vld [vmem:[%s41 + $0x2c] sm:$0xf]
      %v9116 = vld [vmem:[%s41 + $0x30] sm:$0xf]
      %v9117 = vld [vmem:[%s41 + $0x34] sm:$0xf]
      %v9118 = vld [vmem:[%s41 + $0x38] sm:$0xf]
      %v9119 = vld [vmem:[%s41 + $0x3c] sm:$0xf]
      %v9120 = vld [vmem:[%s41 + $0x40] sm:$0xf]
      %v9121 = vld [vmem:[%s41 + $0x44] sm:$0xf]
      %v9122 = vld [vmem:[%s41 + $0x48] sm:$0xf]
      %v9123 = vld [vmem:[%s41 + $0x4c] sm:$0xf]
      %v9124 = vld [vmem:[%s41 + $0x50] sm:$0xf]
      %v9125 = vld [vmem:[%s41 + $0x54] sm:$0xf]
      %v9126 = vld [vmem:[%s41 + $0x58] sm:$0xf]
      %v9127 = vld [vmem:[%s41 + $0x5c] sm:$0xf]
      %v9128 = vld [vmem:[%s41 + $0x60] sm:$0xf]
      %v9129 = vld [vmem:[%s41 + $0x64] sm:$0xf]
      %v9130 = vld [vmem:[%s41 + $0x68] sm:$0xf]
      %v9131 = vld [vmem:[%s41 + $0x6c] sm:$0xf]
      %v9132 = vld [vmem:[%s41 + $0x70] sm:$0xf]
      %v9133 = vld [vmem:[%s41 + $0x74] sm:$0xf]
      %v9134 = vld [vmem:[%s41 + $0x78] sm:$0xf]
      %v9135 = vld [vmem:[%s41 + $0x7c] sm:$0xf]
      %v9136 = vld [vmem:[%s43] sm:$0xf]
      %v9137 = vld [vmem:[%s43 + $0x4] sm:$0xf]
      %v9138 = vld [vmem:[%s43 + $0x8] sm:$0xf]
      %v9139 = vld [vmem:[%s43 + $0xc] sm:$0xf]
      %v9140 = vld [vmem:[%s43 + $0x10] sm:$0xf]
      %v9141 = vld [vmem:[%s43 + $0x14] sm:$0xf]
      %v9142 = vld [vmem:[%s43 + $0x18] sm:$0xf]
      %v9143 = vld [vmem:[%s43 + $0x1c] sm:$0xf]
      %v9144 = vld [vmem:[%s43 + $0x20] sm:$0xf]
      %v9145 = vld [vmem:[%s43 + $0x24] sm:$0xf]
      %v9146 = vld [vmem:[%s43 + $0x28] sm:$0xf]
      %v9147 = vld [vmem:[%s43 + $0x2c] sm:$0xf]
      %v9148 = vld [vmem:[%s43 + $0x30] sm:$0xf]
      %v9149 = vld [vmem:[%s43 + $0x34] sm:$0xf]
      %v9150 = vld [vmem:[%s43 + $0x38] sm:$0xf]
      %v9151 = vld [vmem:[%s43 + $0x3c] sm:$0xf]
      %v9152 = vld [vmem:[%s43 + $0x40] sm:$0xf]
      %v9153 = vld [vmem:[%s43 + $0x44] sm:$0xf]
      %v9154 = vld [vmem:[%s43 + $0x48] sm:$0xf]
      %v9155 = vld [vmem:[%s43 + $0x4c] sm:$0xf]
      %v9156 = vld [vmem:[%s43 + $0x50] sm:$0xf]
      %v9157 = vld [vmem:[%s43 + $0x54] sm:$0xf]
      %v9158 = vld [vmem:[%s43 + $0x58] sm:$0xf]
      %v9159 = vld [vmem:[%s43 + $0x5c] sm:$0xf]
      %v9160 = vld [vmem:[%s43 + $0x60] sm:$0xf]
      %v9161 = vld [vmem:[%s43 + $0x64] sm:$0xf]
      %v9162 = vld [vmem:[%s43 + $0x68] sm:$0xf]
      %v9163 = vld [vmem:[%s43 + $0x6c] sm:$0xf]
      %v9164 = vld [vmem:[%s43 + $0x70] sm:$0xf]
      %v9165 = vld [vmem:[%s43 + $0x74] sm:$0xf]
      %v9166 = vld [vmem:[%s43 + $0x78] sm:$0xf]
      %v9167 = vld [vmem:[%s43 + $0x7c] sm:$0xf]
      %v9200 = vunpack.c.l.b16 %v9136
      %v9201 = vunpack.c.l.b16 %v9137
      %v9202 = vunpack.c.l.b16 %v9138
      %v9203 = vunpack.c.l.b16 %v9139
      %v9204 = vunpack.c.l.b16 %v9140
      %v9205 = vunpack.c.l.b16 %v9141
      %v9206 = vunpack.c.l.b16 %v9142
      %v9207 = vunpack.c.l.b16 %v9143
      %v9208 = vunpack.c.l.b16 %v9144
      %v9209 = vunpack.c.l.b16 %v9145
      %v9210 = vunpack.c.l.b16 %v9146
      %v9211 = vunpack.c.l.b16 %v9147
      %v9212 = vunpack.c.l.b16 %v9148
      %v9213 = vunpack.c.l.b16 %v9149
      %v9214 = vunpack.c.l.b16 %v9150
      %v9215 = vunpack.c.l.b16 %v9151
      %v9216 = vunpack.c.l.b16 %v9152
      %v9217 = vunpack.c.l.b16 %v9153
      %v9218 = vunpack.c.l.b16 %v9154
      %v9219 = vunpack.c.l.b16 %v9155
      %v9220 = vunpack.c.l.b16 %v9156
      %v9221 = vunpack.c.l.b16 %v9157
      %v9222 = vunpack.c.l.b16 %v9158
      %v9223 = vunpack.c.l.b16 %v9159
      %v9224 = vunpack.c.l.b16 %v9160
      %v9225 = vunpack.c.l.b16 %v9161
      %v9226 = vunpack.c.l.b16 %v9162
      %v9227 = vunpack.c.l.b16 %v9163
      %v9228 = vunpack.c.l.b16 %v9164
      %v9229 = vunpack.c.l.b16 %v9165
      %v9230 = vunpack.c.l.b16 %v9166
      %v9231 = vunpack.c.l.b16 %v9167
      %v9232 = vpack.c.b16 %v9201, %v9200
      %v9233 = vpack.c.b16 %v9203, %v9202
      %v9234 = vpack.c.b16 %v9205, %v9204
      %v9235 = vpack.c.b16 %v9207, %v9206
      %v9236 = vpack.c.b16 %v9209, %v9208
      %v9237 = vpack.c.b16 %v9211, %v9210
      %v9238 = vpack.c.b16 %v9213, %v9212
      %v9239 = vpack.c.b16 %v9215, %v9214
      %v9240 = vpack.c.b16 %v9217, %v9216
      %v9241 = vpack.c.b16 %v9219, %v9218
      %v9242 = vpack.c.b16 %v9221, %v9220
      %v9243 = vpack.c.b16 %v9223, %v9222
      %v9244 = vpack.c.b16 %v9225, %v9224
      %v9245 = vpack.c.b16 %v9227, %v9226
      %v9246 = vpack.c.b16 %v9229, %v9228
      %v9247 = vpack.c.b16 %v9231, %v9230
      %9264 = vmatprep.subr.bf16.mxu0 0
      %9265 = vmatpush1.bf16.msra.mxu0 %v9232
      %9266 = vmatprep.subr.bf16.mxu0 0
      %9267 = vmatpush1.bf16.msra.mxu0 %v9233
      %9268 = vmatprep.subr.bf16.mxu0 0
      %9269 = vmatpush1.bf16.msra.mxu0 %v9234
      %9270 = vmatprep.subr.bf16.mxu0 0
      %9271 = vmatpush1.bf16.msra.mxu0 %v9235
      %9272 = vmatprep.subr.bf16.mxu0 0
      %9273 = vmatpush1.bf16.msra.mxu0 %v9236
      %9274 = vmatprep.subr.bf16.mxu0 0
      %9275 = vmatpush1.bf16.msra.mxu0 %v9237
      %9276 = vmatprep.subr.bf16.mxu0 0
      %9277 = vmatpush1.bf16.msra.mxu0 %v9238
      %9278 = vmatprep.subr.bf16.mxu0 0
      %9279 = vmatpush1.bf16.msra.mxu0 %v9239
      %9280 = vmatprep.subr.bf16.mxu0 0
      %9281 = vmatpush1.bf16.msra.mxu0 %v9240
      %9282 = vmatprep.subr.bf16.mxu0 0
      %9283 = vmatpush1.bf16.msra.mxu0 %v9241
      %9284 = vmatprep.subr.bf16.mxu0 0
      %9285 = vmatpush1.bf16.msra.mxu0 %v9242
      %9286 = vmatprep.subr.bf16.mxu0 0
      %9287 = vmatpush1.bf16.msra.mxu0 %v9243
      %9288 = vmatprep.subr.bf16.mxu0 0
      %9289 = vmatpush1.bf16.msra.mxu0 %v9244
      %9290 = vmatprep.subr.bf16.mxu0 0
      %9291 = vmatpush1.bf16.msra.mxu0 %v9245
      %9292 = vmatprep.subr.bf16.mxu0 0
      %9293 = vmatpush1.bf16.msra.mxu0 %v9246
      %9294 = vmatprep.subr.bf16.mxu0 0
      %9295 = vmatpush1.bf16.msra.mxu0 %v9247
      %9296 = vmatprep.mubr.bf16.mxu0 %v9103
      %9297 = vmatmul.mubr.bf16.gmra.mrb[0].mxu0 %v9102
      %v9298 = vpop.f32.mrb[0].mxu0
      %v9299 = vadd.f32 0.0, %v9298
      %v9300 = vpop.f32.mrb[0].mxu0
      %v9301 = vpop.f32.mrb[0].mxu0
      %v9302 = vadd.f32 0.0, %v9301
      %v9303 = vpop.f32.mrb[0].mxu0
      %9304 = vdwg.mxu0
      %v9337 = vunpack.c.l.b16 %v9104
      %v9338 = vunpack.c.l.b16 %v9105
      %v9339 = vunpack.c.l.b16 %v9106
      %v9340 = vunpack.c.l.b16 %v9107
      %v9341 = vunpack.c.l.b16 %v9108
      %v9342 = vunpack.c.l.b16 %v9109
      %v9343 = vunpack.c.l.b16 %v9110
      %v9344 = vunpack.c.l.b16 %v9111
      %v9345 = vunpack.c.l.b16 %v9112
      %v9346 = vunpack.c.l.b16 %v9113
      %v9347 = vunpack.c.l.b16 %v9114
      %v9348 = vunpack.c.l.b16 %v9115
      %v9349 = vunpack.c.l.b16 %v9116
      %v9350 = vunpack.c.l.b16 %v9117
      %v9351 = vunpack.c.l.b16 %v9118
      %v9352 = vunpack.c.l.b16 %v9119
      %v9353 = vunpack.c.l.b16 %v9120
      %v9354 = vunpack.c.l.b16 %v9121
      %v9355 = vunpack.c.l.b16 %v9122
      %v9356 = vunpack.c.l.b16 %v9123
      %v9357 = vunpack.c.l.b16 %v9124
      %v9358 = vunpack.c.l.b16 %v9125
      %v9359 = vunpack.c.l.b16 %v9126
      %v9360 = vunpack.c.l.b16 %v9127
      %v9361 = vunpack.c.l.b16 %v9128
      %v9362 = vunpack.c.l.b16 %v9129
      %v9363 = vunpack.c.l.b16 %v9130
      %v9364 = vunpack.c.l.b16 %v9131
      %v9365 = vunpack.c.l.b16 %v9132
      %v9366 = vunpack.c.l.b16 %v9133
      %v9367 = vunpack.c.l.b16 %v9134
      %v9368 = vunpack.c.l.b16 %v9135
      %v9369 = vpack.c.b16 %v9338, %v9337
      %v9370 = vpack.c.b16 %v9340, %v9339
      %v9371 = vpack.c.b16 %v9342, %v9341
      %v9372 = vpack.c.b16 %v9344, %v9343
      %v9373 = vpack.c.b16 %v9346, %v9345
      %v9374 = vpack.c.b16 %v9348, %v9347
      %v9375 = vpack.c.b16 %v9350, %v9349
      %v9376 = vpack.c.b16 %v9352, %v9351
      %v9377 = vpack.c.b16 %v9354, %v9353
      %v9378 = vpack.c.b16 %v9356, %v9355
      %v9379 = vpack.c.b16 %v9358, %v9357
      %v9380 = vpack.c.b16 %v9360, %v9359
      %v9381 = vpack.c.b16 %v9362, %v9361
      %v9382 = vpack.c.b16 %v9364, %v9363
      %v9383 = vpack.c.b16 %v9366, %v9365
      %v9384 = vpack.c.b16 %v9368, %v9367
      %9401 = vmatprep.subr.bf16.mxu0 0
      %9402 = vmatpush1.bf16.msra.mxu0 %v9369
      %9403 = vmatprep.subr.bf16.mxu0 0
      %9404 = vmatpush1.bf16.msra.mxu0 %v9370
      %9405 = vmatprep.subr.bf16.mxu0 0
      %9406 = vmatpush1.bf16.msra.mxu0 %v9371
      %9407 = vmatprep.subr.bf16.mxu0 0
      %9408 = vmatpush1.bf16.msra.mxu0 %v9372
      %9409 = vmatprep.subr.bf16.mxu0 0
      %9410 = vmatpush1.bf16.msra.mxu0 %v9373
      %9411 = vmatprep.subr.bf16.mxu0 0
      %9412 = vmatpush1.bf16.msra.mxu0 %v9374
      %9413 = vmatprep.subr.bf16.mxu0 0
      %9414 = vmatpush1.bf16.msra.mxu0 %v9375
      %9415 = vmatprep.subr.bf16.mxu0 0
      %9416 = vmatpush1.bf16.msra.mxu0 %v9376
      %9417 = vmatprep.subr.bf16.mxu0 0
      %9418 = vmatpush1.bf16.msra.mxu0 %v9377
      %9419 = vmatprep.subr.bf16.mxu0 0
      %9420 = vmatpush1.bf16.msra.mxu0 %v9378
      %9421 = vmatprep.subr.bf16.mxu0 0
      %9422 = vmatpush1.bf16.msra.mxu0 %v9379
      %9423 = vmatprep.subr.bf16.mxu0 0
      %9424 = vmatpush1.bf16.msra.mxu0 %v9380
      %9425 = vmatprep.subr.bf16.mxu0 0
      %9426 = vmatpush1.bf16.msra.mxu0 %v9381
      %9427 = vmatprep.subr.bf16.mxu0 0
      %9428 = vmatpush1.bf16.msra.mxu0 %v9382
      %9429 = vmatprep.subr.bf16.mxu0 0
      %9430 = vmatpush1.bf16.msra.mxu0 %v9383
      %9431 = vmatprep.subr.bf16.mxu0 0
      %9432 = vmatpush1.bf16.msra.mxu0 %v9384
      %9433 = vmatprep.mubr.bf16.mxu0 %v8740
      %9434 = vmatmul.mubr.bf16.gmra.mrb[0].mxu0 %v8739
      %v9435 = vpop.f32.mrb[0].mxu0
      %v9436 = vadd.f32 %v9299, %v9435
      %v9437 = vpop.f32.mrb[0].mxu0
      %v9438 = vpop.f32.mrb[0].mxu0
      %v9439 = vadd.f32 %v9302, %v9438
      %v9440 = vpop.f32.mrb[0].mxu0
      %9441 = vdwg.mxu0
      %v9442 = vld [vmem:[%s45] sm:$0x1]
      %v9444 = vlaneseq
      %v9445 = vshrl.u32 %v9444, 7
      %v9446 = vsub.s32 0, %v9445
      %v9447 = vrot.slane %v9442, %v9446
      %v9449 = vadd.f32 %v9436, %v9447
      %v9450 = vadd.f32 %v9439, %v9447
      %9451 = vmax.xlane.f32.xlu0 %v9449
      %v9452 = vpop.xlane.xlu0 %9451
      %9453 = vmax.xlane.f32.xlu0 %v9450
      %v9454 = vpop.xlane.xlu0 %9453
      %v9455 = vsub.f32 %v9449, %v9452
      %v9456 = vsub.f32 %v9450, %v9454
      %v9457 = vmul.f32 %v9455, 1.442695
      %v9458 = vpow.pop %v9457
      %v9459 = vmul.f32 %v9456, 1.442695
      %v9460 = vpow.pop %v9459
      %9461 = vadd.xlane.f32.xlu0 %v9458
      %v9462 = vpop.xlane.xlu0 %9461
      %9463 = vadd.xlane.f32.xlu0 %v9460
      %v9464 = vpop.xlane.xlu0 %9463
      %v9465 = vlog2.pop %v9462
      %v9466 = vmul.f32 %v9465, 0.6931472
      %v9467 = vlog2.pop %v9464
      %v9468 = vmul.f32 %v9467, 0.6931472
      %v9469 = vadd.f32 %v9466, %v9452
      %v9470 = vadd.f32 %v9468, %v9454
      %v9471 = vlaneseq
      %v9472 = vand.u32 %v9471, 127
      %v9473 = vld [vmem:[%s1064] sm:$0xff]
      %v9474 = vld [vmem:[%s1064 + $0x8] sm:$0xff]
      %9475 = vset.pattern.permute.xlu0 0
      %9476 = vperm.xlu0 %9475, %v9473
      %v9477 = vpop.permute.xlu0 %9476
      %9478 = vset.pattern.permute.xlu0 0
      %9479 = vperm.xlu0 %9478, %v9474
      %v9480 = vpop.permute.xlu0 %9479
      %vm9481 = vcmp.eq.s32.totalorder %v9472, %v9477
      %vm9482 = vcmp.eq.s32.totalorder %v9472, %v9480
      %v9483 = vsel %vm9481, %v9449, 0.0
      %v9484 = vsel %vm9482, %v9450, 0.0
      %9485 = vadd.xlane.f32.xlu0 %v9483
      %v9486 = vpop.xlane.xlu0 %9485
      %9487 = vadd.xlane.f32.xlu0 %v9484
      %v9488 = vpop.xlane.xlu0 %9487
      %v9489 = vsub.f32 %v9469, %v9486
      %v9490 = vsub.f32 %v9470, %v9488
      %v9491 = vld [vmem:[%s1070] sm:$0xff]
      %v9492 = vld [vmem:[%s1070 + $0x8] sm:$0xff]
      %v9493 = vmul.f32 %v9489, %v9491
      %v9494 = vmul.f32 %v9490, %v9492
      %vm9495 = vcmask 7168
      %v9496 = vsel %vm9495, %v9493, 0.0
      %v9497 = vsel %vm9495, %v9494, 0.0
      %v9498 = vadd.f32 %v9496, %v9497
      %9499 = vadd.xlane.f32.xlu0 %v9498
      %v9500 = vpop.xlane.xlu0 %9499
      %v9501 = vrot.slane %v9500, 4
      %v9502 = vadd.f32 %v9500, %v9501
      %v9503 = vrot.slane %v9502, 2
      %v9504 = vadd.f32 %v9502, %v9503
      %v9505 = vrot.slane %v9504, 1
      %v9506 = vadd.f32 %v9504, %v9505
      %s9507 = vtos %v9506
      %v9508 = vsel %vm9495, %v9491, 0.0
      %v9509 = vsel %vm9495, %v9492, 0.0
      %v9510 = vadd.f32 %v9508, %v9509
      %9511 = vadd.xlane.f32.xlu0 %v9510
      %v9512 = vpop.xlane.xlu0 %9511
      %v9513 = vrot.slane %v9512, 4
      %v9514 = vadd.f32 %v9512, %v9513
      %v9515 = vrot.slane %v9514, 2
      %v9516 = vadd.f32 %v9514, %v9515
      %v9517 = vrot.slane %v9516, 1
      %v9518 = vadd.f32 %v9516, %v9517
      %s9519 = vtos %v9518
      %v9520 = vstv %s9507
      %9521 = vst [vmem:[%s1086] sm:$0x1] %v9520
      %v9522 = vstv %s9519
      %9523 = vst [vmem:[%s1089] sm:$0x1] %v9522
      %v9524 = vld [vmem:[%s47] sm:$0xf]
      %v9525 = vld [vmem:[%s47 + $0x4] sm:$0xf]
      %v9526 = vld [vmem:[%s47 + $0x8] sm:$0xf]
      %v9527 = vld [vmem:[%s47 + $0xc] sm:$0xf]
      %v9528 = vld [vmem:[%s47 + $0x10] sm:$0xf]
      %v9529 = vld [vmem:[%s47 + $0x14] sm:$0xf]
      %v9530 = vld [vmem:[%s47 + $0x18] sm:$0xf]
      %v9531 = vld [vmem:[%s47 + $0x1c] sm:$0xf]
      %v9532 = vld [vmem:[%s47 + $0x20] sm:$0xf]
      %v9533 = vld [vmem:[%s47 + $0x24] sm:$0xf]
      %v9534 = vld [vmem:[%s47 + $0x28] sm:$0xf]
      %v9535 = vld [vmem:[%s47 + $0x2c] sm:$0xf]
      %v9536 = vld [vmem:[%s47 + $0x30] sm:$0xf]
      %v9537 = vld [vmem:[%s47 + $0x34] sm:$0xf]
      %v9538 = vld [vmem:[%s47 + $0x38] sm:$0xf]
      %v9539 = vld [vmem:[%s47 + $0x3c] sm:$0xf]
      %v9540 = vld [vmem:[%s47 + $0x40] sm:$0xf]
      %v9541 = vld [vmem:[%s47 + $0x44] sm:$0xf]
      %v9542 = vld [vmem:[%s47 + $0x48] sm:$0xf]
      %v9543 = vld [vmem:[%s47 + $0x4c] sm:$0xf]
      %v9544 = vld [vmem:[%s47 + $0x50] sm:$0xf]
      %v9545 = vld [vmem:[%s47 + $0x54] sm:$0xf]
      %v9546 = vld [vmem:[%s47 + $0x58] sm:$0xf]
      %v9547 = vld [vmem:[%s47 + $0x5c] sm:$0xf]
      %v9548 = vld [vmem:[%s47 + $0x60] sm:$0xf]
      %v9549 = vld [vmem:[%s47 + $0x64] sm:$0xf]
      %v9550 = vld [vmem:[%s47 + $0x68] sm:$0xf]
      %v9551 = vld [vmem:[%s47 + $0x6c] sm:$0xf]
      %v9552 = vld [vmem:[%s47 + $0x70] sm:$0xf]
      %v9553 = vld [vmem:[%s47 + $0x74] sm:$0xf]
      %v9554 = vld [vmem:[%s47 + $0x78] sm:$0xf]
      %v9555 = vld [vmem:[%s47 + $0x7c] sm:$0xf]
      %v9556 = vld [vmem:[%s49] sm:$0x1]
      %v9558 = vlaneseq
      %v9559 = vshrl.u32 %v9558, 7
      %v9560 = vsub.s32 0, %v9559
      %v9561 = vrot.slane %v9556, %v9560
      %v9595 = vunpack.c.l.b16 %v9524
      %v9596 = vunpack.c.l.b16 %v9525
      %v9597 = vunpack.c.l.b16 %v9526
      %v9598 = vunpack.c.l.b16 %v9527
      %v9599 = vunpack.c.l.b16 %v9528
      %v9600 = vunpack.c.l.b16 %v9529
      %v9601 = vunpack.c.l.b16 %v9530
      %v9602 = vunpack.c.l.b16 %v9531
      %v9603 = vunpack.c.l.b16 %v9532
      %v9604 = vunpack.c.l.b16 %v9533
      %v9605 = vunpack.c.l.b16 %v9534
      %v9606 = vunpack.c.l.b16 %v9535
      %v9607 = vunpack.c.l.b16 %v9536
      %v9608 = vunpack.c.l.b16 %v9537
      %v9609 = vunpack.c.l.b16 %v9538
      %v9610 = vunpack.c.l.b16 %v9539
      %v9611 = vunpack.c.l.b16 %v9540
      %v9612 = vunpack.c.l.b16 %v9541
      %v9613 = vunpack.c.l.b16 %v9542
      %v9614 = vunpack.c.l.b16 %v9543
      %v9615 = vunpack.c.l.b16 %v9544
      %v9616 = vunpack.c.l.b16 %v9545
      %v9617 = vunpack.c.l.b16 %v9546
      %v9618 = vunpack.c.l.b16 %v9547
      %v9619 = vunpack.c.l.b16 %v9548
      %v9620 = vunpack.c.l.b16 %v9549
      %v9621 = vunpack.c.l.b16 %v9550
      %v9622 = vunpack.c.l.b16 %v9551
      %v9623 = vunpack.c.l.b16 %v9552
      %v9624 = vunpack.c.l.b16 %v9553
      %v9625 = vunpack.c.l.b16 %v9554
      %v9626 = vunpack.c.l.b16 %v9555
      %v9627 = vpack.c.b16 %v9596, %v9595
      %v9628 = vpack.c.b16 %v9598, %v9597
      %v9629 = vpack.c.b16 %v9600, %v9599
      %v9630 = vpack.c.b16 %v9602, %v9601
      %v9631 = vpack.c.b16 %v9604, %v9603
      %v9632 = vpack.c.b16 %v9606, %v9605
      %v9633 = vpack.c.b16 %v9608, %v9607
      %v9634 = vpack.c.b16 %v9610, %v9609
      %v9635 = vpack.c.b16 %v9612, %v9611
      %v9636 = vpack.c.b16 %v9614, %v9613
      %v9637 = vpack.c.b16 %v9616, %v9615
      %v9638 = vpack.c.b16 %v9618, %v9617
      %v9639 = vpack.c.b16 %v9620, %v9619
      %v9640 = vpack.c.b16 %v9622, %v9621
      %v9641 = vpack.c.b16 %v9624, %v9623
      %v9642 = vpack.c.b16 %v9626, %v9625
      %9659 = vmatprep.subr.bf16.mxu0 0
      %9660 = vmatpush1.bf16.msra.mxu0 %v9627
      %9661 = vmatprep.subr.bf16.mxu0 0
      %9662 = vmatpush1.bf16.msra.mxu0 %v9628
      %9663 = vmatprep.subr.bf16.mxu0 0
      %9664 = vmatpush1.bf16.msra.mxu0 %v9629
      %9665 = vmatprep.subr.bf16.mxu0 0
      %9666 = vmatpush1.bf16.msra.mxu0 %v9630
      %9667 = vmatprep.subr.bf16.mxu0 0
      %9668 = vmatpush1.bf16.msra.mxu0 %v9631
      %9669 = vmatprep.subr.bf16.mxu0 0
      %9670 = vmatpush1.bf16.msra.mxu0 %v9632
      %9671 = vmatprep.subr.bf16.mxu0 0
      %9672 = vmatpush1.bf16.msra.mxu0 %v9633
      %9673 = vmatprep.subr.bf16.mxu0 0
      %9674 = vmatpush1.bf16.msra.mxu0 %v9634
      %9675 = vmatprep.subr.bf16.mxu0 0
      %9676 = vmatpush1.bf16.msra.mxu0 %v9635
      %9677 = vmatprep.subr.bf16.mxu0 0
      %9678 = vmatpush1.bf16.msra.mxu0 %v9636
      %9679 = vmatprep.subr.bf16.mxu0 0
      %9680 = vmatpush1.bf16.msra.mxu0 %v9637
      %9681 = vmatprep.subr.bf16.mxu0 0
      %9682 = vmatpush1.bf16.msra.mxu0 %v9638
      %9683 = vmatprep.subr.bf16.mxu0 0
      %9684 = vmatpush1.bf16.msra.mxu0 %v9639
      %9685 = vmatprep.subr.bf16.mxu0 0
      %9686 = vmatpush1.bf16.msra.mxu0 %v9640
      %9687 = vmatprep.subr.bf16.mxu0 0
      %9688 = vmatpush1.bf16.msra.mxu0 %v9641
      %9689 = vmatprep.subr.bf16.mxu0 0
      %9690 = vmatpush1.bf16.msra.mxu0 %v9642
      %9691 = vmatprep.mubr.bf16.mxu0 %v8742
      %9692 = vmatmul.mubr.bf16.gmra.mrb[0].mxu0 %v8741
      %v9693 = vpop.f32.mrb[0].mxu0
      %v9694 = vadd.f32 %v9561, %v9693
      %v9695 = vpop.f32.mrb[0].mxu0
      %v9696 = vpop.f32.mrb[0].mxu0
      %v9697 = vadd.f32 %v9561, %v9696
      %v9698 = vpop.f32.mrb[0].mxu0
      %9699 = vdwg.mxu0
      %9700 = vmax.xlane.f32.xlu0 %v9694
      %v9701 = vpop.xlane.xlu0 %9700
      %9702 = vmax.xlane.f32.xlu0 %v9697
      %v9703 = vpop.xlane.xlu0 %9702
      %v9704 = vsub.f32 %v9694, %v9701
      %v9705 = vsub.f32 %v9697, %v9703
      %v9706 = vmul.f32 %v9704, 1.442695
      %v9707 = vpow.pop %v9706
      %v9708 = vmul.f32 %v9705, 1.442695
      %v9709 = vpow.pop %v9708
      %9710 = vadd.xlane.f32.xlu0 %v9707
      %v9711 = vpop.xlane.xlu0 %9710
      %9712 = vadd.xlane.f32.xlu0 %v9709
      %v9713 = vpop.xlane.xlu0 %9712
      %v9714 = vlog2.pop %v9711
      %v9715 = vmul.f32 %v9714, 0.6931472
      %v9716 = vlog2.pop %v9713
      %v9717 = vmul.f32 %v9716, 0.6931472
      %v9718 = vadd.f32 %v9715, %v9701
      %v9719 = vadd.f32 %v9717, %v9703
      %v9720 = vld [vmem:[%s1076] sm:$0xff]
      %v9721 = vld [vmem:[%s1076 + $0x8] sm:$0xff]
      %9722 = vset.pattern.permute.xlu0 0
      %9723 = vperm.xlu0 %9722, %v9720
      %v9724 = vpop.permute.xlu0 %9723
      %9725 = vset.pattern.permute.xlu0 0
      %9726 = vperm.xlu0 %9725, %v9721
      %v9727 = vpop.permute.xlu0 %9726
      %vm9728 = vcmp.eq.s32.totalorder %v9472, %v9724
      %vm9729 = vcmp.eq.s32.totalorder %v9472, %v9727
      %v9730 = vsel %vm9728, %v9694, 0.0
      %v9731 = vsel %vm9729, %v9697, 0.0
      %9732 = vadd.xlane.f32.xlu0 %v9730
      %v9733 = vpop.xlane.xlu0 %9732
      %9734 = vadd.xlane.f32.xlu0 %v9731
      %v9735 = vpop.xlane.xlu0 %9734
      %v9736 = vsub.f32 %v9718, %v9733
      %v9737 = vsub.f32 %v9719, %v9735
      %v9738 = vld [vmem:[%s1082] sm:$0xff]
      %v9739 = vld [vmem:[%s1082 + $0x8] sm:$0xff]
      %v9740 = vmul.f32 %v9736, %v9738
      %v9741 = vmul.f32 %v9737, %v9739
      %v9742 = vsel %vm9495, %v9740, 0.0
      %v9743 = vsel %vm9495, %v9741, 0.0
      %v9744 = vadd.f32 %v9742, %v9743
      %9745 = vadd.xlane.f32.xlu0 %v9744
      %v9746 = vpop.xlane.xlu0 %9745
      %v9747 = vrot.slane %v9746, 4
      %v9748 = vadd.f32 %v9746, %v9747
      %v9749 = vrot.slane %v9748, 2
      %v9750 = vadd.f32 %v9748, %v9749
      %v9751 = vrot.slane %v9750, 1
      %v9752 = vadd.f32 %v9750, %v9751
      %s9753 = vtos %v9752
      %v9754 = vsel %vm9495, %v9738, 0.0
      %v9755 = vsel %vm9495, %v9739, 0.0
      %v9756 = vadd.f32 %v9754, %v9755
      %9757 = vadd.xlane.f32.xlu0 %v9756
      %v9758 = vpop.xlane.xlu0 %9757
      %v9759 = vrot.slane %v9758, 4
      %v9760 = vadd.f32 %v9758, %v9759
      %v9761 = vrot.slane %v9760, 2
      %v9762 = vadd.f32 %v9760, %v9761
      %v9763 = vrot.slane %v9762, 1
      %v9764 = vadd.f32 %v9762, %v9763
      %s9765 = vtos %v9764
      %v9766 = vstv %s9753
      %9767 = vst [vmem:[%s1092] sm:$0x1] %v9766
      %v9768 = vstv %s9765
      %9769 = vst [vmem:[%s1095] sm:$0x1] %v9768
      %p9770 = scmp.lt.s32.totalorder %s77, 1
      %s9771 = scalar_select %p9770, %s77, 1
      %s9772 = scalar_lea.vmem %s59, %s9771
      %p9773 = scmp.lt.s32.totalorder %s77, 1
      %s9774 = scalar_select %p9773, %s77, 1
      %s9775 = scalar_lea.vmem %s61, %s9774
      %p9776 = scmp.lt.s32.totalorder %s77, 1
      %s9777 = scalar_select %p9776, %s77, 1
      %s9778 = scalar_lea.vmem %s63, %s9777
      %p9779 = scmp.lt.s32.totalorder %s77, 1
      %s9780 = scalar_select %p9779, %s77, 1
      %s9781 = scalar_lea.vmem %s65, %s9780
      // Predicated region
      $region137: #{forward.1} parent=135 // pred_check
        %p9782 = pneg %p729
      $region138: #{forward.1} parent=135 // pred_check_branch
        %9784 = sbr.rel (%p9782) target = $region140
      $region139: #{forward.1} parent=135 // pred_region
        _
      $region140: #{forward.1} parent=135 // pred_fallthru
        _
      // Predicated region
      $region141: #{forward.1} parent=135 // pred_check
        %p9785 = pneg %p755
      $region142: #{forward.1} parent=135 // pred_check_branch
        %9787 = sbr.rel (%p9785) target = $region144
      $region143: #{forward.1} parent=135 // pred_region
        _
      $region144: #{forward.1} parent=135 // pred_fallthru
        _
      // Predicated region
      $region145: #{forward.1} parent=135 // pred_check
        %p9788 = pneg %p781
      $region146: #{forward.1} parent=135 // pred_check_branch
        %9790 = sbr.rel (%p9788) target = $region148
      $region147: #{forward.1} parent=135 // pred_region
        _
      $region148: #{forward.1} parent=135 // pred_fallthru
        _
      // Predicated region
      $region149: #{forward.1} parent=135 // pred_check
        %p9791 = pneg %p807
      $region150: #{forward.1} parent=135 // pred_check_branch
        %9793 = sbr.rel (%p9791) target = $region152
      $region151: #{forward.1} parent=135 // pred_region
        _
      $region152: #{forward.1} parent=135 // pred_fallthru
        _
    $region136: #{forward.1} parent=5 // pred_fallthru
      _
    %p9794 = scmp.le.s32.totalorder 2, %s72
    // Predicated region
    $region153: #{forward.1} parent=5 // pred_check
      %p9795 = pneg %p9794
    $region154: #{forward.1} parent=5 // pred_check_branch
      %9797 = sbr.rel (%p9795) target = $region156
    $region155: #{forward.1} parent=5 // pred_region
      %s9798 = ssub.s32 %s72, 2
      // Predicated region
      $region157: #{forward.1} parent=155 // pred_check
        %p9799 = pneg %p735
      $region158: #{forward.1} parent=155 // pred_check_branch
        %9801 = sbr.rel (%p9799) target = $region160
      $region159: #{forward.1} parent=155 // pred_region
        %p9802 = scmp.lt.s32.totalorder %s78, 1
        %s9803 = scalar_select %p9802, %s78, 1
        %s9804 = scalar_lea.vmem %s59, %s9803
      $region160: #{forward.1} parent=155 // pred_fallthru
        _
      // Predicated region
      $region161: #{forward.1} parent=155 // pred_check
        %p9805 = pneg %p761
      $region162: #{forward.1} parent=155 // pred_check_branch
        %9807 = sbr.rel (%p9805) target = $region164
      $region163: #{forward.1} parent=155 // pred_region
        %p9808 = scmp.lt.s32.totalorder %s78, 1
        %s9809 = scalar_select %p9808, %s78, 1
        %s9810 = scalar_lea.vmem %s61, %s9809
      $region164: #{forward.1} parent=155 // pred_fallthru
        _
      // Predicated region
      $region165: #{forward.1} parent=155 // pred_check
        %p9811 = pneg %p787
      $region166: #{forward.1} parent=155 // pred_check_branch
        %9813 = sbr.rel (%p9811) target = $region168
      $region167: #{forward.1} parent=155 // pred_region
        %p9814 = scmp.lt.s32.totalorder %s78, 1
        %s9815 = scalar_select %p9814, %s78, 1
        %s9816 = scalar_lea.vmem %s63, %s9815
      $region168: #{forward.1} parent=155 // pred_fallthru
        _
      // Predicated region
      $region169: #{forward.1} parent=155 // pred_check
        %p9817 = pneg %p813
      $region170: #{forward.1} parent=155 // pred_check_branch
        %9819 = sbr.rel (%p9817) target = $region172
      $region171: #{forward.1} parent=155 // pred_region
        %p9820 = scmp.lt.s32.totalorder %s78, 1
        %s9821 = scalar_select %p9820, %s78, 1
        %s9822 = scalar_lea.vmem %s65, %s9821
      $region172: #{forward.1} parent=155 // pred_fallthru
        _
    $region156: #{forward.1} parent=5 // pred_fallthru
      _
  $region6: #{forward.1} parent=0 // loop_footer
    %s76 = sadd.s32 1, %s72
  $region7: #{forward.1} parent=0 // loop_footer_branch
    %71 = sbr.rel target = $region3
  $region8: #{forward.1} parent=0 // loop_exit
    _

</llo_original>
